<compile_context>
chip_gen: v7x
topology: tpu7x:2x2x1
jax: 0.10.0
libtpu: 0.0.40
codegen_flags: <defaults>
</compile_context>

<pallas_src>
import functools

import jax
import jax.numpy as jnp
import numpy as np
from jax import lax
from jax.experimental import pallas as pl
from jax.experimental.pallas import tpu as pltpu


def _basic_block_kernel(x_ref, w1_ref, w2_ref, *rest, H, W, Ho, Wo, C,
                        stride, has_shortcut):
    """Fused BasicBlock forward for one batch element.

    x_ref  : (1, H, W, C)    bf16  channel-padded NHWC input
    w1_ref : (9*C, C)        bf16  conv1 weights, rows ordered (kh, kw, cin)
    w2_ref : (9*C, C)        bf16  conv2 weights
    wsc_ref: (C, C)          bf16  1x1 shortcut weights (only if has_shortcut)
    aff_ref: (4, C)          f32   [scale1, offset1, scale2, offset2]
    o_ref  : (1, Ho, Wo, C)  bf16  output
    xp_ref : (H+2, W+2, C)   bf16  scratch: zero-padded x
    hp_ref : (Ho+2, Wo+2, C) bf16  scratch: zero-padded conv1 activation
    """
    if has_shortcut:
        wsc_ref, aff_ref, o_ref, xp_ref, hp_ref = rest
    else:
        wsc_ref = None
        aff_ref, o_ref, xp_ref, hp_ref = rest

    x = x_ref[0]                                   # (H, W, C) bf16

    def zero_halo(ref, h, w):
        # Only the 1-pixel border; the interior is rewritten every iteration.
        ref[0:1, :, :] = jnp.zeros((1, w + 2, C), ref.dtype)
        ref[h + 1:h + 2, :, :] = jnp.zeros((1, w + 2, C), ref.dtype)
        ref[:, 0:1, :] = jnp.zeros((h + 2, 1, C), ref.dtype)
        ref[:, w + 1:w + 2, :] = jnp.zeros((h + 2, 1, C), ref.dtype)

    def conv3x3(src_ref, w_ref, s):
        # 9 accumulating per-tap matmuls (K = C each); no im2col slab.
        acc = jnp.zeros((Ho * Wo, C), jnp.float32)
        for kh in range(3):
            for kw in range(3):
                if s == 1:
                    tap = src_ref[kh:kh + Ho, kw:kw + Wo, :]
                else:
                    win = src_ref[kh:kh + s * (Ho - 1) + 1,
                                  kw:kw + s * (Wo - 1) + 1, :]
                    tap = lax.slice(win, (0, 0, 0), win.shape, (s, s, 1))
                w_tap = w_ref[(kh * 3 + kw) * C:(kh * 3 + kw + 1) * C, :]
                acc = acc + jnp.dot(tap.reshape(Ho * Wo, C), w_tap,
                                    preferred_element_type=jnp.float32)
        return acc

    scale1 = aff_ref[0:1, :]
    off1 = aff_ref[1:2, :]
    scale2 = aff_ref[2:3, :]
    off2 = aff_ref[3:4, :]

    # ---- conv1 (+ folded BN1/bias) + ReLU ----------------------------------
    zero_halo(xp_ref, H, W)
    xp_ref[1:H + 1, 1:W + 1, :] = x
    acc1 = conv3x3(xp_ref, w1_ref, stride)
    h1 = jnp.maximum(acc1 * scale1 + off1, 0.0)    # (Ho*Wo, C) f32

    # ---- conv2 (+ folded BN2/bias), stride 1 -------------------------------
    zero_halo(hp_ref, Ho, Wo)
    hp_ref[1:Ho + 1, 1:Wo + 1, :] = h1.reshape(Ho, Wo, C).astype(hp_ref.dtype)
    acc2 = conv3x3(hp_ref, w2_ref, 1)
    h2 = acc2 * scale2 + off2

    # ---- shortcut ------------------------------------------------------------
    if stride == 1:
        xs = x.reshape(H * W, C)
    else:
        xs = lax.slice(x, (0, 0, 0),
                       (stride * (Ho - 1) + 1, stride * (Wo - 1) + 1, C),
                       (stride, stride, 1)).reshape(Ho * Wo, C)
    if has_shortcut:
        ident = jnp.dot(xs, wsc_ref[...], preferred_element_type=jnp.float32)
    else:
        ident = xs.astype(jnp.float32)             # identity: no MXU / no DMA

    # ---- residual add + final ReLU ------------------------------------------
    out = jnp.maximum(h2 + ident, 0.0)
    o_ref[0] = out.reshape(Ho, Wo, C).astype(o_ref.dtype)


def basic_block_forward(x_nchw, params, *, stride, batchnorm, eps=1e-5):
    """BasicBlock forward.  x_nchw: (N, Cin, H, W) f32 -> (N, Cout, Ho, Wo) f32."""
    N, Cin, H, W = x_nchw.shape
    w1, w2, w_sc = params["w1"], params["w2"], params["w_sc"]
    Cout = w1.shape[0]
    has_sc = w_sc is not None
    if not has_sc:
        assert Cin == Cout and stride == 1, (
            "identity shortcut requires in==out channels and stride==1")
    Cp = 128 * (-(-max(Cin, Cout) // 128))         # lane-dense channel pad
    Ho = (H - 1) // stride + 1
    Wo = (W - 1) // stride + 1

    # --- glue: NCHW -> NHWC, channel-pad, cast bf16 --------------------------
    x_nhwc = jnp.transpose(x_nchw, (0, 2, 3, 1))
    x_p = jnp.pad(x_nhwc, ((0, 0), (0, 0), (0, 0), (0, Cp - Cin)))
    x_p = x_p.astype(jnp.bfloat16)

    def pack3x3(w_oihw, cin):
        w = jnp.transpose(w_oihw, (2, 3, 1, 0))                      # HWIO
        w = jnp.pad(w, ((0, 0), (0, 0), (0, Cp - cin), (0, Cp - Cout)))
        return w.reshape(9 * Cp, Cp).astype(jnp.bfloat16)

    w1_m = pack3x3(w1, Cin)
    w2_m = pack3x3(w2, Cout)

    if has_sc:
        wsc = jnp.transpose(w_sc[:, :, 0, 0], (1, 0))                # (Cin,Cout)
        wsc = jnp.pad(wsc, ((0, Cp - Cin), (0, Cp - Cout)))
        wsc_m = wsc.astype(jnp.bfloat16)

    def fold(bias, mean, var):
        b = jnp.zeros((Cout,), jnp.float32) if bias is None else bias
        if batchnorm:
            s = 1.0 / jnp.sqrt(var + eps)
            o = (b - mean) * s
        else:
            s = jnp.ones((Cout,), jnp.float32)
            o = b
        return s, o

    s1, o1 = fold(params.get("b1"), params.get("m1"), params.get("v1"))
    s2, o2 = fold(params.get("b2"), params.get("m2"), params.get("v2"))
    if has_sc and params.get("b_sc") is not None:
        o2 = o2 + params["b_sc"]                   # shortcut bias folds here
    pad_c = Cp - Cout
    affine = jnp.stack([
        jnp.pad(s1, (0, pad_c), constant_values=1.0),
        jnp.pad(o1, (0, pad_c)),
        jnp.pad(s2, (0, pad_c), constant_values=1.0),
        jnp.pad(o2, (0, pad_c)),
    ]).astype(jnp.float32)                          # (4, Cp)

    # --- specs / cost / VMEM budget ------------------------------------------
    in_specs = [
        pl.BlockSpec((1, H, W, Cp), lambda n: (n, 0, 0, 0)),
        pl.BlockSpec((9 * Cp, Cp), lambda n: (0, 0)),
        pl.BlockSpec((9 * Cp, Cp), lambda n: (0, 0)),
    ]
    inputs = [x_p, w1_m, w2_m]
    if has_sc:
        in_specs.append(pl.BlockSpec((Cp, Cp), lambda n: (0, 0)))
        inputs.append(wsc_m)
    in_specs.append(pl.BlockSpec((4, Cp), lambda n: (0, 0)))
    inputs.append(affine)

    flops = 2 * N * Ho * Wo * (9 * Cp * Cp + 9 * Cp * Cp
                               + (Cp * Cp if has_sc else 0))
    bytes_accessed = (x_p.size * 2 + w1_m.size * 2 + w2_m.size * 2 +
                      (Cp * Cp * 2 if has_sc else 0) + affine.size * 4 +
                      N * Ho * Wo * Cp * 2)
    cost = pl.CostEstimate(flops=flops, transcendentals=0,
                           bytes_accessed=bytes_accessed)

    vmem_est = (
        (H + 2) * (W + 2) * Cp * 2                 # xp scratch (bf16)
        + (Ho + 2) * (Wo + 2) * Cp * 2             # hp scratch (bf16)
        + 2 * H * W * Cp * 2                       # x block, double-buffered
        + 2 * 2 * 9 * Cp * Cp * 2                  # w1 + w2, double-buffered
        + (2 * Cp * Cp * 2 if has_sc else 0)       # wsc, double-buffered
        + 2 * 4 * Cp * 4                           # affine, double-buffered
        + 2 * Ho * Wo * Cp * 2                     # out block, double-buffered
    )
    vmem_limit = int(min(48 * 1024 * 1024, max(32 * 1024 * 1024, 2 * vmem_est)))

    kernel = functools.partial(_basic_block_kernel, H=H, W=W, Ho=Ho, Wo=Wo,
                               C=Cp, stride=stride, has_shortcut=has_sc)

    out_nhwc = pl.pallas_call(
        kernel,
        out_shape=jax.ShapeDtypeStruct((N, Ho, Wo, Cp), jnp.bfloat16),
        grid_spec=pltpu.PrefetchScalarGridSpec(
            num_scalar_prefetch=0,
            grid=(N,),
            in_specs=in_specs,
            out_specs=pl.BlockSpec((1, Ho, Wo, Cp), lambda n: (n, 0, 0, 0)),
            scratch_shapes=[
                pltpu.VMEM((H + 2, W + 2, Cp), jnp.bfloat16),
                pltpu.VMEM((Ho + 2, Wo + 2, Cp), jnp.bfloat16),
            ]),
        compiler_params=pltpu.CompilerParams(
            dimension_semantics=("parallel",),
            vmem_limit_bytes=vmem_limit),
        cost_estimate=cost,
    )(*inputs)

    # --- glue: drop channel padding, NHWC -> NCHW, back to f32 ---------------
    return jnp.transpose(out_nhwc[:, :, :, :Cout],
                         (0, 3, 1, 2)).astype(jnp.float32)


def _reference_forward(x_nchw, params, *, stride, batchnorm, eps=1e-5):
    """Pure-JAX f32 reference mirroring the PyTorch BasicBlock forward."""
    def conv(x, w, b, s, pad):
        y = lax.conv_general_dilated(
            x, w, window_strides=(s, s), padding=((pad, pad), (pad, pad)),
            dimension_numbers=("NCHW", "OIHW", "NCHW"))
        if b is not None:
            y = y + b[None, :, None, None]
        return y

    def bn(y, mean, var):
        return (y - mean[None, :, None, None]) / jnp.sqrt(
            var[None, :, None, None] + eps)

    if params["w_sc"] is not None:
        identity = conv(x_nchw, params["w_sc"], params.get("b_sc"), stride, 0)
    else:
        identity = x_nchw
    out = conv(x_nchw, params["w1"], params.get("b1"), stride, 1)
    if batchnorm:
        out = bn(out, params["m1"], params["v1"])
    out = jnp.maximum(out, 0.0)
    out = conv(out, params["w2"], params.get("b2"), 1, 1)
    if batchnorm:
        out = bn(out, params["m2"], params["v2"])
    out = out + identity
    return jnp.maximum(out, 0.0)


def _make_params(key, Cin, Cout, with_shortcut):
    ks = jax.random.split(key, 8)
    return dict(
        w1=jax.random.normal(ks[0], (Cout, Cin, 3, 3), jnp.float32) * 0.1,
        w2=jax.random.normal(ks[1], (Cout, Cout, 3, 3), jnp.float32) * 0.1,
        w_sc=(jax.random.normal(ks[2], (Cout, Cin, 1, 1), jnp.float32) * 0.1
              if with_shortcut else None),
        b1=None, b2=None, b_sc=None,                     # bias=False (default)
        m1=jax.random.normal(ks[3], (Cout,), jnp.float32) * 0.1,
        v1=jax.random.uniform(ks[4], (Cout,), minval=0.5, maxval=1.5),
        m2=jax.random.normal(ks[5], (Cout,), jnp.float32) * 0.1,
        v2=jax.random.uniform(ks[6], (Cout,), minval=0.5, maxval=1.5),
    )


if __name__ == "__main__":
    key = jax.random.PRNGKey(0)
    k_x, k_p1, k_p2 = jax.random.split(key, 3)

    # Case 1: BasicBlock(4 -> 8, stride=1): exercises the 1x1 shortcut conv.
    N, Cin, H, W = 2, 4, 16, 16
    Cout, stride = 8, 1
    x = jax.random.normal(k_x, (N, Cin, H, W), dtype=jnp.float32)
    params = _make_params(k_p1, Cin, Cout, with_shortcut=True)
    for batchnorm in (False, True):
        out = jax.block_until_ready(
            basic_block_forward(x, params, stride=stride, batchnorm=batchnorm))
        ref = jax.block_until_ready(
            _reference_forward(x, params, stride=stride, batchnorm=batchnorm))
        assert out.shape == (N, Cout, H, W), out.shape
        # bf16 operands/output with f32 accumulation vs f32 reference.
        np.testing.assert_allclose(np.asarray(out), np.asarray(ref),
                                   rtol=5e-2, atol=5e-2)

    # Case 2: BasicBlock(8 -> 8, stride=1): identity shortcut (no wsc input).
    params_id = _make_params(k_p2, Cout, Cout, with_shortcut=False)
    x2 = jax.random.normal(k_x, (N, Cout, H, W), dtype=jnp.float32)
    for batchnorm in (False, True):
        out = jax.block_until_ready(
            basic_block_forward(x2, params_id, stride=1, batchnorm=batchnorm))
        ref = jax.block_until_ready(
            _reference_forward(x2, params_id, stride=1, batchnorm=batchnorm))
        assert out.shape == (N, Cout, H, W), out.shape
        np.testing.assert_allclose(np.asarray(out), np.asarray(ref),
                                   rtol=5e-2, atol=5e-2)

    print("KERNEL_OK")
</pallas_src>

<mosaic_0001>
module attributes {stable_mosaic.version = 11 : i64} {
  func.func @_basic_block_kernel(%arg0: i32, %arg1: memref<1x16x16x128xbf16, #tpu.memory_space<vmem>>, %arg2: memref<1152x128xbf16, #tpu.memory_space<vmem>>, %arg3: memref<1152x128xbf16, #tpu.memory_space<vmem>>, %arg4: memref<128x128xbf16, #tpu.memory_space<vmem>>, %arg5: memref<4x128xf32, #tpu.memory_space<vmem>>, %arg6: memref<1x16x16x128xbf16, #tpu.memory_space<vmem>>, %arg7: memref<18x18x128xbf16, #tpu.memory_space<vmem>>, %arg8: memref<18x18x128xbf16, #tpu.memory_space<vmem>>) attributes {dimension_semantics = [#tpu.dimension_semantics<parallel>], iteration_bounds = array<i64: 2>, scalar_prefetch = 0 : i64, scratch_operands = 2 : i64, tpu.core_type = #tpu.core_type<tc>, window_params = [{transform_indices = @transform_0, window_bounds = array<i64: 1, 16, 16, 128>}, {pipeline_mode = #tpu.pipeline_mode<synchronous>, transform_indices = @transform_1, window_bounds = array<i64: 1152, 128>}, {pipeline_mode = #tpu.pipeline_mode<synchronous>, transform_indices = @transform_2, window_bounds = array<i64: 1152, 128>}, {pipeline_mode = #tpu.pipeline_mode<synchronous>, transform_indices = @transform_3, window_bounds = array<i64: 128, 128>}, {pipeline_mode = #tpu.pipeline_mode<synchronous>, transform_indices = @transform_4, window_bounds = array<i64: 4, 128>}, {transform_indices = @transform_5, window_bounds = array<i64: 1, 16, 16, 128>}]} {
    %c0 = arith.constant 0 : index
    %c0_0 = arith.constant 0 : index
    %c0_1 = arith.constant 0 : index
    %c0_2 = arith.constant 0 : index
    %0 = vector.load %arg1[%c0, %c0_0, %c0_1, %c0_2] : memref<1x16x16x128xbf16, #tpu.memory_space<vmem>>, vector<1x16x16x128xbf16>
    %1 = vector.shape_cast %0 : vector<1x16x16x128xbf16> to vector<16x16x128xbf16>
    %c0_3 = arith.constant 0 : index
    %c0_4 = arith.constant 0 : index
    %2 = vector.load %arg5[%c0_3, %c0_4] : memref<4x128xf32, #tpu.memory_space<vmem>>, vector<1x128xf32>
    %c1 = arith.constant 1 : index
    %c0_5 = arith.constant 0 : index
    %3 = vector.load %arg5[%c1, %c0_5] : memref<4x128xf32, #tpu.memory_space<vmem>>, vector<1x128xf32>
    %c2 = arith.constant 2 : index
    %c0_6 = arith.constant 0 : index
    %4 = vector.load %arg5[%c2, %c0_6] : memref<4x128xf32, #tpu.memory_space<vmem>>, vector<1x128xf32>
    %c3 = arith.constant 3 : index
    %c0_7 = arith.constant 0 : index
    %5 = vector.load %arg5[%c3, %c0_7] : memref<4x128xf32, #tpu.memory_space<vmem>>, vector<1x128xf32>
    %cst = arith.constant 0.000000e+00 : bf16
    %6 = vector.broadcast %cst : bf16 to vector<1x18x128xbf16>
    %c0_8 = arith.constant 0 : index
    %c0_9 = arith.constant 0 : index
    %c0_10 = arith.constant 0 : index
    %7 = vector.load %arg7[%c0_8, %c0_9, %c0_10] : memref<18x18x128xbf16, #tpu.memory_space<vmem>>, vector<1x18x128xbf16>
    tpu.vector_store %arg7[%c0_8, %c0_9, %c0_10], %6 {strides = array<i32>} : memref<18x18x128xbf16, #tpu.memory_space<vmem>>, vector<1x18x128xbf16>,
    %cst_11 = arith.constant 0.000000e+00 : bf16
    %8 = vector.broadcast %cst_11 : bf16 to vector<1x18x128xbf16>
    %c17 = arith.constant 17 : index
    %c0_12 = arith.constant 0 : index
    %c0_13 = arith.constant 0 : index
    %9 = vector.load %arg7[%c17, %c0_12, %c0_13] : memref<18x18x128xbf16, #tpu.memory_space<vmem>>, vector<1x18x128xbf16>
    tpu.vector_store %arg7[%c17, %c0_12, %c0_13], %8 {strides = array<i32>} : memref<18x18x128xbf16, #tpu.memory_space<vmem>>, vector<1x18x128xbf16>,
    %cst_14 = arith.constant 0.000000e+00 : bf16
    %10 = vector.broadcast %cst_14 : bf16 to vector<18x1x128xbf16>
    %c0_15 = arith.constant 0 : index
    %c0_16 = arith.constant 0 : index
    %c0_17 = arith.constant 0 : index
    %11 = vector.load %arg7[%c0_15, %c0_16, %c0_17] : memref<18x18x128xbf16, #tpu.memory_space<vmem>>, vector<18x1x128xbf16>
    tpu.vector_store %arg7[%c0_15, %c0_16, %c0_17], %10 {strides = array<i32>} : memref<18x18x128xbf16, #tpu.memory_space<vmem>>, vector<18x1x128xbf16>,
    %cst_18 = arith.constant 0.000000e+00 : bf16
    %12 = vector.broadcast %cst_18 : bf16 to vector<18x1x128xbf16>
    %c0_19 = arith.constant 0 : index
    %c17_20 = arith.constant 17 : index
    %c0_21 = arith.constant 0 : index
    %13 = vector.load %arg7[%c0_19, %c17_20, %c0_21] : memref<18x18x128xbf16, #tpu.memory_space<vmem>>, vector<18x1x128xbf16>
    tpu.vector_store %arg7[%c0_19, %c17_20, %c0_21], %12 {strides = array<i32>} : memref<18x18x128xbf16, #tpu.memory_space<vmem>>, vector<18x1x128xbf16>,
    %c1_22 = arith.constant 1 : index
    %c1_23 = arith.constant 1 : index
    %c0_24 = arith.constant 0 : index
    %14 = vector.load %arg7[%c1_22, %c1_23, %c0_24] : memref<18x18x128xbf16, #tpu.memory_space<vmem>>, vector<16x16x128xbf16>
    tpu.vector_store %arg7[%c1_22, %c1_23, %c0_24], %1 {strides = array<i32>} : memref<18x18x128xbf16, #tpu.memory_space<vmem>>, vector<16x16x128xbf16>,
    %cst_25 = arith.constant 0.000000e+00 : f32
    %15 = vector.broadcast %cst_25 : f32 to vector<256x128xf32>
    %c0_26 = arith.constant 0 : index
    %c0_27 = arith.constant 0 : index
    %c0_28 = arith.constant 0 : index
    %16 = vector.load %arg7[%c0_26, %c0_27, %c0_28] : memref<18x18x128xbf16, #tpu.memory_space<vmem>>, vector<16x16x128xbf16>
    %c0_29 = arith.constant 0 : index
    %c0_30 = arith.constant 0 : index
    %17 = vector.load %arg2[%c0_29, %c0_30] : memref<1152x128xbf16, #tpu.memory_space<vmem>>, vector<128x128xbf16>
    %18 = vector.shape_cast %16 : vector<16x16x128xbf16> to vector<256x128xbf16>
    %cst_31 = arith.constant dense<0.000000e+00> : vector<256x128xf32>
    %19 = tpu.matmul %18, %17, %cst_31 {dimension_numbers = #tpu.dot_dimension_numbers<[1], [0], [0], [1], [0, 0, 1, 1], [], []>} : vector<256x128xbf16>, vector<128x128xbf16>, vector<256x128xf32> -> vector<256x128xf32>
    %20 = arith.addf %15, %19 : vector<256x128xf32>
    %c0_32 = arith.constant 0 : index
    %c1_33 = arith.constant 1 : index
    %c0_34 = arith.constant 0 : index
    %21 = vector.load %arg7[%c0_32, %c1_33, %c0_34] : memref<18x18x128xbf16, #tpu.memory_space<vmem>>, vector<16x16x128xbf16>
    %c128 = arith.constant 128 : index
    %c0_35 = arith.constant 0 : index
    %22 = vector.load %arg2[%c128, %c0_35] : memref<1152x128xbf16, #tpu.memory_space<vmem>>, vector<128x128xbf16>
    %23 = vector.shape_cast %21 : vector<16x16x128xbf16> to vector<256x128xbf16>
    %cst_36 = arith.constant dense<0.000000e+00> : vector<256x128xf32>
    %24 = tpu.matmul %23, %22, %cst_36 {dimension_numbers = #tpu.dot_dimension_numbers<[1], [0], [0], [1], [0, 0, 1, 1], [], []>} : vector<256x128xbf16>, vector<128x128xbf16>, vector<256x128xf32> -> vector<256x128xf32>
    %25 = arith.addf %20, %24 : vector<256x128xf32>
    %c0_37 = arith.constant 0 : index
    %c2_38 = arith.constant 2 : index
    %c0_39 = arith.constant 0 : index
    %26 = vector.load %arg7[%c0_37, %c2_38, %c0_39] : memref<18x18x128xbf16, #tpu.memory_space<vmem>>, vector<16x16x128xbf16>
    %c256 = arith.constant 256 : index
    %c0_40 = arith.constant 0 : index
    %27 = vector.load %arg2[%c256, %c0_40] : memref<1152x128xbf16, #tpu.memory_space<vmem>>, vector<128x128xbf16>
    %28 = vector.shape_cast %26 : vector<16x16x128xbf16> to vector<256x128xbf16>
    %cst_41 = arith.constant dense<0.000000e+00> : vector<256x128xf32>
    %29 = tpu.matmul %28, %27, %cst_41 {dimension_numbers = #tpu.dot_dimension_numbers<[1], [0], [0], [1], [0, 0, 1, 1], [], []>} : vector<256x128xbf16>, vector<128x128xbf16>, vector<256x128xf32> -> vector<256x128xf32>
    %30 = arith.addf %25, %29 : vector<256x128xf32>
    %c1_42 = arith.constant 1 : index
    %c0_43 = arith.constant 0 : index
    %c0_44 = arith.constant 0 : index
    %31 = vector.load %arg7[%c1_42, %c0_43, %c0_44] : memref<18x18x128xbf16, #tpu.memory_space<vmem>>, vector<16x16x128xbf16>
    %c384 = arith.constant 384 : index
    %c0_45 = arith.constant 0 : index
    %32 = vector.load %arg2[%c384, %c0_45] : memref<1152x128xbf16, #tpu.memory_space<vmem>>, vector<128x128xbf16>
    %33 = vector.shape_cast %31 : vector<16x16x128xbf16> to vector<256x128xbf16>
    %cst_46 = arith.constant dense<0.000000e+00> : vector<256x128xf32>
    %34 = tpu.matmul %33, %32, %cst_46 {dimension_numbers = #tpu.dot_dimension_numbers<[1], [0], [0], [1], [0, 0, 1, 1], [], []>} : vector<256x128xbf16>, vector<128x128xbf16>, vector<256x128xf32> -> vector<256x128xf32>
    %35 = arith.addf %30, %34 : vector<256x128xf32>
    %c1_47 = arith.constant 1 : index
    %c1_48 = arith.constant 1 : index
    %c0_49 = arith.constant 0 : index
    %36 = vector.load %arg7[%c1_47, %c1_48, %c0_49] : memref<18x18x128xbf16, #tpu.memory_space<vmem>>, vector<16x16x128xbf16>
    %c512 = arith.constant 512 : index
    %c0_50 = arith.constant 0 : index
    %37 = vector.load %arg2[%c512, %c0_50] : memref<1152x128xbf16, #tpu.memory_space<vmem>>, vector<128x128xbf16>
    %38 = vector.shape_cast %36 : vector<16x16x128xbf16> to vector<256x128xbf16>
    %cst_51 = arith.constant dense<0.000000e+00> : vector<256x128xf32>
    %39 = tpu.matmul %38, %37, %cst_51 {dimension_numbers = #tpu.dot_dimension_numbers<[1], [0], [0], [1], [0, 0, 1, 1], [], []>} : vector<256x128xbf16>, vector<128x128xbf16>, vector<256x128xf32> -> vector<256x128xf32>
    %40 = arith.addf %35, %39 : vector<256x128xf32>
    %c1_52 = arith.constant 1 : index
    %c2_53 = arith.constant 2 : index
    %c0_54 = arith.constant 0 : index
    %41 = vector.load %arg7[%c1_52, %c2_53, %c0_54] : memref<18x18x128xbf16, #tpu.memory_space<vmem>>, vector<16x16x128xbf16>
    %c640 = arith.constant 640 : index
    %c0_55 = arith.constant 0 : index
    %42 = vector.load %arg2[%c640, %c0_55] : memref<1152x128xbf16, #tpu.memory_space<vmem>>, vector<128x128xbf16>
    %43 = vector.shape_cast %41 : vector<16x16x128xbf16> to vector<256x128xbf16>
    %cst_56 = arith.constant dense<0.000000e+00> : vector<256x128xf32>
    %44 = tpu.matmul %43, %42, %cst_56 {dimension_numbers = #tpu.dot_dimension_numbers<[1], [0], [0], [1], [0, 0, 1, 1], [], []>} : vector<256x128xbf16>, vector<128x128xbf16>, vector<256x128xf32> -> vector<256x128xf32>
    %45 = arith.addf %40, %44 : vector<256x128xf32>
    %c2_57 = arith.constant 2 : index
    %c0_58 = arith.constant 0 : index
    %c0_59 = arith.constant 0 : index
    %46 = vector.load %arg7[%c2_57, %c0_58, %c0_59] : memref<18x18x128xbf16, #tpu.memory_space<vmem>>, vector<16x16x128xbf16>
    %c768 = arith.constant 768 : index
    %c0_60 = arith.constant 0 : index
    %47 = vector.load %arg2[%c768, %c0_60] : memref<1152x128xbf16, #tpu.memory_space<vmem>>, vector<128x128xbf16>
    %48 = vector.shape_cast %46 : vector<16x16x128xbf16> to vector<256x128xbf16>
    %cst_61 = arith.constant dense<0.000000e+00> : vector<256x128xf32>
    %49 = tpu.matmul %48, %47, %cst_61 {dimension_numbers = #tpu.dot_dimension_numbers<[1], [0], [0], [1], [0, 0, 1, 1], [], []>} : vector<256x128xbf16>, vector<128x128xbf16>, vector<256x128xf32> -> vector<256x128xf32>
    %50 = arith.addf %45, %49 : vector<256x128xf32>
    %c2_62 = arith.constant 2 : index
    %c1_63 = arith.constant 1 : index
    %c0_64 = arith.constant 0 : index
    %51 = vector.load %arg7[%c2_62, %c1_63, %c0_64] : memref<18x18x128xbf16, #tpu.memory_space<vmem>>, vector<16x16x128xbf16>
    %c896 = arith.constant 896 : index
    %c0_65 = arith.constant 0 : index
    %52 = vector.load %arg2[%c896, %c0_65] : memref<1152x128xbf16, #tpu.memory_space<vmem>>, vector<128x128xbf16>
    %53 = vector.shape_cast %51 : vector<16x16x128xbf16> to vector<256x128xbf16>
    %cst_66 = arith.constant dense<0.000000e+00> : vector<256x128xf32>
    %54 = tpu.matmul %53, %52, %cst_66 {dimension_numbers = #tpu.dot_dimension_numbers<[1], [0], [0], [1], [0, 0, 1, 1], [], []>} : vector<256x128xbf16>, vector<128x128xbf16>, vector<256x128xf32> -> vector<256x128xf32>
    %55 = arith.addf %50, %54 : vector<256x128xf32>
    %c2_67 = arith.constant 2 : index
    %c2_68 = arith.constant 2 : index
    %c0_69 = arith.constant 0 : index
    %56 = vector.load %arg7[%c2_67, %c2_68, %c0_69] : memref<18x18x128xbf16, #tpu.memory_space<vmem>>, vector<16x16x128xbf16>
    %c1024 = arith.constant 1024 : index
    %c0_70 = arith.constant 0 : index
    %57 = vector.load %arg2[%c1024, %c0_70] : memref<1152x128xbf16, #tpu.memory_space<vmem>>, vector<128x128xbf16>
    %58 = vector.shape_cast %56 : vector<16x16x128xbf16> to vector<256x128xbf16>
    %cst_71 = arith.constant dense<0.000000e+00> : vector<256x128xf32>
    %59 = tpu.matmul %58, %57, %cst_71 {dimension_numbers = #tpu.dot_dimension_numbers<[1], [0], [0], [1], [0, 0, 1, 1], [], []>} : vector<256x128xbf16>, vector<128x128xbf16>, vector<256x128xf32> -> vector<256x128xf32>
    %60 = arith.addf %55, %59 : vector<256x128xf32>
    %61 = vector.broadcast %2 : vector<1x128xf32> to vector<256x128xf32>
    %62 = arith.mulf %60, %61 : vector<256x128xf32>
    %63 = vector.broadcast %3 : vector<1x128xf32> to vector<256x128xf32>
    %64 = arith.addf %62, %63 : vector<256x128xf32>
    %cst_72 = arith.constant 0.000000e+00 : f32
    %65 = vector.broadcast %cst_72 : f32 to vector<256x128xf32>
    %66 = arith.maximumf %64, %65 : vector<256x128xf32>
    %cst_73 = arith.constant 0.000000e+00 : bf16
    %67 = vector.broadcast %cst_73 : bf16 to vector<1x18x128xbf16>
    %c0_74 = arith.constant 0 : index
    %c0_75 = arith.constant 0 : index
    %c0_76 = arith.constant 0 : index
    %68 = vector.load %arg8[%c0_74, %c0_75, %c0_76] : memref<18x18x128xbf16, #tpu.memory_space<vmem>>, vector<1x18x128xbf16>
    tpu.vector_store %arg8[%c0_74, %c0_75, %c0_76], %67 {strides = array<i32>} : memref<18x18x128xbf16, #tpu.memory_space<vmem>>, vector<1x18x128xbf16>,
    %cst_77 = arith.constant 0.000000e+00 : bf16
    %69 = vector.broadcast %cst_77 : bf16 to vector<1x18x128xbf16>
    %c17_78 = arith.constant 17 : index
    %c0_79 = arith.constant 0 : index
    %c0_80 = arith.constant 0 : index
    %70 = vector.load %arg8[%c17_78, %c0_79, %c0_80] : memref<18x18x128xbf16, #tpu.memory_space<vmem>>, vector<1x18x128xbf16>
    tpu.vector_store %arg8[%c17_78, %c0_79, %c0_80], %69 {strides = array<i32>} : memref<18x18x128xbf16, #tpu.memory_space<vmem>>, vector<1x18x128xbf16>,
    %cst_81 = arith.constant 0.000000e+00 : bf16
    %71 = vector.broadcast %cst_81 : bf16 to vector<18x1x128xbf16>
    %c0_82 = arith.constant 0 : index
    %c0_83 = arith.constant 0 : index
    %c0_84 = arith.constant 0 : index
    %72 = vector.load %arg8[%c0_82, %c0_83, %c0_84] : memref<18x18x128xbf16, #tpu.memory_space<vmem>>, vector<18x1x128xbf16>
    tpu.vector_store %arg8[%c0_82, %c0_83, %c0_84], %71 {strides = array<i32>} : memref<18x18x128xbf16, #tpu.memory_space<vmem>>, vector<18x1x128xbf16>,
    %cst_85 = arith.constant 0.000000e+00 : bf16
    %73 = vector.broadcast %cst_85 : bf16 to vector<18x1x128xbf16>
    %c0_86 = arith.constant 0 : index
    %c17_87 = arith.constant 17 : index
    %c0_88 = arith.constant 0 : index
    %74 = vector.load %arg8[%c0_86, %c17_87, %c0_88] : memref<18x18x128xbf16, #tpu.memory_space<vmem>>, vector<18x1x128xbf16>
    tpu.vector_store %arg8[%c0_86, %c17_87, %c0_88], %73 {strides = array<i32>} : memref<18x18x128xbf16, #tpu.memory_space<vmem>>, vector<18x1x128xbf16>,
    %75 = vector.shape_cast %66 : vector<256x128xf32> to vector<16x16x128xf32>
    %76 = arith.truncf %75 : vector<16x16x128xf32> to vector<16x16x128xbf16>
    %c1_89 = arith.constant 1 : index
    %c1_90 = arith.constant 1 : index
    %c0_91 = arith.constant 0 : index
    %77 = vector.load %arg8[%c1_89, %c1_90, %c0_91] : memref<18x18x128xbf16, #tpu.memory_space<vmem>>, vector<16x16x128xbf16>
    tpu.vector_store %arg8[%c1_89, %c1_90, %c0_91], %76 {strides = array<i32>} : memref<18x18x128xbf16, #tpu.memory_space<vmem>>, vector<16x16x128xbf16>,
    %cst_92 = arith.constant 0.000000e+00 : f32
    %78 = vector.broadcast %cst_92 : f32 to vector<256x128xf32>
    %c0_93 = arith.constant 0 : index
    %c0_94 = arith.constant 0 : index
    %c0_95 = arith.constant 0 : index
    %79 = vector.load %arg8[%c0_93, %c0_94, %c0_95] : memref<18x18x128xbf16, #tpu.memory_space<vmem>>, vector<16x16x128xbf16>
    %c0_96 = arith.constant 0 : index
    %c0_97 = arith.constant 0 : index
    %80 = vector.load %arg3[%c0_96, %c0_97] : memref<1152x128xbf16, #tpu.memory_space<vmem>>, vector<128x128xbf16>
    %81 = vector.shape_cast %79 : vector<16x16x128xbf16> to vector<256x128xbf16>
    %cst_98 = arith.constant dense<0.000000e+00> : vector<256x128xf32>
    %82 = tpu.matmul %81, %80, %cst_98 {dimension_numbers = #tpu.dot_dimension_numbers<[1], [0], [0], [1], [0, 0, 1, 1], [], []>} : vector<256x128xbf16>, vector<128x128xbf16>, vector<256x128xf32> -> vector<256x128xf32>
    %83 = arith.addf %78, %82 : vector<256x128xf32>
    %c0_99 = arith.constant 0 : index
    %c1_100 = arith.constant 1 : index
    %c0_101 = arith.constant 0 : index
    %84 = vector.load %arg8[%c0_99, %c1_100, %c0_101] : memref<18x18x128xbf16, #tpu.memory_space<vmem>>, vector<16x16x128xbf16>
    %c128_102 = arith.constant 128 : index
    %c0_103 = arith.constant 0 : index
    %85 = vector.load %arg3[%c128_102, %c0_103] : memref<1152x128xbf16, #tpu.memory_space<vmem>>, vector<128x128xbf16>
    %86 = vector.shape_cast %84 : vector<16x16x128xbf16> to vector<256x128xbf16>
    %cst_104 = arith.constant dense<0.000000e+00> : vector<256x128xf32>
    %87 = tpu.matmul %86, %85, %cst_104 {dimension_numbers = #tpu.dot_dimension_numbers<[1], [0], [0], [1], [0, 0, 1, 1], [], []>} : vector<256x128xbf16>, vector<128x128xbf16>, vector<256x128xf32> -> vector<256x128xf32>
    %88 = arith.addf %83, %87 : vector<256x128xf32>
    %c0_105 = arith.constant 0 : index
    %c2_106 = arith.constant 2 : index
    %c0_107 = arith.constant 0 : index
    %89 = vector.load %arg8[%c0_105, %c2_106, %c0_107] : memref<18x18x128xbf16, #tpu.memory_space<vmem>>, vector<16x16x128xbf16>
    %c256_108 = arith.constant 256 : index
    %c0_109 = arith.constant 0 : index
    %90 = vector.load %arg3[%c256_108, %c0_109] : memref<1152x128xbf16, #tpu.memory_space<vmem>>, vector<128x128xbf16>
    %91 = vector.shape_cast %89 : vector<16x16x128xbf16> to vector<256x128xbf16>
    %cst_110 = arith.constant dense<0.000000e+00> : vector<256x128xf32>
    %92 = tpu.matmul %91, %90, %cst_110 {dimension_numbers = #tpu.dot_dimension_numbers<[1], [0], [0], [1], [0, 0, 1, 1], [], []>} : vector<256x128xbf16>, vector<128x128xbf16>, vector<256x128xf32> -> vector<256x128xf32>
    %93 = arith.addf %88, %92 : vector<256x128xf32>
    %c1_111 = arith.constant 1 : index
    %c0_112 = arith.constant 0 : index
    %c0_113 = arith.constant 0 : index
    %94 = vector.load %arg8[%c1_111, %c0_112, %c0_113] : memref<18x18x128xbf16, #tpu.memory_space<vmem>>, vector<16x16x128xbf16>
    %c384_114 = arith.constant 384 : index
    %c0_115 = arith.constant 0 : index
    %95 = vector.load %arg3[%c384_114, %c0_115] : memref<1152x128xbf16, #tpu.memory_space<vmem>>, vector<128x128xbf16>
    %96 = vector.shape_cast %94 : vector<16x16x128xbf16> to vector<256x128xbf16>
    %cst_116 = arith.constant dense<0.000000e+00> : vector<256x128xf32>
    %97 = tpu.matmul %96, %95, %cst_116 {dimension_numbers = #tpu.dot_dimension_numbers<[1], [0], [0], [1], [0, 0, 1, 1], [], []>} : vector<256x128xbf16>, vector<128x128xbf16>, vector<256x128xf32> -> vector<256x128xf32>
    %98 = arith.addf %93, %97 : vector<256x128xf32>
    %c1_117 = arith.constant 1 : index
    %c1_118 = arith.constant 1 : index
    %c0_119 = arith.constant 0 : index
    %99 = vector.load %arg8[%c1_117, %c1_118, %c0_119] : memref<18x18x128xbf16, #tpu.memory_space<vmem>>, vector<16x16x128xbf16>
    %c512_120 = arith.constant 512 : index
    %c0_121 = arith.constant 0 : index
    %100 = vector.load %arg3[%c512_120, %c0_121] : memref<1152x128xbf16, #tpu.memory_space<vmem>>, vector<128x128xbf16>
    %101 = vector.shape_cast %99 : vector<16x16x128xbf16> to vector<256x128xbf16>
    %cst_122 = arith.constant dense<0.000000e+00> : vector<256x128xf32>
    %102 = tpu.matmul %101, %100, %cst_122 {dimension_numbers = #tpu.dot_dimension_numbers<[1], [0], [0], [1], [0, 0, 1, 1], [], []>} : vector<256x128xbf16>, vector<128x128xbf16>, vector<256x128xf32> -> vector<256x128xf32>
    %103 = arith.addf %98, %102 : vector<256x128xf32>
    %c1_123 = arith.constant 1 : index
    %c2_124 = arith.constant 2 : index
    %c0_125 = arith.constant 0 : index
    %104 = vector.load %arg8[%c1_123, %c2_124, %c0_125] : memref<18x18x128xbf16, #tpu.memory_space<vmem>>, vector<16x16x128xbf16>
    %c640_126 = arith.constant 640 : index
    %c0_127 = arith.constant 0 : index
    %105 = vector.load %arg3[%c640_126, %c0_127] : memref<1152x128xbf16, #tpu.memory_space<vmem>>, vector<128x128xbf16>
    %106 = vector.shape_cast %104 : vector<16x16x128xbf16> to vector<256x128xbf16>
    %cst_128 = arith.constant dense<0.000000e+00> : vector<256x128xf32>
    %107 = tpu.matmul %106, %105, %cst_128 {dimension_numbers = #tpu.dot_dimension_numbers<[1], [0], [0], [1], [0, 0, 1, 1], [], []>} : vector<256x128xbf16>, vector<128x128xbf16>, vector<256x128xf32> -> vector<256x128xf32>
    %108 = arith.addf %103, %107 : vector<256x128xf32>
    %c2_129 = arith.constant 2 : index
    %c0_130 = arith.constant 0 : index
    %c0_131 = arith.constant 0 : index
    %109 = vector.load %arg8[%c2_129, %c0_130, %c0_131] : memref<18x18x128xbf16, #tpu.memory_space<vmem>>, vector<16x16x128xbf16>
    %c768_132 = arith.constant 768 : index
    %c0_133 = arith.constant 0 : index
    %110 = vector.load %arg3[%c768_132, %c0_133] : memref<1152x128xbf16, #tpu.memory_space<vmem>>, vector<128x128xbf16>
    %111 = vector.shape_cast %109 : vector<16x16x128xbf16> to vector<256x128xbf16>
    %cst_134 = arith.constant dense<0.000000e+00> : vector<256x128xf32>
    %112 = tpu.matmul %111, %110, %cst_134 {dimension_numbers = #tpu.dot_dimension_numbers<[1], [0], [0], [1], [0, 0, 1, 1], [], []>} : vector<256x128xbf16>, vector<128x128xbf16>, vector<256x128xf32> -> vector<256x128xf32>
    %113 = arith.addf %108, %112 : vector<256x128xf32>
    %c2_135 = arith.constant 2 : index
    %c1_136 = arith.constant 1 : index
    %c0_137 = arith.constant 0 : index
    %114 = vector.load %arg8[%c2_135, %c1_136, %c0_137] : memref<18x18x128xbf16, #tpu.memory_space<vmem>>, vector<16x16x128xbf16>
    %c896_138 = arith.constant 896 : index
    %c0_139 = arith.constant 0 : index
    %115 = vector.load %arg3[%c896_138, %c0_139] : memref<1152x128xbf16, #tpu.memory_space<vmem>>, vector<128x128xbf16>
    %116 = vector.shape_cast %114 : vector<16x16x128xbf16> to vector<256x128xbf16>
    %cst_140 = arith.constant dense<0.000000e+00> : vector<256x128xf32>
    %117 = tpu.matmul %116, %115, %cst_140 {dimension_numbers = #tpu.dot_dimension_numbers<[1], [0], [0], [1], [0, 0, 1, 1], [], []>} : vector<256x128xbf16>, vector<128x128xbf16>, vector<256x128xf32> -> vector<256x128xf32>
    %118 = arith.addf %113, %117 : vector<256x128xf32>
    %c2_141 = arith.constant 2 : index
    %c2_142 = arith.constant 2 : index
    %c0_143 = arith.constant 0 : index
    %119 = vector.load %arg8[%c2_141, %c2_142, %c0_143] : memref<18x18x128xbf16, #tpu.memory_space<vmem>>, vector<16x16x128xbf16>
    %c1024_144 = arith.constant 1024 : index
    %c0_145 = arith.constant 0 : index
    %120 = vector.load %arg3[%c1024_144, %c0_145] : memref<1152x128xbf16, #tpu.memory_space<vmem>>, vector<128x128xbf16>
    %121 = vector.shape_cast %119 : vector<16x16x128xbf16> to vector<256x128xbf16>
    %cst_146 = arith.constant dense<0.000000e+00> : vector<256x128xf32>
    %122 = tpu.matmul %121, %120, %cst_146 {dimension_numbers = #tpu.dot_dimension_numbers<[1], [0], [0], [1], [0, 0, 1, 1], [], []>} : vector<256x128xbf16>, vector<128x128xbf16>, vector<256x128xf32> -> vector<256x128xf32>
    %123 = arith.addf %118, %122 : vector<256x128xf32>
    %124 = vector.broadcast %4 : vector<1x128xf32> to vector<256x128xf32>
    %125 = arith.mulf %123, %124 : vector<256x128xf32>
    %126 = vector.broadcast %5 : vector<1x128xf32> to vector<256x128xf32>
    %127 = arith.addf %125, %126 : vector<256x128xf32>
    %128 = vector.shape_cast %1 : vector<16x16x128xbf16> to vector<256x128xbf16>
    %c0_147 = arith.constant 0 : index
    %c0_148 = arith.constant 0 : index
    %129 = vector.load %arg4[%c0_147, %c0_148] : memref<128x128xbf16, #tpu.memory_space<vmem>>, vector<128x128xbf16>
    %cst_149 = arith.constant dense<0.000000e+00> : vector<256x128xf32>
    %130 = tpu.matmul %128, %129, %cst_149 {dimension_numbers = #tpu.dot_dimension_numbers<[1], [0], [0], [1], [0, 0, 1, 1], [], []>} : vector<256x128xbf16>, vector<128x128xbf16>, vector<256x128xf32> -> vector<256x128xf32>
    %131 = arith.addf %127, %130 : vector<256x128xf32>
    %cst_150 = arith.constant 0.000000e+00 : f32
    %132 = vector.broadcast %cst_150 : f32 to vector<256x128xf32>
    %133 = arith.maximumf %131, %132 : vector<256x128xf32>
    %134 = vector.shape_cast %133 : vector<256x128xf32> to vector<16x16x128xf32>
    %135 = arith.truncf %134 : vector<16x16x128xf32> to vector<16x16x128xbf16>
    %c0_151 = arith.constant 0 : index
    %c0_152 = arith.constant 0 : index
    %c0_153 = arith.constant 0 : index
    %c0_154 = arith.constant 0 : index
    %136 = vector.load %arg6[%c0_151, %c0_152, %c0_153, %c0_154] : memref<1x16x16x128xbf16, #tpu.memory_space<vmem>>, vector<1x16x16x128xbf16>
    %137 = vector.shape_cast %136 : vector<1x16x16x128xbf16> to vector<16x16x128xbf16>
    %138 = vector.shape_cast %135 : vector<16x16x128xbf16> to vector<1x16x16x128xbf16>
    tpu.vector_store %arg6[%c0_151, %c0_152, %c0_153, %c0_154], %138 {strides = array<i32>} : memref<1x16x16x128xbf16, #tpu.memory_space<vmem>>, vector<1x16x16x128xbf16>,
    return
  }
  func.func @transform_0(%arg0: i32) -> (i32, i32, i32, i32) {
    %c0_i32 = arith.constant 0 : i32
    %c0_i32_0 = arith.constant 0 : i32
    %c0_i32_1 = arith.constant 0 : i32
    %c0_i32_2 = arith.constant 0 : i32
    return %arg0, %c0_i32, %c0_i32_0, %c0_i32_1 : i32, i32, i32, i32
  }
  func.func @transform_1(%arg0: i32) -> (i32, i32) {
    %c0_i32 = arith.constant 0 : i32
    %c0_i32_0 = arith.constant 0 : i32
    %c0_i32_1 = arith.constant 0 : i32
    return %c0_i32, %c0_i32_0 : i32, i32
  }
  func.func @transform_2(%arg0: i32) -> (i32, i32) {
    %c0_i32 = arith.constant 0 : i32
    %c0_i32_0 = arith.constant 0 : i32
    %c0_i32_1 = arith.constant 0 : i32
    return %c0_i32, %c0_i32_0 : i32, i32
  }
  func.func @transform_3(%arg0: i32) -> (i32, i32) {
    %c0_i32 = arith.constant 0 : i32
    %c0_i32_0 = arith.constant 0 : i32
    %c0_i32_1 = arith.constant 0 : i32
    return %c0_i32, %c0_i32_0 : i32, i32
  }
  func.func @transform_4(%arg0: i32) -> (i32, i32) {
    %c0_i32 = arith.constant 0 : i32
    %c0_i32_0 = arith.constant 0 : i32
    %c0_i32_1 = arith.constant 0 : i32
    return %c0_i32, %c0_i32_0 : i32, i32
  }
  func.func @transform_5(%arg0: i32) -> (i32, i32, i32, i32) {
    %c0_i32 = arith.constant 0 : i32
    %c0_i32_0 = arith.constant 0 : i32
    %c0_i32_1 = arith.constant 0 : i32
    %c0_i32_2 = arith.constant 0 : i32
    return %arg0, %c0_i32, %c0_i32_0, %c0_i32_1 : i32, i32, i32, i32
  }
}

</mosaic_0001>

<llo_original>
// kernel: tpu_custom_call.1
$region0: #{tpu_custom_call.1}
  #allocation0 [shape = 'u32[]', space=smem, size = 0x4, offset = 0x4, fixed_abs, tag = 'smem constant byte address 0x4 - core index']
  #allocation1 [shape = 'u32[144,128]{1,0:T(1,128)}', space=vmem, size = 0x12000, scoped, tag = 'internal scratch']
  #allocation2 [shape = 'bf16[18,18,128]{2,1,0:T(8,128)(2,1)}', space=vmem, size = 0x1b000, scoped, tag = 'scratch operand']
  #allocation3 [shape = 'bf16[18,18,128]{2,1,0:T(8,128)(2,1)}', space=vmem, size = 0x1b000, scoped, tag = 'scratch operand']
  %s0 = inlined_call_operand.hbm [shape: bf16[2,16,16,128], index: 0, kind: input, shape index: {}]
  %s1 = inlined_call_operand.hbm [shape: bf16[1152,128], index: 1, kind: input, shape index: {}]
  %s2 = inlined_call_operand.hbm [shape: bf16[1152,128], index: 2, kind: input, shape index: {}]
  %s3 = inlined_call_operand.hbm [shape: bf16[128,128], index: 3, kind: input, shape index: {}]
  %s4 = inlined_call_operand.vmem [shape: f32[4,128], index: 4, kind: input, shape index: {}]
  %s5 = inlined_call_operand.hbm [shape: bf16[2,16,16,128], index: 5, kind: output, shape index: {}]
  %s6 = sld [smem:[#allocation0]]
  $region69: #{tpu_custom_call.1} parent=0
    _
  %s8 = ssub.s32 1, %s6
  %s9 = scalar_select 0, %s8, %s6
  $region1: #{tpu_custom_call.1} parent=0
    #allocation4 [shape = 'u8[131072]{0}', space=vmem, size = 0x20000, scoped, tag = 'input window, operand 0']
    #allocation5 [shape = 's32[2]{0}', space=sflag, size = 0x8, scoped, tag = 'scoped memory for tpu_custom_call.1']
    #allocation6 [shape = 's32[2]{0}', space=sflag, size = 0x8, scoped, tag = 'scoped memory for tpu_custom_call.1']
    #allocation7 [shape = 'u8[294912]{0}', space=vmem, size = 0x48000, scoped, tag = 'input window, operand 1, single buffered']
    #allocation8 [shape = 's32[1]{0}', space=sflag, size = 0x4, scoped, tag = 'scoped memory for tpu_custom_call.1']
    #allocation9 [shape = 'u8[294912]{0}', space=vmem, size = 0x48000, scoped, tag = 'input window, operand 2, single buffered']
    #allocation10 [shape = 'u8[32768]{0}', space=vmem, size = 0x8000, scoped, tag = 'input window, operand 3, single buffered']
    #allocation11 [shape = 's32[1]{0}', space=sflag, size = 0x4, scoped, tag = 'scoped memory for tpu_custom_call.1']
    #allocation12 [shape = 'u8[131072]{0}', space=vmem, size = 0x20000, scoped, tag = 'output window, operand 0']
    %10 = vsyncpa [#allocation5], 0
    %s11 = scalar_lea.sflag [#allocation5], 1
    %12 = vsyncpa %s11, 0
    %13 = vsyncpa [#allocation8], 0
    %14 = vsyncpa [#allocation11], 0
    %15 = vsyncpa [#allocation6], 0
    %s16 = scalar_lea.sflag [#allocation6], 1
    %17 = vsyncpa %s16, 0
    loop: start=0, step=1, limit=4
    $region2: #{tpu_custom_call.1} parent=1 // loop_pre_header
      _
    $region3: #{tpu_custom_call.1} parent=1 // loop_header
      %s19 = sphi 0, %s23
      %p20 = scmp.ge.s32.totalorder %s19, 4
      %s29 = sphi 0, %s31
      %s32 = sphi 0, %s29
      %s33 = sphi 0, %s32
      %s49 = sphi 0, %s33
      %s53 = sphi 0, %s53
      %s55 = sphi 0, %s53
      %s56 = sphi 0, %s55
      %s70 = sphi 0, %s56
      %s74 = sphi 0, %s74
      %s76 = sphi 0, %s74
      %s77 = sphi 0, %s76
      %s91 = sphi 0, %s77
      %s95 = sphi 0, %s95
      %s97 = sphi 0, %s95
      %s98 = sphi 0, %s97
      %s112 = sphi 0, %s98
      %s116 = sphi 0, %s116
      %s118 = sphi 0, %s116
      %s119 = sphi 0, %s118
      %s133 = sphi 0, %s119
      %s139 = sphi 0, %s141
      %s142 = sphi 0, %s139
      %s143 = sphi 0, %s142
      %s159 = sphi 0, %s143
    $region4: #{tpu_custom_call.1} parent=1 // loop_header_branch
      %22 = sbr.rel (%p20) target = $region8
    $region5: #{tpu_custom_call.1} parent=1 // loop_body
      %s24 = ssub.s32 %s19, 1
      %s25 = ssub.s32 %s19, 2
      %s26 = sadd.s32 %s19, 1
      %s27 = ssub.s32 %s19, %s26
      %p28 = scmp.eq.s32.totalorder %s27, 0
      %s30 = sadd.s32 %s29, 1
      %s31 = scalar_select %p28, %s29, %s30
      %p34 = pneg %p28
      %p35 = scmp.eq.s32.totalorder %s19, 1
      %p36 = por %p34, %p35
      %p37 = scmp.ne.s32.totalorder %s29, %s32
      %p38 = scmp.eq.s32.totalorder %s19, 0
      %p39 = por %p37, %p38
      %p40 = scmp.ne.s32.totalorder %s29, %s32
      %p41 = scmp.eq.s32.totalorder %s24, 1
      %p42 = por %p40, %p41
      %p43 = scmp.ne.s32.totalorder %s32, %s33
      %p44 = scmp.eq.s32.totalorder %s24, 0
      %p45 = por %p43, %p44
      %p46 = scmp.ne.s32.totalorder %s32, %s33
      %p47 = scmp.eq.s32.totalorder %s25, 1
      %p48 = por %p46, %p47
      %p50 = scmp.ne.s32.totalorder %s33, %s49
      %p51 = scmp.eq.s32.totalorder %s25, 0
      %p52 = por %p50, %p51
      %s54 = sadd.s32 %s53, 1
      %p57 = scmp.eq.s32.totalorder %s19, 1
      %p58 = scmp.ne.s32.totalorder %s53, %s55
      %p59 = scmp.eq.s32.totalorder %s19, 0
      %p60 = por %p58, %p59
      %p61 = scmp.ne.s32.totalorder %s53, %s55
      %p62 = scmp.eq.s32.totalorder %s24, 1
      %p63 = por %p61, %p62
      %p64 = scmp.ne.s32.totalorder %s55, %s56
      %p65 = scmp.eq.s32.totalorder %s24, 0
      %p66 = por %p64, %p65
      %p67 = scmp.ne.s32.totalorder %s55, %s56
      %p68 = scmp.eq.s32.totalorder %s25, 1
      %p69 = por %p67, %p68
      %p71 = scmp.ne.s32.totalorder %s56, %s70
      %p72 = scmp.eq.s32.totalorder %s25, 0
      %p73 = por %p71, %p72
      %s75 = sadd.s32 %s74, 1
      %p78 = scmp.eq.s32.totalorder %s19, 1
      %p79 = scmp.ne.s32.totalorder %s74, %s76
      %p80 = scmp.eq.s32.totalorder %s19, 0
      %p81 = por %p79, %p80
      %p82 = scmp.ne.s32.totalorder %s74, %s76
      %p83 = scmp.eq.s32.totalorder %s24, 1
      %p84 = por %p82, %p83
      %p85 = scmp.ne.s32.totalorder %s76, %s77
      %p86 = scmp.eq.s32.totalorder %s24, 0
      %p87 = por %p85, %p86
      %p88 = scmp.ne.s32.totalorder %s76, %s77
      %p89 = scmp.eq.s32.totalorder %s25, 1
      %p90 = por %p88, %p89
      %p92 = scmp.ne.s32.totalorder %s77, %s91
      %p93 = scmp.eq.s32.totalorder %s25, 0
      %p94 = por %p92, %p93
      %s96 = sadd.s32 %s95, 1
      %p99 = scmp.eq.s32.totalorder %s19, 1
      %p100 = scmp.ne.s32.totalorder %s95, %s97
      %p101 = scmp.eq.s32.totalorder %s19, 0
      %p102 = por %p100, %p101
      %p103 = scmp.ne.s32.totalorder %s95, %s97
      %p104 = scmp.eq.s32.totalorder %s24, 1
      %p105 = por %p103, %p104
      %p106 = scmp.ne.s32.totalorder %s97, %s98
      %p107 = scmp.eq.s32.totalorder %s24, 0
      %p108 = por %p106, %p107
      %p109 = scmp.ne.s32.totalorder %s97, %s98
      %p110 = scmp.eq.s32.totalorder %s25, 1
      %p111 = por %p109, %p110
      %p113 = scmp.ne.s32.totalorder %s98, %s112
      %p114 = scmp.eq.s32.totalorder %s25, 0
      %p115 = por %p113, %p114
      %s117 = sadd.s32 %s116, 1
      %p120 = scmp.eq.s32.totalorder %s19, 1
      %p121 = scmp.ne.s32.totalorder %s116, %s118
      %p122 = scmp.eq.s32.totalorder %s19, 0
      %p123 = por %p121, %p122
      %p124 = scmp.ne.s32.totalorder %s116, %s118
      %p125 = scmp.eq.s32.totalorder %s24, 1
      %p126 = por %p124, %p125
      %p127 = scmp.ne.s32.totalorder %s118, %s119
      %p128 = scmp.eq.s32.totalorder %s24, 0
      %p129 = por %p127, %p128
      %p130 = scmp.ne.s32.totalorder %s118, %s119
      %p131 = scmp.eq.s32.totalorder %s25, 1
      %p132 = por %p130, %p131
      %p134 = scmp.ne.s32.totalorder %s119, %s133
      %p135 = scmp.eq.s32.totalorder %s25, 0
      %p136 = por %p134, %p135
      %s137 = ssub.s32 %s19, %s26
      %p138 = scmp.eq.s32.totalorder %s137, 0
      %s140 = sadd.s32 %s139, 1
      %s141 = scalar_select %p138, %s139, %s140
      %p144 = pneg %p138
      %p145 = scmp.eq.s32.totalorder %s19, 1
      %p146 = por %p144, %p145
      %p147 = scmp.ne.s32.totalorder %s139, %s142
      %p148 = scmp.eq.s32.totalorder %s19, 0
      %p149 = por %p147, %p148
      %p150 = scmp.ne.s32.totalorder %s139, %s142
      %p151 = scmp.eq.s32.totalorder %s24, 1
      %p152 = por %p150, %p151
      %p153 = scmp.ne.s32.totalorder %s142, %s143
      %p154 = scmp.eq.s32.totalorder %s24, 0
      %p155 = por %p153, %p154
      %p156 = scmp.ne.s32.totalorder %s142, %s143
      %p157 = scmp.eq.s32.totalorder %s25, 1
      %p158 = por %p156, %p157
      %p160 = scmp.ne.s32.totalorder %s143, %s159
      %p161 = scmp.eq.s32.totalorder %s25, 0
      %p162 = por %p160, %p161
      %p163 = scmp.le.s32.totalorder 1, %s19
      %p164 = scmp.lt.s32.totalorder %s19, 3
      %p165 = pnand %p163, %p164
      %p166 = pneg %p165
      // Predicated region
      $region9: #{tpu_custom_call.1} parent=5 // pred_check
        _
      $region10: #{tpu_custom_call.1} parent=5 // pred_check_branch
        %168 = sbr.rel (%p165) target = $region12
      $region11: #{tpu_custom_call.1} parent=5 // pred_region
        %s169 = ssub.s32 %s19, 1
        // Predicated region
        $region13: #{tpu_custom_call.1} parent=11 // pred_check
          %p170 = pneg %p66
        $region14: #{tpu_custom_call.1} parent=11 // pred_check_branch
          %172 = sbr.rel (%p170) target = $region16
        $region15: #{tpu_custom_call.1} parent=11 // pred_region
          %s174 = ssub.s32 9216, 9216
          %175 = vsyncadd [#allocation8], %s174
          %s176 = sshll.u32 [#allocation7], 4
          %s177 = int_to_ptr.vmem [resolvable:$true] %s176
          %182 = dma.hbm_to_vmem [thread:$0]  %s1, 9216, %s177, [#allocation8], 64, 64, 4
        $region16: #{tpu_custom_call.1} parent=11 // pred_fallthru
          _
        // Predicated region
        $region17: #{tpu_custom_call.1} parent=11 // pred_check
          %p183 = pneg %p87
        $region18: #{tpu_custom_call.1} parent=11 // pred_check_branch
          %185 = sbr.rel (%p183) target = $region20
        $region19: #{tpu_custom_call.1} parent=11 // pred_region
          %s187 = ssub.s32 9216, 9216
          %188 = vsyncadd [#allocation8], %s187
          %s189 = sshll.u32 [#allocation9], 4
          %s190 = int_to_ptr.vmem [resolvable:$true] %s189
          %195 = dma.hbm_to_vmem [thread:$0]  %s2, 9216, %s190, [#allocation8], 64, 64, 4
        $region20: #{tpu_custom_call.1} parent=11 // pred_fallthru
          _
        // Predicated region
        $region21: #{tpu_custom_call.1} parent=11 // pred_check
          %p196 = pneg %p108
        $region22: #{tpu_custom_call.1} parent=11 // pred_check_branch
          %198 = sbr.rel (%p196) target = $region24
        $region23: #{tpu_custom_call.1} parent=11 // pred_region
          %s200 = ssub.s32 1024, 1024
          %201 = vsyncadd [#allocation11], %s200
          %s202 = sshll.u32 [#allocation10], 4
          %s203 = int_to_ptr.vmem [resolvable:$true] %s202
          %208 = dma.hbm_to_vmem [thread:$0]  %s3, 1024, %s203, [#allocation11], 64, 64, 4
        $region24: #{tpu_custom_call.1} parent=11 // pred_fallthru
          _
        // Predicated region
        $region25: #{tpu_custom_call.1} parent=11 // pred_check
          %p209 = pneg %p129
        $region26: #{tpu_custom_call.1} parent=11 // pred_check_branch
          %211 = sbr.rel (%p209) target = $region28
        $region27: #{tpu_custom_call.1} parent=11 // pred_region
          _
        $region28: #{tpu_custom_call.1} parent=11 // pred_fallthru
          _
      $region12: #{tpu_custom_call.1} parent=5 // pred_fallthru
        _
      %p212 = scmp.lt.s32.totalorder %s19, 2
      // Predicated region
      $region29: #{tpu_custom_call.1} parent=5 // pred_check
        %p213 = pneg %p212
      $region30: #{tpu_custom_call.1} parent=5 // pred_check_branch
        %215 = sbr.rel (%p213) target = $region32
      $region31: #{tpu_custom_call.1} parent=5 // pred_region
        // Predicated region
        $region33: #{tpu_custom_call.1} parent=31 // pred_check
          %p216 = pneg %p39
        $region34: #{tpu_custom_call.1} parent=31 // pred_check_branch
          %218 = sbr.rel (%p216) target = $region36
        $region35: #{tpu_custom_call.1} parent=31 // pred_region
          %s219 = sand.u32 %s29, 1
          %s220 = scalar_lea.sflag [#allocation5], %s219
          %s221 = sand.u32 %s29, 1
          %s222 = smul.addr %s221, 128
          %s223 = scalar_lea.vmem [#allocation4], %s222
          %s225 = ssub.s32 2048, 2048
          %226 = vsyncadd %s220, %s225
          %s227 = smul.addr %s19, 32
          %s228 = smul.addr %s227, 64
          %s229 = scalar_lea.hbm %s0, %s228
          %s230 = sshll.u32 %s223, 4
          %s231 = int_to_ptr.vmem [resolvable:$true] %s230
          %236 = dma.hbm_to_vmem [thread:$0]  %s229, 2048, %s231, %s220, 64, 64, 4
        $region36: #{tpu_custom_call.1} parent=31 // pred_fallthru
          _
      $region32: #{tpu_custom_call.1} parent=5 // pred_fallthru
        _
      %p237 = scmp.le.s32.totalorder 1, %s19
      %p238 = scmp.lt.s32.totalorder %s19, 3
      %p239 = pnand %p237, %p238
      %p240 = pneg %p239
      // Predicated region
      $region37: #{tpu_custom_call.1} parent=5 // pred_check
        _
      $region38: #{tpu_custom_call.1} parent=5 // pred_check_branch
        %242 = sbr.rel (%p239) target = $region40
      $region39: #{tpu_custom_call.1} parent=5 // pred_region
        %s243 = ssub.s32 %s19, 1
        %s244 = sand.u32 %s32, 1
        %s245 = scalar_lea.sflag [#allocation5], %s244
        %s246 = sand.u32 %s32, 1
        %s247 = smul.addr %s246, 128
        %s248 = scalar_lea.vmem [#allocation4], %s247
        // Predicated region
        $region41: #{tpu_custom_call.1} parent=39 // pred_check
          %p249 = pneg %p45
        $region42: #{tpu_custom_call.1} parent=39 // pred_check_branch
          %251 = sbr.rel (%p249) target = $region44
        $region43: #{tpu_custom_call.1} parent=39 // pred_region
          %252 = dma.done %s245, 2048
        $region44: #{tpu_custom_call.1} parent=39 // pred_fallthru
          _
        // Predicated region
        $region45: #{tpu_custom_call.1} parent=39 // pred_check
          %p253 = pneg %p66
        $region46: #{tpu_custom_call.1} parent=39 // pred_check_branch
          %255 = sbr.rel (%p253) target = $region48
        $region47: #{tpu_custom_call.1} parent=39 // pred_region
          %256 = dma.done [#allocation8], 9216
        $region48: #{tpu_custom_call.1} parent=39 // pred_fallthru
          _
        // Predicated region
        $region49: #{tpu_custom_call.1} parent=39 // pred_check
          %p257 = pneg %p87
        $region50: #{tpu_custom_call.1} parent=39 // pred_check_branch
          %259 = sbr.rel (%p257) target = $region52
        $region51: #{tpu_custom_call.1} parent=39 // pred_region
          %260 = dma.done [#allocation8], 9216
        $region52: #{tpu_custom_call.1} parent=39 // pred_fallthru
          _
        // Predicated region
        $region53: #{tpu_custom_call.1} parent=39 // pred_check
          %p261 = pneg %p108
        $region54: #{tpu_custom_call.1} parent=39 // pred_check_branch
          %263 = sbr.rel (%p261) target = $region56
        $region55: #{tpu_custom_call.1} parent=39 // pred_region
          %264 = dma.done [#allocation11], 1024
        $region56: #{tpu_custom_call.1} parent=39 // pred_fallthru
          _
        %s265 = sand.u32 %s32, 1
        %s266 = scalar_lea.sflag [#allocation5], %s265
        %s267 = sand.u32 %s32, 1
        %s268 = smul.addr %s267, 128
        %s269 = scalar_lea.vmem [#allocation4], %s268
        %p270 = pneg %p45
        %p271 = pneg %p42
        %p272 = pneg %p66
        %p273 = pneg %p63
        %p274 = pneg %p87
        %p275 = pneg %p84
        %p276 = pneg %p108
        %p277 = pneg %p105
        %p278 = pneg %p129
        %p279 = pneg %p126
        %p280 = pneg %p155
        %p281 = pneg %p152
        %s282 = sand.u32 %s142, 1
        %s283 = scalar_lea.sflag [#allocation6], %s282
        %s284 = sand.u32 %s142, 1
        %s285 = smul.addr %s284, 128
        %s286 = scalar_lea.vmem [#allocation12], %s285
        %v288 = vld [vmem:[%s248] sm:$0xf]
        %v289 = vld [vmem:[%s248 + $0x4] sm:$0xf]
        %v290 = vld [vmem:[%s248 + $0x8] sm:$0xf]
        %v291 = vld [vmem:[%s248 + $0xc] sm:$0xf]
        %v292 = vld [vmem:[%s248 + $0x10] sm:$0xf]
        %v293 = vld [vmem:[%s248 + $0x14] sm:$0xf]
        %v294 = vld [vmem:[%s248 + $0x18] sm:$0xf]
        %v295 = vld [vmem:[%s248 + $0x1c] sm:$0xf]
        %v296 = vld [vmem:[%s248 + $0x20] sm:$0xf]
        %v297 = vld [vmem:[%s248 + $0x24] sm:$0xf]
        %v298 = vld [vmem:[%s248 + $0x28] sm:$0xf]
        %v299 = vld [vmem:[%s248 + $0x2c] sm:$0xf]
        %v300 = vld [vmem:[%s248 + $0x30] sm:$0xf]
        %v301 = vld [vmem:[%s248 + $0x34] sm:$0xf]
        %v302 = vld [vmem:[%s248 + $0x38] sm:$0xf]
        %v303 = vld [vmem:[%s248 + $0x3c] sm:$0xf]
        %v304 = vld [vmem:[%s248 + $0x40] sm:$0xf]
        %v305 = vld [vmem:[%s248 + $0x44] sm:$0xf]
        %v306 = vld [vmem:[%s248 + $0x48] sm:$0xf]
        %v307 = vld [vmem:[%s248 + $0x4c] sm:$0xf]
        %v308 = vld [vmem:[%s248 + $0x50] sm:$0xf]
        %v309 = vld [vmem:[%s248 + $0x54] sm:$0xf]
        %v310 = vld [vmem:[%s248 + $0x58] sm:$0xf]
        %v311 = vld [vmem:[%s248 + $0x5c] sm:$0xf]
        %v312 = vld [vmem:[%s248 + $0x60] sm:$0xf]
        %v313 = vld [vmem:[%s248 + $0x64] sm:$0xf]
        %v314 = vld [vmem:[%s248 + $0x68] sm:$0xf]
        %v315 = vld [vmem:[%s248 + $0x6c] sm:$0xf]
        %v316 = vld [vmem:[%s248 + $0x70] sm:$0xf]
        %v317 = vld [vmem:[%s248 + $0x74] sm:$0xf]
        %v318 = vld [vmem:[%s248 + $0x78] sm:$0xf]
        %v319 = vld [vmem:[%s248 + $0x7c] sm:$0xf]
        %v320 = vld [vmem:[%s4] sm:$0x1]
        %v321 = vld [vmem:[%s4 + $0x1] sm:$0x1]
        %v322 = vld [vmem:[%s4 + $0x2] sm:$0x1]
        %v323 = vld [vmem:[%s4 + $0x3] sm:$0x1]
        %324 = vst [vmem:[#allocation2] sm:$0xf] 0
        %325 = vst [vmem:[#allocation2 + $0x4] sm:$0xf] 0
        %326 = vst [vmem:[#allocation2 + $0x8] sm:$0x1] 0
        %s327 = scalar_lea.vmem [#allocation2], 204
        %328 = vst [vmem:[%s327] sm:$0xf] 0
        %329 = vst [vmem:[%s327 + $0x4] sm:$0xf] 0
        %330 = vst [vmem:[%s327 + $0x8] sm:$0x1] 0
        %vm331 = vcmask 1040384
        %vm332 = vsmask.f32 256
        %vm333 = vmand %vm331, %vm332
        %v334 = vld [vmem:[#allocation2] sm:$0x1]
        %v335 = vsel %vm333, 0, %v334
        %336 = vst [vmem:[#allocation2] sm:$0x1] %v335
        %v337 = vld [vmem:[#allocation2 + $0xc] sm:$0x1]
        %v338 = vsel %vm333, 0, %v337
        %339 = vst [vmem:[#allocation2 + $0xc] sm:$0x1] %v338
        %v340 = vld [vmem:[#allocation2 + $0x18] sm:$0x1]
        %v341 = vsel %vm333, 0, %v340
        %342 = vst [vmem:[#allocation2 + $0x18] sm:$0x1] %v341
        %v343 = vld [vmem:[#allocation2 + $0x24] sm:$0x1]
        %v344 = vsel %vm333, 0, %v343
        %345 = vst [vmem:[#allocation2 + $0x24] sm:$0x1] %v344
        %v346 = vld [vmem:[#allocation2 + $0x30] sm:$0x1]
        %v347 = vsel %vm333, 0, %v346
        %348 = vst [vmem:[#allocation2 + $0x30] sm:$0x1] %v347
        %v349 = vld [vmem:[#allocation2 + $0x3c] sm:$0x1]
        %v350 = vsel %vm333, 0, %v349
        %351 = vst [vmem:[#allocation2 + $0x3c] sm:$0x1] %v350
        %v352 = vld [vmem:[#allocation2 + $0x48] sm:$0x1]
        %v353 = vsel %vm333, 0, %v352
        %354 = vst [vmem:[#allocation2 + $0x48] sm:$0x1] %v353
        %v355 = vld [vmem:[#allocation2 + $0x54] sm:$0x1]
        %v356 = vsel %vm333, 0, %v355
        %357 = vst [vmem:[#allocation2 + $0x54] sm:$0x1] %v356
        %v358 = vld [vmem:[#allocation2 + $0x60] sm:$0x1]
        %v359 = vsel %vm333, 0, %v358
        %360 = vst [vmem:[#allocation2 + $0x60] sm:$0x1] %v359
        %v361 = vld [vmem:[#allocation2 + $0x6c] sm:$0x1]
        %v362 = vsel %vm333, 0, %v361
        %363 = vst [vmem:[#allocation2 + $0x6c] sm:$0x1] %v362
        %v364 = vld [vmem:[#allocation2 + $0x78] sm:$0x1]
        %v365 = vsel %vm333, 0, %v364
        %366 = vst [vmem:[#allocation2 + $0x78] sm:$0x1] %v365
        %v367 = vld [vmem:[#allocation2 + $0x84] sm:$0x1]
        %v368 = vsel %vm333, 0, %v367
        %369 = vst [vmem:[#allocation2 + $0x84] sm:$0x1] %v368
        %v370 = vld [vmem:[#allocation2 + $0x90] sm:$0x1]
        %v371 = vsel %vm333, 0, %v370
        %372 = vst [vmem:[#allocation2 + $0x90] sm:$0x1] %v371
        %v373 = vld [vmem:[#allocation2 + $0x9c] sm:$0x1]
        %v374 = vsel %vm333, 0, %v373
        %375 = vst [vmem:[#allocation2 + $0x9c] sm:$0x1] %v374
        %v376 = vld [vmem:[#allocation2 + $0xa8] sm:$0x1]
        %v377 = vsel %vm333, 0, %v376
        %378 = vst [vmem:[#allocation2 + $0xa8] sm:$0x1] %v377
        %v379 = vld [vmem:[#allocation2 + $0xb4] sm:$0x1]
        %v380 = vsel %vm333, 0, %v379
        %381 = vst [vmem:[#allocation2 + $0xb4] sm:$0x1] %v380
        %v382 = vld [vmem:[#allocation2 + $0xc0] sm:$0x1]
        %v383 = vsel %vm333, 0, %v382
        %384 = vst [vmem:[#allocation2 + $0xc0] sm:$0x1] %v383
        %v385 = vld [vmem:[#allocation2 + $0xcc] sm:$0x1]
        %v386 = vsel %vm333, 0, %v385
        %387 = vst [vmem:[#allocation2 + $0xcc] sm:$0x1] %v386
        %vm388 = vsmask.f32 7938
        %vm389 = vmand %vm331, %vm388
        %v390 = vld [vmem:[#allocation2 + $0x8] sm:$0x1]
        %v391 = vsel %vm389, 0, %v390
        %392 = vst [vmem:[#allocation2 + $0x8] sm:$0x1] %v391
        %v393 = vld [vmem:[#allocation2 + $0x14] sm:$0x1]
        %v394 = vsel %vm389, 0, %v393
        %395 = vst [vmem:[#allocation2 + $0x14] sm:$0x1] %v394
        %v396 = vld [vmem:[#allocation2 + $0x20] sm:$0x1]
        %v397 = vsel %vm389, 0, %v396
        %398 = vst [vmem:[#allocation2 + $0x20] sm:$0x1] %v397
        %v399 = vld [vmem:[#allocation2 + $0x2c] sm:$0x1]
        %v400 = vsel %vm389, 0, %v399
        %401 = vst [vmem:[#allocation2 + $0x2c] sm:$0x1] %v400
        %v402 = vld [vmem:[#allocation2 + $0x38] sm:$0x1]
        %v403 = vsel %vm389, 0, %v402
        %404 = vst [vmem:[#allocation2 + $0x38] sm:$0x1] %v403
        %v405 = vld [vmem:[#allocation2 + $0x44] sm:$0x1]
        %v406 = vsel %vm389, 0, %v405
        %407 = vst [vmem:[#allocation2 + $0x44] sm:$0x1] %v406
        %v408 = vld [vmem:[#allocation2 + $0x50] sm:$0x1]
        %v409 = vsel %vm389, 0, %v408
        %410 = vst [vmem:[#allocation2 + $0x50] sm:$0x1] %v409
        %v411 = vld [vmem:[#allocation2 + $0x5c] sm:$0x1]
        %v412 = vsel %vm389, 0, %v411
        %413 = vst [vmem:[#allocation2 + $0x5c] sm:$0x1] %v412
        %v414 = vld [vmem:[#allocation2 + $0x68] sm:$0x1]
        %v415 = vsel %vm389, 0, %v414
        %416 = vst [vmem:[#allocation2 + $0x68] sm:$0x1] %v415
        %v417 = vld [vmem:[#allocation2 + $0x74] sm:$0x1]
        %v418 = vsel %vm389, 0, %v417
        %419 = vst [vmem:[#allocation2 + $0x74] sm:$0x1] %v418
        %v420 = vld [vmem:[#allocation2 + $0x80] sm:$0x1]
        %v421 = vsel %vm389, 0, %v420
        %422 = vst [vmem:[#allocation2 + $0x80] sm:$0x1] %v421
        %v423 = vld [vmem:[#allocation2 + $0x8c] sm:$0x1]
        %v424 = vsel %vm389, 0, %v423
        %425 = vst [vmem:[#allocation2 + $0x8c] sm:$0x1] %v424
        %v426 = vld [vmem:[#allocation2 + $0x98] sm:$0x1]
        %v427 = vsel %vm389, 0, %v426
        %428 = vst [vmem:[#allocation2 + $0x98] sm:$0x1] %v427
        %v429 = vld [vmem:[#allocation2 + $0xa4] sm:$0x1]
        %v430 = vsel %vm389, 0, %v429
        %431 = vst [vmem:[#allocation2 + $0xa4] sm:$0x1] %v430
        %v432 = vld [vmem:[#allocation2 + $0xb0] sm:$0x1]
        %v433 = vsel %vm389, 0, %v432
        %434 = vst [vmem:[#allocation2 + $0xb0] sm:$0x1] %v433
        %v435 = vld [vmem:[#allocation2 + $0xbc] sm:$0x1]
        %v436 = vsel %vm389, 0, %v435
        %437 = vst [vmem:[#allocation2 + $0xbc] sm:$0x1] %v436
        %v438 = vld [vmem:[#allocation2 + $0xc8] sm:$0x1]
        %v439 = vsel %vm389, 0, %v438
        %440 = vst [vmem:[#allocation2 + $0xc8] sm:$0x1] %v439
        %v441 = vld [vmem:[#allocation2 + $0xd4] sm:$0x1]
        %v442 = vsel %vm389, 0, %v441
        %443 = vst [vmem:[#allocation2 + $0xd4] sm:$0x1] %v442
        %vm444 = vsmask.f32 4368
        %vm445 = vmor %vm332, %vm444
        %v447 = vshrl.u32 %v288, 16
        %v449 = vrot.slane %v447, 7
        %v450 = vshll.u32 %v288, 16
        %v452 = vor.u32 %v449, %v450
        %v453 = vrot.slane %v449, 4
        %v455 = vshrl.u32 %v289, 16
        %v457 = vrot.slane %v455, 7
        %v458 = vshll.u32 %v289, 16
        %v460 = vor.u32 %v457, %v458
        %v461 = vsel %vm445, %v453, %v460
        %v462 = vrot.slane %v457, 4
        %v464 = vshrl.u32 %v290, 16
        %v466 = vrot.slane %v464, 7
        %v467 = vshll.u32 %v290, 16
        %v469 = vor.u32 %v466, %v467
        %v470 = vrot.slane %v466, 4
        %v472 = vshrl.u32 %v291, 16
        %v474 = vrot.slane %v472, 7
        %v475 = vshll.u32 %v291, 16
        %v477 = vor.u32 %v474, %v475
        %v478 = vsel %vm445, %v470, %v477
        %v479 = vrot.slane %v474, 4
        %v481 = vshrl.u32 %v292, 16
        %v483 = vrot.slane %v481, 7
        %v484 = vshll.u32 %v292, 16
        %v486 = vor.u32 %v483, %v484
        %v487 = vrot.slane %v483, 4
        %v489 = vshrl.u32 %v293, 16
        %v491 = vrot.slane %v489, 7
        %v492 = vshll.u32 %v293, 16
        %v494 = vor.u32 %v491, %v492
        %v495 = vsel %vm445, %v487, %v494
        %v496 = vrot.slane %v491, 4
        %v498 = vshrl.u32 %v294, 16
        %v500 = vrot.slane %v498, 7
        %v501 = vshll.u32 %v294, 16
        %v503 = vor.u32 %v500, %v501
        %v504 = vrot.slane %v500, 4
        %v506 = vshrl.u32 %v295, 16
        %v508 = vrot.slane %v506, 7
        %v509 = vshll.u32 %v295, 16
        %v511 = vor.u32 %v508, %v509
        %v512 = vsel %vm445, %v504, %v511
        %v513 = vrot.slane %v508, 4
        %v515 = vshrl.u32 %v296, 16
        %v517 = vrot.slane %v515, 7
        %v518 = vshll.u32 %v296, 16
        %v520 = vor.u32 %v517, %v518
        %v521 = vrot.slane %v517, 4
        %v523 = vshrl.u32 %v297, 16
        %v525 = vrot.slane %v523, 7
        %v526 = vshll.u32 %v297, 16
        %v528 = vor.u32 %v525, %v526
        %v529 = vsel %vm445, %v521, %v528
        %v530 = vrot.slane %v525, 4
        %v532 = vshrl.u32 %v298, 16
        %v534 = vrot.slane %v532, 7
        %v535 = vshll.u32 %v298, 16
        %v537 = vor.u32 %v534, %v535
        %v538 = vrot.slane %v534, 4
        %v540 = vshrl.u32 %v299, 16
        %v542 = vrot.slane %v540, 7
        %v543 = vshll.u32 %v299, 16
        %v545 = vor.u32 %v542, %v543
        %v546 = vsel %vm445, %v538, %v545
        %v547 = vrot.slane %v542, 4
        %v549 = vshrl.u32 %v300, 16
        %v551 = vrot.slane %v549, 7
        %v552 = vshll.u32 %v300, 16
        %v554 = vor.u32 %v551, %v552
        %v555 = vrot.slane %v551, 4
        %v557 = vshrl.u32 %v301, 16
        %v559 = vrot.slane %v557, 7
        %v560 = vshll.u32 %v301, 16
        %v562 = vor.u32 %v559, %v560
        %v563 = vsel %vm445, %v555, %v562
        %v564 = vrot.slane %v559, 4
        %v566 = vshrl.u32 %v302, 16
        %v568 = vrot.slane %v566, 7
        %v569 = vshll.u32 %v302, 16
        %v571 = vor.u32 %v568, %v569
        %v572 = vrot.slane %v568, 4
        %v574 = vshrl.u32 %v303, 16
        %v576 = vrot.slane %v574, 7
        %v577 = vshll.u32 %v303, 16
        %v579 = vor.u32 %v576, %v577
        %v580 = vsel %vm445, %v572, %v579
        %v581 = vrot.slane %v576, 4
        %v583 = vshrl.u32 %v304, 16
        %v585 = vrot.slane %v583, 7
        %v586 = vshll.u32 %v304, 16
        %v588 = vor.u32 %v585, %v586
        %v589 = vrot.slane %v585, 4
        %v591 = vshrl.u32 %v305, 16
        %v593 = vrot.slane %v591, 7
        %v594 = vshll.u32 %v305, 16
        %v596 = vor.u32 %v593, %v594
        %v597 = vsel %vm445, %v589, %v596
        %v598 = vrot.slane %v593, 4
        %v600 = vshrl.u32 %v306, 16
        %v602 = vrot.slane %v600, 7
        %v603 = vshll.u32 %v306, 16
        %v605 = vor.u32 %v602, %v603
        %v606 = vrot.slane %v602, 4
        %v608 = vshrl.u32 %v307, 16
        %v610 = vrot.slane %v608, 7
        %v611 = vshll.u32 %v307, 16
        %v613 = vor.u32 %v610, %v611
        %v614 = vsel %vm445, %v606, %v613
        %v615 = vrot.slane %v610, 4
        %v617 = vshrl.u32 %v308, 16
        %v619 = vrot.slane %v617, 7
        %v620 = vshll.u32 %v308, 16
        %v622 = vor.u32 %v619, %v620
        %v623 = vrot.slane %v619, 4
        %v625 = vshrl.u32 %v309, 16
        %v627 = vrot.slane %v625, 7
        %v628 = vshll.u32 %v309, 16
        %v630 = vor.u32 %v627, %v628
        %v631 = vsel %vm445, %v623, %v630
        %v632 = vrot.slane %v627, 4
        %v634 = vshrl.u32 %v310, 16
        %v636 = vrot.slane %v634, 7
        %v637 = vshll.u32 %v310, 16
        %v639 = vor.u32 %v636, %v637
        %v640 = vrot.slane %v636, 4
        %v642 = vshrl.u32 %v311, 16
        %v644 = vrot.slane %v642, 7
        %v645 = vshll.u32 %v311, 16
        %v647 = vor.u32 %v644, %v645
        %v648 = vsel %vm445, %v640, %v647
        %v649 = vrot.slane %v644, 4
        %v651 = vshrl.u32 %v312, 16
        %v653 = vrot.slane %v651, 7
        %v654 = vshll.u32 %v312, 16
        %v656 = vor.u32 %v653, %v654
        %v657 = vrot.slane %v653, 4
        %v659 = vshrl.u32 %v313, 16
        %v661 = vrot.slane %v659, 7
        %v662 = vshll.u32 %v313, 16
        %v664 = vor.u32 %v661, %v662
        %v665 = vsel %vm445, %v657, %v664
        %v666 = vrot.slane %v661, 4
        %v668 = vshrl.u32 %v314, 16
        %v670 = vrot.slane %v668, 7
        %v671 = vshll.u32 %v314, 16
        %v673 = vor.u32 %v670, %v671
        %v674 = vrot.slane %v670, 4
        %v676 = vshrl.u32 %v315, 16
        %v678 = vrot.slane %v676, 7
        %v679 = vshll.u32 %v315, 16
        %v681 = vor.u32 %v678, %v679
        %v682 = vsel %vm445, %v674, %v681
        %v683 = vrot.slane %v678, 4
        %v685 = vshrl.u32 %v316, 16
        %v687 = vrot.slane %v685, 7
        %v688 = vshll.u32 %v316, 16
        %v690 = vor.u32 %v687, %v688
        %v691 = vrot.slane %v687, 4
        %v693 = vshrl.u32 %v317, 16
        %v695 = vrot.slane %v693, 7
        %v696 = vshll.u32 %v317, 16
        %v698 = vor.u32 %v695, %v696
        %v699 = vsel %vm445, %v691, %v698
        %v700 = vrot.slane %v695, 4
        %v702 = vshrl.u32 %v318, 16
        %v704 = vrot.slane %v702, 7
        %v705 = vshll.u32 %v318, 16
        %v707 = vor.u32 %v704, %v705
        %v708 = vrot.slane %v704, 4
        %v710 = vshrl.u32 %v319, 16
        %v712 = vrot.slane %v710, 7
        %v713 = vshll.u32 %v319, 16
        %v715 = vor.u32 %v712, %v713
        %v716 = vsel %vm445, %v708, %v715
        %v717 = vrot.slane %v712, 4
        %s766 = scalar_lea.vmem [#allocation2], 12
        %vm767 = vcmask 1043456
        %vm768 = vmand %vm767, %vm388
        %v769 = vld [vmem:[%s766] sm:$0xf]
        %v770 = vsel %vm768, %v452, %v769
        %771 = vst [vmem:[%s766] sm:$0xf] %v770
        %772 = vst [vmem:[%s766 + $0x4] sm:$0xf] %v461
        %v773 = vld [vmem:[%s766 + $0x8] sm:$0x1]
        %v774 = vsel %vm333, %v462, %v773
        %775 = vst [vmem:[%s766 + $0x8] sm:$0x1] %v774
        %v776 = vld [vmem:[%s766 + $0xc] sm:$0xf]
        %v777 = vsel %vm768, %v469, %v776
        %778 = vst [vmem:[%s766 + $0xc] sm:$0xf] %v777
        %779 = vst [vmem:[%s766 + $0x10] sm:$0xf] %v478
        %v780 = vld [vmem:[%s766 + $0x14] sm:$0x1]
        %v781 = vsel %vm333, %v479, %v780
        %782 = vst [vmem:[%s766 + $0x14] sm:$0x1] %v781
        %v783 = vld [vmem:[%s766 + $0x18] sm:$0xf]
        %v784 = vsel %vm768, %v486, %v783
        %785 = vst [vmem:[%s766 + $0x18] sm:$0xf] %v784
        %786 = vst [vmem:[%s766 + $0x1c] sm:$0xf] %v495
        %v787 = vld [vmem:[%s766 + $0x20] sm:$0x1]
        %v788 = vsel %vm333, %v496, %v787
        %789 = vst [vmem:[%s766 + $0x20] sm:$0x1] %v788
        %v790 = vld [vmem:[%s766 + $0x24] sm:$0xf]
        %v791 = vsel %vm768, %v503, %v790
        %792 = vst [vmem:[%s766 + $0x24] sm:$0xf] %v791
        %793 = vst [vmem:[%s766 + $0x28] sm:$0xf] %v512
        %v794 = vld [vmem:[%s766 + $0x2c] sm:$0x1]
        %v795 = vsel %vm333, %v513, %v794
        %796 = vst [vmem:[%s766 + $0x2c] sm:$0x1] %v795
        %v797 = vld [vmem:[%s766 + $0x30] sm:$0xf]
        %v798 = vsel %vm768, %v520, %v797
        %799 = vst [vmem:[%s766 + $0x30] sm:$0xf] %v798
        %800 = vst [vmem:[%s766 + $0x34] sm:$0xf] %v529
        %v801 = vld [vmem:[%s766 + $0x38] sm:$0x1]
        %v802 = vsel %vm333, %v530, %v801
        %803 = vst [vmem:[%s766 + $0x38] sm:$0x1] %v802
        %v804 = vld [vmem:[%s766 + $0x3c] sm:$0xf]
        %v805 = vsel %vm768, %v537, %v804
        %806 = vst [vmem:[%s766 + $0x3c] sm:$0xf] %v805
        %807 = vst [vmem:[%s766 + $0x40] sm:$0xf] %v546
        %v808 = vld [vmem:[%s766 + $0x44] sm:$0x1]
        %v809 = vsel %vm333, %v547, %v808
        %810 = vst [vmem:[%s766 + $0x44] sm:$0x1] %v809
        %v811 = vld [vmem:[%s766 + $0x48] sm:$0xf]
        %v812 = vsel %vm768, %v554, %v811
        %813 = vst [vmem:[%s766 + $0x48] sm:$0xf] %v812
        %814 = vst [vmem:[%s766 + $0x4c] sm:$0xf] %v563
        %v815 = vld [vmem:[%s766 + $0x50] sm:$0x1]
        %v816 = vsel %vm333, %v564, %v815
        %817 = vst [vmem:[%s766 + $0x50] sm:$0x1] %v816
        %v818 = vld [vmem:[%s766 + $0x54] sm:$0xf]
        %v819 = vsel %vm768, %v571, %v818
        %820 = vst [vmem:[%s766 + $0x54] sm:$0xf] %v819
        %821 = vst [vmem:[%s766 + $0x58] sm:$0xf] %v580
        %v822 = vld [vmem:[%s766 + $0x5c] sm:$0x1]
        %v823 = vsel %vm333, %v581, %v822
        %824 = vst [vmem:[%s766 + $0x5c] sm:$0x1] %v823
        %v825 = vld [vmem:[%s766 + $0x60] sm:$0xf]
        %v826 = vsel %vm768, %v588, %v825
        %827 = vst [vmem:[%s766 + $0x60] sm:$0xf] %v826
        %828 = vst [vmem:[%s766 + $0x64] sm:$0xf] %v597
        %v829 = vld [vmem:[%s766 + $0x68] sm:$0x1]
        %v830 = vsel %vm333, %v598, %v829
        %831 = vst [vmem:[%s766 + $0x68] sm:$0x1] %v830
        %v832 = vld [vmem:[%s766 + $0x6c] sm:$0xf]
        %v833 = vsel %vm768, %v605, %v832
        %834 = vst [vmem:[%s766 + $0x6c] sm:$0xf] %v833
        %835 = vst [vmem:[%s766 + $0x70] sm:$0xf] %v614
        %v836 = vld [vmem:[%s766 + $0x74] sm:$0x1]
        %v837 = vsel %vm333, %v615, %v836
        %838 = vst [vmem:[%s766 + $0x74] sm:$0x1] %v837
        %v839 = vld [vmem:[%s766 + $0x78] sm:$0xf]
        %v840 = vsel %vm768, %v622, %v839
        %841 = vst [vmem:[%s766 + $0x78] sm:$0xf] %v840
        %842 = vst [vmem:[%s766 + $0x7c] sm:$0xf] %v631
        %v843 = vld [vmem:[%s766 + $0x80] sm:$0x1]
        %v844 = vsel %vm333, %v632, %v843
        %845 = vst [vmem:[%s766 + $0x80] sm:$0x1] %v844
        %v846 = vld [vmem:[%s766 + $0x84] sm:$0xf]
        %v847 = vsel %vm768, %v639, %v846
        %848 = vst [vmem:[%s766 + $0x84] sm:$0xf] %v847
        %849 = vst [vmem:[%s766 + $0x88] sm:$0xf] %v648
        %v850 = vld [vmem:[%s766 + $0x8c] sm:$0x1]
        %v851 = vsel %vm333, %v649, %v850
        %852 = vst [vmem:[%s766 + $0x8c] sm:$0x1] %v851
        %v853 = vld [vmem:[%s766 + $0x90] sm:$0xf]
        %v854 = vsel %vm768, %v656, %v853
        %855 = vst [vmem:[%s766 + $0x90] sm:$0xf] %v854
        %856 = vst [vmem:[%s766 + $0x94] sm:$0xf] %v665
        %v857 = vld [vmem:[%s766 + $0x98] sm:$0x1]
        %v858 = vsel %vm333, %v666, %v857
        %859 = vst [vmem:[%s766 + $0x98] sm:$0x1] %v858
        %v860 = vld [vmem:[%s766 + $0x9c] sm:$0xf]
        %v861 = vsel %vm768, %v673, %v860
        %862 = vst [vmem:[%s766 + $0x9c] sm:$0xf] %v861
        %863 = vst [vmem:[%s766 + $0xa0] sm:$0xf] %v682
        %v864 = vld [vmem:[%s766 + $0xa4] sm:$0x1]
        %v865 = vsel %vm333, %v683, %v864
        %866 = vst [vmem:[%s766 + $0xa4] sm:$0x1] %v865
        %v867 = vld [vmem:[%s766 + $0xa8] sm:$0xf]
        %v868 = vsel %vm768, %v690, %v867
        %869 = vst [vmem:[%s766 + $0xa8] sm:$0xf] %v868
        %870 = vst [vmem:[%s766 + $0xac] sm:$0xf] %v699
        %v871 = vld [vmem:[%s766 + $0xb0] sm:$0x1]
        %v872 = vsel %vm333, %v700, %v871
        %873 = vst [vmem:[%s766 + $0xb0] sm:$0x1] %v872
        %v874 = vld [vmem:[%s766 + $0xb4] sm:$0xf]
        %v875 = vsel %vm768, %v707, %v874
        %876 = vst [vmem:[%s766 + $0xb4] sm:$0xf] %v875
        %877 = vst [vmem:[%s766 + $0xb8] sm:$0xf] %v716
        %v878 = vld [vmem:[%s766 + $0xbc] sm:$0x1]
        %v879 = vsel %vm333, %v717, %v878
        %880 = vst [vmem:[%s766 + $0xbc] sm:$0x1] %v879
        %v881 = vld [vmem:[#allocation2] sm:$0xf]
        %v882 = vld [vmem:[#allocation2 + $0x4] sm:$0xf]
        %v883 = vld [vmem:[#allocation2 + $0xc] sm:$0xf]
        %v884 = vld [vmem:[#allocation2 + $0x10] sm:$0xf]
        %v885 = vld [vmem:[#allocation2 + $0x18] sm:$0xf]
        %v886 = vld [vmem:[#allocation2 + $0x1c] sm:$0xf]
        %v887 = vld [vmem:[#allocation2 + $0x24] sm:$0xf]
        %v888 = vld [vmem:[#allocation2 + $0x28] sm:$0xf]
        %v889 = vld [vmem:[#allocation2 + $0x30] sm:$0xf]
        %v890 = vld [vmem:[#allocation2 + $0x34] sm:$0xf]
        %v891 = vld [vmem:[#allocation2 + $0x3c] sm:$0xf]
        %v892 = vld [vmem:[#allocation2 + $0x40] sm:$0xf]
        %v893 = vld [vmem:[#allocation2 + $0x48] sm:$0xf]
        %v894 = vld [vmem:[#allocation2 + $0x4c] sm:$0xf]
        %v895 = vld [vmem:[#allocation2 + $0x54] sm:$0xf]
        %v896 = vld [vmem:[#allocation2 + $0x58] sm:$0xf]
        %v897 = vld [vmem:[#allocation2 + $0x60] sm:$0xf]
        %v898 = vld [vmem:[#allocation2 + $0x64] sm:$0xf]
        %v899 = vld [vmem:[#allocation2 + $0x6c] sm:$0xf]
        %v900 = vld [vmem:[#allocation2 + $0x70] sm:$0xf]
        %v901 = vld [vmem:[#allocation2 + $0x78] sm:$0xf]
        %v902 = vld [vmem:[#allocation2 + $0x7c] sm:$0xf]
        %v903 = vld [vmem:[#allocation2 + $0x84] sm:$0xf]
        %v904 = vld [vmem:[#allocation2 + $0x88] sm:$0xf]
        %v905 = vld [vmem:[#allocation2 + $0x90] sm:$0xf]
        %v906 = vld [vmem:[#allocation2 + $0x94] sm:$0xf]
        %v907 = vld [vmem:[#allocation2 + $0x9c] sm:$0xf]
        %v908 = vld [vmem:[#allocation2 + $0xa0] sm:$0xf]
        %v909 = vld [vmem:[#allocation2 + $0xa8] sm:$0xf]
        %v910 = vld [vmem:[#allocation2 + $0xac] sm:$0xf]
        %v911 = vld [vmem:[#allocation2 + $0xb4] sm:$0xf]
        %v912 = vld [vmem:[#allocation2 + $0xb8] sm:$0xf]
        %v913 = vld [vmem:[#allocation7] sm:$0xf]
        %v914 = vld [vmem:[#allocation7 + $0x4] sm:$0xf]
        %v915 = vld [vmem:[#allocation7 + $0x8] sm:$0xf]
        %v916 = vld [vmem:[#allocation7 + $0xc] sm:$0xf]
        %v917 = vld [vmem:[#allocation7 + $0x10] sm:$0xf]
        %v918 = vld [vmem:[#allocation7 + $0x14] sm:$0xf]
        %v919 = vld [vmem:[#allocation7 + $0x18] sm:$0xf]
        %v920 = vld [vmem:[#allocation7 + $0x1c] sm:$0xf]
        %v921 = vld [vmem:[#allocation7 + $0x20] sm:$0xf]
        %v922 = vld [vmem:[#allocation7 + $0x24] sm:$0xf]
        %v923 = vld [vmem:[#allocation7 + $0x28] sm:$0xf]
        %v924 = vld [vmem:[#allocation7 + $0x2c] sm:$0xf]
        %v925 = vld [vmem:[#allocation7 + $0x30] sm:$0xf]
        %v926 = vld [vmem:[#allocation7 + $0x34] sm:$0xf]
        %v927 = vld [vmem:[#allocation7 + $0x38] sm:$0xf]
        %v928 = vld [vmem:[#allocation7 + $0x3c] sm:$0xf]
        %v929 = vld [vmem:[#allocation2 + $0x8] sm:$0x1]
        %v930 = vld [vmem:[#allocation2 + $0x14] sm:$0x1]
        %v931 = vld [vmem:[#allocation2 + $0x20] sm:$0x1]
        %v932 = vld [vmem:[#allocation2 + $0x2c] sm:$0x1]
        %v933 = vld [vmem:[#allocation2 + $0x38] sm:$0x1]
        %v934 = vld [vmem:[#allocation2 + $0x44] sm:$0x1]
        %v935 = vld [vmem:[#allocation2 + $0x50] sm:$0x1]
        %v936 = vld [vmem:[#allocation2 + $0x5c] sm:$0x1]
        %v937 = vld [vmem:[#allocation2 + $0x68] sm:$0x1]
        %v938 = vld [vmem:[#allocation2 + $0x74] sm:$0x1]
        %v939 = vld [vmem:[#allocation2 + $0x80] sm:$0x1]
        %v940 = vld [vmem:[#allocation2 + $0x8c] sm:$0x1]
        %v941 = vld [vmem:[#allocation2 + $0x98] sm:$0x1]
        %v942 = vld [vmem:[#allocation2 + $0xa4] sm:$0x1]
        %v943 = vld [vmem:[#allocation2 + $0xb0] sm:$0x1]
        %v944 = vld [vmem:[#allocation2 + $0xbc] sm:$0x1]
        %v945 = vld [vmem:[#allocation7 + $0x40] sm:$0xf]
        %v946 = vld [vmem:[#allocation7 + $0x44] sm:$0xf]
        %v947 = vld [vmem:[#allocation7 + $0x48] sm:$0xf]
        %v948 = vld [vmem:[#allocation7 + $0x4c] sm:$0xf]
        %v949 = vld [vmem:[#allocation7 + $0x50] sm:$0xf]
        %v950 = vld [vmem:[#allocation7 + $0x54] sm:$0xf]
        %v951 = vld [vmem:[#allocation7 + $0x58] sm:$0xf]
        %v952 = vld [vmem:[#allocation7 + $0x5c] sm:$0xf]
        %v953 = vld [vmem:[#allocation7 + $0x60] sm:$0xf]
        %v954 = vld [vmem:[#allocation7 + $0x64] sm:$0xf]
        %v955 = vld [vmem:[#allocation7 + $0x68] sm:$0xf]
        %v956 = vld [vmem:[#allocation7 + $0x6c] sm:$0xf]
        %v957 = vld [vmem:[#allocation7 + $0x70] sm:$0xf]
        %v958 = vld [vmem:[#allocation7 + $0x74] sm:$0xf]
        %v959 = vld [vmem:[#allocation7 + $0x78] sm:$0xf]
        %v960 = vld [vmem:[#allocation7 + $0x7c] sm:$0xf]
        %vm961 = vsmask.f32 3328
        %vm962 = vsmask.f32 7440
        %vm963 = vmor %vm961, %vm962
        %v965 = vshrl.u32 %v881, 16
        %v967 = vrot.slane %v965, 4
        %v968 = vshll.u32 %v881, 16
        %v970 = vrot.slane %v968, 5
        %v971 = vor.u32 %v967, %v970
        %v972 = vrot.slane %v971, 4
        %v974 = vshll.u32 %v882, 16
        %v976 = vrot.slane %v974, 5
        %v977 = vsel %vm963, %v972, %v976
        %v978 = vshrl.u32 %v882, 16
        %v980 = vrot.slane %v978, 4
        %v981 = vor.u32 %v980, %v976
        %v982 = vrot.slane %v981, 4
        %v984 = vshll.u32 %v929, 16
        %v986 = vrot.slane %v984, 5
        %v987 = vsel %vm963, %v982, %v986
        %v989 = vshrl.u32 %v883, 16
        %v991 = vrot.slane %v989, 4
        %v992 = vshll.u32 %v883, 16
        %v994 = vrot.slane %v992, 5
        %v995 = vor.u32 %v991, %v994
        %v996 = vrot.slane %v995, 4
        %v998 = vshll.u32 %v884, 16
        %v1000 = vrot.slane %v998, 5
        %v1001 = vsel %vm963, %v996, %v1000
        %v1002 = vshrl.u32 %v884, 16
        %v1004 = vrot.slane %v1002, 4
        %v1005 = vor.u32 %v1004, %v1000
        %v1006 = vrot.slane %v1005, 4
        %v1008 = vshll.u32 %v930, 16
        %v1010 = vrot.slane %v1008, 5
        %v1011 = vsel %vm963, %v1006, %v1010
        %v1013 = vshrl.u32 %v885, 16
        %v1015 = vrot.slane %v1013, 4
        %v1016 = vshll.u32 %v885, 16
        %v1018 = vrot.slane %v1016, 5
        %v1019 = vor.u32 %v1015, %v1018
        %v1020 = vrot.slane %v1019, 4
        %v1022 = vshll.u32 %v886, 16
        %v1024 = vrot.slane %v1022, 5
        %v1025 = vsel %vm963, %v1020, %v1024
        %v1026 = vshrl.u32 %v886, 16
        %v1028 = vrot.slane %v1026, 4
        %v1029 = vor.u32 %v1028, %v1024
        %v1030 = vrot.slane %v1029, 4
        %v1032 = vshll.u32 %v931, 16
        %v1034 = vrot.slane %v1032, 5
        %v1035 = vsel %vm963, %v1030, %v1034
        %v1037 = vshrl.u32 %v887, 16
        %v1039 = vrot.slane %v1037, 4
        %v1040 = vshll.u32 %v887, 16
        %v1042 = vrot.slane %v1040, 5
        %v1043 = vor.u32 %v1039, %v1042
        %v1044 = vrot.slane %v1043, 4
        %v1046 = vshll.u32 %v888, 16
        %v1048 = vrot.slane %v1046, 5
        %v1049 = vsel %vm963, %v1044, %v1048
        %v1050 = vshrl.u32 %v888, 16
        %v1052 = vrot.slane %v1050, 4
        %v1053 = vor.u32 %v1052, %v1048
        %v1054 = vrot.slane %v1053, 4
        %v1056 = vshll.u32 %v932, 16
        %v1058 = vrot.slane %v1056, 5
        %v1059 = vsel %vm963, %v1054, %v1058
        %v1061 = vshrl.u32 %v889, 16
        %v1063 = vrot.slane %v1061, 4
        %v1064 = vshll.u32 %v889, 16
        %v1066 = vrot.slane %v1064, 5
        %v1067 = vor.u32 %v1063, %v1066
        %v1068 = vrot.slane %v1067, 4
        %v1070 = vshll.u32 %v890, 16
        %v1072 = vrot.slane %v1070, 5
        %v1073 = vsel %vm963, %v1068, %v1072
        %v1074 = vshrl.u32 %v890, 16
        %v1076 = vrot.slane %v1074, 4
        %v1077 = vor.u32 %v1076, %v1072
        %v1078 = vrot.slane %v1077, 4
        %v1080 = vshll.u32 %v933, 16
        %v1082 = vrot.slane %v1080, 5
        %v1083 = vsel %vm963, %v1078, %v1082
        %v1085 = vshrl.u32 %v891, 16
        %v1087 = vrot.slane %v1085, 4
        %v1088 = vshll.u32 %v891, 16
        %v1090 = vrot.slane %v1088, 5
        %v1091 = vor.u32 %v1087, %v1090
        %v1092 = vrot.slane %v1091, 4
        %v1094 = vshll.u32 %v892, 16
        %v1096 = vrot.slane %v1094, 5
        %v1097 = vsel %vm963, %v1092, %v1096
        %v1098 = vshrl.u32 %v892, 16
        %v1100 = vrot.slane %v1098, 4
        %v1101 = vor.u32 %v1100, %v1096
        %v1102 = vrot.slane %v1101, 4
        %v1104 = vshll.u32 %v934, 16
        %v1106 = vrot.slane %v1104, 5
        %v1107 = vsel %vm963, %v1102, %v1106
        %v1109 = vshrl.u32 %v893, 16
        %v1111 = vrot.slane %v1109, 4
        %v1112 = vshll.u32 %v893, 16
        %v1114 = vrot.slane %v1112, 5
        %v1115 = vor.u32 %v1111, %v1114
        %v1116 = vrot.slane %v1115, 4
        %v1118 = vshll.u32 %v894, 16
        %v1120 = vrot.slane %v1118, 5
        %v1121 = vsel %vm963, %v1116, %v1120
        %v1122 = vshrl.u32 %v894, 16
        %v1124 = vrot.slane %v1122, 4
        %v1125 = vor.u32 %v1124, %v1120
        %v1126 = vrot.slane %v1125, 4
        %v1128 = vshll.u32 %v935, 16
        %v1130 = vrot.slane %v1128, 5
        %v1131 = vsel %vm963, %v1126, %v1130
        %v1133 = vshrl.u32 %v895, 16
        %v1135 = vrot.slane %v1133, 4
        %v1136 = vshll.u32 %v895, 16
        %v1138 = vrot.slane %v1136, 5
        %v1139 = vor.u32 %v1135, %v1138
        %v1140 = vrot.slane %v1139, 4
        %v1142 = vshll.u32 %v896, 16
        %v1144 = vrot.slane %v1142, 5
        %v1145 = vsel %vm963, %v1140, %v1144
        %v1146 = vshrl.u32 %v896, 16
        %v1148 = vrot.slane %v1146, 4
        %v1149 = vor.u32 %v1148, %v1144
        %v1150 = vrot.slane %v1149, 4
        %v1152 = vshll.u32 %v936, 16
        %v1154 = vrot.slane %v1152, 5
        %v1155 = vsel %vm963, %v1150, %v1154
        %v1157 = vshrl.u32 %v897, 16
        %v1159 = vrot.slane %v1157, 4
        %v1160 = vshll.u32 %v897, 16
        %v1162 = vrot.slane %v1160, 5
        %v1163 = vor.u32 %v1159, %v1162
        %v1164 = vrot.slane %v1163, 4
        %v1166 = vshll.u32 %v898, 16
        %v1168 = vrot.slane %v1166, 5
        %v1169 = vsel %vm963, %v1164, %v1168
        %v1170 = vshrl.u32 %v898, 16
        %v1172 = vrot.slane %v1170, 4
        %v1173 = vor.u32 %v1172, %v1168
        %v1174 = vrot.slane %v1173, 4
        %v1176 = vshll.u32 %v937, 16
        %v1178 = vrot.slane %v1176, 5
        %v1179 = vsel %vm963, %v1174, %v1178
        %v1181 = vshrl.u32 %v899, 16
        %v1183 = vrot.slane %v1181, 4
        %v1184 = vshll.u32 %v899, 16
        %v1186 = vrot.slane %v1184, 5
        %v1187 = vor.u32 %v1183, %v1186
        %v1188 = vrot.slane %v1187, 4
        %v1190 = vshll.u32 %v900, 16
        %v1192 = vrot.slane %v1190, 5
        %v1193 = vsel %vm963, %v1188, %v1192
        %v1194 = vshrl.u32 %v900, 16
        %v1196 = vrot.slane %v1194, 4
        %v1197 = vor.u32 %v1196, %v1192
        %v1198 = vrot.slane %v1197, 4
        %v1200 = vshll.u32 %v938, 16
        %v1202 = vrot.slane %v1200, 5
        %v1203 = vsel %vm963, %v1198, %v1202
        %v1205 = vshrl.u32 %v901, 16
        %v1207 = vrot.slane %v1205, 4
        %v1208 = vshll.u32 %v901, 16
        %v1210 = vrot.slane %v1208, 5
        %v1211 = vor.u32 %v1207, %v1210
        %v1212 = vrot.slane %v1211, 4
        %v1214 = vshll.u32 %v902, 16
        %v1216 = vrot.slane %v1214, 5
        %v1217 = vsel %vm963, %v1212, %v1216
        %v1218 = vshrl.u32 %v902, 16
        %v1220 = vrot.slane %v1218, 4
        %v1221 = vor.u32 %v1220, %v1216
        %v1222 = vrot.slane %v1221, 4
        %v1224 = vshll.u32 %v939, 16
        %v1226 = vrot.slane %v1224, 5
        %v1227 = vsel %vm963, %v1222, %v1226
        %v1229 = vshrl.u32 %v903, 16
        %v1231 = vrot.slane %v1229, 4
        %v1232 = vshll.u32 %v903, 16
        %v1234 = vrot.slane %v1232, 5
        %v1235 = vor.u32 %v1231, %v1234
        %v1236 = vrot.slane %v1235, 4
        %v1238 = vshll.u32 %v904, 16
        %v1240 = vrot.slane %v1238, 5
        %v1241 = vsel %vm963, %v1236, %v1240
        %v1242 = vshrl.u32 %v904, 16
        %v1244 = vrot.slane %v1242, 4
        %v1245 = vor.u32 %v1244, %v1240
        %v1246 = vrot.slane %v1245, 4
        %v1248 = vshll.u32 %v940, 16
        %v1250 = vrot.slane %v1248, 5
        %v1251 = vsel %vm963, %v1246, %v1250
        %v1253 = vshrl.u32 %v905, 16
        %v1255 = vrot.slane %v1253, 4
        %v1256 = vshll.u32 %v905, 16
        %v1258 = vrot.slane %v1256, 5
        %v1259 = vor.u32 %v1255, %v1258
        %v1260 = vrot.slane %v1259, 4
        %v1262 = vshll.u32 %v906, 16
        %v1264 = vrot.slane %v1262, 5
        %v1265 = vsel %vm963, %v1260, %v1264
        %v1266 = vshrl.u32 %v906, 16
        %v1268 = vrot.slane %v1266, 4
        %v1269 = vor.u32 %v1268, %v1264
        %v1270 = vrot.slane %v1269, 4
        %v1272 = vshll.u32 %v941, 16
        %v1274 = vrot.slane %v1272, 5
        %v1275 = vsel %vm963, %v1270, %v1274
        %v1277 = vshrl.u32 %v907, 16
        %v1279 = vrot.slane %v1277, 4
        %v1280 = vshll.u32 %v907, 16
        %v1282 = vrot.slane %v1280, 5
        %v1283 = vor.u32 %v1279, %v1282
        %v1284 = vrot.slane %v1283, 4
        %v1286 = vshll.u32 %v908, 16
        %v1288 = vrot.slane %v1286, 5
        %v1289 = vsel %vm963, %v1284, %v1288
        %v1290 = vshrl.u32 %v908, 16
        %v1292 = vrot.slane %v1290, 4
        %v1293 = vor.u32 %v1292, %v1288
        %v1294 = vrot.slane %v1293, 4
        %v1296 = vshll.u32 %v942, 16
        %v1298 = vrot.slane %v1296, 5
        %v1299 = vsel %vm963, %v1294, %v1298
        %v1301 = vshrl.u32 %v909, 16
        %v1303 = vrot.slane %v1301, 4
        %v1304 = vshll.u32 %v909, 16
        %v1306 = vrot.slane %v1304, 5
        %v1307 = vor.u32 %v1303, %v1306
        %v1308 = vrot.slane %v1307, 4
        %v1310 = vshll.u32 %v910, 16
        %v1312 = vrot.slane %v1310, 5
        %v1313 = vsel %vm963, %v1308, %v1312
        %v1314 = vshrl.u32 %v910, 16
        %v1316 = vrot.slane %v1314, 4
        %v1317 = vor.u32 %v1316, %v1312
        %v1318 = vrot.slane %v1317, 4
        %v1320 = vshll.u32 %v943, 16
        %v1322 = vrot.slane %v1320, 5
        %v1323 = vsel %vm963, %v1318, %v1322
        %v1325 = vshrl.u32 %v911, 16
        %v1327 = vrot.slane %v1325, 4
        %v1328 = vshll.u32 %v911, 16
        %v1330 = vrot.slane %v1328, 5
        %v1331 = vor.u32 %v1327, %v1330
        %v1332 = vrot.slane %v1331, 4
        %v1334 = vshll.u32 %v912, 16
        %v1336 = vrot.slane %v1334, 5
        %v1337 = vsel %vm963, %v1332, %v1336
        %v1338 = vshrl.u32 %v912, 16
        %v1340 = vrot.slane %v1338, 4
        %v1341 = vor.u32 %v1340, %v1336
        %v1342 = vrot.slane %v1341, 4
        %v1344 = vshll.u32 %v944, 16
        %v1346 = vrot.slane %v1344, 5
        %v1347 = vsel %vm963, %v1342, %v1346
        %v1348 = vunpack.c.l.b16 %v977
        %v1349 = vunpack.c.l.b16 %v987
        %v1350 = vunpack.c.l.b16 %v1001
        %v1351 = vunpack.c.l.b16 %v1011
        %v1352 = vunpack.c.l.b16 %v1025
        %v1353 = vunpack.c.l.b16 %v1035
        %v1354 = vunpack.c.l.b16 %v1049
        %v1355 = vunpack.c.l.b16 %v1059
        %v1356 = vunpack.c.l.b16 %v1073
        %v1357 = vunpack.c.l.b16 %v1083
        %v1358 = vunpack.c.l.b16 %v1097
        %v1359 = vunpack.c.l.b16 %v1107
        %v1360 = vunpack.c.l.b16 %v1121
        %v1361 = vunpack.c.l.b16 %v1131
        %v1362 = vunpack.c.l.b16 %v1145
        %v1363 = vunpack.c.l.b16 %v1155
        %v1364 = vunpack.c.l.b16 %v1169
        %v1365 = vunpack.c.l.b16 %v1179
        %v1366 = vunpack.c.l.b16 %v1193
        %v1367 = vunpack.c.l.b16 %v1203
        %v1368 = vunpack.c.l.b16 %v1217
        %v1369 = vunpack.c.l.b16 %v1227
        %v1370 = vunpack.c.l.b16 %v1241
        %v1371 = vunpack.c.l.b16 %v1251
        %v1372 = vunpack.c.l.b16 %v1265
        %v1373 = vunpack.c.l.b16 %v1275
        %v1374 = vunpack.c.l.b16 %v1289
        %v1375 = vunpack.c.l.b16 %v1299
        %v1376 = vunpack.c.l.b16 %v1313
        %v1377 = vunpack.c.l.b16 %v1323
        %v1378 = vunpack.c.l.b16 %v1337
        %v1379 = vunpack.c.l.b16 %v1347
        %v1380 = vpack.c.b16 %v1349, %v1348
        %v1381 = vpack.c.b16 %v1351, %v1350
        %v1382 = vpack.c.b16 %v1353, %v1352
        %v1383 = vpack.c.b16 %v1355, %v1354
        %v1384 = vpack.c.b16 %v1357, %v1356
        %v1385 = vpack.c.b16 %v1359, %v1358
        %v1386 = vpack.c.b16 %v1361, %v1360
        %v1387 = vpack.c.b16 %v1363, %v1362
        %v1388 = vpack.c.b16 %v1365, %v1364
        %v1389 = vpack.c.b16 %v1367, %v1366
        %v1390 = vpack.c.b16 %v1369, %v1368
        %v1391 = vpack.c.b16 %v1371, %v1370
        %v1392 = vpack.c.b16 %v1373, %v1372
        %v1393 = vpack.c.b16 %v1375, %v1374
        %v1394 = vpack.c.b16 %v1377, %v1376
        %v1395 = vpack.c.b16 %v1379, %v1378
        %v1428 = vunpack.c.l.b16 %v945
        %v1429 = vunpack.c.l.b16 %v946
        %v1430 = vunpack.c.l.b16 %v947
        %v1431 = vunpack.c.l.b16 %v948
        %v1432 = vunpack.c.l.b16 %v949
        %v1433 = vunpack.c.l.b16 %v950
        %v1434 = vunpack.c.l.b16 %v951
        %v1435 = vunpack.c.l.b16 %v952
        %v1436 = vunpack.c.l.b16 %v953
        %v1437 = vunpack.c.l.b16 %v954
        %v1438 = vunpack.c.l.b16 %v955
        %v1439 = vunpack.c.l.b16 %v956
        %v1440 = vunpack.c.l.b16 %v957
        %v1441 = vunpack.c.l.b16 %v958
        %v1442 = vunpack.c.l.b16 %v959
        %v1443 = vunpack.c.l.b16 %v960
        %v1444 = vpack.c.b16 %v1429, %v1428
        %v1445 = vpack.c.b16 %v1431, %v1430
        %v1446 = vpack.c.b16 %v1433, %v1432
        %v1447 = vpack.c.b16 %v1435, %v1434
        %v1448 = vpack.c.b16 %v1437, %v1436
        %v1449 = vpack.c.b16 %v1439, %v1438
        %v1450 = vpack.c.b16 %v1441, %v1440
        %v1451 = vpack.c.b16 %v1443, %v1442
        %1460 = vmatprep.subr.bf16.mxu0 0
        %1461 = vmatpush1.bf16.msra.mxu0 %v1444
        %1462 = vmatprep.subr.bf16.mxu0 0
        %1463 = vmatpush1.bf16.msra.mxu0 %v1445
        %1464 = vmatprep.subr.bf16.mxu0 0
        %1465 = vmatpush1.bf16.msra.mxu0 %v1446
        %1466 = vmatprep.subr.bf16.mxu0 0
        %1467 = vmatpush1.bf16.msra.mxu0 %v1447
        %1468 = vmatprep.subr.bf16.mxu0 0
        %1469 = vmatpush1.bf16.msra.mxu0 %v1448
        %1470 = vmatprep.subr.bf16.mxu0 0
        %1471 = vmatpush1.bf16.msra.mxu0 %v1449
        %1472 = vmatprep.subr.bf16.mxu0 0
        %1473 = vmatpush1.bf16.msra.mxu0 %v1450
        %1474 = vmatprep.subr.bf16.mxu0 0
        %1475 = vmatpush1.bf16.msra.mxu0 %v1451
        %1476 = vmatprep.subr.bf16.mxu0 0
        %1477 = vmatpush1.bf16.msra.mxu0 0
        %1478 = vmatprep.subr.bf16.mxu0 0
        %1479 = vmatpush1.bf16.msra.mxu0 0
        %1480 = vmatprep.subr.bf16.mxu0 0
        %1481 = vmatpush1.bf16.msra.mxu0 0
        %1482 = vmatprep.subr.bf16.mxu0 0
        %1483 = vmatpush1.bf16.msra.mxu0 0
        %1484 = vmatprep.subr.bf16.mxu0 0
        %1485 = vmatpush1.bf16.msra.mxu0 0
        %1486 = vmatprep.subr.bf16.mxu0 0
        %1487 = vmatpush1.bf16.msra.mxu0 0
        %1488 = vmatprep.subr.bf16.mxu0 0
        %1489 = vmatpush1.bf16.msra.mxu0 0
        %1490 = vmatprep.subr.bf16.mxu0 0
        %1491 = vmatpush1.bf16.msra.mxu0 0
        %1492 = vmatprep.mubr.bf16.mxu0 0
        %1493 = vmatmul.mubr.bf16.gmra.mrb[0].mxu0 %v1380
        %v1494 = vpop.f32.mrb[0].mxu0
        %v1495 = vadd.f32 0.0, %v1494
        %v1496 = vpop.f32.mrb[0].mxu0
        %v1497 = vpop.f32.mrb[0].mxu0
        %v1498 = vadd.f32 0.0, %v1497
        %v1499 = vpop.f32.mrb[0].mxu0
        %1500 = vmatprep.mubr.bf16.mxu0 0
        %1501 = vmatmul.mubr.bf16.gmra.mrb[0].mxu0 %v1381
        %v1502 = vpop.f32.mrb[0].mxu0
        %v1503 = vadd.f32 0.0, %v1502
        %v1504 = vpop.f32.mrb[0].mxu0
        %v1505 = vpop.f32.mrb[0].mxu0
        %v1506 = vadd.f32 0.0, %v1505
        %v1507 = vpop.f32.mrb[0].mxu0
        %1508 = vmatprep.mubr.bf16.mxu0 0
        %1509 = vmatmul.mubr.bf16.gmra.mrb[0].mxu0 %v1382
        %v1510 = vpop.f32.mrb[0].mxu0
        %v1511 = vadd.f32 0.0, %v1510
        %v1512 = vpop.f32.mrb[0].mxu0
        %v1513 = vpop.f32.mrb[0].mxu0
        %v1514 = vadd.f32 0.0, %v1513
        %v1515 = vpop.f32.mrb[0].mxu0
        %1516 = vmatprep.mubr.bf16.mxu0 0
        %1517 = vmatmul.mubr.bf16.gmra.mrb[0].mxu0 %v1383
        %v1518 = vpop.f32.mrb[0].mxu0
        %v1519 = vadd.f32 0.0, %v1518
        %v1520 = vpop.f32.mrb[0].mxu0
        %v1521 = vpop.f32.mrb[0].mxu0
        %v1522 = vadd.f32 0.0, %v1521
        %v1523 = vpop.f32.mrb[0].mxu0
        %1524 = vmatprep.mubr.bf16.mxu0 0
        %1525 = vmatmul.mubr.bf16.gmra.mrb[0].mxu0 %v1384
        %v1526 = vpop.f32.mrb[0].mxu0
        %v1527 = vadd.f32 0.0, %v1526
        %v1528 = vpop.f32.mrb[0].mxu0
        %v1529 = vpop.f32.mrb[0].mxu0
        %v1530 = vadd.f32 0.0, %v1529
        %v1531 = vpop.f32.mrb[0].mxu0
        %1532 = vmatprep.mubr.bf16.mxu0 0
        %1533 = vmatmul.mubr.bf16.gmra.mrb[0].mxu0 %v1385
        %v1534 = vpop.f32.mrb[0].mxu0
        %v1535 = vadd.f32 0.0, %v1534
        %v1536 = vpop.f32.mrb[0].mxu0
        %v1537 = vpop.f32.mrb[0].mxu0
        %v1538 = vadd.f32 0.0, %v1537
        %v1539 = vpop.f32.mrb[0].mxu0
        %1540 = vmatprep.mubr.bf16.mxu0 0
        %1541 = vmatmul.mubr.bf16.gmra.mrb[0].mxu0 %v1386
        %v1542 = vpop.f32.mrb[0].mxu0
        %v1543 = vadd.f32 0.0, %v1542
        %v1544 = vpop.f32.mrb[0].mxu0
        %v1545 = vpop.f32.mrb[0].mxu0
        %v1546 = vadd.f32 0.0, %v1545
        %v1547 = vpop.f32.mrb[0].mxu0
        %1548 = vmatprep.mubr.bf16.mxu0 0
        %1549 = vmatmul.mubr.bf16.gmra.mrb[0].mxu0 %v1387
        %v1550 = vpop.f32.mrb[0].mxu0
        %v1551 = vadd.f32 0.0, %v1550
        %v1552 = vpop.f32.mrb[0].mxu0
        %v1553 = vpop.f32.mrb[0].mxu0
        %v1554 = vadd.f32 0.0, %v1553
        %v1555 = vpop.f32.mrb[0].mxu0
        %1556 = vmatprep.mubr.bf16.mxu0 0
        %1557 = vmatmul.mubr.bf16.gmra.mrb[0].mxu0 %v1388
        %v1558 = vpop.f32.mrb[0].mxu0
        %v1559 = vadd.f32 0.0, %v1558
        %v1560 = vpop.f32.mrb[0].mxu0
        %v1561 = vpop.f32.mrb[0].mxu0
        %v1562 = vadd.f32 0.0, %v1561
        %v1563 = vpop.f32.mrb[0].mxu0
        %1564 = vmatprep.mubr.bf16.mxu0 0
        %1565 = vmatmul.mubr.bf16.gmra.mrb[0].mxu0 %v1389
        %v1566 = vpop.f32.mrb[0].mxu0
        %v1567 = vadd.f32 0.0, %v1566
        %v1568 = vpop.f32.mrb[0].mxu0
        %v1569 = vpop.f32.mrb[0].mxu0
        %v1570 = vadd.f32 0.0, %v1569
        %v1571 = vpop.f32.mrb[0].mxu0
        %1572 = vmatprep.mubr.bf16.mxu0 0
        %1573 = vmatmul.mubr.bf16.gmra.mrb[0].mxu0 %v1390
        %v1574 = vpop.f32.mrb[0].mxu0
        %v1575 = vadd.f32 0.0, %v1574
        %v1576 = vpop.f32.mrb[0].mxu0
        %v1577 = vpop.f32.mrb[0].mxu0
        %v1578 = vadd.f32 0.0, %v1577
        %v1579 = vpop.f32.mrb[0].mxu0
        %1580 = vmatprep.mubr.bf16.mxu0 0
        %1581 = vmatmul.mubr.bf16.gmra.mrb[0].mxu0 %v1391
        %v1582 = vpop.f32.mrb[0].mxu0
        %v1583 = vadd.f32 0.0, %v1582
        %v1584 = vpop.f32.mrb[0].mxu0
        %v1585 = vpop.f32.mrb[0].mxu0
        %v1586 = vadd.f32 0.0, %v1585
        %v1587 = vpop.f32.mrb[0].mxu0
        %1588 = vmatprep.mubr.bf16.mxu0 0
        %1589 = vmatmul.mubr.bf16.gmra.mrb[0].mxu0 %v1392
        %v1590 = vpop.f32.mrb[0].mxu0
        %v1591 = vadd.f32 0.0, %v1590
        %v1592 = vpop.f32.mrb[0].mxu0
        %v1593 = vpop.f32.mrb[0].mxu0
        %v1594 = vadd.f32 0.0, %v1593
        %v1595 = vpop.f32.mrb[0].mxu0
        %1596 = vmatprep.mubr.bf16.mxu0 0
        %1597 = vmatmul.mubr.bf16.gmra.mrb[0].mxu0 %v1393
        %v1598 = vpop.f32.mrb[0].mxu0
        %v1599 = vadd.f32 0.0, %v1598
        %v1600 = vpop.f32.mrb[0].mxu0
        %v1601 = vpop.f32.mrb[0].mxu0
        %v1602 = vadd.f32 0.0, %v1601
        %v1603 = vpop.f32.mrb[0].mxu0
        %1604 = vmatprep.mubr.bf16.mxu0 0
        %1605 = vmatmul.mubr.bf16.gmra.mrb[0].mxu0 %v1394
        %v1606 = vpop.f32.mrb[0].mxu0
        %v1607 = vadd.f32 0.0, %v1606
        %v1608 = vpop.f32.mrb[0].mxu0
        %v1609 = vpop.f32.mrb[0].mxu0
        %v1610 = vadd.f32 0.0, %v1609
        %v1611 = vpop.f32.mrb[0].mxu0
        %1612 = vmatprep.mubr.bf16.mxu0 0
        %1613 = vmatmul.mubr.bf16.gmra.mrb[0].mxu0 %v1395
        %v1614 = vpop.f32.mrb[0].mxu0
        %v1615 = vadd.f32 0.0, %v1614
        %v1616 = vpop.f32.mrb[0].mxu0
        %v1617 = vpop.f32.mrb[0].mxu0
        %v1618 = vadd.f32 0.0, %v1617
        %v1619 = vpop.f32.mrb[0].mxu0
        %1620 = vdwg.mxu0
        %v1653 = vunpack.c.l.b16 %v881
        %v1654 = vunpack.c.l.b16 %v882
        %v1655 = vunpack.c.l.b16 %v883
        %v1656 = vunpack.c.l.b16 %v884
        %v1657 = vunpack.c.l.b16 %v885
        %v1658 = vunpack.c.l.b16 %v886
        %v1659 = vunpack.c.l.b16 %v887
        %v1660 = vunpack.c.l.b16 %v888
        %v1661 = vunpack.c.l.b16 %v889
        %v1662 = vunpack.c.l.b16 %v890
        %v1663 = vunpack.c.l.b16 %v891
        %v1664 = vunpack.c.l.b16 %v892
        %v1665 = vunpack.c.l.b16 %v893
        %v1666 = vunpack.c.l.b16 %v894
        %v1667 = vunpack.c.l.b16 %v895
        %v1668 = vunpack.c.l.b16 %v896
        %v1669 = vunpack.c.l.b16 %v897
        %v1670 = vunpack.c.l.b16 %v898
        %v1671 = vunpack.c.l.b16 %v899
        %v1672 = vunpack.c.l.b16 %v900
        %v1673 = vunpack.c.l.b16 %v901
        %v1674 = vunpack.c.l.b16 %v902
        %v1675 = vunpack.c.l.b16 %v903
        %v1676 = vunpack.c.l.b16 %v904
        %v1677 = vunpack.c.l.b16 %v905
        %v1678 = vunpack.c.l.b16 %v906
        %v1679 = vunpack.c.l.b16 %v907
        %v1680 = vunpack.c.l.b16 %v908
        %v1681 = vunpack.c.l.b16 %v909
        %v1682 = vunpack.c.l.b16 %v910
        %v1683 = vunpack.c.l.b16 %v911
        %v1684 = vunpack.c.l.b16 %v912
        %v1685 = vpack.c.b16 %v1654, %v1653
        %v1686 = vpack.c.b16 %v1656, %v1655
        %v1687 = vpack.c.b16 %v1658, %v1657
        %v1688 = vpack.c.b16 %v1660, %v1659
        %v1689 = vpack.c.b16 %v1662, %v1661
        %v1690 = vpack.c.b16 %v1664, %v1663
        %v1691 = vpack.c.b16 %v1666, %v1665
        %v1692 = vpack.c.b16 %v1668, %v1667
        %v1693 = vpack.c.b16 %v1670, %v1669
        %v1694 = vpack.c.b16 %v1672, %v1671
        %v1695 = vpack.c.b16 %v1674, %v1673
        %v1696 = vpack.c.b16 %v1676, %v1675
        %v1697 = vpack.c.b16 %v1678, %v1677
        %v1698 = vpack.c.b16 %v1680, %v1679
        %v1699 = vpack.c.b16 %v1682, %v1681
        %v1700 = vpack.c.b16 %v1684, %v1683
        %v1733 = vunpack.c.l.b16 %v913
        %v1734 = vunpack.c.l.b16 %v914
        %v1735 = vunpack.c.l.b16 %v915
        %v1736 = vunpack.c.l.b16 %v916
        %v1737 = vunpack.c.l.b16 %v917
        %v1738 = vunpack.c.l.b16 %v918
        %v1739 = vunpack.c.l.b16 %v919
        %v1740 = vunpack.c.l.b16 %v920
        %v1741 = vunpack.c.l.b16 %v921
        %v1742 = vunpack.c.l.b16 %v922
        %v1743 = vunpack.c.l.b16 %v923
        %v1744 = vunpack.c.l.b16 %v924
        %v1745 = vunpack.c.l.b16 %v925
        %v1746 = vunpack.c.l.b16 %v926
        %v1747 = vunpack.c.l.b16 %v927
        %v1748 = vunpack.c.l.b16 %v928
        %v1749 = vpack.c.b16 %v1734, %v1733
        %v1750 = vpack.c.b16 %v1736, %v1735
        %v1751 = vpack.c.b16 %v1738, %v1737
        %v1752 = vpack.c.b16 %v1740, %v1739
        %v1753 = vpack.c.b16 %v1742, %v1741
        %v1754 = vpack.c.b16 %v1744, %v1743
        %v1755 = vpack.c.b16 %v1746, %v1745
        %v1756 = vpack.c.b16 %v1748, %v1747
        %1765 = vmatprep.subr.bf16.mxu0 0
        %1766 = vmatpush1.bf16.msra.mxu0 %v1749
        %1767 = vmatprep.subr.bf16.mxu0 0
        %1768 = vmatpush1.bf16.msra.mxu0 %v1750
        %1769 = vmatprep.subr.bf16.mxu0 0
        %1770 = vmatpush1.bf16.msra.mxu0 %v1751
        %1771 = vmatprep.subr.bf16.mxu0 0
        %1772 = vmatpush1.bf16.msra.mxu0 %v1752
        %1773 = vmatprep.subr.bf16.mxu0 0
        %1774 = vmatpush1.bf16.msra.mxu0 %v1753
        %1775 = vmatprep.subr.bf16.mxu0 0
        %1776 = vmatpush1.bf16.msra.mxu0 %v1754
        %1777 = vmatprep.subr.bf16.mxu0 0
        %1778 = vmatpush1.bf16.msra.mxu0 %v1755
        %1779 = vmatprep.subr.bf16.mxu0 0
        %1780 = vmatpush1.bf16.msra.mxu0 %v1756
        %1781 = vmatprep.subr.bf16.mxu0 0
        %1782 = vmatpush1.bf16.msra.mxu0 0
        %1783 = vmatprep.subr.bf16.mxu0 0
        %1784 = vmatpush1.bf16.msra.mxu0 0
        %1785 = vmatprep.subr.bf16.mxu0 0
        %1786 = vmatpush1.bf16.msra.mxu0 0
        %1787 = vmatprep.subr.bf16.mxu0 0
        %1788 = vmatpush1.bf16.msra.mxu0 0
        %1789 = vmatprep.subr.bf16.mxu0 0
        %1790 = vmatpush1.bf16.msra.mxu0 0
        %1791 = vmatprep.subr.bf16.mxu0 0
        %1792 = vmatpush1.bf16.msra.mxu0 0
        %1793 = vmatprep.subr.bf16.mxu0 0
        %1794 = vmatpush1.bf16.msra.mxu0 0
        %1795 = vmatprep.subr.bf16.mxu0 0
        %1796 = vmatpush1.bf16.msra.mxu0 0
        %1797 = vmatprep.mubr.bf16.mxu0 0
        %1798 = vmatmul.mubr.bf16.gmra.mrb[0].mxu0 %v1685
        %v1799 = vpop.f32.mrb[0].mxu0
        %v1800 = vadd.f32 %v1495, %v1799
        %v1801 = vpop.f32.mrb[0].mxu0
        %v1802 = vpop.f32.mrb[0].mxu0
        %v1803 = vadd.f32 %v1498, %v1802
        %v1804 = vpop.f32.mrb[0].mxu0
        %1805 = vmatprep.mubr.bf16.mxu0 0
        %1806 = vmatmul.mubr.bf16.gmra.mrb[0].mxu0 %v1686
        %v1807 = vpop.f32.mrb[0].mxu0
        %v1808 = vadd.f32 %v1503, %v1807
        %v1809 = vpop.f32.mrb[0].mxu0
        %v1810 = vpop.f32.mrb[0].mxu0
        %v1811 = vadd.f32 %v1506, %v1810
        %v1812 = vpop.f32.mrb[0].mxu0
        %1813 = vmatprep.mubr.bf16.mxu0 0
        %1814 = vmatmul.mubr.bf16.gmra.mrb[0].mxu0 %v1687
        %v1815 = vpop.f32.mrb[0].mxu0
        %v1816 = vadd.f32 %v1511, %v1815
        %v1817 = vpop.f32.mrb[0].mxu0
        %v1818 = vpop.f32.mrb[0].mxu0
        %v1819 = vadd.f32 %v1514, %v1818
        %v1820 = vpop.f32.mrb[0].mxu0
        %1821 = vmatprep.mubr.bf16.mxu0 0
        %1822 = vmatmul.mubr.bf16.gmra.mrb[0].mxu0 %v1688
        %v1823 = vpop.f32.mrb[0].mxu0
        %v1824 = vadd.f32 %v1519, %v1823
        %v1825 = vpop.f32.mrb[0].mxu0
        %v1826 = vpop.f32.mrb[0].mxu0
        %v1827 = vadd.f32 %v1522, %v1826
        %v1828 = vpop.f32.mrb[0].mxu0
        %1829 = vmatprep.mubr.bf16.mxu0 0
        %1830 = vmatmul.mubr.bf16.gmra.mrb[0].mxu0 %v1689
        %v1831 = vpop.f32.mrb[0].mxu0
        %v1832 = vadd.f32 %v1527, %v1831
        %v1833 = vpop.f32.mrb[0].mxu0
        %v1834 = vpop.f32.mrb[0].mxu0
        %v1835 = vadd.f32 %v1530, %v1834
        %v1836 = vpop.f32.mrb[0].mxu0
        %1837 = vmatprep.mubr.bf16.mxu0 0
        %1838 = vmatmul.mubr.bf16.gmra.mrb[0].mxu0 %v1690
        %v1839 = vpop.f32.mrb[0].mxu0
        %v1840 = vadd.f32 %v1535, %v1839
        %v1841 = vpop.f32.mrb[0].mxu0
        %v1842 = vpop.f32.mrb[0].mxu0
        %v1843 = vadd.f32 %v1538, %v1842
        %v1844 = vpop.f32.mrb[0].mxu0
        %1845 = vmatprep.mubr.bf16.mxu0 0
        %1846 = vmatmul.mubr.bf16.gmra.mrb[0].mxu0 %v1691
        %v1847 = vpop.f32.mrb[0].mxu0
        %v1848 = vadd.f32 %v1543, %v1847
        %v1849 = vpop.f32.mrb[0].mxu0
        %v1850 = vpop.f32.mrb[0].mxu0
        %v1851 = vadd.f32 %v1546, %v1850
        %v1852 = vpop.f32.mrb[0].mxu0
        %1853 = vmatprep.mubr.bf16.mxu0 0
        %1854 = vmatmul.mubr.bf16.gmra.mrb[0].mxu0 %v1692
        %v1855 = vpop.f32.mrb[0].mxu0
        %v1856 = vadd.f32 %v1551, %v1855
        %v1857 = vpop.f32.mrb[0].mxu0
        %v1858 = vpop.f32.mrb[0].mxu0
        %v1859 = vadd.f32 %v1554, %v1858
        %v1860 = vpop.f32.mrb[0].mxu0
        %1861 = vmatprep.mubr.bf16.mxu0 0
        %1862 = vmatmul.mubr.bf16.gmra.mrb[0].mxu0 %v1693
        %v1863 = vpop.f32.mrb[0].mxu0
        %v1864 = vadd.f32 %v1559, %v1863
        %v1865 = vpop.f32.mrb[0].mxu0
        %v1866 = vpop.f32.mrb[0].mxu0
        %v1867 = vadd.f32 %v1562, %v1866
        %v1868 = vpop.f32.mrb[0].mxu0
        %1869 = vmatprep.mubr.bf16.mxu0 0
        %1870 = vmatmul.mubr.bf16.gmra.mrb[0].mxu0 %v1694
        %v1871 = vpop.f32.mrb[0].mxu0
        %v1872 = vadd.f32 %v1567, %v1871
        %v1873 = vpop.f32.mrb[0].mxu0
        %v1874 = vpop.f32.mrb[0].mxu0
        %v1875 = vadd.f32 %v1570, %v1874
        %v1876 = vpop.f32.mrb[0].mxu0
        %1877 = vmatprep.mubr.bf16.mxu0 0
        %1878 = vmatmul.mubr.bf16.gmra.mrb[0].mxu0 %v1695
        %v1879 = vpop.f32.mrb[0].mxu0
        %v1880 = vadd.f32 %v1575, %v1879
        %v1881 = vpop.f32.mrb[0].mxu0
        %v1882 = vpop.f32.mrb[0].mxu0
        %v1883 = vadd.f32 %v1578, %v1882
        %v1884 = vpop.f32.mrb[0].mxu0
        %1885 = vmatprep.mubr.bf16.mxu0 0
        %1886 = vmatmul.mubr.bf16.gmra.mrb[0].mxu0 %v1696
        %v1887 = vpop.f32.mrb[0].mxu0
        %v1888 = vadd.f32 %v1583, %v1887
        %v1889 = vpop.f32.mrb[0].mxu0
        %v1890 = vpop.f32.mrb[0].mxu0
        %v1891 = vadd.f32 %v1586, %v1890
        %v1892 = vpop.f32.mrb[0].mxu0
        %1893 = vmatprep.mubr.bf16.mxu0 0
        %1894 = vmatmul.mubr.bf16.gmra.mrb[0].mxu0 %v1697
        %v1895 = vpop.f32.mrb[0].mxu0
        %v1896 = vadd.f32 %v1591, %v1895
        %v1897 = vpop.f32.mrb[0].mxu0
        %v1898 = vpop.f32.mrb[0].mxu0
        %v1899 = vadd.f32 %v1594, %v1898
        %v1900 = vpop.f32.mrb[0].mxu0
        %1901 = vmatprep.mubr.bf16.mxu0 0
        %1902 = vmatmul.mubr.bf16.gmra.mrb[0].mxu0 %v1698
        %v1903 = vpop.f32.mrb[0].mxu0
        %v1904 = vadd.f32 %v1599, %v1903
        %v1905 = vpop.f32.mrb[0].mxu0
        %v1906 = vpop.f32.mrb[0].mxu0
        %v1907 = vadd.f32 %v1602, %v1906
        %v1908 = vpop.f32.mrb[0].mxu0
        %1909 = vmatprep.mubr.bf16.mxu0 0
        %1910 = vmatmul.mubr.bf16.gmra.mrb[0].mxu0 %v1699
        %v1911 = vpop.f32.mrb[0].mxu0
        %v1912 = vadd.f32 %v1607, %v1911
        %v1913 = vpop.f32.mrb[0].mxu0
        %v1914 = vpop.f32.mrb[0].mxu0
        %v1915 = vadd.f32 %v1610, %v1914
        %v1916 = vpop.f32.mrb[0].mxu0
        %1917 = vmatprep.mubr.bf16.mxu0 0
        %1918 = vmatmul.mubr.bf16.gmra.mrb[0].mxu0 %v1700
        %v1919 = vpop.f32.mrb[0].mxu0
        %v1920 = vadd.f32 %v1615, %v1919
        %v1921 = vpop.f32.mrb[0].mxu0
        %v1922 = vpop.f32.mrb[0].mxu0
        %v1923 = vadd.f32 %v1618, %v1922
        %v1924 = vpop.f32.mrb[0].mxu0
        %1925 = vdwg.mxu0
        %v1926 = vld [vmem:[#allocation2] sm:$0xe]
        %v1927 = vld [vmem:[#allocation2 + $0xc] sm:$0xe]
        %v1928 = vld [vmem:[#allocation2 + $0x18] sm:$0xe]
        %v1929 = vld [vmem:[#allocation2 + $0x24] sm:$0xe]
        %v1930 = vld [vmem:[#allocation2 + $0x30] sm:$0xe]
        %v1931 = vld [vmem:[#allocation2 + $0x3c] sm:$0xe]
        %v1932 = vld [vmem:[#allocation2 + $0x48] sm:$0xe]
        %v1933 = vld [vmem:[#allocation2 + $0x54] sm:$0xe]
        %v1934 = vld [vmem:[#allocation2 + $0x60] sm:$0xe]
        %v1935 = vld [vmem:[#allocation2 + $0x6c] sm:$0xe]
        %v1936 = vld [vmem:[#allocation2 + $0x78] sm:$0xe]
        %v1937 = vld [vmem:[#allocation2 + $0x84] sm:$0xe]
        %v1938 = vld [vmem:[#allocation2 + $0x90] sm:$0xe]
        %v1939 = vld [vmem:[#allocation2 + $0x9c] sm:$0xe]
        %v1940 = vld [vmem:[#allocation2 + $0xa8] sm:$0xe]
        %v1941 = vld [vmem:[#allocation2 + $0xb4] sm:$0xe]
        %v1942 = vld [vmem:[#allocation7 + $0x80] sm:$0xf]
        %v1943 = vld [vmem:[#allocation7 + $0x84] sm:$0xf]
        %v1944 = vld [vmem:[#allocation7 + $0x88] sm:$0xf]
        %v1945 = vld [vmem:[#allocation7 + $0x8c] sm:$0xf]
        %v1946 = vld [vmem:[#allocation7 + $0x90] sm:$0xf]
        %v1947 = vld [vmem:[#allocation7 + $0x94] sm:$0xf]
        %v1948 = vld [vmem:[#allocation7 + $0x98] sm:$0xf]
        %v1949 = vld [vmem:[#allocation7 + $0x9c] sm:$0xf]
        %v1950 = vld [vmem:[#allocation7 + $0xa0] sm:$0xf]
        %v1951 = vld [vmem:[#allocation7 + $0xa4] sm:$0xf]
        %v1952 = vld [vmem:[#allocation7 + $0xa8] sm:$0xf]
        %v1953 = vld [vmem:[#allocation7 + $0xac] sm:$0xf]
        %v1954 = vld [vmem:[#allocation7 + $0xb0] sm:$0xf]
        %v1955 = vld [vmem:[#allocation7 + $0xb4] sm:$0xf]
        %v1956 = vld [vmem:[#allocation7 + $0xb8] sm:$0xf]
        %v1957 = vld [vmem:[#allocation7 + $0xbc] sm:$0xf]
        %vm1990 = vcmask 1042432
        %vm1991 = vcmask 1046532
        %vm1992 = vmor %vm1990, %vm1991
        %v1993 = vrot.slane %v1926, 5
        %v1994 = vrot.slane %v1993, 4
        %v1995 = vrot.slane %v882, 5
        %v1996 = vsel %vm1992, %v1994, %v1995
        %v1997 = vrot.slane %v1995, 4
        %v1998 = vrot.slane %v929, 5
        %v1999 = vsel %vm1992, %v1997, %v1998
        %v2000 = vrot.slane %v1927, 5
        %v2001 = vrot.slane %v2000, 4
        %v2002 = vrot.slane %v884, 5
        %v2003 = vsel %vm1992, %v2001, %v2002
        %v2004 = vrot.slane %v2002, 4
        %v2005 = vrot.slane %v930, 5
        %v2006 = vsel %vm1992, %v2004, %v2005
        %v2007 = vrot.slane %v1928, 5
        %v2008 = vrot.slane %v2007, 4
        %v2009 = vrot.slane %v886, 5
        %v2010 = vsel %vm1992, %v2008, %v2009
        %v2011 = vrot.slane %v2009, 4
        %v2012 = vrot.slane %v931, 5
        %v2013 = vsel %vm1992, %v2011, %v2012
        %v2014 = vrot.slane %v1929, 5
        %v2015 = vrot.slane %v2014, 4
        %v2016 = vrot.slane %v888, 5
        %v2017 = vsel %vm1992, %v2015, %v2016
        %v2018 = vrot.slane %v2016, 4
        %v2019 = vrot.slane %v932, 5
        %v2020 = vsel %vm1992, %v2018, %v2019
        %v2021 = vrot.slane %v1930, 5
        %v2022 = vrot.slane %v2021, 4
        %v2023 = vrot.slane %v890, 5
        %v2024 = vsel %vm1992, %v2022, %v2023
        %v2025 = vrot.slane %v2023, 4
        %v2026 = vrot.slane %v933, 5
        %v2027 = vsel %vm1992, %v2025, %v2026
        %v2028 = vrot.slane %v1931, 5
        %v2029 = vrot.slane %v2028, 4
        %v2030 = vrot.slane %v892, 5
        %v2031 = vsel %vm1992, %v2029, %v2030
        %v2032 = vrot.slane %v2030, 4
        %v2033 = vrot.slane %v934, 5
        %v2034 = vsel %vm1992, %v2032, %v2033
        %v2035 = vrot.slane %v1932, 5
        %v2036 = vrot.slane %v2035, 4
        %v2037 = vrot.slane %v894, 5
        %v2038 = vsel %vm1992, %v2036, %v2037
        %v2039 = vrot.slane %v2037, 4
        %v2040 = vrot.slane %v935, 5
        %v2041 = vsel %vm1992, %v2039, %v2040
        %v2042 = vrot.slane %v1933, 5
        %v2043 = vrot.slane %v2042, 4
        %v2044 = vrot.slane %v896, 5
        %v2045 = vsel %vm1992, %v2043, %v2044
        %v2046 = vrot.slane %v2044, 4
        %v2047 = vrot.slane %v936, 5
        %v2048 = vsel %vm1992, %v2046, %v2047
        %v2049 = vrot.slane %v1934, 5
        %v2050 = vrot.slane %v2049, 4
        %v2051 = vrot.slane %v898, 5
        %v2052 = vsel %vm1992, %v2050, %v2051
        %v2053 = vrot.slane %v2051, 4
        %v2054 = vrot.slane %v937, 5
        %v2055 = vsel %vm1992, %v2053, %v2054
        %v2056 = vrot.slane %v1935, 5
        %v2057 = vrot.slane %v2056, 4
        %v2058 = vrot.slane %v900, 5
        %v2059 = vsel %vm1992, %v2057, %v2058
        %v2060 = vrot.slane %v2058, 4
        %v2061 = vrot.slane %v938, 5
        %v2062 = vsel %vm1992, %v2060, %v2061
        %v2063 = vrot.slane %v1936, 5
        %v2064 = vrot.slane %v2063, 4
        %v2065 = vrot.slane %v902, 5
        %v2066 = vsel %vm1992, %v2064, %v2065
        %v2067 = vrot.slane %v2065, 4
        %v2068 = vrot.slane %v939, 5
        %v2069 = vsel %vm1992, %v2067, %v2068
        %v2070 = vrot.slane %v1937, 5
        %v2071 = vrot.slane %v2070, 4
        %v2072 = vrot.slane %v904, 5
        %v2073 = vsel %vm1992, %v2071, %v2072
        %v2074 = vrot.slane %v2072, 4
        %v2075 = vrot.slane %v940, 5
        %v2076 = vsel %vm1992, %v2074, %v2075
        %v2077 = vrot.slane %v1938, 5
        %v2078 = vrot.slane %v2077, 4
        %v2079 = vrot.slane %v906, 5
        %v2080 = vsel %vm1992, %v2078, %v2079
        %v2081 = vrot.slane %v2079, 4
        %v2082 = vrot.slane %v941, 5
        %v2083 = vsel %vm1992, %v2081, %v2082
        %v2084 = vrot.slane %v1939, 5
        %v2085 = vrot.slane %v2084, 4
        %v2086 = vrot.slane %v908, 5
        %v2087 = vsel %vm1992, %v2085, %v2086
        %v2088 = vrot.slane %v2086, 4
        %v2089 = vrot.slane %v942, 5
        %v2090 = vsel %vm1992, %v2088, %v2089
        %v2091 = vrot.slane %v1940, 5
        %v2092 = vrot.slane %v2091, 4
        %v2093 = vrot.slane %v910, 5
        %v2094 = vsel %vm1992, %v2092, %v2093
        %v2095 = vrot.slane %v2093, 4
        %v2096 = vrot.slane %v943, 5
        %v2097 = vsel %vm1992, %v2095, %v2096
        %v2098 = vrot.slane %v1941, 5
        %v2099 = vrot.slane %v2098, 4
        %v2100 = vrot.slane %v912, 5
        %v2101 = vsel %vm1992, %v2099, %v2100
        %v2102 = vrot.slane %v2100, 4
        %v2103 = vrot.slane %v944, 5
        %v2104 = vsel %vm1992, %v2102, %v2103
        %v2105 = vunpack.c.l.b16 %v1996
        %v2106 = vunpack.c.l.b16 %v1999
        %v2107 = vunpack.c.l.b16 %v2003
        %v2108 = vunpack.c.l.b16 %v2006
        %v2109 = vunpack.c.l.b16 %v2010
        %v2110 = vunpack.c.l.b16 %v2013
        %v2111 = vunpack.c.l.b16 %v2017
        %v2112 = vunpack.c.l.b16 %v2020
        %v2113 = vunpack.c.l.b16 %v2024
        %v2114 = vunpack.c.l.b16 %v2027
        %v2115 = vunpack.c.l.b16 %v2031
        %v2116 = vunpack.c.l.b16 %v2034
        %v2117 = vunpack.c.l.b16 %v2038
        %v2118 = vunpack.c.l.b16 %v2041
        %v2119 = vunpack.c.l.b16 %v2045
        %v2120 = vunpack.c.l.b16 %v2048
        %v2121 = vunpack.c.l.b16 %v2052
        %v2122 = vunpack.c.l.b16 %v2055
        %v2123 = vunpack.c.l.b16 %v2059
        %v2124 = vunpack.c.l.b16 %v2062
        %v2125 = vunpack.c.l.b16 %v2066
        %v2126 = vunpack.c.l.b16 %v2069
        %v2127 = vunpack.c.l.b16 %v2073
        %v2128 = vunpack.c.l.b16 %v2076
        %v2129 = vunpack.c.l.b16 %v2080
        %v2130 = vunpack.c.l.b16 %v2083
        %v2131 = vunpack.c.l.b16 %v2087
        %v2132 = vunpack.c.l.b16 %v2090
        %v2133 = vunpack.c.l.b16 %v2094
        %v2134 = vunpack.c.l.b16 %v2097
        %v2135 = vunpack.c.l.b16 %v2101
        %v2136 = vunpack.c.l.b16 %v2104
        %v2137 = vpack.c.b16 %v2106, %v2105
        %v2138 = vpack.c.b16 %v2108, %v2107
        %v2139 = vpack.c.b16 %v2110, %v2109
        %v2140 = vpack.c.b16 %v2112, %v2111
        %v2141 = vpack.c.b16 %v2114, %v2113
        %v2142 = vpack.c.b16 %v2116, %v2115
        %v2143 = vpack.c.b16 %v2118, %v2117
        %v2144 = vpack.c.b16 %v2120, %v2119
        %v2145 = vpack.c.b16 %v2122, %v2121
        %v2146 = vpack.c.b16 %v2124, %v2123
        %v2147 = vpack.c.b16 %v2126, %v2125
        %v2148 = vpack.c.b16 %v2128, %v2127
        %v2149 = vpack.c.b16 %v2130, %v2129
        %v2150 = vpack.c.b16 %v2132, %v2131
        %v2151 = vpack.c.b16 %v2134, %v2133
        %v2152 = vpack.c.b16 %v2136, %v2135
        %v2185 = vunpack.c.l.b16 %v1942
        %v2186 = vunpack.c.l.b16 %v1943
        %v2187 = vunpack.c.l.b16 %v1944
        %v2188 = vunpack.c.l.b16 %v1945
        %v2189 = vunpack.c.l.b16 %v1946
        %v2190 = vunpack.c.l.b16 %v1947
        %v2191 = vunpack.c.l.b16 %v1948
        %v2192 = vunpack.c.l.b16 %v1949
        %v2193 = vunpack.c.l.b16 %v1950
        %v2194 = vunpack.c.l.b16 %v1951
        %v2195 = vunpack.c.l.b16 %v1952
        %v2196 = vunpack.c.l.b16 %v1953
        %v2197 = vunpack.c.l.b16 %v1954
        %v2198 = vunpack.c.l.b16 %v1955
        %v2199 = vunpack.c.l.b16 %v1956
        %v2200 = vunpack.c.l.b16 %v1957
        %v2201 = vpack.c.b16 %v2186, %v2185
        %v2202 = vpack.c.b16 %v2188, %v2187
        %v2203 = vpack.c.b16 %v2190, %v2189
        %v2204 = vpack.c.b16 %v2192, %v2191
        %v2205 = vpack.c.b16 %v2194, %v2193
        %v2206 = vpack.c.b16 %v2196, %v2195
        %v2207 = vpack.c.b16 %v2198, %v2197
        %v2208 = vpack.c.b16 %v2200, %v2199
        %2217 = vmatprep.subr.bf16.mxu0 0
        %2218 = vmatpush1.bf16.msra.mxu0 %v2201
        %2219 = vmatprep.subr.bf16.mxu0 0
        %2220 = vmatpush1.bf16.msra.mxu0 %v2202
        %2221 = vmatprep.subr.bf16.mxu0 0
        %2222 = vmatpush1.bf16.msra.mxu0 %v2203
        %2223 = vmatprep.subr.bf16.mxu0 0
        %2224 = vmatpush1.bf16.msra.mxu0 %v2204
        %2225 = vmatprep.subr.bf16.mxu0 0
        %2226 = vmatpush1.bf16.msra.mxu0 %v2205
        %2227 = vmatprep.subr.bf16.mxu0 0
        %2228 = vmatpush1.bf16.msra.mxu0 %v2206
        %2229 = vmatprep.subr.bf16.mxu0 0
        %2230 = vmatpush1.bf16.msra.mxu0 %v2207
        %2231 = vmatprep.subr.bf16.mxu0 0
        %2232 = vmatpush1.bf16.msra.mxu0 %v2208
        %2233 = vmatprep.subr.bf16.mxu0 0
        %2234 = vmatpush1.bf16.msra.mxu0 0
        %2235 = vmatprep.subr.bf16.mxu0 0
        %2236 = vmatpush1.bf16.msra.mxu0 0
        %2237 = vmatprep.subr.bf16.mxu0 0
        %2238 = vmatpush1.bf16.msra.mxu0 0
        %2239 = vmatprep.subr.bf16.mxu0 0
        %2240 = vmatpush1.bf16.msra.mxu0 0
        %2241 = vmatprep.subr.bf16.mxu0 0
        %2242 = vmatpush1.bf16.msra.mxu0 0
        %2243 = vmatprep.subr.bf16.mxu0 0
        %2244 = vmatpush1.bf16.msra.mxu0 0
        %2245 = vmatprep.subr.bf16.mxu0 0
        %2246 = vmatpush1.bf16.msra.mxu0 0
        %2247 = vmatprep.subr.bf16.mxu0 0
        %2248 = vmatpush1.bf16.msra.mxu0 0
        %2249 = vmatprep.mubr.bf16.mxu0 0
        %2250 = vmatmul.mubr.bf16.gmra.mrb[0].mxu0 %v2137
        %v2251 = vpop.f32.mrb[0].mxu0
        %v2252 = vadd.f32 0.0, %v2251
        %v2253 = vpop.f32.mrb[0].mxu0
        %v2254 = vpop.f32.mrb[0].mxu0
        %v2255 = vadd.f32 0.0, %v2254
        %v2256 = vpop.f32.mrb[0].mxu0
        %2257 = vmatprep.mubr.bf16.mxu0 0
        %2258 = vmatmul.mubr.bf16.gmra.mrb[0].mxu0 %v2138
        %v2259 = vpop.f32.mrb[0].mxu0
        %v2260 = vadd.f32 0.0, %v2259
        %v2261 = vpop.f32.mrb[0].mxu0
        %v2262 = vpop.f32.mrb[0].mxu0
        %v2263 = vadd.f32 0.0, %v2262
        %v2264 = vpop.f32.mrb[0].mxu0
        %2265 = vmatprep.mubr.bf16.mxu0 0
        %2266 = vmatmul.mubr.bf16.gmra.mrb[0].mxu0 %v2139
        %v2267 = vpop.f32.mrb[0].mxu0
        %v2268 = vadd.f32 0.0, %v2267
        %v2269 = vpop.f32.mrb[0].mxu0
        %v2270 = vpop.f32.mrb[0].mxu0
        %v2271 = vadd.f32 0.0, %v2270
        %v2272 = vpop.f32.mrb[0].mxu0
        %2273 = vmatprep.mubr.bf16.mxu0 0
        %2274 = vmatmul.mubr.bf16.gmra.mrb[0].mxu0 %v2140
        %v2275 = vpop.f32.mrb[0].mxu0
        %v2276 = vadd.f32 0.0, %v2275
        %v2277 = vpop.f32.mrb[0].mxu0
        %v2278 = vpop.f32.mrb[0].mxu0
        %v2279 = vadd.f32 0.0, %v2278
        %v2280 = vpop.f32.mrb[0].mxu0
        %2281 = vmatprep.mubr.bf16.mxu0 0
        %2282 = vmatmul.mubr.bf16.gmra.mrb[0].mxu0 %v2141
        %v2283 = vpop.f32.mrb[0].mxu0
        %v2284 = vadd.f32 0.0, %v2283
        %v2285 = vpop.f32.mrb[0].mxu0
        %v2286 = vpop.f32.mrb[0].mxu0
        %v2287 = vadd.f32 0.0, %v2286
        %v2288 = vpop.f32.mrb[0].mxu0
        %2289 = vmatprep.mubr.bf16.mxu0 0
        %2290 = vmatmul.mubr.bf16.gmra.mrb[0].mxu0 %v2142
        %v2291 = vpop.f32.mrb[0].mxu0
        %v2292 = vadd.f32 0.0, %v2291
        %v2293 = vpop.f32.mrb[0].mxu0
        %v2294 = vpop.f32.mrb[0].mxu0
        %v2295 = vadd.f32 0.0, %v2294
        %v2296 = vpop.f32.mrb[0].mxu0
        %2297 = vmatprep.mubr.bf16.mxu0 0
        %2298 = vmatmul.mubr.bf16.gmra.mrb[0].mxu0 %v2143
        %v2299 = vpop.f32.mrb[0].mxu0
        %v2300 = vadd.f32 0.0, %v2299
        %v2301 = vpop.f32.mrb[0].mxu0
        %v2302 = vpop.f32.mrb[0].mxu0
        %v2303 = vadd.f32 0.0, %v2302
        %v2304 = vpop.f32.mrb[0].mxu0
        %2305 = vmatprep.mubr.bf16.mxu0 0
        %2306 = vmatmul.mubr.bf16.gmra.mrb[0].mxu0 %v2144
        %v2307 = vpop.f32.mrb[0].mxu0
        %v2308 = vadd.f32 0.0, %v2307
        %v2309 = vpop.f32.mrb[0].mxu0
        %v2310 = vpop.f32.mrb[0].mxu0
        %v2311 = vadd.f32 0.0, %v2310
        %v2312 = vpop.f32.mrb[0].mxu0
        %2313 = vmatprep.mubr.bf16.mxu0 0
        %2314 = vmatmul.mubr.bf16.gmra.mrb[0].mxu0 %v2145
        %v2315 = vpop.f32.mrb[0].mxu0
        %v2316 = vadd.f32 0.0, %v2315
        %v2317 = vpop.f32.mrb[0].mxu0
        %v2318 = vpop.f32.mrb[0].mxu0
        %v2319 = vadd.f32 0.0, %v2318
        %v2320 = vpop.f32.mrb[0].mxu0
        %2321 = vmatprep.mubr.bf16.mxu0 0
        %2322 = vmatmul.mubr.bf16.gmra.mrb[0].mxu0 %v2146
        %v2323 = vpop.f32.mrb[0].mxu0
        %v2324 = vadd.f32 0.0, %v2323
        %v2325 = vpop.f32.mrb[0].mxu0
        %v2326 = vpop.f32.mrb[0].mxu0
        %v2327 = vadd.f32 0.0, %v2326
        %v2328 = vpop.f32.mrb[0].mxu0
        %2329 = vmatprep.mubr.bf16.mxu0 0
        %2330 = vmatmul.mubr.bf16.gmra.mrb[0].mxu0 %v2147
        %v2331 = vpop.f32.mrb[0].mxu0
        %v2332 = vadd.f32 0.0, %v2331
        %v2333 = vpop.f32.mrb[0].mxu0
        %v2334 = vpop.f32.mrb[0].mxu0
        %v2335 = vadd.f32 0.0, %v2334
        %v2336 = vpop.f32.mrb[0].mxu0
        %2337 = vmatprep.mubr.bf16.mxu0 0
        %2338 = vmatmul.mubr.bf16.gmra.mrb[0].mxu0 %v2148
        %v2339 = vpop.f32.mrb[0].mxu0
        %v2340 = vadd.f32 0.0, %v2339
        %v2341 = vpop.f32.mrb[0].mxu0
        %v2342 = vpop.f32.mrb[0].mxu0
        %v2343 = vadd.f32 0.0, %v2342
        %v2344 = vpop.f32.mrb[0].mxu0
        %2345 = vmatprep.mubr.bf16.mxu0 0
        %2346 = vmatmul.mubr.bf16.gmra.mrb[0].mxu0 %v2149
        %v2347 = vpop.f32.mrb[0].mxu0
        %v2348 = vadd.f32 0.0, %v2347
        %v2349 = vpop.f32.mrb[0].mxu0
        %v2350 = vpop.f32.mrb[0].mxu0
        %v2351 = vadd.f32 0.0, %v2350
        %v2352 = vpop.f32.mrb[0].mxu0
        %2353 = vmatprep.mubr.bf16.mxu0 0
        %2354 = vmatmul.mubr.bf16.gmra.mrb[0].mxu0 %v2150
        %v2355 = vpop.f32.mrb[0].mxu0
        %v2356 = vadd.f32 0.0, %v2355
        %v2357 = vpop.f32.mrb[0].mxu0
        %v2358 = vpop.f32.mrb[0].mxu0
        %v2359 = vadd.f32 0.0, %v2358
        %v2360 = vpop.f32.mrb[0].mxu0
        %2361 = vmatprep.mubr.bf16.mxu0 0
        %2362 = vmatmul.mubr.bf16.gmra.mrb[0].mxu0 %v2151
        %v2363 = vpop.f32.mrb[0].mxu0
        %v2364 = vadd.f32 0.0, %v2363
        %v2365 = vpop.f32.mrb[0].mxu0
        %v2366 = vpop.f32.mrb[0].mxu0
        %v2367 = vadd.f32 0.0, %v2366
        %v2368 = vpop.f32.mrb[0].mxu0
        %2369 = vmatprep.mubr.bf16.mxu0 0
        %2370 = vmatmul.mubr.bf16.gmra.mrb[0].mxu0 %v2152
        %v2371 = vpop.f32.mrb[0].mxu0
        %v2372 = vadd.f32 0.0, %v2371
        %v2373 = vpop.f32.mrb[0].mxu0
        %v2374 = vpop.f32.mrb[0].mxu0
        %v2375 = vadd.f32 0.0, %v2374
        %v2376 = vpop.f32.mrb[0].mxu0
        %2377 = vdwg.mxu0
        %v2378 = vadd.f32 %v1800, %v2252
        %v2379 = vadd.f32 %v1803, %v2255
        %v2380 = vadd.f32 %v1808, %v2260
        %v2381 = vadd.f32 %v1811, %v2263
        %v2382 = vadd.f32 %v1816, %v2268
        %v2383 = vadd.f32 %v1819, %v2271
        %v2384 = vadd.f32 %v1824, %v2276
        %v2385 = vadd.f32 %v1827, %v2279
        %v2386 = vadd.f32 %v1832, %v2284
        %v2387 = vadd.f32 %v1835, %v2287
        %v2388 = vadd.f32 %v1840, %v2292
        %v2389 = vadd.f32 %v1843, %v2295
        %v2390 = vadd.f32 %v1848, %v2300
        %v2391 = vadd.f32 %v1851, %v2303
        %v2392 = vadd.f32 %v1856, %v2308
        %v2393 = vadd.f32 %v1859, %v2311
        %v2394 = vadd.f32 %v1864, %v2316
        %v2395 = vadd.f32 %v1867, %v2319
        %v2396 = vadd.f32 %v1872, %v2324
        %v2397 = vadd.f32 %v1875, %v2327
        %v2398 = vadd.f32 %v1880, %v2332
        %v2399 = vadd.f32 %v1883, %v2335
        %v2400 = vadd.f32 %v1888, %v2340
        %v2401 = vadd.f32 %v1891, %v2343
        %v2402 = vadd.f32 %v1896, %v2348
        %v2403 = vadd.f32 %v1899, %v2351
        %v2404 = vadd.f32 %v1904, %v2356
        %v2405 = vadd.f32 %v1907, %v2359
        %v2406 = vadd.f32 %v1912, %v2364
        %v2407 = vadd.f32 %v1915, %v2367
        %v2408 = vadd.f32 %v1920, %v2372
        %v2409 = vadd.f32 %v1923, %v2375
        %v2410 = vld [vmem:[%s766] sm:$0xf]
        %v2411 = vld [vmem:[%s766 + $0x4] sm:$0xf]
        %v2412 = vld [vmem:[%s766 + $0xc] sm:$0xf]
        %v2413 = vld [vmem:[%s766 + $0x10] sm:$0xf]
        %v2414 = vld [vmem:[%s766 + $0x18] sm:$0xf]
        %v2415 = vld [vmem:[%s766 + $0x1c] sm:$0xf]
        %v2416 = vld [vmem:[%s766 + $0x24] sm:$0xf]
        %v2417 = vld [vmem:[%s766 + $0x28] sm:$0xf]
        %v2418 = vld [vmem:[%s766 + $0x30] sm:$0xf]
        %v2419 = vld [vmem:[%s766 + $0x34] sm:$0xf]
        %v2420 = vld [vmem:[%s766 + $0x3c] sm:$0xf]
        %v2421 = vld [vmem:[%s766 + $0x40] sm:$0xf]
        %v2422 = vld [vmem:[%s766 + $0x48] sm:$0xf]
        %v2423 = vld [vmem:[%s766 + $0x4c] sm:$0xf]
        %v2424 = vld [vmem:[%s766 + $0x54] sm:$0xf]
        %v2425 = vld [vmem:[%s766 + $0x58] sm:$0xf]
        %v2426 = vld [vmem:[%s766 + $0x60] sm:$0xf]
        %v2427 = vld [vmem:[%s766 + $0x64] sm:$0xf]
        %v2428 = vld [vmem:[%s766 + $0x6c] sm:$0xf]
        %v2429 = vld [vmem:[%s766 + $0x70] sm:$0xf]
        %v2430 = vld [vmem:[%s766 + $0x78] sm:$0xf]
        %v2431 = vld [vmem:[%s766 + $0x7c] sm:$0xf]
        %v2432 = vld [vmem:[%s766 + $0x84] sm:$0xf]
        %v2433 = vld [vmem:[%s766 + $0x88] sm:$0xf]
        %v2434 = vld [vmem:[%s766 + $0x90] sm:$0xf]
        %v2435 = vld [vmem:[%s766 + $0x94] sm:$0xf]
        %v2436 = vld [vmem:[%s766 + $0x9c] sm:$0xf]
        %v2437 = vld [vmem:[%s766 + $0xa0] sm:$0xf]
        %v2438 = vld [vmem:[%s766 + $0xa8] sm:$0xf]
        %v2439 = vld [vmem:[%s766 + $0xac] sm:$0xf]
        %v2440 = vld [vmem:[%s766 + $0xb4] sm:$0xf]
        %v2441 = vld [vmem:[%s766 + $0xb8] sm:$0xf]
        %v2442 = vld [vmem:[#allocation7 + $0xc0] sm:$0xf]
        %v2443 = vld [vmem:[#allocation7 + $0xc4] sm:$0xf]
        %v2444 = vld [vmem:[#allocation7 + $0xc8] sm:$0xf]
        %v2445 = vld [vmem:[#allocation7 + $0xcc] sm:$0xf]
        %v2446 = vld [vmem:[#allocation7 + $0xd0] sm:$0xf]
        %v2447 = vld [vmem:[#allocation7 + $0xd4] sm:$0xf]
        %v2448 = vld [vmem:[#allocation7 + $0xd8] sm:$0xf]
        %v2449 = vld [vmem:[#allocation7 + $0xdc] sm:$0xf]
        %v2450 = vld [vmem:[#allocation7 + $0xe0] sm:$0xf]
        %v2451 = vld [vmem:[#allocation7 + $0xe4] sm:$0xf]
        %v2452 = vld [vmem:[#allocation7 + $0xe8] sm:$0xf]
        %v2453 = vld [vmem:[#allocation7 + $0xec] sm:$0xf]
        %v2454 = vld [vmem:[#allocation7 + $0xf0] sm:$0xf]
        %v2455 = vld [vmem:[#allocation7 + $0xf4] sm:$0xf]
        %v2456 = vld [vmem:[#allocation7 + $0xf8] sm:$0xf]
        %v2457 = vld [vmem:[#allocation7 + $0xfc] sm:$0xf]
        %v2490 = vunpack.c.l.b16 %v2410
        %v2491 = vunpack.c.l.b16 %v2411
        %v2492 = vunpack.c.l.b16 %v2412
        %v2493 = vunpack.c.l.b16 %v2413
        %v2494 = vunpack.c.l.b16 %v2414
        %v2495 = vunpack.c.l.b16 %v2415
        %v2496 = vunpack.c.l.b16 %v2416
        %v2497 = vunpack.c.l.b16 %v2417
        %v2498 = vunpack.c.l.b16 %v2418
        %v2499 = vunpack.c.l.b16 %v2419
        %v2500 = vunpack.c.l.b16 %v2420
        %v2501 = vunpack.c.l.b16 %v2421
        %v2502 = vunpack.c.l.b16 %v2422
        %v2503 = vunpack.c.l.b16 %v2423
        %v2504 = vunpack.c.l.b16 %v2424
        %v2505 = vunpack.c.l.b16 %v2425
        %v2506 = vunpack.c.l.b16 %v2426
        %v2507 = vunpack.c.l.b16 %v2427
        %v2508 = vunpack.c.l.b16 %v2428
        %v2509 = vunpack.c.l.b16 %v2429
        %v2510 = vunpack.c.l.b16 %v2430
        %v2511 = vunpack.c.l.b16 %v2431
        %v2512 = vunpack.c.l.b16 %v2432
        %v2513 = vunpack.c.l.b16 %v2433
        %v2514 = vunpack.c.l.b16 %v2434
        %v2515 = vunpack.c.l.b16 %v2435
        %v2516 = vunpack.c.l.b16 %v2436
        %v2517 = vunpack.c.l.b16 %v2437
        %v2518 = vunpack.c.l.b16 %v2438
        %v2519 = vunpack.c.l.b16 %v2439
        %v2520 = vunpack.c.l.b16 %v2440
        %v2521 = vunpack.c.l.b16 %v2441
        %v2522 = vpack.c.b16 %v2491, %v2490
        %v2523 = vpack.c.b16 %v2493, %v2492
        %v2524 = vpack.c.b16 %v2495, %v2494
        %v2525 = vpack.c.b16 %v2497, %v2496
        %v2526 = vpack.c.b16 %v2499, %v2498
        %v2527 = vpack.c.b16 %v2501, %v2500
        %v2528 = vpack.c.b16 %v2503, %v2502
        %v2529 = vpack.c.b16 %v2505, %v2504
        %v2530 = vpack.c.b16 %v2507, %v2506
        %v2531 = vpack.c.b16 %v2509, %v2508
        %v2532 = vpack.c.b16 %v2511, %v2510
        %v2533 = vpack.c.b16 %v2513, %v2512
        %v2534 = vpack.c.b16 %v2515, %v2514
        %v2535 = vpack.c.b16 %v2517, %v2516
        %v2536 = vpack.c.b16 %v2519, %v2518
        %v2537 = vpack.c.b16 %v2521, %v2520
        %v2570 = vunpack.c.l.b16 %v2442
        %v2571 = vunpack.c.l.b16 %v2443
        %v2572 = vunpack.c.l.b16 %v2444
        %v2573 = vunpack.c.l.b16 %v2445
        %v2574 = vunpack.c.l.b16 %v2446
        %v2575 = vunpack.c.l.b16 %v2447
        %v2576 = vunpack.c.l.b16 %v2448
        %v2577 = vunpack.c.l.b16 %v2449
        %v2578 = vunpack.c.l.b16 %v2450
        %v2579 = vunpack.c.l.b16 %v2451
        %v2580 = vunpack.c.l.b16 %v2452
        %v2581 = vunpack.c.l.b16 %v2453
        %v2582 = vunpack.c.l.b16 %v2454
        %v2583 = vunpack.c.l.b16 %v2455
        %v2584 = vunpack.c.l.b16 %v2456
        %v2585 = vunpack.c.l.b16 %v2457
        %v2586 = vpack.c.b16 %v2571, %v2570
        %v2587 = vpack.c.b16 %v2573, %v2572
        %v2588 = vpack.c.b16 %v2575, %v2574
        %v2589 = vpack.c.b16 %v2577, %v2576
        %v2590 = vpack.c.b16 %v2579, %v2578
        %v2591 = vpack.c.b16 %v2581, %v2580
        %v2592 = vpack.c.b16 %v2583, %v2582
        %v2593 = vpack.c.b16 %v2585, %v2584
        %2602 = vmatprep.subr.bf16.mxu0 0
        %2603 = vmatpush1.bf16.msra.mxu0 %v2586
        %2604 = vmatprep.subr.bf16.mxu0 0
        %2605 = vmatpush1.bf16.msra.mxu0 %v2587
        %2606 = vmatprep.subr.bf16.mxu0 0
        %2607 = vmatpush1.bf16.msra.mxu0 %v2588
        %2608 = vmatprep.subr.bf16.mxu0 0
        %2609 = vmatpush1.bf16.msra.mxu0 %v2589
        %2610 = vmatprep.subr.bf16.mxu0 0
        %2611 = vmatpush1.bf16.msra.mxu0 %v2590
        %2612 = vmatprep.subr.bf16.mxu0 0
        %2613 = vmatpush1.bf16.msra.mxu0 %v2591
        %2614 = vmatprep.subr.bf16.mxu0 0
        %2615 = vmatpush1.bf16.msra.mxu0 %v2592
        %2616 = vmatprep.subr.bf16.mxu0 0
        %2617 = vmatpush1.bf16.msra.mxu0 %v2593
        %2618 = vmatprep.subr.bf16.mxu0 0
        %2619 = vmatpush1.bf16.msra.mxu0 0
        %2620 = vmatprep.subr.bf16.mxu0 0
        %2621 = vmatpush1.bf16.msra.mxu0 0
        %2622 = vmatprep.subr.bf16.mxu0 0
        %2623 = vmatpush1.bf16.msra.mxu0 0
        %2624 = vmatprep.subr.bf16.mxu0 0
        %2625 = vmatpush1.bf16.msra.mxu0 0
        %2626 = vmatprep.subr.bf16.mxu0 0
        %2627 = vmatpush1.bf16.msra.mxu0 0
        %2628 = vmatprep.subr.bf16.mxu0 0
        %2629 = vmatpush1.bf16.msra.mxu0 0
        %2630 = vmatprep.subr.bf16.mxu0 0
        %2631 = vmatpush1.bf16.msra.mxu0 0
        %2632 = vmatprep.subr.bf16.mxu0 0
        %2633 = vmatpush1.bf16.msra.mxu0 0
        %2634 = vmatprep.mubr.bf16.mxu0 0
        %2635 = vmatmul.mubr.bf16.gmra.mrb[0].mxu0 %v2522
        %v2636 = vpop.f32.mrb[0].mxu0
        %v2637 = vadd.f32 0.0, %v2636
        %v2638 = vpop.f32.mrb[0].mxu0
        %v2639 = vpop.f32.mrb[0].mxu0
        %v2640 = vadd.f32 0.0, %v2639
        %v2641 = vpop.f32.mrb[0].mxu0
        %2642 = vmatprep.mubr.bf16.mxu0 0
        %2643 = vmatmul.mubr.bf16.gmra.mrb[0].mxu0 %v2523
        %v2644 = vpop.f32.mrb[0].mxu0
        %v2645 = vadd.f32 0.0, %v2644
        %v2646 = vpop.f32.mrb[0].mxu0
        %v2647 = vpop.f32.mrb[0].mxu0
        %v2648 = vadd.f32 0.0, %v2647
        %v2649 = vpop.f32.mrb[0].mxu0
        %2650 = vmatprep.mubr.bf16.mxu0 0
        %2651 = vmatmul.mubr.bf16.gmra.mrb[0].mxu0 %v2524
        %v2652 = vpop.f32.mrb[0].mxu0
        %v2653 = vadd.f32 0.0, %v2652
        %v2654 = vpop.f32.mrb[0].mxu0
        %v2655 = vpop.f32.mrb[0].mxu0
        %v2656 = vadd.f32 0.0, %v2655
        %v2657 = vpop.f32.mrb[0].mxu0
        %2658 = vmatprep.mubr.bf16.mxu0 0
        %2659 = vmatmul.mubr.bf16.gmra.mrb[0].mxu0 %v2525
        %v2660 = vpop.f32.mrb[0].mxu0
        %v2661 = vadd.f32 0.0, %v2660
        %v2662 = vpop.f32.mrb[0].mxu0
        %v2663 = vpop.f32.mrb[0].mxu0
        %v2664 = vadd.f32 0.0, %v2663
        %v2665 = vpop.f32.mrb[0].mxu0
        %2666 = vmatprep.mubr.bf16.mxu0 0
        %2667 = vmatmul.mubr.bf16.gmra.mrb[0].mxu0 %v2526
        %v2668 = vpop.f32.mrb[0].mxu0
        %v2669 = vadd.f32 0.0, %v2668
        %v2670 = vpop.f32.mrb[0].mxu0
        %v2671 = vpop.f32.mrb[0].mxu0
        %v2672 = vadd.f32 0.0, %v2671
        %v2673 = vpop.f32.mrb[0].mxu0
        %2674 = vmatprep.mubr.bf16.mxu0 0
        %2675 = vmatmul.mubr.bf16.gmra.mrb[0].mxu0 %v2527
        %v2676 = vpop.f32.mrb[0].mxu0
        %v2677 = vadd.f32 0.0, %v2676
        %v2678 = vpop.f32.mrb[0].mxu0
        %v2679 = vpop.f32.mrb[0].mxu0
        %v2680 = vadd.f32 0.0, %v2679
        %v2681 = vpop.f32.mrb[0].mxu0
        %2682 = vmatprep.mubr.bf16.mxu0 0
        %2683 = vmatmul.mubr.bf16.gmra.mrb[0].mxu0 %v2528
        %v2684 = vpop.f32.mrb[0].mxu0
        %v2685 = vadd.f32 0.0, %v2684
        %v2686 = vpop.f32.mrb[0].mxu0
        %v2687 = vpop.f32.mrb[0].mxu0
        %v2688 = vadd.f32 0.0, %v2687
        %v2689 = vpop.f32.mrb[0].mxu0
        %2690 = vmatprep.mubr.bf16.mxu0 0
        %2691 = vmatmul.mubr.bf16.gmra.mrb[0].mxu0 %v2529
        %v2692 = vpop.f32.mrb[0].mxu0
        %v2693 = vadd.f32 0.0, %v2692
        %v2694 = vpop.f32.mrb[0].mxu0
        %v2695 = vpop.f32.mrb[0].mxu0
        %v2696 = vadd.f32 0.0, %v2695
        %v2697 = vpop.f32.mrb[0].mxu0
        %2698 = vmatprep.mubr.bf16.mxu0 0
        %2699 = vmatmul.mubr.bf16.gmra.mrb[0].mxu0 %v2530
        %v2700 = vpop.f32.mrb[0].mxu0
        %v2701 = vadd.f32 0.0, %v2700
        %v2702 = vpop.f32.mrb[0].mxu0
        %v2703 = vpop.f32.mrb[0].mxu0
        %v2704 = vadd.f32 0.0, %v2703
        %v2705 = vpop.f32.mrb[0].mxu0
        %2706 = vmatprep.mubr.bf16.mxu0 0
        %2707 = vmatmul.mubr.bf16.gmra.mrb[0].mxu0 %v2531
        %v2708 = vpop.f32.mrb[0].mxu0
        %v2709 = vadd.f32 0.0, %v2708
        %v2710 = vpop.f32.mrb[0].mxu0
        %v2711 = vpop.f32.mrb[0].mxu0
        %v2712 = vadd.f32 0.0, %v2711
        %v2713 = vpop.f32.mrb[0].mxu0
        %2714 = vmatprep.mubr.bf16.mxu0 0
        %2715 = vmatmul.mubr.bf16.gmra.mrb[0].mxu0 %v2532
        %v2716 = vpop.f32.mrb[0].mxu0
        %v2717 = vadd.f32 0.0, %v2716
        %v2718 = vpop.f32.mrb[0].mxu0
        %v2719 = vpop.f32.mrb[0].mxu0
        %v2720 = vadd.f32 0.0, %v2719
        %v2721 = vpop.f32.mrb[0].mxu0
        %2722 = vmatprep.mubr.bf16.mxu0 0
        %2723 = vmatmul.mubr.bf16.gmra.mrb[0].mxu0 %v2533
        %v2724 = vpop.f32.mrb[0].mxu0
        %v2725 = vadd.f32 0.0, %v2724
        %v2726 = vpop.f32.mrb[0].mxu0
        %v2727 = vpop.f32.mrb[0].mxu0
        %v2728 = vadd.f32 0.0, %v2727
        %v2729 = vpop.f32.mrb[0].mxu0
        %2730 = vmatprep.mubr.bf16.mxu0 0
        %2731 = vmatmul.mubr.bf16.gmra.mrb[0].mxu0 %v2534
        %v2732 = vpop.f32.mrb[0].mxu0
        %v2733 = vadd.f32 0.0, %v2732
        %v2734 = vpop.f32.mrb[0].mxu0
        %v2735 = vpop.f32.mrb[0].mxu0
        %v2736 = vadd.f32 0.0, %v2735
        %v2737 = vpop.f32.mrb[0].mxu0
        %2738 = vmatprep.mubr.bf16.mxu0 0
        %2739 = vmatmul.mubr.bf16.gmra.mrb[0].mxu0 %v2535
        %v2740 = vpop.f32.mrb[0].mxu0
        %v2741 = vadd.f32 0.0, %v2740
        %v2742 = vpop.f32.mrb[0].mxu0
        %v2743 = vpop.f32.mrb[0].mxu0
        %v2744 = vadd.f32 0.0, %v2743
        %v2745 = vpop.f32.mrb[0].mxu0
        %2746 = vmatprep.mubr.bf16.mxu0 0
        %2747 = vmatmul.mubr.bf16.gmra.mrb[0].mxu0 %v2536
        %v2748 = vpop.f32.mrb[0].mxu0
        %v2749 = vadd.f32 0.0, %v2748
        %v2750 = vpop.f32.mrb[0].mxu0
        %v2751 = vpop.f32.mrb[0].mxu0
        %v2752 = vadd.f32 0.0, %v2751
        %v2753 = vpop.f32.mrb[0].mxu0
        %2754 = vmatprep.mubr.bf16.mxu0 0
        %2755 = vmatmul.mubr.bf16.gmra.mrb[0].mxu0 %v2537
        %v2756 = vpop.f32.mrb[0].mxu0
        %v2757 = vadd.f32 0.0, %v2756
        %v2758 = vpop.f32.mrb[0].mxu0
        %v2759 = vpop.f32.mrb[0].mxu0
        %v2760 = vadd.f32 0.0, %v2759
        %v2761 = vpop.f32.mrb[0].mxu0
        %2762 = vdwg.mxu0
        %v2763 = vadd.f32 %v2378, %v2637
        %v2764 = vadd.f32 %v2379, %v2640
        %v2765 = vadd.f32 %v2380, %v2645
        %v2766 = vadd.f32 %v2381, %v2648
        %v2767 = vadd.f32 %v2382, %v2653
        %v2768 = vadd.f32 %v2383, %v2656
        %v2769 = vadd.f32 %v2384, %v2661
        %v2770 = vadd.f32 %v2385, %v2664
        %v2771 = vadd.f32 %v2386, %v2669
        %v2772 = vadd.f32 %v2387, %v2672
        %v2773 = vadd.f32 %v2388, %v2677
        %v2774 = vadd.f32 %v2389, %v2680
        %v2775 = vadd.f32 %v2390, %v2685
        %v2776 = vadd.f32 %v2391, %v2688
        %v2777 = vadd.f32 %v2392, %v2693
        %v2778 = vadd.f32 %v2393, %v2696
        %v2779 = vadd.f32 %v2394, %v2701
        %v2780 = vadd.f32 %v2395, %v2704
        %v2781 = vadd.f32 %v2396, %v2709
        %v2782 = vadd.f32 %v2397, %v2712
        %v2783 = vadd.f32 %v2398, %v2717
        %v2784 = vadd.f32 %v2399, %v2720
        %v2785 = vadd.f32 %v2400, %v2725
        %v2786 = vadd.f32 %v2401, %v2728
        %v2787 = vadd.f32 %v2402, %v2733
        %v2788 = vadd.f32 %v2403, %v2736
        %v2789 = vadd.f32 %v2404, %v2741
        %v2790 = vadd.f32 %v2405, %v2744
        %v2791 = vadd.f32 %v2406, %v2749
        %v2792 = vadd.f32 %v2407, %v2752
        %v2793 = vadd.f32 %v2408, %v2757
        %v2794 = vadd.f32 %v2409, %v2760
        %v2795 = vld [vmem:[%s766] sm:$0xf]
        %v2796 = vld [vmem:[%s766 + $0x4] sm:$0xf]
        %v2797 = vld [vmem:[%s766 + $0x8] sm:$0x1]
        %v2798 = vld [vmem:[%s766 + $0xc] sm:$0xf]
        %v2799 = vld [vmem:[%s766 + $0x10] sm:$0xf]
        %v2800 = vld [vmem:[%s766 + $0x14] sm:$0x1]
        %v2801 = vld [vmem:[%s766 + $0x18] sm:$0xf]
        %v2802 = vld [vmem:[%s766 + $0x1c] sm:$0xf]
        %v2803 = vld [vmem:[%s766 + $0x20] sm:$0x1]
        %v2804 = vld [vmem:[%s766 + $0x24] sm:$0xf]
        %v2805 = vld [vmem:[%s766 + $0x28] sm:$0xf]
        %v2806 = vld [vmem:[%s766 + $0x2c] sm:$0x1]
        %v2807 = vld [vmem:[%s766 + $0x30] sm:$0xf]
        %v2808 = vld [vmem:[%s766 + $0x34] sm:$0xf]
        %v2809 = vld [vmem:[%s766 + $0x38] sm:$0x1]
        %v2810 = vld [vmem:[%s766 + $0x3c] sm:$0xf]
        %v2811 = vld [vmem:[%s766 + $0x40] sm:$0xf]
        %v2812 = vld [vmem:[%s766 + $0x44] sm:$0x1]
        %v2813 = vld [vmem:[%s766 + $0x48] sm:$0xf]
        %v2814 = vld [vmem:[%s766 + $0x4c] sm:$0xf]
        %v2815 = vld [vmem:[%s766 + $0x50] sm:$0x1]
        %v2816 = vld [vmem:[%s766 + $0x54] sm:$0xf]
        %v2817 = vld [vmem:[%s766 + $0x58] sm:$0xf]
        %v2818 = vld [vmem:[%s766 + $0x5c] sm:$0x1]
        %v2819 = vld [vmem:[%s766 + $0x60] sm:$0xf]
        %v2820 = vld [vmem:[%s766 + $0x64] sm:$0xf]
        %v2821 = vld [vmem:[%s766 + $0x68] sm:$0x1]
        %v2822 = vld [vmem:[%s766 + $0x6c] sm:$0xf]
        %v2823 = vld [vmem:[%s766 + $0x70] sm:$0xf]
        %v2824 = vld [vmem:[%s766 + $0x74] sm:$0x1]
        %v2825 = vld [vmem:[%s766 + $0x78] sm:$0xf]
        %v2826 = vld [vmem:[%s766 + $0x7c] sm:$0xf]
        %v2827 = vld [vmem:[%s766 + $0x80] sm:$0x1]
        %v2828 = vld [vmem:[%s766 + $0x84] sm:$0xf]
        %v2829 = vld [vmem:[%s766 + $0x88] sm:$0xf]
        %v2830 = vld [vmem:[%s766 + $0x8c] sm:$0x1]
        %v2831 = vld [vmem:[%s766 + $0x90] sm:$0xf]
        %v2832 = vld [vmem:[%s766 + $0x94] sm:$0xf]
        %v2833 = vld [vmem:[%s766 + $0x98] sm:$0x1]
        %v2834 = vld [vmem:[%s766 + $0x9c] sm:$0xf]
        %v2835 = vld [vmem:[%s766 + $0xa0] sm:$0xf]
        %v2836 = vld [vmem:[%s766 + $0xa4] sm:$0x1]
        %v2837 = vld [vmem:[%s766 + $0xa8] sm:$0xf]
        %v2838 = vld [vmem:[%s766 + $0xac] sm:$0xf]
        %v2839 = vld [vmem:[%s766 + $0xb0] sm:$0x1]
        %v2840 = vld [vmem:[%s766 + $0xb4] sm:$0xf]
        %v2841 = vld [vmem:[%s766 + $0xb8] sm:$0xf]
        %v2842 = vld [vmem:[%s766 + $0xbc] sm:$0x1]
        %v2843 = vld [vmem:[#allocation7 + $0x100] sm:$0xf]
        %v2844 = vld [vmem:[#allocation7 + $0x104] sm:$0xf]
        %v2845 = vld [vmem:[#allocation7 + $0x108] sm:$0xf]
        %v2846 = vld [vmem:[#allocation7 + $0x10c] sm:$0xf]
        %v2847 = vld [vmem:[#allocation7 + $0x110] sm:$0xf]
        %v2848 = vld [vmem:[#allocation7 + $0x114] sm:$0xf]
        %v2849 = vld [vmem:[#allocation7 + $0x118] sm:$0xf]
        %v2850 = vld [vmem:[#allocation7 + $0x11c] sm:$0xf]
        %v2851 = vld [vmem:[#allocation7 + $0x120] sm:$0xf]
        %v2852 = vld [vmem:[#allocation7 + $0x124] sm:$0xf]
        %v2853 = vld [vmem:[#allocation7 + $0x128] sm:$0xf]
        %v2854 = vld [vmem:[#allocation7 + $0x12c] sm:$0xf]
        %v2855 = vld [vmem:[#allocation7 + $0x130] sm:$0xf]
        %v2856 = vld [vmem:[#allocation7 + $0x134] sm:$0xf]
        %v2857 = vld [vmem:[#allocation7 + $0x138] sm:$0xf]
        %v2858 = vld [vmem:[#allocation7 + $0x13c] sm:$0xf]
        %v2860 = vshrl.u32 %v2795, 16
        %v2862 = vrot.slane %v2860, 4
        %v2863 = vshll.u32 %v2795, 16
        %v2865 = vrot.slane %v2863, 5
        %v2866 = vor.u32 %v2862, %v2865
        %v2867 = vrot.slane %v2866, 4
        %v2869 = vshll.u32 %v2796, 16
        %v2871 = vrot.slane %v2869, 5
        %v2872 = vsel %vm963, %v2867, %v2871
        %v2873 = vshrl.u32 %v2796, 16
        %v2875 = vrot.slane %v2873, 4
        %v2876 = vor.u32 %v2875, %v2871
        %v2877 = vrot.slane %v2876, 4
        %v2879 = vshll.u32 %v2797, 16
        %v2881 = vrot.slane %v2879, 5
        %v2882 = vsel %vm963, %v2877, %v2881
        %v2884 = vshrl.u32 %v2798, 16
        %v2886 = vrot.slane %v2884, 4
        %v2887 = vshll.u32 %v2798, 16
        %v2889 = vrot.slane %v2887, 5
        %v2890 = vor.u32 %v2886, %v2889
        %v2891 = vrot.slane %v2890, 4
        %v2893 = vshll.u32 %v2799, 16
        %v2895 = vrot.slane %v2893, 5
        %v2896 = vsel %vm963, %v2891, %v2895
        %v2897 = vshrl.u32 %v2799, 16
        %v2899 = vrot.slane %v2897, 4
        %v2900 = vor.u32 %v2899, %v2895
        %v2901 = vrot.slane %v2900, 4
        %v2903 = vshll.u32 %v2800, 16
        %v2905 = vrot.slane %v2903, 5
        %v2906 = vsel %vm963, %v2901, %v2905
        %v2908 = vshrl.u32 %v2801, 16
        %v2910 = vrot.slane %v2908, 4
        %v2911 = vshll.u32 %v2801, 16
        %v2913 = vrot.slane %v2911, 5
        %v2914 = vor.u32 %v2910, %v2913
        %v2915 = vrot.slane %v2914, 4
        %v2917 = vshll.u32 %v2802, 16
        %v2919 = vrot.slane %v2917, 5
        %v2920 = vsel %vm963, %v2915, %v2919
        %v2921 = vshrl.u32 %v2802, 16
        %v2923 = vrot.slane %v2921, 4
        %v2924 = vor.u32 %v2923, %v2919
        %v2925 = vrot.slane %v2924, 4
        %v2927 = vshll.u32 %v2803, 16
        %v2929 = vrot.slane %v2927, 5
        %v2930 = vsel %vm963, %v2925, %v2929
        %v2932 = vshrl.u32 %v2804, 16
        %v2934 = vrot.slane %v2932, 4
        %v2935 = vshll.u32 %v2804, 16
        %v2937 = vrot.slane %v2935, 5
        %v2938 = vor.u32 %v2934, %v2937
        %v2939 = vrot.slane %v2938, 4
        %v2941 = vshll.u32 %v2805, 16
        %v2943 = vrot.slane %v2941, 5
        %v2944 = vsel %vm963, %v2939, %v2943
        %v2945 = vshrl.u32 %v2805, 16
        %v2947 = vrot.slane %v2945, 4
        %v2948 = vor.u32 %v2947, %v2943
        %v2949 = vrot.slane %v2948, 4
        %v2951 = vshll.u32 %v2806, 16
        %v2953 = vrot.slane %v2951, 5
        %v2954 = vsel %vm963, %v2949, %v2953
        %v2956 = vshrl.u32 %v2807, 16
        %v2958 = vrot.slane %v2956, 4
        %v2959 = vshll.u32 %v2807, 16
        %v2961 = vrot.slane %v2959, 5
        %v2962 = vor.u32 %v2958, %v2961
        %v2963 = vrot.slane %v2962, 4
        %v2965 = vshll.u32 %v2808, 16
        %v2967 = vrot.slane %v2965, 5
        %v2968 = vsel %vm963, %v2963, %v2967
        %v2969 = vshrl.u32 %v2808, 16
        %v2971 = vrot.slane %v2969, 4
        %v2972 = vor.u32 %v2971, %v2967
        %v2973 = vrot.slane %v2972, 4
        %v2975 = vshll.u32 %v2809, 16
        %v2977 = vrot.slane %v2975, 5
        %v2978 = vsel %vm963, %v2973, %v2977
        %v2980 = vshrl.u32 %v2810, 16
        %v2982 = vrot.slane %v2980, 4
        %v2983 = vshll.u32 %v2810, 16
        %v2985 = vrot.slane %v2983, 5
        %v2986 = vor.u32 %v2982, %v2985
        %v2987 = vrot.slane %v2986, 4
        %v2989 = vshll.u32 %v2811, 16
        %v2991 = vrot.slane %v2989, 5
        %v2992 = vsel %vm963, %v2987, %v2991
        %v2993 = vshrl.u32 %v2811, 16
        %v2995 = vrot.slane %v2993, 4
        %v2996 = vor.u32 %v2995, %v2991
        %v2997 = vrot.slane %v2996, 4
        %v2999 = vshll.u32 %v2812, 16
        %v3001 = vrot.slane %v2999, 5
        %v3002 = vsel %vm963, %v2997, %v3001
        %v3004 = vshrl.u32 %v2813, 16
        %v3006 = vrot.slane %v3004, 4
        %v3007 = vshll.u32 %v2813, 16
        %v3009 = vrot.slane %v3007, 5
        %v3010 = vor.u32 %v3006, %v3009
        %v3011 = vrot.slane %v3010, 4
        %v3013 = vshll.u32 %v2814, 16
        %v3015 = vrot.slane %v3013, 5
        %v3016 = vsel %vm963, %v3011, %v3015
        %v3017 = vshrl.u32 %v2814, 16
        %v3019 = vrot.slane %v3017, 4
        %v3020 = vor.u32 %v3019, %v3015
        %v3021 = vrot.slane %v3020, 4
        %v3023 = vshll.u32 %v2815, 16
        %v3025 = vrot.slane %v3023, 5
        %v3026 = vsel %vm963, %v3021, %v3025
        %v3028 = vshrl.u32 %v2816, 16
        %v3030 = vrot.slane %v3028, 4
        %v3031 = vshll.u32 %v2816, 16
        %v3033 = vrot.slane %v3031, 5
        %v3034 = vor.u32 %v3030, %v3033
        %v3035 = vrot.slane %v3034, 4
        %v3037 = vshll.u32 %v2817, 16
        %v3039 = vrot.slane %v3037, 5
        %v3040 = vsel %vm963, %v3035, %v3039
        %v3041 = vshrl.u32 %v2817, 16
        %v3043 = vrot.slane %v3041, 4
        %v3044 = vor.u32 %v3043, %v3039
        %v3045 = vrot.slane %v3044, 4
        %v3047 = vshll.u32 %v2818, 16
        %v3049 = vrot.slane %v3047, 5
        %v3050 = vsel %vm963, %v3045, %v3049
        %v3052 = vshrl.u32 %v2819, 16
        %v3054 = vrot.slane %v3052, 4
        %v3055 = vshll.u32 %v2819, 16
        %v3057 = vrot.slane %v3055, 5
        %v3058 = vor.u32 %v3054, %v3057
        %v3059 = vrot.slane %v3058, 4
        %v3061 = vshll.u32 %v2820, 16
        %v3063 = vrot.slane %v3061, 5
        %v3064 = vsel %vm963, %v3059, %v3063
        %v3065 = vshrl.u32 %v2820, 16
        %v3067 = vrot.slane %v3065, 4
        %v3068 = vor.u32 %v3067, %v3063
        %v3069 = vrot.slane %v3068, 4
        %v3071 = vshll.u32 %v2821, 16
        %v3073 = vrot.slane %v3071, 5
        %v3074 = vsel %vm963, %v3069, %v3073
        %v3076 = vshrl.u32 %v2822, 16
        %v3078 = vrot.slane %v3076, 4
        %v3079 = vshll.u32 %v2822, 16
        %v3081 = vrot.slane %v3079, 5
        %v3082 = vor.u32 %v3078, %v3081
        %v3083 = vrot.slane %v3082, 4
        %v3085 = vshll.u32 %v2823, 16
        %v3087 = vrot.slane %v3085, 5
        %v3088 = vsel %vm963, %v3083, %v3087
        %v3089 = vshrl.u32 %v2823, 16
        %v3091 = vrot.slane %v3089, 4
        %v3092 = vor.u32 %v3091, %v3087
        %v3093 = vrot.slane %v3092, 4
        %v3095 = vshll.u32 %v2824, 16
        %v3097 = vrot.slane %v3095, 5
        %v3098 = vsel %vm963, %v3093, %v3097
        %v3100 = vshrl.u32 %v2825, 16
        %v3102 = vrot.slane %v3100, 4
        %v3103 = vshll.u32 %v2825, 16
        %v3105 = vrot.slane %v3103, 5
        %v3106 = vor.u32 %v3102, %v3105
        %v3107 = vrot.slane %v3106, 4
        %v3109 = vshll.u32 %v2826, 16
        %v3111 = vrot.slane %v3109, 5
        %v3112 = vsel %vm963, %v3107, %v3111
        %v3113 = vshrl.u32 %v2826, 16
        %v3115 = vrot.slane %v3113, 4
        %v3116 = vor.u32 %v3115, %v3111
        %v3117 = vrot.slane %v3116, 4
        %v3119 = vshll.u32 %v2827, 16
        %v3121 = vrot.slane %v3119, 5
        %v3122 = vsel %vm963, %v3117, %v3121
        %v3124 = vshrl.u32 %v2828, 16
        %v3126 = vrot.slane %v3124, 4
        %v3127 = vshll.u32 %v2828, 16
        %v3129 = vrot.slane %v3127, 5
        %v3130 = vor.u32 %v3126, %v3129
        %v3131 = vrot.slane %v3130, 4
        %v3133 = vshll.u32 %v2829, 16
        %v3135 = vrot.slane %v3133, 5
        %v3136 = vsel %vm963, %v3131, %v3135
        %v3137 = vshrl.u32 %v2829, 16
        %v3139 = vrot.slane %v3137, 4
        %v3140 = vor.u32 %v3139, %v3135
        %v3141 = vrot.slane %v3140, 4
        %v3143 = vshll.u32 %v2830, 16
        %v3145 = vrot.slane %v3143, 5
        %v3146 = vsel %vm963, %v3141, %v3145
        %v3148 = vshrl.u32 %v2831, 16
        %v3150 = vrot.slane %v3148, 4
        %v3151 = vshll.u32 %v2831, 16
        %v3153 = vrot.slane %v3151, 5
        %v3154 = vor.u32 %v3150, %v3153
        %v3155 = vrot.slane %v3154, 4
        %v3157 = vshll.u32 %v2832, 16
        %v3159 = vrot.slane %v3157, 5
        %v3160 = vsel %vm963, %v3155, %v3159
        %v3161 = vshrl.u32 %v2832, 16
        %v3163 = vrot.slane %v3161, 4
        %v3164 = vor.u32 %v3163, %v3159
        %v3165 = vrot.slane %v3164, 4
        %v3167 = vshll.u32 %v2833, 16
        %v3169 = vrot.slane %v3167, 5
        %v3170 = vsel %vm963, %v3165, %v3169
        %v3172 = vshrl.u32 %v2834, 16
        %v3174 = vrot.slane %v3172, 4
        %v3175 = vshll.u32 %v2834, 16
        %v3177 = vrot.slane %v3175, 5
        %v3178 = vor.u32 %v3174, %v3177
        %v3179 = vrot.slane %v3178, 4
        %v3181 = vshll.u32 %v2835, 16
        %v3183 = vrot.slane %v3181, 5
        %v3184 = vsel %vm963, %v3179, %v3183
        %v3185 = vshrl.u32 %v2835, 16
        %v3187 = vrot.slane %v3185, 4
        %v3188 = vor.u32 %v3187, %v3183
        %v3189 = vrot.slane %v3188, 4
        %v3191 = vshll.u32 %v2836, 16
        %v3193 = vrot.slane %v3191, 5
        %v3194 = vsel %vm963, %v3189, %v3193
        %v3196 = vshrl.u32 %v2837, 16
        %v3198 = vrot.slane %v3196, 4
        %v3199 = vshll.u32 %v2837, 16
        %v3201 = vrot.slane %v3199, 5
        %v3202 = vor.u32 %v3198, %v3201
        %v3203 = vrot.slane %v3202, 4
        %v3205 = vshll.u32 %v2838, 16
        %v3207 = vrot.slane %v3205, 5
        %v3208 = vsel %vm963, %v3203, %v3207
        %v3209 = vshrl.u32 %v2838, 16
        %v3211 = vrot.slane %v3209, 4
        %v3212 = vor.u32 %v3211, %v3207
        %v3213 = vrot.slane %v3212, 4
        %v3215 = vshll.u32 %v2839, 16
        %v3217 = vrot.slane %v3215, 5
        %v3218 = vsel %vm963, %v3213, %v3217
        %v3220 = vshrl.u32 %v2840, 16
        %v3222 = vrot.slane %v3220, 4
        %v3223 = vshll.u32 %v2840, 16
        %v3225 = vrot.slane %v3223, 5
        %v3226 = vor.u32 %v3222, %v3225
        %v3227 = vrot.slane %v3226, 4
        %v3229 = vshll.u32 %v2841, 16
        %v3231 = vrot.slane %v3229, 5
        %v3232 = vsel %vm963, %v3227, %v3231
        %v3233 = vshrl.u32 %v2841, 16
        %v3235 = vrot.slane %v3233, 4
        %v3236 = vor.u32 %v3235, %v3231
        %v3237 = vrot.slane %v3236, 4
        %v3239 = vshll.u32 %v2842, 16
        %v3241 = vrot.slane %v3239, 5
        %v3242 = vsel %vm963, %v3237, %v3241
        %v3243 = vunpack.c.l.b16 %v2872
        %v3244 = vunpack.c.l.b16 %v2882
        %v3245 = vunpack.c.l.b16 %v2896
        %v3246 = vunpack.c.l.b16 %v2906
        %v3247 = vunpack.c.l.b16 %v2920
        %v3248 = vunpack.c.l.b16 %v2930
        %v3249 = vunpack.c.l.b16 %v2944
        %v3250 = vunpack.c.l.b16 %v2954
        %v3251 = vunpack.c.l.b16 %v2968
        %v3252 = vunpack.c.l.b16 %v2978
        %v3253 = vunpack.c.l.b16 %v2992
        %v3254 = vunpack.c.l.b16 %v3002
        %v3255 = vunpack.c.l.b16 %v3016
        %v3256 = vunpack.c.l.b16 %v3026
        %v3257 = vunpack.c.l.b16 %v3040
        %v3258 = vunpack.c.l.b16 %v3050
        %v3259 = vunpack.c.l.b16 %v3064
        %v3260 = vunpack.c.l.b16 %v3074
        %v3261 = vunpack.c.l.b16 %v3088
        %v3262 = vunpack.c.l.b16 %v3098
        %v3263 = vunpack.c.l.b16 %v3112
        %v3264 = vunpack.c.l.b16 %v3122
        %v3265 = vunpack.c.l.b16 %v3136
        %v3266 = vunpack.c.l.b16 %v3146
        %v3267 = vunpack.c.l.b16 %v3160
        %v3268 = vunpack.c.l.b16 %v3170
        %v3269 = vunpack.c.l.b16 %v3184
        %v3270 = vunpack.c.l.b16 %v3194
        %v3271 = vunpack.c.l.b16 %v3208
        %v3272 = vunpack.c.l.b16 %v3218
        %v3273 = vunpack.c.l.b16 %v3232
        %v3274 = vunpack.c.l.b16 %v3242
        %v3275 = vpack.c.b16 %v3244, %v3243
        %v3276 = vpack.c.b16 %v3246, %v3245
        %v3277 = vpack.c.b16 %v3248, %v3247
        %v3278 = vpack.c.b16 %v3250, %v3249
        %v3279 = vpack.c.b16 %v3252, %v3251
        %v3280 = vpack.c.b16 %v3254, %v3253
        %v3281 = vpack.c.b16 %v3256, %v3255
        %v3282 = vpack.c.b16 %v3258, %v3257
        %v3283 = vpack.c.b16 %v3260, %v3259
        %v3284 = vpack.c.b16 %v3262, %v3261
        %v3285 = vpack.c.b16 %v3264, %v3263
        %v3286 = vpack.c.b16 %v3266, %v3265
        %v3287 = vpack.c.b16 %v3268, %v3267
        %v3288 = vpack.c.b16 %v3270, %v3269
        %v3289 = vpack.c.b16 %v3272, %v3271
        %v3290 = vpack.c.b16 %v3274, %v3273
        %v3323 = vunpack.c.l.b16 %v2843
        %v3324 = vunpack.c.l.b16 %v2844
        %v3325 = vunpack.c.l.b16 %v2845
        %v3326 = vunpack.c.l.b16 %v2846
        %v3327 = vunpack.c.l.b16 %v2847
        %v3328 = vunpack.c.l.b16 %v2848
        %v3329 = vunpack.c.l.b16 %v2849
        %v3330 = vunpack.c.l.b16 %v2850
        %v3331 = vunpack.c.l.b16 %v2851
        %v3332 = vunpack.c.l.b16 %v2852
        %v3333 = vunpack.c.l.b16 %v2853
        %v3334 = vunpack.c.l.b16 %v2854
        %v3335 = vunpack.c.l.b16 %v2855
        %v3336 = vunpack.c.l.b16 %v2856
        %v3337 = vunpack.c.l.b16 %v2857
        %v3338 = vunpack.c.l.b16 %v2858
        %v3339 = vpack.c.b16 %v3324, %v3323
        %v3340 = vpack.c.b16 %v3326, %v3325
        %v3341 = vpack.c.b16 %v3328, %v3327
        %v3342 = vpack.c.b16 %v3330, %v3329
        %v3343 = vpack.c.b16 %v3332, %v3331
        %v3344 = vpack.c.b16 %v3334, %v3333
        %v3345 = vpack.c.b16 %v3336, %v3335
        %v3346 = vpack.c.b16 %v3338, %v3337
        %3355 = vmatprep.subr.bf16.mxu0 0
        %3356 = vmatpush1.bf16.msra.mxu0 %v3339
        %3357 = vmatprep.subr.bf16.mxu0 0
        %3358 = vmatpush1.bf16.msra.mxu0 %v3340
        %3359 = vmatprep.subr.bf16.mxu0 0
        %3360 = vmatpush1.bf16.msra.mxu0 %v3341
        %3361 = vmatprep.subr.bf16.mxu0 0
        %3362 = vmatpush1.bf16.msra.mxu0 %v3342
        %3363 = vmatprep.subr.bf16.mxu0 0
        %3364 = vmatpush1.bf16.msra.mxu0 %v3343
        %3365 = vmatprep.subr.bf16.mxu0 0
        %3366 = vmatpush1.bf16.msra.mxu0 %v3344
        %3367 = vmatprep.subr.bf16.mxu0 0
        %3368 = vmatpush1.bf16.msra.mxu0 %v3345
        %3369 = vmatprep.subr.bf16.mxu0 0
        %3370 = vmatpush1.bf16.msra.mxu0 %v3346
        %3371 = vmatprep.subr.bf16.mxu0 0
        %3372 = vmatpush1.bf16.msra.mxu0 0
        %3373 = vmatprep.subr.bf16.mxu0 0
        %3374 = vmatpush1.bf16.msra.mxu0 0
        %3375 = vmatprep.subr.bf16.mxu0 0
        %3376 = vmatpush1.bf16.msra.mxu0 0
        %3377 = vmatprep.subr.bf16.mxu0 0
        %3378 = vmatpush1.bf16.msra.mxu0 0
        %3379 = vmatprep.subr.bf16.mxu0 0
        %3380 = vmatpush1.bf16.msra.mxu0 0
        %3381 = vmatprep.subr.bf16.mxu0 0
        %3382 = vmatpush1.bf16.msra.mxu0 0
        %3383 = vmatprep.subr.bf16.mxu0 0
        %3384 = vmatpush1.bf16.msra.mxu0 0
        %3385 = vmatprep.subr.bf16.mxu0 0
        %3386 = vmatpush1.bf16.msra.mxu0 0
        %3387 = vmatprep.mubr.bf16.mxu0 0
        %3388 = vmatmul.mubr.bf16.gmra.mrb[0].mxu0 %v3275
        %v3389 = vpop.f32.mrb[0].mxu0
        %v3390 = vadd.f32 0.0, %v3389
        %v3391 = vpop.f32.mrb[0].mxu0
        %v3392 = vpop.f32.mrb[0].mxu0
        %v3393 = vadd.f32 0.0, %v3392
        %v3394 = vpop.f32.mrb[0].mxu0
        %3395 = vmatprep.mubr.bf16.mxu0 0
        %3396 = vmatmul.mubr.bf16.gmra.mrb[0].mxu0 %v3276
        %v3397 = vpop.f32.mrb[0].mxu0
        %v3398 = vadd.f32 0.0, %v3397
        %v3399 = vpop.f32.mrb[0].mxu0
        %v3400 = vpop.f32.mrb[0].mxu0
        %v3401 = vadd.f32 0.0, %v3400
        %v3402 = vpop.f32.mrb[0].mxu0
        %3403 = vmatprep.mubr.bf16.mxu0 0
        %3404 = vmatmul.mubr.bf16.gmra.mrb[0].mxu0 %v3277
        %v3405 = vpop.f32.mrb[0].mxu0
        %v3406 = vadd.f32 0.0, %v3405
        %v3407 = vpop.f32.mrb[0].mxu0
        %v3408 = vpop.f32.mrb[0].mxu0
        %v3409 = vadd.f32 0.0, %v3408
        %v3410 = vpop.f32.mrb[0].mxu0
        %3411 = vmatprep.mubr.bf16.mxu0 0
        %3412 = vmatmul.mubr.bf16.gmra.mrb[0].mxu0 %v3278
        %v3413 = vpop.f32.mrb[0].mxu0
        %v3414 = vadd.f32 0.0, %v3413
        %v3415 = vpop.f32.mrb[0].mxu0
        %v3416 = vpop.f32.mrb[0].mxu0
        %v3417 = vadd.f32 0.0, %v3416
        %v3418 = vpop.f32.mrb[0].mxu0
        %3419 = vmatprep.mubr.bf16.mxu0 0
        %3420 = vmatmul.mubr.bf16.gmra.mrb[0].mxu0 %v3279
        %v3421 = vpop.f32.mrb[0].mxu0
        %v3422 = vadd.f32 0.0, %v3421
        %v3423 = vpop.f32.mrb[0].mxu0
        %v3424 = vpop.f32.mrb[0].mxu0
        %v3425 = vadd.f32 0.0, %v3424
        %v3426 = vpop.f32.mrb[0].mxu0
        %3427 = vmatprep.mubr.bf16.mxu0 0
        %3428 = vmatmul.mubr.bf16.gmra.mrb[0].mxu0 %v3280
        %v3429 = vpop.f32.mrb[0].mxu0
        %v3430 = vadd.f32 0.0, %v3429
        %v3431 = vpop.f32.mrb[0].mxu0
        %v3432 = vpop.f32.mrb[0].mxu0
        %v3433 = vadd.f32 0.0, %v3432
        %v3434 = vpop.f32.mrb[0].mxu0
        %3435 = vmatprep.mubr.bf16.mxu0 0
        %3436 = vmatmul.mubr.bf16.gmra.mrb[0].mxu0 %v3281
        %v3437 = vpop.f32.mrb[0].mxu0
        %v3438 = vadd.f32 0.0, %v3437
        %v3439 = vpop.f32.mrb[0].mxu0
        %v3440 = vpop.f32.mrb[0].mxu0
        %v3441 = vadd.f32 0.0, %v3440
        %v3442 = vpop.f32.mrb[0].mxu0
        %3443 = vmatprep.mubr.bf16.mxu0 0
        %3444 = vmatmul.mubr.bf16.gmra.mrb[0].mxu0 %v3282
        %v3445 = vpop.f32.mrb[0].mxu0
        %v3446 = vadd.f32 0.0, %v3445
        %v3447 = vpop.f32.mrb[0].mxu0
        %v3448 = vpop.f32.mrb[0].mxu0
        %v3449 = vadd.f32 0.0, %v3448
        %v3450 = vpop.f32.mrb[0].mxu0
        %3451 = vmatprep.mubr.bf16.mxu0 0
        %3452 = vmatmul.mubr.bf16.gmra.mrb[0].mxu0 %v3283
        %v3453 = vpop.f32.mrb[0].mxu0
        %v3454 = vadd.f32 0.0, %v3453
        %v3455 = vpop.f32.mrb[0].mxu0
        %v3456 = vpop.f32.mrb[0].mxu0
        %v3457 = vadd.f32 0.0, %v3456
        %v3458 = vpop.f32.mrb[0].mxu0
        %3459 = vmatprep.mubr.bf16.mxu0 0
        %3460 = vmatmul.mubr.bf16.gmra.mrb[0].mxu0 %v3284
        %v3461 = vpop.f32.mrb[0].mxu0
        %v3462 = vadd.f32 0.0, %v3461
        %v3463 = vpop.f32.mrb[0].mxu0
        %v3464 = vpop.f32.mrb[0].mxu0
        %v3465 = vadd.f32 0.0, %v3464
        %v3466 = vpop.f32.mrb[0].mxu0
        %3467 = vmatprep.mubr.bf16.mxu0 0
        %3468 = vmatmul.mubr.bf16.gmra.mrb[0].mxu0 %v3285
        %v3469 = vpop.f32.mrb[0].mxu0
        %v3470 = vadd.f32 0.0, %v3469
        %v3471 = vpop.f32.mrb[0].mxu0
        %v3472 = vpop.f32.mrb[0].mxu0
        %v3473 = vadd.f32 0.0, %v3472
        %v3474 = vpop.f32.mrb[0].mxu0
        %3475 = vmatprep.mubr.bf16.mxu0 0
        %3476 = vmatmul.mubr.bf16.gmra.mrb[0].mxu0 %v3286
        %v3477 = vpop.f32.mrb[0].mxu0
        %v3478 = vadd.f32 0.0, %v3477
        %v3479 = vpop.f32.mrb[0].mxu0
        %v3480 = vpop.f32.mrb[0].mxu0
        %v3481 = vadd.f32 0.0, %v3480
        %v3482 = vpop.f32.mrb[0].mxu0
        %3483 = vmatprep.mubr.bf16.mxu0 0
        %3484 = vmatmul.mubr.bf16.gmra.mrb[0].mxu0 %v3287
        %v3485 = vpop.f32.mrb[0].mxu0
        %v3486 = vadd.f32 0.0, %v3485
        %v3487 = vpop.f32.mrb[0].mxu0
        %v3488 = vpop.f32.mrb[0].mxu0
        %v3489 = vadd.f32 0.0, %v3488
        %v3490 = vpop.f32.mrb[0].mxu0
        %3491 = vmatprep.mubr.bf16.mxu0 0
        %3492 = vmatmul.mubr.bf16.gmra.mrb[0].mxu0 %v3288
        %v3493 = vpop.f32.mrb[0].mxu0
        %v3494 = vadd.f32 0.0, %v3493
        %v3495 = vpop.f32.mrb[0].mxu0
        %v3496 = vpop.f32.mrb[0].mxu0
        %v3497 = vadd.f32 0.0, %v3496
        %v3498 = vpop.f32.mrb[0].mxu0
        %3499 = vmatprep.mubr.bf16.mxu0 0
        %3500 = vmatmul.mubr.bf16.gmra.mrb[0].mxu0 %v3289
        %v3501 = vpop.f32.mrb[0].mxu0
        %v3502 = vadd.f32 0.0, %v3501
        %v3503 = vpop.f32.mrb[0].mxu0
        %v3504 = vpop.f32.mrb[0].mxu0
        %v3505 = vadd.f32 0.0, %v3504
        %v3506 = vpop.f32.mrb[0].mxu0
        %3507 = vmatprep.mubr.bf16.mxu0 0
        %3508 = vmatmul.mubr.bf16.gmra.mrb[0].mxu0 %v3290
        %v3509 = vpop.f32.mrb[0].mxu0
        %v3510 = vadd.f32 0.0, %v3509
        %v3511 = vpop.f32.mrb[0].mxu0
        %v3512 = vpop.f32.mrb[0].mxu0
        %v3513 = vadd.f32 0.0, %v3512
        %v3514 = vpop.f32.mrb[0].mxu0
        %3515 = vdwg.mxu0
        %v3516 = vadd.f32 %v2763, %v3390
        %v3517 = vadd.f32 %v2764, %v3393
        %v3518 = vadd.f32 %v2765, %v3398
        %v3519 = vadd.f32 %v2766, %v3401
        %v3520 = vadd.f32 %v2767, %v3406
        %v3521 = vadd.f32 %v2768, %v3409
        %v3522 = vadd.f32 %v2769, %v3414
        %v3523 = vadd.f32 %v2770, %v3417
        %v3524 = vadd.f32 %v2771, %v3422
        %v3525 = vadd.f32 %v2772, %v3425
        %v3526 = vadd.f32 %v2773, %v3430
        %v3527 = vadd.f32 %v2774, %v3433
        %v3528 = vadd.f32 %v2775, %v3438
        %v3529 = vadd.f32 %v2776, %v3441
        %v3530 = vadd.f32 %v2777, %v3446
        %v3531 = vadd.f32 %v2778, %v3449
        %v3532 = vadd.f32 %v2779, %v3454
        %v3533 = vadd.f32 %v2780, %v3457
        %v3534 = vadd.f32 %v2781, %v3462
        %v3535 = vadd.f32 %v2782, %v3465
        %v3536 = vadd.f32 %v2783, %v3470
        %v3537 = vadd.f32 %v2784, %v3473
        %v3538 = vadd.f32 %v2785, %v3478
        %v3539 = vadd.f32 %v2786, %v3481
        %v3540 = vadd.f32 %v2787, %v3486
        %v3541 = vadd.f32 %v2788, %v3489
        %v3542 = vadd.f32 %v2789, %v3494
        %v3543 = vadd.f32 %v2790, %v3497
        %v3544 = vadd.f32 %v2791, %v3502
        %v3545 = vadd.f32 %v2792, %v3505
        %v3546 = vadd.f32 %v2793, %v3510
        %v3547 = vadd.f32 %v2794, %v3513
        %v3548 = vld [vmem:[%s766] sm:$0xe]
        %v3549 = vld [vmem:[%s766 + $0xc] sm:$0xe]
        %v3550 = vld [vmem:[%s766 + $0x18] sm:$0xe]
        %v3551 = vld [vmem:[%s766 + $0x24] sm:$0xe]
        %v3552 = vld [vmem:[%s766 + $0x30] sm:$0xe]
        %v3553 = vld [vmem:[%s766 + $0x3c] sm:$0xe]
        %v3554 = vld [vmem:[%s766 + $0x48] sm:$0xe]
        %v3555 = vld [vmem:[%s766 + $0x54] sm:$0xe]
        %v3556 = vld [vmem:[%s766 + $0x60] sm:$0xe]
        %v3557 = vld [vmem:[%s766 + $0x6c] sm:$0xe]
        %v3558 = vld [vmem:[%s766 + $0x78] sm:$0xe]
        %v3559 = vld [vmem:[%s766 + $0x84] sm:$0xe]
        %v3560 = vld [vmem:[%s766 + $0x90] sm:$0xe]
        %v3561 = vld [vmem:[%s766 + $0x9c] sm:$0xe]
        %v3562 = vld [vmem:[%s766 + $0xa8] sm:$0xe]
        %v3563 = vld [vmem:[%s766 + $0xb4] sm:$0xe]
        %v3564 = vld [vmem:[#allocation7 + $0x140] sm:$0xf]
        %v3565 = vld [vmem:[#allocation7 + $0x144] sm:$0xf]
        %v3566 = vld [vmem:[#allocation7 + $0x148] sm:$0xf]
        %v3567 = vld [vmem:[#allocation7 + $0x14c] sm:$0xf]
        %v3568 = vld [vmem:[#allocation7 + $0x150] sm:$0xf]
        %v3569 = vld [vmem:[#allocation7 + $0x154] sm:$0xf]
        %v3570 = vld [vmem:[#allocation7 + $0x158] sm:$0xf]
        %v3571 = vld [vmem:[#allocation7 + $0x15c] sm:$0xf]
        %v3572 = vld [vmem:[#allocation7 + $0x160] sm:$0xf]
        %v3573 = vld [vmem:[#allocation7 + $0x164] sm:$0xf]
        %v3574 = vld [vmem:[#allocation7 + $0x168] sm:$0xf]
        %v3575 = vld [vmem:[#allocation7 + $0x16c] sm:$0xf]
        %v3576 = vld [vmem:[#allocation7 + $0x170] sm:$0xf]
        %v3577 = vld [vmem:[#allocation7 + $0x174] sm:$0xf]
        %v3578 = vld [vmem:[#allocation7 + $0x178] sm:$0xf]
        %v3579 = vld [vmem:[#allocation7 + $0x17c] sm:$0xf]
        %v3628 = vrot.slane %v3548, 5
        %v3629 = vrot.slane %v3628, 4
        %v3630 = vrot.slane %v2796, 5
        %v3631 = vsel %vm1992, %v3629, %v3630
        %v3632 = vrot.slane %v3630, 4
        %v3633 = vrot.slane %v2797, 5
        %v3634 = vsel %vm1992, %v3632, %v3633
        %v3635 = vrot.slane %v3549, 5
        %v3636 = vrot.slane %v3635, 4
        %v3637 = vrot.slane %v2799, 5
        %v3638 = vsel %vm1992, %v3636, %v3637
        %v3639 = vrot.slane %v3637, 4
        %v3640 = vrot.slane %v2800, 5
        %v3641 = vsel %vm1992, %v3639, %v3640
        %v3642 = vrot.slane %v3550, 5
        %v3643 = vrot.slane %v3642, 4
        %v3644 = vrot.slane %v2802, 5
        %v3645 = vsel %vm1992, %v3643, %v3644
        %v3646 = vrot.slane %v3644, 4
        %v3647 = vrot.slane %v2803, 5
        %v3648 = vsel %vm1992, %v3646, %v3647
        %v3649 = vrot.slane %v3551, 5
        %v3650 = vrot.slane %v3649, 4
        %v3651 = vrot.slane %v2805, 5
        %v3652 = vsel %vm1992, %v3650, %v3651
        %v3653 = vrot.slane %v3651, 4
        %v3654 = vrot.slane %v2806, 5
        %v3655 = vsel %vm1992, %v3653, %v3654
        %v3656 = vrot.slane %v3552, 5
        %v3657 = vrot.slane %v3656, 4
        %v3658 = vrot.slane %v2808, 5
        %v3659 = vsel %vm1992, %v3657, %v3658
        %v3660 = vrot.slane %v3658, 4
        %v3661 = vrot.slane %v2809, 5
        %v3662 = vsel %vm1992, %v3660, %v3661
        %v3663 = vrot.slane %v3553, 5
        %v3664 = vrot.slane %v3663, 4
        %v3665 = vrot.slane %v2811, 5
        %v3666 = vsel %vm1992, %v3664, %v3665
        %v3667 = vrot.slane %v3665, 4
        %v3668 = vrot.slane %v2812, 5
        %v3669 = vsel %vm1992, %v3667, %v3668
        %v3670 = vrot.slane %v3554, 5
        %v3671 = vrot.slane %v3670, 4
        %v3672 = vrot.slane %v2814, 5
        %v3673 = vsel %vm1992, %v3671, %v3672
        %v3674 = vrot.slane %v3672, 4
        %v3675 = vrot.slane %v2815, 5
        %v3676 = vsel %vm1992, %v3674, %v3675
        %v3677 = vrot.slane %v3555, 5
        %v3678 = vrot.slane %v3677, 4
        %v3679 = vrot.slane %v2817, 5
        %v3680 = vsel %vm1992, %v3678, %v3679
        %v3681 = vrot.slane %v3679, 4
        %v3682 = vrot.slane %v2818, 5
        %v3683 = vsel %vm1992, %v3681, %v3682
        %v3684 = vrot.slane %v3556, 5
        %v3685 = vrot.slane %v3684, 4
        %v3686 = vrot.slane %v2820, 5
        %v3687 = vsel %vm1992, %v3685, %v3686
        %v3688 = vrot.slane %v3686, 4
        %v3689 = vrot.slane %v2821, 5
        %v3690 = vsel %vm1992, %v3688, %v3689
        %v3691 = vrot.slane %v3557, 5
        %v3692 = vrot.slane %v3691, 4
        %v3693 = vrot.slane %v2823, 5
        %v3694 = vsel %vm1992, %v3692, %v3693
        %v3695 = vrot.slane %v3693, 4
        %v3696 = vrot.slane %v2824, 5
        %v3697 = vsel %vm1992, %v3695, %v3696
        %v3698 = vrot.slane %v3558, 5
        %v3699 = vrot.slane %v3698, 4
        %v3700 = vrot.slane %v2826, 5
        %v3701 = vsel %vm1992, %v3699, %v3700
        %v3702 = vrot.slane %v3700, 4
        %v3703 = vrot.slane %v2827, 5
        %v3704 = vsel %vm1992, %v3702, %v3703
        %v3705 = vrot.slane %v3559, 5
        %v3706 = vrot.slane %v3705, 4
        %v3707 = vrot.slane %v2829, 5
        %v3708 = vsel %vm1992, %v3706, %v3707
        %v3709 = vrot.slane %v3707, 4
        %v3710 = vrot.slane %v2830, 5
        %v3711 = vsel %vm1992, %v3709, %v3710
        %v3712 = vrot.slane %v3560, 5
        %v3713 = vrot.slane %v3712, 4
        %v3714 = vrot.slane %v2832, 5
        %v3715 = vsel %vm1992, %v3713, %v3714
        %v3716 = vrot.slane %v3714, 4
        %v3717 = vrot.slane %v2833, 5
        %v3718 = vsel %vm1992, %v3716, %v3717
        %v3719 = vrot.slane %v3561, 5
        %v3720 = vrot.slane %v3719, 4
        %v3721 = vrot.slane %v2835, 5
        %v3722 = vsel %vm1992, %v3720, %v3721
        %v3723 = vrot.slane %v3721, 4
        %v3724 = vrot.slane %v2836, 5
        %v3725 = vsel %vm1992, %v3723, %v3724
        %v3726 = vrot.slane %v3562, 5
        %v3727 = vrot.slane %v3726, 4
        %v3728 = vrot.slane %v2838, 5
        %v3729 = vsel %vm1992, %v3727, %v3728
        %v3730 = vrot.slane %v3728, 4
        %v3731 = vrot.slane %v2839, 5
        %v3732 = vsel %vm1992, %v3730, %v3731
        %v3733 = vrot.slane %v3563, 5
        %v3734 = vrot.slane %v3733, 4
        %v3735 = vrot.slane %v2841, 5
        %v3736 = vsel %vm1992, %v3734, %v3735
        %v3737 = vrot.slane %v3735, 4
        %v3738 = vrot.slane %v2842, 5
        %v3739 = vsel %vm1992, %v3737, %v3738
        %v3740 = vunpack.c.l.b16 %v3631
        %v3741 = vunpack.c.l.b16 %v3634
        %v3742 = vunpack.c.l.b16 %v3638
        %v3743 = vunpack.c.l.b16 %v3641
        %v3744 = vunpack.c.l.b16 %v3645
        %v3745 = vunpack.c.l.b16 %v3648
        %v3746 = vunpack.c.l.b16 %v3652
        %v3747 = vunpack.c.l.b16 %v3655
        %v3748 = vunpack.c.l.b16 %v3659
        %v3749 = vunpack.c.l.b16 %v3662
        %v3750 = vunpack.c.l.b16 %v3666
        %v3751 = vunpack.c.l.b16 %v3669
        %v3752 = vunpack.c.l.b16 %v3673
        %v3753 = vunpack.c.l.b16 %v3676
        %v3754 = vunpack.c.l.b16 %v3680
        %v3755 = vunpack.c.l.b16 %v3683
        %v3756 = vunpack.c.l.b16 %v3687
        %v3757 = vunpack.c.l.b16 %v3690
        %v3758 = vunpack.c.l.b16 %v3694
        %v3759 = vunpack.c.l.b16 %v3697
        %v3760 = vunpack.c.l.b16 %v3701
        %v3761 = vunpack.c.l.b16 %v3704
        %v3762 = vunpack.c.l.b16 %v3708
        %v3763 = vunpack.c.l.b16 %v3711
        %v3764 = vunpack.c.l.b16 %v3715
        %v3765 = vunpack.c.l.b16 %v3718
        %v3766 = vunpack.c.l.b16 %v3722
        %v3767 = vunpack.c.l.b16 %v3725
        %v3768 = vunpack.c.l.b16 %v3729
        %v3769 = vunpack.c.l.b16 %v3732
        %v3770 = vunpack.c.l.b16 %v3736
        %v3771 = vunpack.c.l.b16 %v3739
        %v3772 = vpack.c.b16 %v3741, %v3740
        %v3773 = vpack.c.b16 %v3743, %v3742
        %v3774 = vpack.c.b16 %v3745, %v3744
        %v3775 = vpack.c.b16 %v3747, %v3746
        %v3776 = vpack.c.b16 %v3749, %v3748
        %v3777 = vpack.c.b16 %v3751, %v3750
        %v3778 = vpack.c.b16 %v3753, %v3752
        %v3779 = vpack.c.b16 %v3755, %v3754
        %v3780 = vpack.c.b16 %v3757, %v3756
        %v3781 = vpack.c.b16 %v3759, %v3758
        %v3782 = vpack.c.b16 %v3761, %v3760
        %v3783 = vpack.c.b16 %v3763, %v3762
        %v3784 = vpack.c.b16 %v3765, %v3764
        %v3785 = vpack.c.b16 %v3767, %v3766
        %v3786 = vpack.c.b16 %v3769, %v3768
        %v3787 = vpack.c.b16 %v3771, %v3770
        %v3820 = vunpack.c.l.b16 %v3564
        %v3821 = vunpack.c.l.b16 %v3565
        %v3822 = vunpack.c.l.b16 %v3566
        %v3823 = vunpack.c.l.b16 %v3567
        %v3824 = vunpack.c.l.b16 %v3568
        %v3825 = vunpack.c.l.b16 %v3569
        %v3826 = vunpack.c.l.b16 %v3570
        %v3827 = vunpack.c.l.b16 %v3571
        %v3828 = vunpack.c.l.b16 %v3572
        %v3829 = vunpack.c.l.b16 %v3573
        %v3830 = vunpack.c.l.b16 %v3574
        %v3831 = vunpack.c.l.b16 %v3575
        %v3832 = vunpack.c.l.b16 %v3576
        %v3833 = vunpack.c.l.b16 %v3577
        %v3834 = vunpack.c.l.b16 %v3578
        %v3835 = vunpack.c.l.b16 %v3579
        %v3836 = vpack.c.b16 %v3821, %v3820
        %v3837 = vpack.c.b16 %v3823, %v3822
        %v3838 = vpack.c.b16 %v3825, %v3824
        %v3839 = vpack.c.b16 %v3827, %v3826
        %v3840 = vpack.c.b16 %v3829, %v3828
        %v3841 = vpack.c.b16 %v3831, %v3830
        %v3842 = vpack.c.b16 %v3833, %v3832
        %v3843 = vpack.c.b16 %v3835, %v3834
        %3852 = vmatprep.subr.bf16.mxu0 0
        %3853 = vmatpush1.bf16.msra.mxu0 %v3836
        %3854 = vmatprep.subr.bf16.mxu0 0
        %3855 = vmatpush1.bf16.msra.mxu0 %v3837
        %3856 = vmatprep.subr.bf16.mxu0 0
        %3857 = vmatpush1.bf16.msra.mxu0 %v3838
        %3858 = vmatprep.subr.bf16.mxu0 0
        %3859 = vmatpush1.bf16.msra.mxu0 %v3839
        %3860 = vmatprep.subr.bf16.mxu0 0
        %3861 = vmatpush1.bf16.msra.mxu0 %v3840
        %3862 = vmatprep.subr.bf16.mxu0 0
        %3863 = vmatpush1.bf16.msra.mxu0 %v3841
        %3864 = vmatprep.subr.bf16.mxu0 0
        %3865 = vmatpush1.bf16.msra.mxu0 %v3842
        %3866 = vmatprep.subr.bf16.mxu0 0
        %3867 = vmatpush1.bf16.msra.mxu0 %v3843
        %3868 = vmatprep.subr.bf16.mxu0 0
        %3869 = vmatpush1.bf16.msra.mxu0 0
        %3870 = vmatprep.subr.bf16.mxu0 0
        %3871 = vmatpush1.bf16.msra.mxu0 0
        %3872 = vmatprep.subr.bf16.mxu0 0
        %3873 = vmatpush1.bf16.msra.mxu0 0
        %3874 = vmatprep.subr.bf16.mxu0 0
        %3875 = vmatpush1.bf16.msra.mxu0 0
        %3876 = vmatprep.subr.bf16.mxu0 0
        %3877 = vmatpush1.bf16.msra.mxu0 0
        %3878 = vmatprep.subr.bf16.mxu0 0
        %3879 = vmatpush1.bf16.msra.mxu0 0
        %3880 = vmatprep.subr.bf16.mxu0 0
        %3881 = vmatpush1.bf16.msra.mxu0 0
        %3882 = vmatprep.subr.bf16.mxu0 0
        %3883 = vmatpush1.bf16.msra.mxu0 0
        %3884 = vmatprep.mubr.bf16.mxu0 0
        %3885 = vmatmul.mubr.bf16.gmra.mrb[0].mxu0 %v3772
        %v3886 = vpop.f32.mrb[0].mxu0
        %v3887 = vadd.f32 0.0, %v3886
        %v3888 = vpop.f32.mrb[0].mxu0
        %v3889 = vpop.f32.mrb[0].mxu0
        %v3890 = vadd.f32 0.0, %v3889
        %v3891 = vpop.f32.mrb[0].mxu0
        %3892 = vmatprep.mubr.bf16.mxu0 0
        %3893 = vmatmul.mubr.bf16.gmra.mrb[0].mxu0 %v3773
        %v3894 = vpop.f32.mrb[0].mxu0
        %v3895 = vadd.f32 0.0, %v3894
        %v3896 = vpop.f32.mrb[0].mxu0
        %v3897 = vpop.f32.mrb[0].mxu0
        %v3898 = vadd.f32 0.0, %v3897
        %v3899 = vpop.f32.mrb[0].mxu0
        %3900 = vmatprep.mubr.bf16.mxu0 0
        %3901 = vmatmul.mubr.bf16.gmra.mrb[0].mxu0 %v3774
        %v3902 = vpop.f32.mrb[0].mxu0
        %v3903 = vadd.f32 0.0, %v3902
        %v3904 = vpop.f32.mrb[0].mxu0
        %v3905 = vpop.f32.mrb[0].mxu0
        %v3906 = vadd.f32 0.0, %v3905
        %v3907 = vpop.f32.mrb[0].mxu0
        %3908 = vmatprep.mubr.bf16.mxu0 0
        %3909 = vmatmul.mubr.bf16.gmra.mrb[0].mxu0 %v3775
        %v3910 = vpop.f32.mrb[0].mxu0
        %v3911 = vadd.f32 0.0, %v3910
        %v3912 = vpop.f32.mrb[0].mxu0
        %v3913 = vpop.f32.mrb[0].mxu0
        %v3914 = vadd.f32 0.0, %v3913
        %v3915 = vpop.f32.mrb[0].mxu0
        %3916 = vmatprep.mubr.bf16.mxu0 0
        %3917 = vmatmul.mubr.bf16.gmra.mrb[0].mxu0 %v3776
        %v3918 = vpop.f32.mrb[0].mxu0
        %v3919 = vadd.f32 0.0, %v3918
        %v3920 = vpop.f32.mrb[0].mxu0
        %v3921 = vpop.f32.mrb[0].mxu0
        %v3922 = vadd.f32 0.0, %v3921
        %v3923 = vpop.f32.mrb[0].mxu0
        %3924 = vmatprep.mubr.bf16.mxu0 0
        %3925 = vmatmul.mubr.bf16.gmra.mrb[0].mxu0 %v3777
        %v3926 = vpop.f32.mrb[0].mxu0
        %v3927 = vadd.f32 0.0, %v3926
        %v3928 = vpop.f32.mrb[0].mxu0
        %v3929 = vpop.f32.mrb[0].mxu0
        %v3930 = vadd.f32 0.0, %v3929
        %v3931 = vpop.f32.mrb[0].mxu0
        %3932 = vmatprep.mubr.bf16.mxu0 0
        %3933 = vmatmul.mubr.bf16.gmra.mrb[0].mxu0 %v3778
        %v3934 = vpop.f32.mrb[0].mxu0
        %v3935 = vadd.f32 0.0, %v3934
        %v3936 = vpop.f32.mrb[0].mxu0
        %v3937 = vpop.f32.mrb[0].mxu0
        %v3938 = vadd.f32 0.0, %v3937
        %v3939 = vpop.f32.mrb[0].mxu0
        %3940 = vmatprep.mubr.bf16.mxu0 0
        %3941 = vmatmul.mubr.bf16.gmra.mrb[0].mxu0 %v3779
        %v3942 = vpop.f32.mrb[0].mxu0
        %v3943 = vadd.f32 0.0, %v3942
        %v3944 = vpop.f32.mrb[0].mxu0
        %v3945 = vpop.f32.mrb[0].mxu0
        %v3946 = vadd.f32 0.0, %v3945
        %v3947 = vpop.f32.mrb[0].mxu0
        %3948 = vmatprep.mubr.bf16.mxu0 0
        %3949 = vmatmul.mubr.bf16.gmra.mrb[0].mxu0 %v3780
        %v3950 = vpop.f32.mrb[0].mxu0
        %v3951 = vadd.f32 0.0, %v3950
        %v3952 = vpop.f32.mrb[0].mxu0
        %v3953 = vpop.f32.mrb[0].mxu0
        %v3954 = vadd.f32 0.0, %v3953
        %v3955 = vpop.f32.mrb[0].mxu0
        %3956 = vmatprep.mubr.bf16.mxu0 0
        %3957 = vmatmul.mubr.bf16.gmra.mrb[0].mxu0 %v3781
        %v3958 = vpop.f32.mrb[0].mxu0
        %v3959 = vadd.f32 0.0, %v3958
        %v3960 = vpop.f32.mrb[0].mxu0
        %v3961 = vpop.f32.mrb[0].mxu0
        %v3962 = vadd.f32 0.0, %v3961
        %v3963 = vpop.f32.mrb[0].mxu0
        %3964 = vmatprep.mubr.bf16.mxu0 0
        %3965 = vmatmul.mubr.bf16.gmra.mrb[0].mxu0 %v3782
        %v3966 = vpop.f32.mrb[0].mxu0
        %v3967 = vadd.f32 0.0, %v3966
        %v3968 = vpop.f32.mrb[0].mxu0
        %v3969 = vpop.f32.mrb[0].mxu0
        %v3970 = vadd.f32 0.0, %v3969
        %v3971 = vpop.f32.mrb[0].mxu0
        %3972 = vmatprep.mubr.bf16.mxu0 0
        %3973 = vmatmul.mubr.bf16.gmra.mrb[0].mxu0 %v3783
        %v3974 = vpop.f32.mrb[0].mxu0
        %v3975 = vadd.f32 0.0, %v3974
        %v3976 = vpop.f32.mrb[0].mxu0
        %v3977 = vpop.f32.mrb[0].mxu0
        %v3978 = vadd.f32 0.0, %v3977
        %v3979 = vpop.f32.mrb[0].mxu0
        %3980 = vmatprep.mubr.bf16.mxu0 0
        %3981 = vmatmul.mubr.bf16.gmra.mrb[0].mxu0 %v3784
        %v3982 = vpop.f32.mrb[0].mxu0
        %v3983 = vadd.f32 0.0, %v3982
        %v3984 = vpop.f32.mrb[0].mxu0
        %v3985 = vpop.f32.mrb[0].mxu0
        %v3986 = vadd.f32 0.0, %v3985
        %v3987 = vpop.f32.mrb[0].mxu0
        %3988 = vmatprep.mubr.bf16.mxu0 0
        %3989 = vmatmul.mubr.bf16.gmra.mrb[0].mxu0 %v3785
        %v3990 = vpop.f32.mrb[0].mxu0
        %v3991 = vadd.f32 0.0, %v3990
        %v3992 = vpop.f32.mrb[0].mxu0
        %v3993 = vpop.f32.mrb[0].mxu0
        %v3994 = vadd.f32 0.0, %v3993
        %v3995 = vpop.f32.mrb[0].mxu0
        %3996 = vmatprep.mubr.bf16.mxu0 0
        %3997 = vmatmul.mubr.bf16.gmra.mrb[0].mxu0 %v3786
        %v3998 = vpop.f32.mrb[0].mxu0
        %v3999 = vadd.f32 0.0, %v3998
        %v4000 = vpop.f32.mrb[0].mxu0
        %v4001 = vpop.f32.mrb[0].mxu0
        %v4002 = vadd.f32 0.0, %v4001
        %v4003 = vpop.f32.mrb[0].mxu0
        %4004 = vmatprep.mubr.bf16.mxu0 0
        %4005 = vmatmul.mubr.bf16.gmra.mrb[0].mxu0 %v3787
        %v4006 = vpop.f32.mrb[0].mxu0
        %v4007 = vadd.f32 0.0, %v4006
        %v4008 = vpop.f32.mrb[0].mxu0
        %v4009 = vpop.f32.mrb[0].mxu0
        %v4010 = vadd.f32 0.0, %v4009
        %v4011 = vpop.f32.mrb[0].mxu0
        %4012 = vdwg.mxu0
        %v4013 = vadd.f32 %v3516, %v3887
        %v4014 = vadd.f32 %v3517, %v3890
        %v4015 = vadd.f32 %v3518, %v3895
        %v4016 = vadd.f32 %v3519, %v3898
        %v4017 = vadd.f32 %v3520, %v3903
        %v4018 = vadd.f32 %v3521, %v3906
        %v4019 = vadd.f32 %v3522, %v3911
        %v4020 = vadd.f32 %v3523, %v3914
        %v4021 = vadd.f32 %v3524, %v3919
        %v4022 = vadd.f32 %v3525, %v3922
        %v4023 = vadd.f32 %v3526, %v3927
        %v4024 = vadd.f32 %v3527, %v3930
        %v4025 = vadd.f32 %v3528, %v3935
        %v4026 = vadd.f32 %v3529, %v3938
        %v4027 = vadd.f32 %v3530, %v3943
        %v4028 = vadd.f32 %v3531, %v3946
        %v4029 = vadd.f32 %v3532, %v3951
        %v4030 = vadd.f32 %v3533, %v3954
        %v4031 = vadd.f32 %v3534, %v3959
        %v4032 = vadd.f32 %v3535, %v3962
        %v4033 = vadd.f32 %v3536, %v3967
        %v4034 = vadd.f32 %v3537, %v3970
        %v4035 = vadd.f32 %v3538, %v3975
        %v4036 = vadd.f32 %v3539, %v3978
        %v4037 = vadd.f32 %v3540, %v3983
        %v4038 = vadd.f32 %v3541, %v3986
        %v4039 = vadd.f32 %v3542, %v3991
        %v4040 = vadd.f32 %v3543, %v3994
        %v4041 = vadd.f32 %v3544, %v3999
        %v4042 = vadd.f32 %v3545, %v4002
        %v4043 = vadd.f32 %v3546, %v4007
        %v4044 = vadd.f32 %v3547, %v4010
        %s4045 = scalar_lea.vmem [#allocation2], 24
        %v4046 = vld [vmem:[%s4045] sm:$0xf]
        %v4047 = vld [vmem:[%s4045 + $0x4] sm:$0xf]
        %v4048 = vld [vmem:[%s4045 + $0xc] sm:$0xf]
        %v4049 = vld [vmem:[%s4045 + $0x10] sm:$0xf]
        %v4050 = vld [vmem:[%s4045 + $0x18] sm:$0xf]
        %v4051 = vld [vmem:[%s4045 + $0x1c] sm:$0xf]
        %v4052 = vld [vmem:[%s4045 + $0x24] sm:$0xf]
        %v4053 = vld [vmem:[%s4045 + $0x28] sm:$0xf]
        %v4054 = vld [vmem:[%s4045 + $0x30] sm:$0xf]
        %v4055 = vld [vmem:[%s4045 + $0x34] sm:$0xf]
        %v4056 = vld [vmem:[%s4045 + $0x3c] sm:$0xf]
        %v4057 = vld [vmem:[%s4045 + $0x40] sm:$0xf]
        %v4058 = vld [vmem:[%s4045 + $0x48] sm:$0xf]
        %v4059 = vld [vmem:[%s4045 + $0x4c] sm:$0xf]
        %v4060 = vld [vmem:[%s4045 + $0x54] sm:$0xf]
        %v4061 = vld [vmem:[%s4045 + $0x58] sm:$0xf]
        %v4062 = vld [vmem:[%s4045 + $0x60] sm:$0xf]
        %v4063 = vld [vmem:[%s4045 + $0x64] sm:$0xf]
        %v4064 = vld [vmem:[%s4045 + $0x6c] sm:$0xf]
        %v4065 = vld [vmem:[%s4045 + $0x70] sm:$0xf]
        %v4066 = vld [vmem:[%s4045 + $0x78] sm:$0xf]
        %v4067 = vld [vmem:[%s4045 + $0x7c] sm:$0xf]
        %v4068 = vld [vmem:[%s4045 + $0x84] sm:$0xf]
        %v4069 = vld [vmem:[%s4045 + $0x88] sm:$0xf]
        %v4070 = vld [vmem:[%s4045 + $0x90] sm:$0xf]
        %v4071 = vld [vmem:[%s4045 + $0x94] sm:$0xf]
        %v4072 = vld [vmem:[%s4045 + $0x9c] sm:$0xf]
        %v4073 = vld [vmem:[%s4045 + $0xa0] sm:$0xf]
        %v4074 = vld [vmem:[%s4045 + $0xa8] sm:$0xf]
        %v4075 = vld [vmem:[%s4045 + $0xac] sm:$0xf]
        %v4076 = vld [vmem:[%s4045 + $0xb4] sm:$0xf]
        %v4077 = vld [vmem:[%s4045 + $0xb8] sm:$0xf]
        %v4078 = vld [vmem:[#allocation7 + $0x180] sm:$0xf]
        %v4079 = vld [vmem:[#allocation7 + $0x184] sm:$0xf]
        %v4080 = vld [vmem:[#allocation7 + $0x188] sm:$0xf]
        %v4081 = vld [vmem:[#allocation7 + $0x18c] sm:$0xf]
        %v4082 = vld [vmem:[#allocation7 + $0x190] sm:$0xf]
        %v4083 = vld [vmem:[#allocation7 + $0x194] sm:$0xf]
        %v4084 = vld [vmem:[#allocation7 + $0x198] sm:$0xf]
        %v4085 = vld [vmem:[#allocation7 + $0x19c] sm:$0xf]
        %v4086 = vld [vmem:[#allocation7 + $0x1a0] sm:$0xf]
        %v4087 = vld [vmem:[#allocation7 + $0x1a4] sm:$0xf]
        %v4088 = vld [vmem:[#allocation7 + $0x1a8] sm:$0xf]
        %v4089 = vld [vmem:[#allocation7 + $0x1ac] sm:$0xf]
        %v4090 = vld [vmem:[#allocation7 + $0x1b0] sm:$0xf]
        %v4091 = vld [vmem:[#allocation7 + $0x1b4] sm:$0xf]
        %v4092 = vld [vmem:[#allocation7 + $0x1b8] sm:$0xf]
        %v4093 = vld [vmem:[#allocation7 + $0x1bc] sm:$0xf]
        %v4126 = vunpack.c.l.b16 %v4046
        %v4127 = vunpack.c.l.b16 %v4047
        %v4128 = vunpack.c.l.b16 %v4048
        %v4129 = vunpack.c.l.b16 %v4049
        %v4130 = vunpack.c.l.b16 %v4050
        %v4131 = vunpack.c.l.b16 %v4051
        %v4132 = vunpack.c.l.b16 %v4052
        %v4133 = vunpack.c.l.b16 %v4053
        %v4134 = vunpack.c.l.b16 %v4054
        %v4135 = vunpack.c.l.b16 %v4055
        %v4136 = vunpack.c.l.b16 %v4056
        %v4137 = vunpack.c.l.b16 %v4057
        %v4138 = vunpack.c.l.b16 %v4058
        %v4139 = vunpack.c.l.b16 %v4059
        %v4140 = vunpack.c.l.b16 %v4060
        %v4141 = vunpack.c.l.b16 %v4061
        %v4142 = vunpack.c.l.b16 %v4062
        %v4143 = vunpack.c.l.b16 %v4063
        %v4144 = vunpack.c.l.b16 %v4064
        %v4145 = vunpack.c.l.b16 %v4065
        %v4146 = vunpack.c.l.b16 %v4066
        %v4147 = vunpack.c.l.b16 %v4067
        %v4148 = vunpack.c.l.b16 %v4068
        %v4149 = vunpack.c.l.b16 %v4069
        %v4150 = vunpack.c.l.b16 %v4070
        %v4151 = vunpack.c.l.b16 %v4071
        %v4152 = vunpack.c.l.b16 %v4072
        %v4153 = vunpack.c.l.b16 %v4073
        %v4154 = vunpack.c.l.b16 %v4074
        %v4155 = vunpack.c.l.b16 %v4075
        %v4156 = vunpack.c.l.b16 %v4076
        %v4157 = vunpack.c.l.b16 %v4077
        %v4158 = vpack.c.b16 %v4127, %v4126
        %v4159 = vpack.c.b16 %v4129, %v4128
        %v4160 = vpack.c.b16 %v4131, %v4130
        %v4161 = vpack.c.b16 %v4133, %v4132
        %v4162 = vpack.c.b16 %v4135, %v4134
        %v4163 = vpack.c.b16 %v4137, %v4136
        %v4164 = vpack.c.b16 %v4139, %v4138
        %v4165 = vpack.c.b16 %v4141, %v4140
        %v4166 = vpack.c.b16 %v4143, %v4142
        %v4167 = vpack.c.b16 %v4145, %v4144
        %v4168 = vpack.c.b16 %v4147, %v4146
        %v4169 = vpack.c.b16 %v4149, %v4148
        %v4170 = vpack.c.b16 %v4151, %v4150
        %v4171 = vpack.c.b16 %v4153, %v4152
        %v4172 = vpack.c.b16 %v4155, %v4154
        %v4173 = vpack.c.b16 %v4157, %v4156
        %v4206 = vunpack.c.l.b16 %v4078
        %v4207 = vunpack.c.l.b16 %v4079
        %v4208 = vunpack.c.l.b16 %v4080
        %v4209 = vunpack.c.l.b16 %v4081
        %v4210 = vunpack.c.l.b16 %v4082
        %v4211 = vunpack.c.l.b16 %v4083
        %v4212 = vunpack.c.l.b16 %v4084
        %v4213 = vunpack.c.l.b16 %v4085
        %v4214 = vunpack.c.l.b16 %v4086
        %v4215 = vunpack.c.l.b16 %v4087
        %v4216 = vunpack.c.l.b16 %v4088
        %v4217 = vunpack.c.l.b16 %v4089
        %v4218 = vunpack.c.l.b16 %v4090
        %v4219 = vunpack.c.l.b16 %v4091
        %v4220 = vunpack.c.l.b16 %v4092
        %v4221 = vunpack.c.l.b16 %v4093
        %v4222 = vpack.c.b16 %v4207, %v4206
        %v4223 = vpack.c.b16 %v4209, %v4208
        %v4224 = vpack.c.b16 %v4211, %v4210
        %v4225 = vpack.c.b16 %v4213, %v4212
        %v4226 = vpack.c.b16 %v4215, %v4214
        %v4227 = vpack.c.b16 %v4217, %v4216
        %v4228 = vpack.c.b16 %v4219, %v4218
        %v4229 = vpack.c.b16 %v4221, %v4220
        %4238 = vmatprep.subr.bf16.mxu0 0
        %4239 = vmatpush1.bf16.msra.mxu0 %v4222
        %4240 = vmatprep.subr.bf16.mxu0 0
        %4241 = vmatpush1.bf16.msra.mxu0 %v4223
        %4242 = vmatprep.subr.bf16.mxu0 0
        %4243 = vmatpush1.bf16.msra.mxu0 %v4224
        %4244 = vmatprep.subr.bf16.mxu0 0
        %4245 = vmatpush1.bf16.msra.mxu0 %v4225
        %4246 = vmatprep.subr.bf16.mxu0 0
        %4247 = vmatpush1.bf16.msra.mxu0 %v4226
        %4248 = vmatprep.subr.bf16.mxu0 0
        %4249 = vmatpush1.bf16.msra.mxu0 %v4227
        %4250 = vmatprep.subr.bf16.mxu0 0
        %4251 = vmatpush1.bf16.msra.mxu0 %v4228
        %4252 = vmatprep.subr.bf16.mxu0 0
        %4253 = vmatpush1.bf16.msra.mxu0 %v4229
        %4254 = vmatprep.subr.bf16.mxu0 0
        %4255 = vmatpush1.bf16.msra.mxu0 0
        %4256 = vmatprep.subr.bf16.mxu0 0
        %4257 = vmatpush1.bf16.msra.mxu0 0
        %4258 = vmatprep.subr.bf16.mxu0 0
        %4259 = vmatpush1.bf16.msra.mxu0 0
        %4260 = vmatprep.subr.bf16.mxu0 0
        %4261 = vmatpush1.bf16.msra.mxu0 0
        %4262 = vmatprep.subr.bf16.mxu0 0
        %4263 = vmatpush1.bf16.msra.mxu0 0
        %4264 = vmatprep.subr.bf16.mxu0 0
        %4265 = vmatpush1.bf16.msra.mxu0 0
        %4266 = vmatprep.subr.bf16.mxu0 0
        %4267 = vmatpush1.bf16.msra.mxu0 0
        %4268 = vmatprep.subr.bf16.mxu0 0
        %4269 = vmatpush1.bf16.msra.mxu0 0
        %4270 = vmatprep.mubr.bf16.mxu0 0
        %4271 = vmatmul.mubr.bf16.gmra.mrb[0].mxu0 %v4158
        %v4272 = vpop.f32.mrb[0].mxu0
        %v4273 = vadd.f32 0.0, %v4272
        %v4274 = vpop.f32.mrb[0].mxu0
        %v4275 = vpop.f32.mrb[0].mxu0
        %v4276 = vadd.f32 0.0, %v4275
        %v4277 = vpop.f32.mrb[0].mxu0
        %4278 = vmatprep.mubr.bf16.mxu0 0
        %4279 = vmatmul.mubr.bf16.gmra.mrb[0].mxu0 %v4159
        %v4280 = vpop.f32.mrb[0].mxu0
        %v4281 = vadd.f32 0.0, %v4280
        %v4282 = vpop.f32.mrb[0].mxu0
        %v4283 = vpop.f32.mrb[0].mxu0
        %v4284 = vadd.f32 0.0, %v4283
        %v4285 = vpop.f32.mrb[0].mxu0
        %4286 = vmatprep.mubr.bf16.mxu0 0
        %4287 = vmatmul.mubr.bf16.gmra.mrb[0].mxu0 %v4160
        %v4288 = vpop.f32.mrb[0].mxu0
        %v4289 = vadd.f32 0.0, %v4288
        %v4290 = vpop.f32.mrb[0].mxu0
        %v4291 = vpop.f32.mrb[0].mxu0
        %v4292 = vadd.f32 0.0, %v4291
        %v4293 = vpop.f32.mrb[0].mxu0
        %4294 = vmatprep.mubr.bf16.mxu0 0
        %4295 = vmatmul.mubr.bf16.gmra.mrb[0].mxu0 %v4161
        %v4296 = vpop.f32.mrb[0].mxu0
        %v4297 = vadd.f32 0.0, %v4296
        %v4298 = vpop.f32.mrb[0].mxu0
        %v4299 = vpop.f32.mrb[0].mxu0
        %v4300 = vadd.f32 0.0, %v4299
        %v4301 = vpop.f32.mrb[0].mxu0
        %4302 = vmatprep.mubr.bf16.mxu0 0
        %4303 = vmatmul.mubr.bf16.gmra.mrb[0].mxu0 %v4162
        %v4304 = vpop.f32.mrb[0].mxu0
        %v4305 = vadd.f32 0.0, %v4304
        %v4306 = vpop.f32.mrb[0].mxu0
        %v4307 = vpop.f32.mrb[0].mxu0
        %v4308 = vadd.f32 0.0, %v4307
        %v4309 = vpop.f32.mrb[0].mxu0
        %4310 = vmatprep.mubr.bf16.mxu0 0
        %4311 = vmatmul.mubr.bf16.gmra.mrb[0].mxu0 %v4163
        %v4312 = vpop.f32.mrb[0].mxu0
        %v4313 = vadd.f32 0.0, %v4312
        %v4314 = vpop.f32.mrb[0].mxu0
        %v4315 = vpop.f32.mrb[0].mxu0
        %v4316 = vadd.f32 0.0, %v4315
        %v4317 = vpop.f32.mrb[0].mxu0
        %4318 = vmatprep.mubr.bf16.mxu0 0
        %4319 = vmatmul.mubr.bf16.gmra.mrb[0].mxu0 %v4164
        %v4320 = vpop.f32.mrb[0].mxu0
        %v4321 = vadd.f32 0.0, %v4320
        %v4322 = vpop.f32.mrb[0].mxu0
        %v4323 = vpop.f32.mrb[0].mxu0
        %v4324 = vadd.f32 0.0, %v4323
        %v4325 = vpop.f32.mrb[0].mxu0
        %4326 = vmatprep.mubr.bf16.mxu0 0
        %4327 = vmatmul.mubr.bf16.gmra.mrb[0].mxu0 %v4165
        %v4328 = vpop.f32.mrb[0].mxu0
        %v4329 = vadd.f32 0.0, %v4328
        %v4330 = vpop.f32.mrb[0].mxu0
        %v4331 = vpop.f32.mrb[0].mxu0
        %v4332 = vadd.f32 0.0, %v4331
        %v4333 = vpop.f32.mrb[0].mxu0
        %4334 = vmatprep.mubr.bf16.mxu0 0
        %4335 = vmatmul.mubr.bf16.gmra.mrb[0].mxu0 %v4166
        %v4336 = vpop.f32.mrb[0].mxu0
        %v4337 = vadd.f32 0.0, %v4336
        %v4338 = vpop.f32.mrb[0].mxu0
        %v4339 = vpop.f32.mrb[0].mxu0
        %v4340 = vadd.f32 0.0, %v4339
        %v4341 = vpop.f32.mrb[0].mxu0
        %4342 = vmatprep.mubr.bf16.mxu0 0
        %4343 = vmatmul.mubr.bf16.gmra.mrb[0].mxu0 %v4167
        %v4344 = vpop.f32.mrb[0].mxu0
        %v4345 = vadd.f32 0.0, %v4344
        %v4346 = vpop.f32.mrb[0].mxu0
        %v4347 = vpop.f32.mrb[0].mxu0
        %v4348 = vadd.f32 0.0, %v4347
        %v4349 = vpop.f32.mrb[0].mxu0
        %4350 = vmatprep.mubr.bf16.mxu0 0
        %4351 = vmatmul.mubr.bf16.gmra.mrb[0].mxu0 %v4168
        %v4352 = vpop.f32.mrb[0].mxu0
        %v4353 = vadd.f32 0.0, %v4352
        %v4354 = vpop.f32.mrb[0].mxu0
        %v4355 = vpop.f32.mrb[0].mxu0
        %v4356 = vadd.f32 0.0, %v4355
        %v4357 = vpop.f32.mrb[0].mxu0
        %4358 = vmatprep.mubr.bf16.mxu0 0
        %4359 = vmatmul.mubr.bf16.gmra.mrb[0].mxu0 %v4169
        %v4360 = vpop.f32.mrb[0].mxu0
        %v4361 = vadd.f32 0.0, %v4360
        %v4362 = vpop.f32.mrb[0].mxu0
        %v4363 = vpop.f32.mrb[0].mxu0
        %v4364 = vadd.f32 0.0, %v4363
        %v4365 = vpop.f32.mrb[0].mxu0
        %4366 = vmatprep.mubr.bf16.mxu0 0
        %4367 = vmatmul.mubr.bf16.gmra.mrb[0].mxu0 %v4170
        %v4368 = vpop.f32.mrb[0].mxu0
        %v4369 = vadd.f32 0.0, %v4368
        %v4370 = vpop.f32.mrb[0].mxu0
        %v4371 = vpop.f32.mrb[0].mxu0
        %v4372 = vadd.f32 0.0, %v4371
        %v4373 = vpop.f32.mrb[0].mxu0
        %4374 = vmatprep.mubr.bf16.mxu0 0
        %4375 = vmatmul.mubr.bf16.gmra.mrb[0].mxu0 %v4171
        %v4376 = vpop.f32.mrb[0].mxu0
        %v4377 = vadd.f32 0.0, %v4376
        %v4378 = vpop.f32.mrb[0].mxu0
        %v4379 = vpop.f32.mrb[0].mxu0
        %v4380 = vadd.f32 0.0, %v4379
        %v4381 = vpop.f32.mrb[0].mxu0
        %4382 = vmatprep.mubr.bf16.mxu0 0
        %4383 = vmatmul.mubr.bf16.gmra.mrb[0].mxu0 %v4172
        %v4384 = vpop.f32.mrb[0].mxu0
        %v4385 = vadd.f32 0.0, %v4384
        %v4386 = vpop.f32.mrb[0].mxu0
        %v4387 = vpop.f32.mrb[0].mxu0
        %v4388 = vadd.f32 0.0, %v4387
        %v4389 = vpop.f32.mrb[0].mxu0
        %4390 = vmatprep.mubr.bf16.mxu0 0
        %4391 = vmatmul.mubr.bf16.gmra.mrb[0].mxu0 %v4173
        %v4392 = vpop.f32.mrb[0].mxu0
        %v4393 = vadd.f32 0.0, %v4392
        %v4394 = vpop.f32.mrb[0].mxu0
        %v4395 = vpop.f32.mrb[0].mxu0
        %v4396 = vadd.f32 0.0, %v4395
        %v4397 = vpop.f32.mrb[0].mxu0
        %4398 = vdwg.mxu0
        %v4399 = vadd.f32 %v4013, %v4273
        %v4400 = vadd.f32 %v4014, %v4276
        %v4401 = vadd.f32 %v4015, %v4281
        %v4402 = vadd.f32 %v4016, %v4284
        %v4403 = vadd.f32 %v4017, %v4289
        %v4404 = vadd.f32 %v4018, %v4292
        %v4405 = vadd.f32 %v4019, %v4297
        %v4406 = vadd.f32 %v4020, %v4300
        %v4407 = vadd.f32 %v4021, %v4305
        %v4408 = vadd.f32 %v4022, %v4308
        %v4409 = vadd.f32 %v4023, %v4313
        %v4410 = vadd.f32 %v4024, %v4316
        %v4411 = vadd.f32 %v4025, %v4321
        %v4412 = vadd.f32 %v4026, %v4324
        %v4413 = vadd.f32 %v4027, %v4329
        %v4414 = vadd.f32 %v4028, %v4332
        %v4415 = vadd.f32 %v4029, %v4337
        %v4416 = vadd.f32 %v4030, %v4340
        %v4417 = vadd.f32 %v4031, %v4345
        %v4418 = vadd.f32 %v4032, %v4348
        %v4419 = vadd.f32 %v4033, %v4353
        %v4420 = vadd.f32 %v4034, %v4356
        %v4421 = vadd.f32 %v4035, %v4361
        %v4422 = vadd.f32 %v4036, %v4364
        %v4423 = vadd.f32 %v4037, %v4369
        %v4424 = vadd.f32 %v4038, %v4372
        %v4425 = vadd.f32 %v4039, %v4377
        %v4426 = vadd.f32 %v4040, %v4380
        %v4427 = vadd.f32 %v4041, %v4385
        %v4428 = vadd.f32 %v4042, %v4388
        %v4429 = vadd.f32 %v4043, %v4393
        %v4430 = vadd.f32 %v4044, %v4396
        %v4431 = vld [vmem:[%s4045] sm:$0xf]
        %v4432 = vld [vmem:[%s4045 + $0x4] sm:$0xf]
        %v4433 = vld [vmem:[%s4045 + $0x8] sm:$0x1]
        %v4434 = vld [vmem:[%s4045 + $0xc] sm:$0xf]
        %v4435 = vld [vmem:[%s4045 + $0x10] sm:$0xf]
        %v4436 = vld [vmem:[%s4045 + $0x14] sm:$0x1]
        %v4437 = vld [vmem:[%s4045 + $0x18] sm:$0xf]
        %v4438 = vld [vmem:[%s4045 + $0x1c] sm:$0xf]
        %v4439 = vld [vmem:[%s4045 + $0x20] sm:$0x1]
        %v4440 = vld [vmem:[%s4045 + $0x24] sm:$0xf]
        %v4441 = vld [vmem:[%s4045 + $0x28] sm:$0xf]
        %v4442 = vld [vmem:[%s4045 + $0x2c] sm:$0x1]
        %v4443 = vld [vmem:[%s4045 + $0x30] sm:$0xf]
        %v4444 = vld [vmem:[%s4045 + $0x34] sm:$0xf]
        %v4445 = vld [vmem:[%s4045 + $0x38] sm:$0x1]
        %v4446 = vld [vmem:[%s4045 + $0x3c] sm:$0xf]
        %v4447 = vld [vmem:[%s4045 + $0x40] sm:$0xf]
        %v4448 = vld [vmem:[%s4045 + $0x44] sm:$0x1]
        %v4449 = vld [vmem:[%s4045 + $0x48] sm:$0xf]
        %v4450 = vld [vmem:[%s4045 + $0x4c] sm:$0xf]
        %v4451 = vld [vmem:[%s4045 + $0x50] sm:$0x1]
        %v4452 = vld [vmem:[%s4045 + $0x54] sm:$0xf]
        %v4453 = vld [vmem:[%s4045 + $0x58] sm:$0xf]
        %v4454 = vld [vmem:[%s4045 + $0x5c] sm:$0x1]
        %v4455 = vld [vmem:[%s4045 + $0x60] sm:$0xf]
        %v4456 = vld [vmem:[%s4045 + $0x64] sm:$0xf]
        %v4457 = vld [vmem:[%s4045 + $0x68] sm:$0x1]
        %v4458 = vld [vmem:[%s4045 + $0x6c] sm:$0xf]
        %v4459 = vld [vmem:[%s4045 + $0x70] sm:$0xf]
        %v4460 = vld [vmem:[%s4045 + $0x74] sm:$0x1]
        %v4461 = vld [vmem:[%s4045 + $0x78] sm:$0xf]
        %v4462 = vld [vmem:[%s4045 + $0x7c] sm:$0xf]
        %v4463 = vld [vmem:[%s4045 + $0x80] sm:$0x1]
        %v4464 = vld [vmem:[%s4045 + $0x84] sm:$0xf]
        %v4465 = vld [vmem:[%s4045 + $0x88] sm:$0xf]
        %v4466 = vld [vmem:[%s4045 + $0x8c] sm:$0x1]
        %v4467 = vld [vmem:[%s4045 + $0x90] sm:$0xf]
        %v4468 = vld [vmem:[%s4045 + $0x94] sm:$0xf]
        %v4469 = vld [vmem:[%s4045 + $0x98] sm:$0x1]
        %v4470 = vld [vmem:[%s4045 + $0x9c] sm:$0xf]
        %v4471 = vld [vmem:[%s4045 + $0xa0] sm:$0xf]
        %v4472 = vld [vmem:[%s4045 + $0xa4] sm:$0x1]
        %v4473 = vld [vmem:[%s4045 + $0xa8] sm:$0xf]
        %v4474 = vld [vmem:[%s4045 + $0xac] sm:$0xf]
        %v4475 = vld [vmem:[%s4045 + $0xb0] sm:$0x1]
        %v4476 = vld [vmem:[%s4045 + $0xb4] sm:$0xf]
        %v4477 = vld [vmem:[%s4045 + $0xb8] sm:$0xf]
        %v4478 = vld [vmem:[%s4045 + $0xbc] sm:$0x1]
        %v4479 = vld [vmem:[#allocation7 + $0x1c0] sm:$0xf]
        %v4480 = vld [vmem:[#allocation7 + $0x1c4] sm:$0xf]
        %v4481 = vld [vmem:[#allocation7 + $0x1c8] sm:$0xf]
        %v4482 = vld [vmem:[#allocation7 + $0x1cc] sm:$0xf]
        %v4483 = vld [vmem:[#allocation7 + $0x1d0] sm:$0xf]
        %v4484 = vld [vmem:[#allocation7 + $0x1d4] sm:$0xf]
        %v4485 = vld [vmem:[#allocation7 + $0x1d8] sm:$0xf]
        %v4486 = vld [vmem:[#allocation7 + $0x1dc] sm:$0xf]
        %v4487 = vld [vmem:[#allocation7 + $0x1e0] sm:$0xf]
        %v4488 = vld [vmem:[#allocation7 + $0x1e4] sm:$0xf]
        %v4489 = vld [vmem:[#allocation7 + $0x1e8] sm:$0xf]
        %v4490 = vld [vmem:[#allocation7 + $0x1ec] sm:$0xf]
        %v4491 = vld [vmem:[#allocation7 + $0x1f0] sm:$0xf]
        %v4492 = vld [vmem:[#allocation7 + $0x1f4] sm:$0xf]
        %v4493 = vld [vmem:[#allocation7 + $0x1f8] sm:$0xf]
        %v4494 = vld [vmem:[#allocation7 + $0x1fc] sm:$0xf]
        %v4496 = vshrl.u32 %v4431, 16
        %v4498 = vrot.slane %v4496, 4
        %v4499 = vshll.u32 %v4431, 16
        %v4501 = vrot.slane %v4499, 5
        %v4502 = vor.u32 %v4498, %v4501
        %v4503 = vrot.slane %v4502, 4
        %v4505 = vshll.u32 %v4432, 16
        %v4507 = vrot.slane %v4505, 5
        %v4508 = vsel %vm963, %v4503, %v4507
        %v4509 = vshrl.u32 %v4432, 16
        %v4511 = vrot.slane %v4509, 4
        %v4512 = vor.u32 %v4511, %v4507
        %v4513 = vrot.slane %v4512, 4
        %v4515 = vshll.u32 %v4433, 16
        %v4517 = vrot.slane %v4515, 5
        %v4518 = vsel %vm963, %v4513, %v4517
        %v4520 = vshrl.u32 %v4434, 16
        %v4522 = vrot.slane %v4520, 4
        %v4523 = vshll.u32 %v4434, 16
        %v4525 = vrot.slane %v4523, 5
        %v4526 = vor.u32 %v4522, %v4525
        %v4527 = vrot.slane %v4526, 4
        %v4529 = vshll.u32 %v4435, 16
        %v4531 = vrot.slane %v4529, 5
        %v4532 = vsel %vm963, %v4527, %v4531
        %v4533 = vshrl.u32 %v4435, 16
        %v4535 = vrot.slane %v4533, 4
        %v4536 = vor.u32 %v4535, %v4531
        %v4537 = vrot.slane %v4536, 4
        %v4539 = vshll.u32 %v4436, 16
        %v4541 = vrot.slane %v4539, 5
        %v4542 = vsel %vm963, %v4537, %v4541
        %v4544 = vshrl.u32 %v4437, 16
        %v4546 = vrot.slane %v4544, 4
        %v4547 = vshll.u32 %v4437, 16
        %v4549 = vrot.slane %v4547, 5
        %v4550 = vor.u32 %v4546, %v4549
        %v4551 = vrot.slane %v4550, 4
        %v4553 = vshll.u32 %v4438, 16
        %v4555 = vrot.slane %v4553, 5
        %v4556 = vsel %vm963, %v4551, %v4555
        %v4557 = vshrl.u32 %v4438, 16
        %v4559 = vrot.slane %v4557, 4
        %v4560 = vor.u32 %v4559, %v4555
        %v4561 = vrot.slane %v4560, 4
        %v4563 = vshll.u32 %v4439, 16
        %v4565 = vrot.slane %v4563, 5
        %v4566 = vsel %vm963, %v4561, %v4565
        %v4568 = vshrl.u32 %v4440, 16
        %v4570 = vrot.slane %v4568, 4
        %v4571 = vshll.u32 %v4440, 16
        %v4573 = vrot.slane %v4571, 5
        %v4574 = vor.u32 %v4570, %v4573
        %v4575 = vrot.slane %v4574, 4
        %v4577 = vshll.u32 %v4441, 16
        %v4579 = vrot.slane %v4577, 5
        %v4580 = vsel %vm963, %v4575, %v4579
        %v4581 = vshrl.u32 %v4441, 16
        %v4583 = vrot.slane %v4581, 4
        %v4584 = vor.u32 %v4583, %v4579
        %v4585 = vrot.slane %v4584, 4
        %v4587 = vshll.u32 %v4442, 16
        %v4589 = vrot.slane %v4587, 5
        %v4590 = vsel %vm963, %v4585, %v4589
        %v4592 = vshrl.u32 %v4443, 16
        %v4594 = vrot.slane %v4592, 4
        %v4595 = vshll.u32 %v4443, 16
        %v4597 = vrot.slane %v4595, 5
        %v4598 = vor.u32 %v4594, %v4597
        %v4599 = vrot.slane %v4598, 4
        %v4601 = vshll.u32 %v4444, 16
        %v4603 = vrot.slane %v4601, 5
        %v4604 = vsel %vm963, %v4599, %v4603
        %v4605 = vshrl.u32 %v4444, 16
        %v4607 = vrot.slane %v4605, 4
        %v4608 = vor.u32 %v4607, %v4603
        %v4609 = vrot.slane %v4608, 4
        %v4611 = vshll.u32 %v4445, 16
        %v4613 = vrot.slane %v4611, 5
        %v4614 = vsel %vm963, %v4609, %v4613
        %v4616 = vshrl.u32 %v4446, 16
        %v4618 = vrot.slane %v4616, 4
        %v4619 = vshll.u32 %v4446, 16
        %v4621 = vrot.slane %v4619, 5
        %v4622 = vor.u32 %v4618, %v4621
        %v4623 = vrot.slane %v4622, 4
        %v4625 = vshll.u32 %v4447, 16
        %v4627 = vrot.slane %v4625, 5
        %v4628 = vsel %vm963, %v4623, %v4627
        %v4629 = vshrl.u32 %v4447, 16
        %v4631 = vrot.slane %v4629, 4
        %v4632 = vor.u32 %v4631, %v4627
        %v4633 = vrot.slane %v4632, 4
        %v4635 = vshll.u32 %v4448, 16
        %v4637 = vrot.slane %v4635, 5
        %v4638 = vsel %vm963, %v4633, %v4637
        %v4640 = vshrl.u32 %v4449, 16
        %v4642 = vrot.slane %v4640, 4
        %v4643 = vshll.u32 %v4449, 16
        %v4645 = vrot.slane %v4643, 5
        %v4646 = vor.u32 %v4642, %v4645
        %v4647 = vrot.slane %v4646, 4
        %v4649 = vshll.u32 %v4450, 16
        %v4651 = vrot.slane %v4649, 5
        %v4652 = vsel %vm963, %v4647, %v4651
        %v4653 = vshrl.u32 %v4450, 16
        %v4655 = vrot.slane %v4653, 4
        %v4656 = vor.u32 %v4655, %v4651
        %v4657 = vrot.slane %v4656, 4
        %v4659 = vshll.u32 %v4451, 16
        %v4661 = vrot.slane %v4659, 5
        %v4662 = vsel %vm963, %v4657, %v4661
        %v4664 = vshrl.u32 %v4452, 16
        %v4666 = vrot.slane %v4664, 4
        %v4667 = vshll.u32 %v4452, 16
        %v4669 = vrot.slane %v4667, 5
        %v4670 = vor.u32 %v4666, %v4669
        %v4671 = vrot.slane %v4670, 4
        %v4673 = vshll.u32 %v4453, 16
        %v4675 = vrot.slane %v4673, 5
        %v4676 = vsel %vm963, %v4671, %v4675
        %v4677 = vshrl.u32 %v4453, 16
        %v4679 = vrot.slane %v4677, 4
        %v4680 = vor.u32 %v4679, %v4675
        %v4681 = vrot.slane %v4680, 4
        %v4683 = vshll.u32 %v4454, 16
        %v4685 = vrot.slane %v4683, 5
        %v4686 = vsel %vm963, %v4681, %v4685
        %v4688 = vshrl.u32 %v4455, 16
        %v4690 = vrot.slane %v4688, 4
        %v4691 = vshll.u32 %v4455, 16
        %v4693 = vrot.slane %v4691, 5
        %v4694 = vor.u32 %v4690, %v4693
        %v4695 = vrot.slane %v4694, 4
        %v4697 = vshll.u32 %v4456, 16
        %v4699 = vrot.slane %v4697, 5
        %v4700 = vsel %vm963, %v4695, %v4699
        %v4701 = vshrl.u32 %v4456, 16
        %v4703 = vrot.slane %v4701, 4
        %v4704 = vor.u32 %v4703, %v4699
        %v4705 = vrot.slane %v4704, 4
        %v4707 = vshll.u32 %v4457, 16
        %v4709 = vrot.slane %v4707, 5
        %v4710 = vsel %vm963, %v4705, %v4709
        %v4712 = vshrl.u32 %v4458, 16
        %v4714 = vrot.slane %v4712, 4
        %v4715 = vshll.u32 %v4458, 16
        %v4717 = vrot.slane %v4715, 5
        %v4718 = vor.u32 %v4714, %v4717
        %v4719 = vrot.slane %v4718, 4
        %v4721 = vshll.u32 %v4459, 16
        %v4723 = vrot.slane %v4721, 5
        %v4724 = vsel %vm963, %v4719, %v4723
        %v4725 = vshrl.u32 %v4459, 16
        %v4727 = vrot.slane %v4725, 4
        %v4728 = vor.u32 %v4727, %v4723
        %v4729 = vrot.slane %v4728, 4
        %v4731 = vshll.u32 %v4460, 16
        %v4733 = vrot.slane %v4731, 5
        %v4734 = vsel %vm963, %v4729, %v4733
        %v4736 = vshrl.u32 %v4461, 16
        %v4738 = vrot.slane %v4736, 4
        %v4739 = vshll.u32 %v4461, 16
        %v4741 = vrot.slane %v4739, 5
        %v4742 = vor.u32 %v4738, %v4741
        %v4743 = vrot.slane %v4742, 4
        %v4745 = vshll.u32 %v4462, 16
        %v4747 = vrot.slane %v4745, 5
        %v4748 = vsel %vm963, %v4743, %v4747
        %v4749 = vshrl.u32 %v4462, 16
        %v4751 = vrot.slane %v4749, 4
        %v4752 = vor.u32 %v4751, %v4747
        %v4753 = vrot.slane %v4752, 4
        %v4755 = vshll.u32 %v4463, 16
        %v4757 = vrot.slane %v4755, 5
        %v4758 = vsel %vm963, %v4753, %v4757
        %v4760 = vshrl.u32 %v4464, 16
        %v4762 = vrot.slane %v4760, 4
        %v4763 = vshll.u32 %v4464, 16
        %v4765 = vrot.slane %v4763, 5
        %v4766 = vor.u32 %v4762, %v4765
        %v4767 = vrot.slane %v4766, 4
        %v4769 = vshll.u32 %v4465, 16
        %v4771 = vrot.slane %v4769, 5
        %v4772 = vsel %vm963, %v4767, %v4771
        %v4773 = vshrl.u32 %v4465, 16
        %v4775 = vrot.slane %v4773, 4
        %v4776 = vor.u32 %v4775, %v4771
        %v4777 = vrot.slane %v4776, 4
        %v4779 = vshll.u32 %v4466, 16
        %v4781 = vrot.slane %v4779, 5
        %v4782 = vsel %vm963, %v4777, %v4781
        %v4784 = vshrl.u32 %v4467, 16
        %v4786 = vrot.slane %v4784, 4
        %v4787 = vshll.u32 %v4467, 16
        %v4789 = vrot.slane %v4787, 5
        %v4790 = vor.u32 %v4786, %v4789
        %v4791 = vrot.slane %v4790, 4
        %v4793 = vshll.u32 %v4468, 16
        %v4795 = vrot.slane %v4793, 5
        %v4796 = vsel %vm963, %v4791, %v4795
        %v4797 = vshrl.u32 %v4468, 16
        %v4799 = vrot.slane %v4797, 4
        %v4800 = vor.u32 %v4799, %v4795
        %v4801 = vrot.slane %v4800, 4
        %v4803 = vshll.u32 %v4469, 16
        %v4805 = vrot.slane %v4803, 5
        %v4806 = vsel %vm963, %v4801, %v4805
        %v4808 = vshrl.u32 %v4470, 16
        %v4810 = vrot.slane %v4808, 4
        %v4811 = vshll.u32 %v4470, 16
        %v4813 = vrot.slane %v4811, 5
        %v4814 = vor.u32 %v4810, %v4813
        %v4815 = vrot.slane %v4814, 4
        %v4817 = vshll.u32 %v4471, 16
        %v4819 = vrot.slane %v4817, 5
        %v4820 = vsel %vm963, %v4815, %v4819
        %v4821 = vshrl.u32 %v4471, 16
        %v4823 = vrot.slane %v4821, 4
        %v4824 = vor.u32 %v4823, %v4819
        %v4825 = vrot.slane %v4824, 4
        %v4827 = vshll.u32 %v4472, 16
        %v4829 = vrot.slane %v4827, 5
        %v4830 = vsel %vm963, %v4825, %v4829
        %v4832 = vshrl.u32 %v4473, 16
        %v4834 = vrot.slane %v4832, 4
        %v4835 = vshll.u32 %v4473, 16
        %v4837 = vrot.slane %v4835, 5
        %v4838 = vor.u32 %v4834, %v4837
        %v4839 = vrot.slane %v4838, 4
        %v4841 = vshll.u32 %v4474, 16
        %v4843 = vrot.slane %v4841, 5
        %v4844 = vsel %vm963, %v4839, %v4843
        %v4845 = vshrl.u32 %v4474, 16
        %v4847 = vrot.slane %v4845, 4
        %v4848 = vor.u32 %v4847, %v4843
        %v4849 = vrot.slane %v4848, 4
        %v4851 = vshll.u32 %v4475, 16
        %v4853 = vrot.slane %v4851, 5
        %v4854 = vsel %vm963, %v4849, %v4853
        %v4856 = vshrl.u32 %v4476, 16
        %v4858 = vrot.slane %v4856, 4
        %v4859 = vshll.u32 %v4476, 16
        %v4861 = vrot.slane %v4859, 5
        %v4862 = vor.u32 %v4858, %v4861
        %v4863 = vrot.slane %v4862, 4
        %v4865 = vshll.u32 %v4477, 16
        %v4867 = vrot.slane %v4865, 5
        %v4868 = vsel %vm963, %v4863, %v4867
        %v4869 = vshrl.u32 %v4477, 16
        %v4871 = vrot.slane %v4869, 4
        %v4872 = vor.u32 %v4871, %v4867
        %v4873 = vrot.slane %v4872, 4
        %v4875 = vshll.u32 %v4478, 16
        %v4877 = vrot.slane %v4875, 5
        %v4878 = vsel %vm963, %v4873, %v4877
        %v4879 = vunpack.c.l.b16 %v4508
        %v4880 = vunpack.c.l.b16 %v4518
        %v4881 = vunpack.c.l.b16 %v4532
        %v4882 = vunpack.c.l.b16 %v4542
        %v4883 = vunpack.c.l.b16 %v4556
        %v4884 = vunpack.c.l.b16 %v4566
        %v4885 = vunpack.c.l.b16 %v4580
        %v4886 = vunpack.c.l.b16 %v4590
        %v4887 = vunpack.c.l.b16 %v4604
        %v4888 = vunpack.c.l.b16 %v4614
        %v4889 = vunpack.c.l.b16 %v4628
        %v4890 = vunpack.c.l.b16 %v4638
        %v4891 = vunpack.c.l.b16 %v4652
        %v4892 = vunpack.c.l.b16 %v4662
        %v4893 = vunpack.c.l.b16 %v4676
        %v4894 = vunpack.c.l.b16 %v4686
        %v4895 = vunpack.c.l.b16 %v4700
        %v4896 = vunpack.c.l.b16 %v4710
        %v4897 = vunpack.c.l.b16 %v4724
        %v4898 = vunpack.c.l.b16 %v4734
        %v4899 = vunpack.c.l.b16 %v4748
        %v4900 = vunpack.c.l.b16 %v4758
        %v4901 = vunpack.c.l.b16 %v4772
        %v4902 = vunpack.c.l.b16 %v4782
        %v4903 = vunpack.c.l.b16 %v4796
        %v4904 = vunpack.c.l.b16 %v4806
        %v4905 = vunpack.c.l.b16 %v4820
        %v4906 = vunpack.c.l.b16 %v4830
        %v4907 = vunpack.c.l.b16 %v4844
        %v4908 = vunpack.c.l.b16 %v4854
        %v4909 = vunpack.c.l.b16 %v4868
        %v4910 = vunpack.c.l.b16 %v4878
        %v4911 = vpack.c.b16 %v4880, %v4879
        %v4912 = vpack.c.b16 %v4882, %v4881
        %v4913 = vpack.c.b16 %v4884, %v4883
        %v4914 = vpack.c.b16 %v4886, %v4885
        %v4915 = vpack.c.b16 %v4888, %v4887
        %v4916 = vpack.c.b16 %v4890, %v4889
        %v4917 = vpack.c.b16 %v4892, %v4891
        %v4918 = vpack.c.b16 %v4894, %v4893
        %v4919 = vpack.c.b16 %v4896, %v4895
        %v4920 = vpack.c.b16 %v4898, %v4897
        %v4921 = vpack.c.b16 %v4900, %v4899
        %v4922 = vpack.c.b16 %v4902, %v4901
        %v4923 = vpack.c.b16 %v4904, %v4903
        %v4924 = vpack.c.b16 %v4906, %v4905
        %v4925 = vpack.c.b16 %v4908, %v4907
        %v4926 = vpack.c.b16 %v4910, %v4909
        %v4959 = vunpack.c.l.b16 %v4479
        %v4960 = vunpack.c.l.b16 %v4480
        %v4961 = vunpack.c.l.b16 %v4481
        %v4962 = vunpack.c.l.b16 %v4482
        %v4963 = vunpack.c.l.b16 %v4483
        %v4964 = vunpack.c.l.b16 %v4484
        %v4965 = vunpack.c.l.b16 %v4485
        %v4966 = vunpack.c.l.b16 %v4486
        %v4967 = vunpack.c.l.b16 %v4487
        %v4968 = vunpack.c.l.b16 %v4488
        %v4969 = vunpack.c.l.b16 %v4489
        %v4970 = vunpack.c.l.b16 %v4490
        %v4971 = vunpack.c.l.b16 %v4491
        %v4972 = vunpack.c.l.b16 %v4492
        %v4973 = vunpack.c.l.b16 %v4493
        %v4974 = vunpack.c.l.b16 %v4494
        %v4975 = vpack.c.b16 %v4960, %v4959
        %v4976 = vpack.c.b16 %v4962, %v4961
        %v4977 = vpack.c.b16 %v4964, %v4963
        %v4978 = vpack.c.b16 %v4966, %v4965
        %v4979 = vpack.c.b16 %v4968, %v4967
        %v4980 = vpack.c.b16 %v4970, %v4969
        %v4981 = vpack.c.b16 %v4972, %v4971
        %v4982 = vpack.c.b16 %v4974, %v4973
        %4991 = vmatprep.subr.bf16.mxu0 0
        %4992 = vmatpush1.bf16.msra.mxu0 %v4975
        %4993 = vmatprep.subr.bf16.mxu0 0
        %4994 = vmatpush1.bf16.msra.mxu0 %v4976
        %4995 = vmatprep.subr.bf16.mxu0 0
        %4996 = vmatpush1.bf16.msra.mxu0 %v4977
        %4997 = vmatprep.subr.bf16.mxu0 0
        %4998 = vmatpush1.bf16.msra.mxu0 %v4978
        %4999 = vmatprep.subr.bf16.mxu0 0
        %5000 = vmatpush1.bf16.msra.mxu0 %v4979
        %5001 = vmatprep.subr.bf16.mxu0 0
        %5002 = vmatpush1.bf16.msra.mxu0 %v4980
        %5003 = vmatprep.subr.bf16.mxu0 0
        %5004 = vmatpush1.bf16.msra.mxu0 %v4981
        %5005 = vmatprep.subr.bf16.mxu0 0
        %5006 = vmatpush1.bf16.msra.mxu0 %v4982
        %5007 = vmatprep.subr.bf16.mxu0 0
        %5008 = vmatpush1.bf16.msra.mxu0 0
        %5009 = vmatprep.subr.bf16.mxu0 0
        %5010 = vmatpush1.bf16.msra.mxu0 0
        %5011 = vmatprep.subr.bf16.mxu0 0
        %5012 = vmatpush1.bf16.msra.mxu0 0
        %5013 = vmatprep.subr.bf16.mxu0 0
        %5014 = vmatpush1.bf16.msra.mxu0 0
        %5015 = vmatprep.subr.bf16.mxu0 0
        %5016 = vmatpush1.bf16.msra.mxu0 0
        %5017 = vmatprep.subr.bf16.mxu0 0
        %5018 = vmatpush1.bf16.msra.mxu0 0
        %5019 = vmatprep.subr.bf16.mxu0 0
        %5020 = vmatpush1.bf16.msra.mxu0 0
        %5021 = vmatprep.subr.bf16.mxu0 0
        %5022 = vmatpush1.bf16.msra.mxu0 0
        %5023 = vmatprep.mubr.bf16.mxu0 0
        %5024 = vmatmul.mubr.bf16.gmra.mrb[0].mxu0 %v4911
        %v5025 = vpop.f32.mrb[0].mxu0
        %v5026 = vadd.f32 0.0, %v5025
        %v5027 = vpop.f32.mrb[0].mxu0
        %v5028 = vpop.f32.mrb[0].mxu0
        %v5029 = vadd.f32 0.0, %v5028
        %v5030 = vpop.f32.mrb[0].mxu0
        %5031 = vmatprep.mubr.bf16.mxu0 0
        %5032 = vmatmul.mubr.bf16.gmra.mrb[0].mxu0 %v4912
        %v5033 = vpop.f32.mrb[0].mxu0
        %v5034 = vadd.f32 0.0, %v5033
        %v5035 = vpop.f32.mrb[0].mxu0
        %v5036 = vpop.f32.mrb[0].mxu0
        %v5037 = vadd.f32 0.0, %v5036
        %v5038 = vpop.f32.mrb[0].mxu0
        %5039 = vmatprep.mubr.bf16.mxu0 0
        %5040 = vmatmul.mubr.bf16.gmra.mrb[0].mxu0 %v4913
        %v5041 = vpop.f32.mrb[0].mxu0
        %v5042 = vadd.f32 0.0, %v5041
        %v5043 = vpop.f32.mrb[0].mxu0
        %v5044 = vpop.f32.mrb[0].mxu0
        %v5045 = vadd.f32 0.0, %v5044
        %v5046 = vpop.f32.mrb[0].mxu0
        %5047 = vmatprep.mubr.bf16.mxu0 0
        %5048 = vmatmul.mubr.bf16.gmra.mrb[0].mxu0 %v4914
        %v5049 = vpop.f32.mrb[0].mxu0
        %v5050 = vadd.f32 0.0, %v5049
        %v5051 = vpop.f32.mrb[0].mxu0
        %v5052 = vpop.f32.mrb[0].mxu0
        %v5053 = vadd.f32 0.0, %v5052
        %v5054 = vpop.f32.mrb[0].mxu0
        %5055 = vmatprep.mubr.bf16.mxu0 0
        %5056 = vmatmul.mubr.bf16.gmra.mrb[0].mxu0 %v4915
        %v5057 = vpop.f32.mrb[0].mxu0
        %v5058 = vadd.f32 0.0, %v5057
        %v5059 = vpop.f32.mrb[0].mxu0
        %v5060 = vpop.f32.mrb[0].mxu0
        %v5061 = vadd.f32 0.0, %v5060
        %v5062 = vpop.f32.mrb[0].mxu0
        %5063 = vmatprep.mubr.bf16.mxu0 0
        %5064 = vmatmul.mubr.bf16.gmra.mrb[0].mxu0 %v4916
        %v5065 = vpop.f32.mrb[0].mxu0
        %v5066 = vadd.f32 0.0, %v5065
        %v5067 = vpop.f32.mrb[0].mxu0
        %v5068 = vpop.f32.mrb[0].mxu0
        %v5069 = vadd.f32 0.0, %v5068
        %v5070 = vpop.f32.mrb[0].mxu0
        %5071 = vmatprep.mubr.bf16.mxu0 0
        %5072 = vmatmul.mubr.bf16.gmra.mrb[0].mxu0 %v4917
        %v5073 = vpop.f32.mrb[0].mxu0
        %v5074 = vadd.f32 0.0, %v5073
        %v5075 = vpop.f32.mrb[0].mxu0
        %v5076 = vpop.f32.mrb[0].mxu0
        %v5077 = vadd.f32 0.0, %v5076
        %v5078 = vpop.f32.mrb[0].mxu0
        %5079 = vmatprep.mubr.bf16.mxu0 0
        %5080 = vmatmul.mubr.bf16.gmra.mrb[0].mxu0 %v4918
        %v5081 = vpop.f32.mrb[0].mxu0
        %v5082 = vadd.f32 0.0, %v5081
        %v5083 = vpop.f32.mrb[0].mxu0
        %v5084 = vpop.f32.mrb[0].mxu0
        %v5085 = vadd.f32 0.0, %v5084
        %v5086 = vpop.f32.mrb[0].mxu0
        %5087 = vmatprep.mubr.bf16.mxu0 0
        %5088 = vmatmul.mubr.bf16.gmra.mrb[0].mxu0 %v4919
        %v5089 = vpop.f32.mrb[0].mxu0
        %v5090 = vadd.f32 0.0, %v5089
        %v5091 = vpop.f32.mrb[0].mxu0
        %v5092 = vpop.f32.mrb[0].mxu0
        %v5093 = vadd.f32 0.0, %v5092
        %v5094 = vpop.f32.mrb[0].mxu0
        %5095 = vmatprep.mubr.bf16.mxu0 0
        %5096 = vmatmul.mubr.bf16.gmra.mrb[0].mxu0 %v4920
        %v5097 = vpop.f32.mrb[0].mxu0
        %v5098 = vadd.f32 0.0, %v5097
        %v5099 = vpop.f32.mrb[0].mxu0
        %v5100 = vpop.f32.mrb[0].mxu0
        %v5101 = vadd.f32 0.0, %v5100
        %v5102 = vpop.f32.mrb[0].mxu0
        %5103 = vmatprep.mubr.bf16.mxu0 0
        %5104 = vmatmul.mubr.bf16.gmra.mrb[0].mxu0 %v4921
        %v5105 = vpop.f32.mrb[0].mxu0
        %v5106 = vadd.f32 0.0, %v5105
        %v5107 = vpop.f32.mrb[0].mxu0
        %v5108 = vpop.f32.mrb[0].mxu0
        %v5109 = vadd.f32 0.0, %v5108
        %v5110 = vpop.f32.mrb[0].mxu0
        %5111 = vmatprep.mubr.bf16.mxu0 0
        %5112 = vmatmul.mubr.bf16.gmra.mrb[0].mxu0 %v4922
        %v5113 = vpop.f32.mrb[0].mxu0
        %v5114 = vadd.f32 0.0, %v5113
        %v5115 = vpop.f32.mrb[0].mxu0
        %v5116 = vpop.f32.mrb[0].mxu0
        %v5117 = vadd.f32 0.0, %v5116
        %v5118 = vpop.f32.mrb[0].mxu0
        %5119 = vmatprep.mubr.bf16.mxu0 0
        %5120 = vmatmul.mubr.bf16.gmra.mrb[0].mxu0 %v4923
        %v5121 = vpop.f32.mrb[0].mxu0
        %v5122 = vadd.f32 0.0, %v5121
        %v5123 = vpop.f32.mrb[0].mxu0
        %v5124 = vpop.f32.mrb[0].mxu0
        %v5125 = vadd.f32 0.0, %v5124
        %v5126 = vpop.f32.mrb[0].mxu0
        %5127 = vmatprep.mubr.bf16.mxu0 0
        %5128 = vmatmul.mubr.bf16.gmra.mrb[0].mxu0 %v4924
        %v5129 = vpop.f32.mrb[0].mxu0
        %v5130 = vadd.f32 0.0, %v5129
        %v5131 = vpop.f32.mrb[0].mxu0
        %v5132 = vpop.f32.mrb[0].mxu0
        %v5133 = vadd.f32 0.0, %v5132
        %v5134 = vpop.f32.mrb[0].mxu0
        %5135 = vmatprep.mubr.bf16.mxu0 0
        %5136 = vmatmul.mubr.bf16.gmra.mrb[0].mxu0 %v4925
        %v5137 = vpop.f32.mrb[0].mxu0
        %v5138 = vadd.f32 0.0, %v5137
        %v5139 = vpop.f32.mrb[0].mxu0
        %v5140 = vpop.f32.mrb[0].mxu0
        %v5141 = vadd.f32 0.0, %v5140
        %v5142 = vpop.f32.mrb[0].mxu0
        %5143 = vmatprep.mubr.bf16.mxu0 0
        %5144 = vmatmul.mubr.bf16.gmra.mrb[0].mxu0 %v4926
        %v5145 = vpop.f32.mrb[0].mxu0
        %v5146 = vadd.f32 0.0, %v5145
        %v5147 = vpop.f32.mrb[0].mxu0
        %v5148 = vpop.f32.mrb[0].mxu0
        %v5149 = vadd.f32 0.0, %v5148
        %v5150 = vpop.f32.mrb[0].mxu0
        %5151 = vdwg.mxu0
        %v5152 = vadd.f32 %v4399, %v5026
        %v5153 = vadd.f32 %v4400, %v5029
        %v5154 = vadd.f32 %v4401, %v5034
        %v5155 = vadd.f32 %v4402, %v5037
        %v5156 = vadd.f32 %v4403, %v5042
        %v5157 = vadd.f32 %v4404, %v5045
        %v5158 = vadd.f32 %v4405, %v5050
        %v5159 = vadd.f32 %v4406, %v5053
        %v5160 = vadd.f32 %v4407, %v5058
        %v5161 = vadd.f32 %v4408, %v5061
        %v5162 = vadd.f32 %v4409, %v5066
        %v5163 = vadd.f32 %v4410, %v5069
        %v5164 = vadd.f32 %v4411, %v5074
        %v5165 = vadd.f32 %v4412, %v5077
        %v5166 = vadd.f32 %v4413, %v5082
        %v5167 = vadd.f32 %v4414, %v5085
        %v5168 = vadd.f32 %v4415, %v5090
        %v5169 = vadd.f32 %v4416, %v5093
        %v5170 = vadd.f32 %v4417, %v5098
        %v5171 = vadd.f32 %v4418, %v5101
        %v5172 = vadd.f32 %v4419, %v5106
        %v5173 = vadd.f32 %v4420, %v5109
        %v5174 = vadd.f32 %v4421, %v5114
        %v5175 = vadd.f32 %v4422, %v5117
        %v5176 = vadd.f32 %v4423, %v5122
        %v5177 = vadd.f32 %v4424, %v5125
        %v5178 = vadd.f32 %v4425, %v5130
        %v5179 = vadd.f32 %v4426, %v5133
        %v5180 = vadd.f32 %v4427, %v5138
        %v5181 = vadd.f32 %v4428, %v5141
        %v5182 = vadd.f32 %v4429, %v5146
        %v5183 = vadd.f32 %v4430, %v5149
        %v5184 = vld [vmem:[%s4045] sm:$0xe]
        %v5185 = vld [vmem:[%s4045 + $0xc] sm:$0xe]
        %v5186 = vld [vmem:[%s4045 + $0x18] sm:$0xe]
        %v5187 = vld [vmem:[%s4045 + $0x24] sm:$0xe]
        %v5188 = vld [vmem:[%s4045 + $0x30] sm:$0xe]
        %v5189 = vld [vmem:[%s4045 + $0x3c] sm:$0xe]
        %v5190 = vld [vmem:[%s4045 + $0x48] sm:$0xe]
        %v5191 = vld [vmem:[%s4045 + $0x54] sm:$0xe]
        %v5192 = vld [vmem:[%s4045 + $0x60] sm:$0xe]
        %v5193 = vld [vmem:[%s4045 + $0x6c] sm:$0xe]
        %v5194 = vld [vmem:[%s4045 + $0x78] sm:$0xe]
        %v5195 = vld [vmem:[%s4045 + $0x84] sm:$0xe]
        %v5196 = vld [vmem:[%s4045 + $0x90] sm:$0xe]
        %v5197 = vld [vmem:[%s4045 + $0x9c] sm:$0xe]
        %v5198 = vld [vmem:[%s4045 + $0xa8] sm:$0xe]
        %v5199 = vld [vmem:[%s4045 + $0xb4] sm:$0xe]
        %v5200 = vld [vmem:[#allocation7 + $0x200] sm:$0xf]
        %v5201 = vld [vmem:[#allocation7 + $0x204] sm:$0xf]
        %v5202 = vld [vmem:[#allocation7 + $0x208] sm:$0xf]
        %v5203 = vld [vmem:[#allocation7 + $0x20c] sm:$0xf]
        %v5204 = vld [vmem:[#allocation7 + $0x210] sm:$0xf]
        %v5205 = vld [vmem:[#allocation7 + $0x214] sm:$0xf]
        %v5206 = vld [vmem:[#allocation7 + $0x218] sm:$0xf]
        %v5207 = vld [vmem:[#allocation7 + $0x21c] sm:$0xf]
        %v5208 = vld [vmem:[#allocation7 + $0x220] sm:$0xf]
        %v5209 = vld [vmem:[#allocation7 + $0x224] sm:$0xf]
        %v5210 = vld [vmem:[#allocation7 + $0x228] sm:$0xf]
        %v5211 = vld [vmem:[#allocation7 + $0x22c] sm:$0xf]
        %v5212 = vld [vmem:[#allocation7 + $0x230] sm:$0xf]
        %v5213 = vld [vmem:[#allocation7 + $0x234] sm:$0xf]
        %v5214 = vld [vmem:[#allocation7 + $0x238] sm:$0xf]
        %v5215 = vld [vmem:[#allocation7 + $0x23c] sm:$0xf]
        %v5264 = vrot.slane %v5184, 5
        %v5265 = vrot.slane %v5264, 4
        %v5266 = vrot.slane %v4432, 5
        %v5267 = vsel %vm1992, %v5265, %v5266
        %v5268 = vrot.slane %v5266, 4
        %v5269 = vrot.slane %v4433, 5
        %v5270 = vsel %vm1992, %v5268, %v5269
        %v5271 = vrot.slane %v5185, 5
        %v5272 = vrot.slane %v5271, 4
        %v5273 = vrot.slane %v4435, 5
        %v5274 = vsel %vm1992, %v5272, %v5273
        %v5275 = vrot.slane %v5273, 4
        %v5276 = vrot.slane %v4436, 5
        %v5277 = vsel %vm1992, %v5275, %v5276
        %v5278 = vrot.slane %v5186, 5
        %v5279 = vrot.slane %v5278, 4
        %v5280 = vrot.slane %v4438, 5
        %v5281 = vsel %vm1992, %v5279, %v5280
        %v5282 = vrot.slane %v5280, 4
        %v5283 = vrot.slane %v4439, 5
        %v5284 = vsel %vm1992, %v5282, %v5283
        %v5285 = vrot.slane %v5187, 5
        %v5286 = vrot.slane %v5285, 4
        %v5287 = vrot.slane %v4441, 5
        %v5288 = vsel %vm1992, %v5286, %v5287
        %v5289 = vrot.slane %v5287, 4
        %v5290 = vrot.slane %v4442, 5
        %v5291 = vsel %vm1992, %v5289, %v5290
        %v5292 = vrot.slane %v5188, 5
        %v5293 = vrot.slane %v5292, 4
        %v5294 = vrot.slane %v4444, 5
        %v5295 = vsel %vm1992, %v5293, %v5294
        %v5296 = vrot.slane %v5294, 4
        %v5297 = vrot.slane %v4445, 5
        %v5298 = vsel %vm1992, %v5296, %v5297
        %v5299 = vrot.slane %v5189, 5
        %v5300 = vrot.slane %v5299, 4
        %v5301 = vrot.slane %v4447, 5
        %v5302 = vsel %vm1992, %v5300, %v5301
        %v5303 = vrot.slane %v5301, 4
        %v5304 = vrot.slane %v4448, 5
        %v5305 = vsel %vm1992, %v5303, %v5304
        %v5306 = vrot.slane %v5190, 5
        %v5307 = vrot.slane %v5306, 4
        %v5308 = vrot.slane %v4450, 5
        %v5309 = vsel %vm1992, %v5307, %v5308
        %v5310 = vrot.slane %v5308, 4
        %v5311 = vrot.slane %v4451, 5
        %v5312 = vsel %vm1992, %v5310, %v5311
        %v5313 = vrot.slane %v5191, 5
        %v5314 = vrot.slane %v5313, 4
        %v5315 = vrot.slane %v4453, 5
        %v5316 = vsel %vm1992, %v5314, %v5315
        %v5317 = vrot.slane %v5315, 4
        %v5318 = vrot.slane %v4454, 5
        %v5319 = vsel %vm1992, %v5317, %v5318
        %v5320 = vrot.slane %v5192, 5
        %v5321 = vrot.slane %v5320, 4
        %v5322 = vrot.slane %v4456, 5
        %v5323 = vsel %vm1992, %v5321, %v5322
        %v5324 = vrot.slane %v5322, 4
        %v5325 = vrot.slane %v4457, 5
        %v5326 = vsel %vm1992, %v5324, %v5325
        %v5327 = vrot.slane %v5193, 5
        %v5328 = vrot.slane %v5327, 4
        %v5329 = vrot.slane %v4459, 5
        %v5330 = vsel %vm1992, %v5328, %v5329
        %v5331 = vrot.slane %v5329, 4
        %v5332 = vrot.slane %v4460, 5
        %v5333 = vsel %vm1992, %v5331, %v5332
        %v5334 = vrot.slane %v5194, 5
        %v5335 = vrot.slane %v5334, 4
        %v5336 = vrot.slane %v4462, 5
        %v5337 = vsel %vm1992, %v5335, %v5336
        %v5338 = vrot.slane %v5336, 4
        %v5339 = vrot.slane %v4463, 5
        %v5340 = vsel %vm1992, %v5338, %v5339
        %v5341 = vrot.slane %v5195, 5
        %v5342 = vrot.slane %v5341, 4
        %v5343 = vrot.slane %v4465, 5
        %v5344 = vsel %vm1992, %v5342, %v5343
        %v5345 = vrot.slane %v5343, 4
        %v5346 = vrot.slane %v4466, 5
        %v5347 = vsel %vm1992, %v5345, %v5346
        %v5348 = vrot.slane %v5196, 5
        %v5349 = vrot.slane %v5348, 4
        %v5350 = vrot.slane %v4468, 5
        %v5351 = vsel %vm1992, %v5349, %v5350
        %v5352 = vrot.slane %v5350, 4
        %v5353 = vrot.slane %v4469, 5
        %v5354 = vsel %vm1992, %v5352, %v5353
        %v5355 = vrot.slane %v5197, 5
        %v5356 = vrot.slane %v5355, 4
        %v5357 = vrot.slane %v4471, 5
        %v5358 = vsel %vm1992, %v5356, %v5357
        %v5359 = vrot.slane %v5357, 4
        %v5360 = vrot.slane %v4472, 5
        %v5361 = vsel %vm1992, %v5359, %v5360
        %v5362 = vrot.slane %v5198, 5
        %v5363 = vrot.slane %v5362, 4
        %v5364 = vrot.slane %v4474, 5
        %v5365 = vsel %vm1992, %v5363, %v5364
        %v5366 = vrot.slane %v5364, 4
        %v5367 = vrot.slane %v4475, 5
        %v5368 = vsel %vm1992, %v5366, %v5367
        %v5369 = vrot.slane %v5199, 5
        %v5370 = vrot.slane %v5369, 4
        %v5371 = vrot.slane %v4477, 5
        %v5372 = vsel %vm1992, %v5370, %v5371
        %v5373 = vrot.slane %v5371, 4
        %v5374 = vrot.slane %v4478, 5
        %v5375 = vsel %vm1992, %v5373, %v5374
        %v5376 = vunpack.c.l.b16 %v5267
        %v5377 = vunpack.c.l.b16 %v5270
        %v5378 = vunpack.c.l.b16 %v5274
        %v5379 = vunpack.c.l.b16 %v5277
        %v5380 = vunpack.c.l.b16 %v5281
        %v5381 = vunpack.c.l.b16 %v5284
        %v5382 = vunpack.c.l.b16 %v5288
        %v5383 = vunpack.c.l.b16 %v5291
        %v5384 = vunpack.c.l.b16 %v5295
        %v5385 = vunpack.c.l.b16 %v5298
        %v5386 = vunpack.c.l.b16 %v5302
        %v5387 = vunpack.c.l.b16 %v5305
        %v5388 = vunpack.c.l.b16 %v5309
        %v5389 = vunpack.c.l.b16 %v5312
        %v5390 = vunpack.c.l.b16 %v5316
        %v5391 = vunpack.c.l.b16 %v5319
        %v5392 = vunpack.c.l.b16 %v5323
        %v5393 = vunpack.c.l.b16 %v5326
        %v5394 = vunpack.c.l.b16 %v5330
        %v5395 = vunpack.c.l.b16 %v5333
        %v5396 = vunpack.c.l.b16 %v5337
        %v5397 = vunpack.c.l.b16 %v5340
        %v5398 = vunpack.c.l.b16 %v5344
        %v5399 = vunpack.c.l.b16 %v5347
        %v5400 = vunpack.c.l.b16 %v5351
        %v5401 = vunpack.c.l.b16 %v5354
        %v5402 = vunpack.c.l.b16 %v5358
        %v5403 = vunpack.c.l.b16 %v5361
        %v5404 = vunpack.c.l.b16 %v5365
        %v5405 = vunpack.c.l.b16 %v5368
        %v5406 = vunpack.c.l.b16 %v5372
        %v5407 = vunpack.c.l.b16 %v5375
        %v5408 = vpack.c.b16 %v5377, %v5376
        %v5409 = vpack.c.b16 %v5379, %v5378
        %v5410 = vpack.c.b16 %v5381, %v5380
        %v5411 = vpack.c.b16 %v5383, %v5382
        %v5412 = vpack.c.b16 %v5385, %v5384
        %v5413 = vpack.c.b16 %v5387, %v5386
        %v5414 = vpack.c.b16 %v5389, %v5388
        %v5415 = vpack.c.b16 %v5391, %v5390
        %v5416 = vpack.c.b16 %v5393, %v5392
        %v5417 = vpack.c.b16 %v5395, %v5394
        %v5418 = vpack.c.b16 %v5397, %v5396
        %v5419 = vpack.c.b16 %v5399, %v5398
        %v5420 = vpack.c.b16 %v5401, %v5400
        %v5421 = vpack.c.b16 %v5403, %v5402
        %v5422 = vpack.c.b16 %v5405, %v5404
        %v5423 = vpack.c.b16 %v5407, %v5406
        %v5456 = vunpack.c.l.b16 %v5200
        %v5457 = vunpack.c.l.b16 %v5201
        %v5458 = vunpack.c.l.b16 %v5202
        %v5459 = vunpack.c.l.b16 %v5203
        %v5460 = vunpack.c.l.b16 %v5204
        %v5461 = vunpack.c.l.b16 %v5205
        %v5462 = vunpack.c.l.b16 %v5206
        %v5463 = vunpack.c.l.b16 %v5207
        %v5464 = vunpack.c.l.b16 %v5208
        %v5465 = vunpack.c.l.b16 %v5209
        %v5466 = vunpack.c.l.b16 %v5210
        %v5467 = vunpack.c.l.b16 %v5211
        %v5468 = vunpack.c.l.b16 %v5212
        %v5469 = vunpack.c.l.b16 %v5213
        %v5470 = vunpack.c.l.b16 %v5214
        %v5471 = vunpack.c.l.b16 %v5215
        %v5472 = vpack.c.b16 %v5457, %v5456
        %v5473 = vpack.c.b16 %v5459, %v5458
        %v5474 = vpack.c.b16 %v5461, %v5460
        %v5475 = vpack.c.b16 %v5463, %v5462
        %v5476 = vpack.c.b16 %v5465, %v5464
        %v5477 = vpack.c.b16 %v5467, %v5466
        %v5478 = vpack.c.b16 %v5469, %v5468
        %v5479 = vpack.c.b16 %v5471, %v5470
        %5488 = vmatprep.subr.bf16.mxu0 0
        %5489 = vmatpush1.bf16.msra.mxu0 %v5472
        %5490 = vmatprep.subr.bf16.mxu0 0
        %5491 = vmatpush1.bf16.msra.mxu0 %v5473
        %5492 = vmatprep.subr.bf16.mxu0 0
        %5493 = vmatpush1.bf16.msra.mxu0 %v5474
        %5494 = vmatprep.subr.bf16.mxu0 0
        %5495 = vmatpush1.bf16.msra.mxu0 %v5475
        %5496 = vmatprep.subr.bf16.mxu0 0
        %5497 = vmatpush1.bf16.msra.mxu0 %v5476
        %5498 = vmatprep.subr.bf16.mxu0 0
        %5499 = vmatpush1.bf16.msra.mxu0 %v5477
        %5500 = vmatprep.subr.bf16.mxu0 0
        %5501 = vmatpush1.bf16.msra.mxu0 %v5478
        %5502 = vmatprep.subr.bf16.mxu0 0
        %5503 = vmatpush1.bf16.msra.mxu0 %v5479
        %5504 = vmatprep.subr.bf16.mxu0 0
        %5505 = vmatpush1.bf16.msra.mxu0 0
        %5506 = vmatprep.subr.bf16.mxu0 0
        %5507 = vmatpush1.bf16.msra.mxu0 0
        %5508 = vmatprep.subr.bf16.mxu0 0
        %5509 = vmatpush1.bf16.msra.mxu0 0
        %5510 = vmatprep.subr.bf16.mxu0 0
        %5511 = vmatpush1.bf16.msra.mxu0 0
        %5512 = vmatprep.subr.bf16.mxu0 0
        %5513 = vmatpush1.bf16.msra.mxu0 0
        %5514 = vmatprep.subr.bf16.mxu0 0
        %5515 = vmatpush1.bf16.msra.mxu0 0
        %5516 = vmatprep.subr.bf16.mxu0 0
        %5517 = vmatpush1.bf16.msra.mxu0 0
        %5518 = vmatprep.subr.bf16.mxu0 0
        %5519 = vmatpush1.bf16.msra.mxu0 0
        %5520 = vmatprep.mubr.bf16.mxu0 0
        %5521 = vmatmul.mubr.bf16.gmra.mrb[0].mxu0 %v5408
        %v5522 = vpop.f32.mrb[0].mxu0
        %v5523 = vadd.f32 0.0, %v5522
        %v5524 = vpop.f32.mrb[0].mxu0
        %v5525 = vpop.f32.mrb[0].mxu0
        %v5526 = vadd.f32 0.0, %v5525
        %v5527 = vpop.f32.mrb[0].mxu0
        %5528 = vmatprep.mubr.bf16.mxu0 0
        %5529 = vmatmul.mubr.bf16.gmra.mrb[0].mxu0 %v5409
        %v5530 = vpop.f32.mrb[0].mxu0
        %v5531 = vadd.f32 0.0, %v5530
        %v5532 = vpop.f32.mrb[0].mxu0
        %v5533 = vpop.f32.mrb[0].mxu0
        %v5534 = vadd.f32 0.0, %v5533
        %v5535 = vpop.f32.mrb[0].mxu0
        %5536 = vmatprep.mubr.bf16.mxu0 0
        %5537 = vmatmul.mubr.bf16.gmra.mrb[0].mxu0 %v5410
        %v5538 = vpop.f32.mrb[0].mxu0
        %v5539 = vadd.f32 0.0, %v5538
        %v5540 = vpop.f32.mrb[0].mxu0
        %v5541 = vpop.f32.mrb[0].mxu0
        %v5542 = vadd.f32 0.0, %v5541
        %v5543 = vpop.f32.mrb[0].mxu0
        %5544 = vmatprep.mubr.bf16.mxu0 0
        %5545 = vmatmul.mubr.bf16.gmra.mrb[0].mxu0 %v5411
        %v5546 = vpop.f32.mrb[0].mxu0
        %v5547 = vadd.f32 0.0, %v5546
        %v5548 = vpop.f32.mrb[0].mxu0
        %v5549 = vpop.f32.mrb[0].mxu0
        %v5550 = vadd.f32 0.0, %v5549
        %v5551 = vpop.f32.mrb[0].mxu0
        %5552 = vmatprep.mubr.bf16.mxu0 0
        %5553 = vmatmul.mubr.bf16.gmra.mrb[0].mxu0 %v5412
        %v5554 = vpop.f32.mrb[0].mxu0
        %v5555 = vadd.f32 0.0, %v5554
        %v5556 = vpop.f32.mrb[0].mxu0
        %v5557 = vpop.f32.mrb[0].mxu0
        %v5558 = vadd.f32 0.0, %v5557
        %v5559 = vpop.f32.mrb[0].mxu0
        %5560 = vmatprep.mubr.bf16.mxu0 0
        %5561 = vmatmul.mubr.bf16.gmra.mrb[0].mxu0 %v5413
        %v5562 = vpop.f32.mrb[0].mxu0
        %v5563 = vadd.f32 0.0, %v5562
        %v5564 = vpop.f32.mrb[0].mxu0
        %v5565 = vpop.f32.mrb[0].mxu0
        %v5566 = vadd.f32 0.0, %v5565
        %v5567 = vpop.f32.mrb[0].mxu0
        %5568 = vmatprep.mubr.bf16.mxu0 0
        %5569 = vmatmul.mubr.bf16.gmra.mrb[0].mxu0 %v5414
        %v5570 = vpop.f32.mrb[0].mxu0
        %v5571 = vadd.f32 0.0, %v5570
        %v5572 = vpop.f32.mrb[0].mxu0
        %v5573 = vpop.f32.mrb[0].mxu0
        %v5574 = vadd.f32 0.0, %v5573
        %v5575 = vpop.f32.mrb[0].mxu0
        %5576 = vmatprep.mubr.bf16.mxu0 0
        %5577 = vmatmul.mubr.bf16.gmra.mrb[0].mxu0 %v5415
        %v5578 = vpop.f32.mrb[0].mxu0
        %v5579 = vadd.f32 0.0, %v5578
        %v5580 = vpop.f32.mrb[0].mxu0
        %v5581 = vpop.f32.mrb[0].mxu0
        %v5582 = vadd.f32 0.0, %v5581
        %v5583 = vpop.f32.mrb[0].mxu0
        %5584 = vmatprep.mubr.bf16.mxu0 0
        %5585 = vmatmul.mubr.bf16.gmra.mrb[0].mxu0 %v5416
        %v5586 = vpop.f32.mrb[0].mxu0
        %v5587 = vadd.f32 0.0, %v5586
        %v5588 = vpop.f32.mrb[0].mxu0
        %v5589 = vpop.f32.mrb[0].mxu0
        %v5590 = vadd.f32 0.0, %v5589
        %v5591 = vpop.f32.mrb[0].mxu0
        %5592 = vmatprep.mubr.bf16.mxu0 0
        %5593 = vmatmul.mubr.bf16.gmra.mrb[0].mxu0 %v5417
        %v5594 = vpop.f32.mrb[0].mxu0
        %v5595 = vadd.f32 0.0, %v5594
        %v5596 = vpop.f32.mrb[0].mxu0
        %v5597 = vpop.f32.mrb[0].mxu0
        %v5598 = vadd.f32 0.0, %v5597
        %v5599 = vpop.f32.mrb[0].mxu0
        %5600 = vmatprep.mubr.bf16.mxu0 0
        %5601 = vmatmul.mubr.bf16.gmra.mrb[0].mxu0 %v5418
        %v5602 = vpop.f32.mrb[0].mxu0
        %v5603 = vadd.f32 0.0, %v5602
        %v5604 = vpop.f32.mrb[0].mxu0
        %v5605 = vpop.f32.mrb[0].mxu0
        %v5606 = vadd.f32 0.0, %v5605
        %v5607 = vpop.f32.mrb[0].mxu0
        %5608 = vmatprep.mubr.bf16.mxu0 0
        %5609 = vmatmul.mubr.bf16.gmra.mrb[0].mxu0 %v5419
        %v5610 = vpop.f32.mrb[0].mxu0
        %v5611 = vadd.f32 0.0, %v5610
        %v5612 = vpop.f32.mrb[0].mxu0
        %v5613 = vpop.f32.mrb[0].mxu0
        %v5614 = vadd.f32 0.0, %v5613
        %v5615 = vpop.f32.mrb[0].mxu0
        %5616 = vmatprep.mubr.bf16.mxu0 0
        %5617 = vmatmul.mubr.bf16.gmra.mrb[0].mxu0 %v5420
        %v5618 = vpop.f32.mrb[0].mxu0
        %v5619 = vadd.f32 0.0, %v5618
        %v5620 = vpop.f32.mrb[0].mxu0
        %v5621 = vpop.f32.mrb[0].mxu0
        %v5622 = vadd.f32 0.0, %v5621
        %v5623 = vpop.f32.mrb[0].mxu0
        %5624 = vmatprep.mubr.bf16.mxu0 0
        %5625 = vmatmul.mubr.bf16.gmra.mrb[0].mxu0 %v5421
        %v5626 = vpop.f32.mrb[0].mxu0
        %v5627 = vadd.f32 0.0, %v5626
        %v5628 = vpop.f32.mrb[0].mxu0
        %v5629 = vpop.f32.mrb[0].mxu0
        %v5630 = vadd.f32 0.0, %v5629
        %v5631 = vpop.f32.mrb[0].mxu0
        %5632 = vmatprep.mubr.bf16.mxu0 0
        %5633 = vmatmul.mubr.bf16.gmra.mrb[0].mxu0 %v5422
        %v5634 = vpop.f32.mrb[0].mxu0
        %v5635 = vadd.f32 0.0, %v5634
        %v5636 = vpop.f32.mrb[0].mxu0
        %v5637 = vpop.f32.mrb[0].mxu0
        %v5638 = vadd.f32 0.0, %v5637
        %v5639 = vpop.f32.mrb[0].mxu0
        %5640 = vmatprep.mubr.bf16.mxu0 0
        %5641 = vmatmul.mubr.bf16.gmra.mrb[0].mxu0 %v5423
        %v5642 = vpop.f32.mrb[0].mxu0
        %v5643 = vadd.f32 0.0, %v5642
        %v5644 = vpop.f32.mrb[0].mxu0
        %v5645 = vpop.f32.mrb[0].mxu0
        %v5646 = vadd.f32 0.0, %v5645
        %v5647 = vpop.f32.mrb[0].mxu0
        %5648 = vdwg.mxu0
        %v5649 = vadd.f32 %v5152, %v5523
        %v5650 = vadd.f32 %v5153, %v5526
        %v5651 = vadd.f32 %v5154, %v5531
        %v5652 = vadd.f32 %v5155, %v5534
        %v5653 = vadd.f32 %v5156, %v5539
        %v5654 = vadd.f32 %v5157, %v5542
        %v5655 = vadd.f32 %v5158, %v5547
        %v5656 = vadd.f32 %v5159, %v5550
        %v5657 = vadd.f32 %v5160, %v5555
        %v5658 = vadd.f32 %v5161, %v5558
        %v5659 = vadd.f32 %v5162, %v5563
        %v5660 = vadd.f32 %v5163, %v5566
        %v5661 = vadd.f32 %v5164, %v5571
        %v5662 = vadd.f32 %v5165, %v5574
        %v5663 = vadd.f32 %v5166, %v5579
        %v5664 = vadd.f32 %v5167, %v5582
        %v5665 = vadd.f32 %v5168, %v5587
        %v5666 = vadd.f32 %v5169, %v5590
        %v5667 = vadd.f32 %v5170, %v5595
        %v5668 = vadd.f32 %v5171, %v5598
        %v5669 = vadd.f32 %v5172, %v5603
        %v5670 = vadd.f32 %v5173, %v5606
        %v5671 = vadd.f32 %v5174, %v5611
        %v5672 = vadd.f32 %v5175, %v5614
        %v5673 = vadd.f32 %v5176, %v5619
        %v5674 = vadd.f32 %v5177, %v5622
        %v5675 = vadd.f32 %v5178, %v5627
        %v5676 = vadd.f32 %v5179, %v5630
        %v5677 = vadd.f32 %v5180, %v5635
        %v5678 = vadd.f32 %v5181, %v5638
        %v5679 = vadd.f32 %v5182, %v5643
        %v5680 = vadd.f32 %v5183, %v5646
        %v5681 = vlaneseq
        %v5682 = vshrl.u32 %v5681, 7
        %v5683 = vsub.s32 0, %v5682
        %v5684 = vrot.slane %v320, %v5683
        %v5685 = vmul.f32 %v5649, %v5684
        %v5686 = vmul.f32 %v5650, %v5684
        %v5687 = vmul.f32 %v5651, %v5684
        %v5688 = vmul.f32 %v5652, %v5684
        %v5689 = vmul.f32 %v5653, %v5684
        %v5690 = vmul.f32 %v5654, %v5684
        %v5691 = vmul.f32 %v5655, %v5684
        %v5692 = vmul.f32 %v5656, %v5684
        %v5693 = vmul.f32 %v5657, %v5684
        %v5694 = vmul.f32 %v5658, %v5684
        %v5695 = vmul.f32 %v5659, %v5684
        %v5696 = vmul.f32 %v5660, %v5684
        %v5697 = vmul.f32 %v5661, %v5684
        %v5698 = vmul.f32 %v5662, %v5684
        %v5699 = vmul.f32 %v5663, %v5684
        %v5700 = vmul.f32 %v5664, %v5684
        %v5701 = vmul.f32 %v5665, %v5684
        %v5702 = vmul.f32 %v5666, %v5684
        %v5703 = vmul.f32 %v5667, %v5684
        %v5704 = vmul.f32 %v5668, %v5684
        %v5705 = vmul.f32 %v5669, %v5684
        %v5706 = vmul.f32 %v5670, %v5684
        %v5707 = vmul.f32 %v5671, %v5684
        %v5708 = vmul.f32 %v5672, %v5684
        %v5709 = vmul.f32 %v5673, %v5684
        %v5710 = vmul.f32 %v5674, %v5684
        %v5711 = vmul.f32 %v5675, %v5684
        %v5712 = vmul.f32 %v5676, %v5684
        %v5713 = vmul.f32 %v5677, %v5684
        %v5714 = vmul.f32 %v5678, %v5684
        %v5715 = vmul.f32 %v5679, %v5684
        %v5716 = vmul.f32 %v5680, %v5684
        %v5717 = vlaneseq
        %v5718 = vshrl.u32 %v5717, 7
        %v5719 = vsub.s32 0, %v5718
        %v5720 = vrot.slane %v321, %v5719
        %v5721 = vadd.f32 %v5685, %v5720
        %v5722 = vadd.f32 %v5686, %v5720
        %v5723 = vadd.f32 %v5687, %v5720
        %v5724 = vadd.f32 %v5688, %v5720
        %v5725 = vadd.f32 %v5689, %v5720
        %v5726 = vadd.f32 %v5690, %v5720
        %v5727 = vadd.f32 %v5691, %v5720
        %v5728 = vadd.f32 %v5692, %v5720
        %v5729 = vadd.f32 %v5693, %v5720
        %v5730 = vadd.f32 %v5694, %v5720
        %v5731 = vadd.f32 %v5695, %v5720
        %v5732 = vadd.f32 %v5696, %v5720
        %v5733 = vadd.f32 %v5697, %v5720
        %v5734 = vadd.f32 %v5698, %v5720
        %v5735 = vadd.f32 %v5699, %v5720
        %v5736 = vadd.f32 %v5700, %v5720
        %v5737 = vadd.f32 %v5701, %v5720
        %v5738 = vadd.f32 %v5702, %v5720
        %v5739 = vadd.f32 %v5703, %v5720
        %v5740 = vadd.f32 %v5704, %v5720
        %v5741 = vadd.f32 %v5705, %v5720
        %v5742 = vadd.f32 %v5706, %v5720
        %v5743 = vadd.f32 %v5707, %v5720
        %v5744 = vadd.f32 %v5708, %v5720
        %v5745 = vadd.f32 %v5709, %v5720
        %v5746 = vadd.f32 %v5710, %v5720
        %v5747 = vadd.f32 %v5711, %v5720
        %v5748 = vadd.f32 %v5712, %v5720
        %v5749 = vadd.f32 %v5713, %v5720
        %v5750 = vadd.f32 %v5714, %v5720
        %v5751 = vadd.f32 %v5715, %v5720
        %v5752 = vadd.f32 %v5716, %v5720
        %v5753 = vmax.f32 %v5721, 0.0
        %v5754 = vmax.f32 %v5722, 0.0
        %v5755 = vmax.f32 %v5723, 0.0
        %v5756 = vmax.f32 %v5724, 0.0
        %v5757 = vmax.f32 %v5725, 0.0
        %v5758 = vmax.f32 %v5726, 0.0
        %v5759 = vmax.f32 %v5727, 0.0
        %v5760 = vmax.f32 %v5728, 0.0
        %v5761 = vmax.f32 %v5729, 0.0
        %v5762 = vmax.f32 %v5730, 0.0
        %v5763 = vmax.f32 %v5731, 0.0
        %v5764 = vmax.f32 %v5732, 0.0
        %v5765 = vmax.f32 %v5733, 0.0
        %v5766 = vmax.f32 %v5734, 0.0
        %v5767 = vmax.f32 %v5735, 0.0
        %v5768 = vmax.f32 %v5736, 0.0
        %v5769 = vmax.f32 %v5737, 0.0
        %v5770 = vmax.f32 %v5738, 0.0
        %v5771 = vmax.f32 %v5739, 0.0
        %v5772 = vmax.f32 %v5740, 0.0
        %v5773 = vmax.f32 %v5741, 0.0
        %v5774 = vmax.f32 %v5742, 0.0
        %v5775 = vmax.f32 %v5743, 0.0
        %v5776 = vmax.f32 %v5744, 0.0
        %v5777 = vmax.f32 %v5745, 0.0
        %v5778 = vmax.f32 %v5746, 0.0
        %v5779 = vmax.f32 %v5747, 0.0
        %v5780 = vmax.f32 %v5748, 0.0
        %v5781 = vmax.f32 %v5749, 0.0
        %v5782 = vmax.f32 %v5750, 0.0
        %v5783 = vmax.f32 %v5751, 0.0
        %v5784 = vmax.f32 %v5752, 0.0
        %5785 = vst [vmem:[#allocation3] sm:$0xf] 0
        %5786 = vst [vmem:[#allocation3 + $0x4] sm:$0xf] 0
        %5787 = vst [vmem:[#allocation3 + $0x8] sm:$0x1] 0
        %s5788 = scalar_lea.vmem [#allocation3], 204
        %5789 = vst [vmem:[%s5788] sm:$0xf] 0
        %5790 = vst [vmem:[%s5788 + $0x4] sm:$0xf] 0
        %5791 = vst [vmem:[%s5788 + $0x8] sm:$0x1] 0
        %v5792 = vld [vmem:[#allocation3] sm:$0x1]
        %v5793 = vsel %vm333, 0, %v5792
        %5794 = vst [vmem:[#allocation3] sm:$0x1] %v5793
        %v5795 = vld [vmem:[#allocation3 + $0xc] sm:$0x1]
        %v5796 = vsel %vm333, 0, %v5795
        %5797 = vst [vmem:[#allocation3 + $0xc] sm:$0x1] %v5796
        %v5798 = vld [vmem:[#allocation3 + $0x18] sm:$0x1]
        %v5799 = vsel %vm333, 0, %v5798
        %5800 = vst [vmem:[#allocation3 + $0x18] sm:$0x1] %v5799
        %v5801 = vld [vmem:[#allocation3 + $0x24] sm:$0x1]
        %v5802 = vsel %vm333, 0, %v5801
        %5803 = vst [vmem:[#allocation3 + $0x24] sm:$0x1] %v5802
        %v5804 = vld [vmem:[#allocation3 + $0x30] sm:$0x1]
        %v5805 = vsel %vm333, 0, %v5804
        %5806 = vst [vmem:[#allocation3 + $0x30] sm:$0x1] %v5805
        %v5807 = vld [vmem:[#allocation3 + $0x3c] sm:$0x1]
        %v5808 = vsel %vm333, 0, %v5807
        %5809 = vst [vmem:[#allocation3 + $0x3c] sm:$0x1] %v5808
        %v5810 = vld [vmem:[#allocation3 + $0x48] sm:$0x1]
        %v5811 = vsel %vm333, 0, %v5810
        %5812 = vst [vmem:[#allocation3 + $0x48] sm:$0x1] %v5811
        %v5813 = vld [vmem:[#allocation3 + $0x54] sm:$0x1]
        %v5814 = vsel %vm333, 0, %v5813
        %5815 = vst [vmem:[#allocation3 + $0x54] sm:$0x1] %v5814
        %v5816 = vld [vmem:[#allocation3 + $0x60] sm:$0x1]
        %v5817 = vsel %vm333, 0, %v5816
        %5818 = vst [vmem:[#allocation3 + $0x60] sm:$0x1] %v5817
        %v5819 = vld [vmem:[#allocation3 + $0x6c] sm:$0x1]
        %v5820 = vsel %vm333, 0, %v5819
        %5821 = vst [vmem:[#allocation3 + $0x6c] sm:$0x1] %v5820
        %v5822 = vld [vmem:[#allocation3 + $0x78] sm:$0x1]
        %v5823 = vsel %vm333, 0, %v5822
        %5824 = vst [vmem:[#allocation3 + $0x78] sm:$0x1] %v5823
        %v5825 = vld [vmem:[#allocation3 + $0x84] sm:$0x1]
        %v5826 = vsel %vm333, 0, %v5825
        %5827 = vst [vmem:[#allocation3 + $0x84] sm:$0x1] %v5826
        %v5828 = vld [vmem:[#allocation3 + $0x90] sm:$0x1]
        %v5829 = vsel %vm333, 0, %v5828
        %5830 = vst [vmem:[#allocation3 + $0x90] sm:$0x1] %v5829
        %v5831 = vld [vmem:[#allocation3 + $0x9c] sm:$0x1]
        %v5832 = vsel %vm333, 0, %v5831
        %5833 = vst [vmem:[#allocation3 + $0x9c] sm:$0x1] %v5832
        %v5834 = vld [vmem:[#allocation3 + $0xa8] sm:$0x1]
        %v5835 = vsel %vm333, 0, %v5834
        %5836 = vst [vmem:[#allocation3 + $0xa8] sm:$0x1] %v5835
        %v5837 = vld [vmem:[#allocation3 + $0xb4] sm:$0x1]
        %v5838 = vsel %vm333, 0, %v5837
        %5839 = vst [vmem:[#allocation3 + $0xb4] sm:$0x1] %v5838
        %v5840 = vld [vmem:[#allocation3 + $0xc0] sm:$0x1]
        %v5841 = vsel %vm333, 0, %v5840
        %5842 = vst [vmem:[#allocation3 + $0xc0] sm:$0x1] %v5841
        %v5843 = vld [vmem:[#allocation3 + $0xcc] sm:$0x1]
        %v5844 = vsel %vm333, 0, %v5843
        %5845 = vst [vmem:[#allocation3 + $0xcc] sm:$0x1] %v5844
        %v5846 = vld [vmem:[#allocation3 + $0x8] sm:$0x1]
        %v5847 = vsel %vm389, 0, %v5846
        %5848 = vst [vmem:[#allocation3 + $0x8] sm:$0x1] %v5847
        %v5849 = vld [vmem:[#allocation3 + $0x14] sm:$0x1]
        %v5850 = vsel %vm389, 0, %v5849
        %5851 = vst [vmem:[#allocation3 + $0x14] sm:$0x1] %v5850
        %v5852 = vld [vmem:[#allocation3 + $0x20] sm:$0x1]
        %v5853 = vsel %vm389, 0, %v5852
        %5854 = vst [vmem:[#allocation3 + $0x20] sm:$0x1] %v5853
        %v5855 = vld [vmem:[#allocation3 + $0x2c] sm:$0x1]
        %v5856 = vsel %vm389, 0, %v5855
        %5857 = vst [vmem:[#allocation3 + $0x2c] sm:$0x1] %v5856
        %v5858 = vld [vmem:[#allocation3 + $0x38] sm:$0x1]
        %v5859 = vsel %vm389, 0, %v5858
        %5860 = vst [vmem:[#allocation3 + $0x38] sm:$0x1] %v5859
        %v5861 = vld [vmem:[#allocation3 + $0x44] sm:$0x1]
        %v5862 = vsel %vm389, 0, %v5861
        %5863 = vst [vmem:[#allocation3 + $0x44] sm:$0x1] %v5862
        %v5864 = vld [vmem:[#allocation3 + $0x50] sm:$0x1]
        %v5865 = vsel %vm389, 0, %v5864
        %5866 = vst [vmem:[#allocation3 + $0x50] sm:$0x1] %v5865
        %v5867 = vld [vmem:[#allocation3 + $0x5c] sm:$0x1]
        %v5868 = vsel %vm389, 0, %v5867
        %5869 = vst [vmem:[#allocation3 + $0x5c] sm:$0x1] %v5868
        %v5870 = vld [vmem:[#allocation3 + $0x68] sm:$0x1]
        %v5871 = vsel %vm389, 0, %v5870
        %5872 = vst [vmem:[#allocation3 + $0x68] sm:$0x1] %v5871
        %v5873 = vld [vmem:[#allocation3 + $0x74] sm:$0x1]
        %v5874 = vsel %vm389, 0, %v5873
        %5875 = vst [vmem:[#allocation3 + $0x74] sm:$0x1] %v5874
        %v5876 = vld [vmem:[#allocation3 + $0x80] sm:$0x1]
        %v5877 = vsel %vm389, 0, %v5876
        %5878 = vst [vmem:[#allocation3 + $0x80] sm:$0x1] %v5877
        %v5879 = vld [vmem:[#allocation3 + $0x8c] sm:$0x1]
        %v5880 = vsel %vm389, 0, %v5879
        %5881 = vst [vmem:[#allocation3 + $0x8c] sm:$0x1] %v5880
        %v5882 = vld [vmem:[#allocation3 + $0x98] sm:$0x1]
        %v5883 = vsel %vm389, 0, %v5882
        %5884 = vst [vmem:[#allocation3 + $0x98] sm:$0x1] %v5883
        %v5885 = vld [vmem:[#allocation3 + $0xa4] sm:$0x1]
        %v5886 = vsel %vm389, 0, %v5885
        %5887 = vst [vmem:[#allocation3 + $0xa4] sm:$0x1] %v5886
        %v5888 = vld [vmem:[#allocation3 + $0xb0] sm:$0x1]
        %v5889 = vsel %vm389, 0, %v5888
        %5890 = vst [vmem:[#allocation3 + $0xb0] sm:$0x1] %v5889
        %v5891 = vld [vmem:[#allocation3 + $0xbc] sm:$0x1]
        %v5892 = vsel %vm389, 0, %v5891
        %5893 = vst [vmem:[#allocation3 + $0xbc] sm:$0x1] %v5892
        %v5894 = vld [vmem:[#allocation3 + $0xc8] sm:$0x1]
        %v5895 = vsel %vm389, 0, %v5894
        %5896 = vst [vmem:[#allocation3 + $0xc8] sm:$0x1] %v5895
        %v5897 = vld [vmem:[#allocation3 + $0xd4] sm:$0x1]
        %v5898 = vsel %vm389, 0, %v5897
        %5899 = vst [vmem:[#allocation3 + $0xd4] sm:$0x1] %v5898
        %v5900 = vpack.c.bf16 %v5754, %v5753
        %v5901 = vpack.c.bf16 %v5756, %v5755
        %v5902 = vpack.c.bf16 %v5758, %v5757
        %v5903 = vpack.c.bf16 %v5760, %v5759
        %v5904 = vpack.c.bf16 %v5762, %v5761
        %v5905 = vpack.c.bf16 %v5764, %v5763
        %v5906 = vpack.c.bf16 %v5766, %v5765
        %v5907 = vpack.c.bf16 %v5768, %v5767
        %v5908 = vpack.c.bf16 %v5770, %v5769
        %v5909 = vpack.c.bf16 %v5772, %v5771
        %v5910 = vpack.c.bf16 %v5774, %v5773
        %v5911 = vpack.c.bf16 %v5776, %v5775
        %v5912 = vpack.c.bf16 %v5778, %v5777
        %v5913 = vpack.c.bf16 %v5780, %v5779
        %v5914 = vpack.c.bf16 %v5782, %v5781
        %v5915 = vpack.c.bf16 %v5784, %v5783
        %v5932 = vunpack.c.l.b16 %v5900
        %v5933 = vunpack.c.h.b16 %v5900
        %v5934 = vunpack.c.l.b16 %v5901
        %v5935 = vunpack.c.h.b16 %v5901
        %v5936 = vunpack.c.l.b16 %v5902
        %v5937 = vunpack.c.h.b16 %v5902
        %v5938 = vunpack.c.l.b16 %v5903
        %v5939 = vunpack.c.h.b16 %v5903
        %v5940 = vunpack.c.l.b16 %v5904
        %v5941 = vunpack.c.h.b16 %v5904
        %v5942 = vunpack.c.l.b16 %v5905
        %v5943 = vunpack.c.h.b16 %v5905
        %v5944 = vunpack.c.l.b16 %v5906
        %v5945 = vunpack.c.h.b16 %v5906
        %v5946 = vunpack.c.l.b16 %v5907
        %v5947 = vunpack.c.h.b16 %v5907
        %v5948 = vunpack.c.l.b16 %v5908
        %v5949 = vunpack.c.h.b16 %v5908
        %v5950 = vunpack.c.l.b16 %v5909
        %v5951 = vunpack.c.h.b16 %v5909
        %v5952 = vunpack.c.l.b16 %v5910
        %v5953 = vunpack.c.h.b16 %v5910
        %v5954 = vunpack.c.l.b16 %v5911
        %v5955 = vunpack.c.h.b16 %v5911
        %v5956 = vunpack.c.l.b16 %v5912
        %v5957 = vunpack.c.h.b16 %v5912
        %v5958 = vunpack.c.l.b16 %v5913
        %v5959 = vunpack.c.h.b16 %v5913
        %v5960 = vunpack.c.l.b16 %v5914
        %v5961 = vunpack.c.h.b16 %v5914
        %v5962 = vunpack.c.l.b16 %v5915
        %v5963 = vunpack.c.h.b16 %v5915
        %v5964 = vpack.c.b16 %v5932, %v5932
        %v5965 = vpack.c.b16 %v5933, %v5933
        %v5966 = vpack.c.b16 %v5934, %v5934
        %v5967 = vpack.c.b16 %v5935, %v5935
        %v5968 = vpack.c.b16 %v5936, %v5936
        %v5969 = vpack.c.b16 %v5937, %v5937
        %v5970 = vpack.c.b16 %v5938, %v5938
        %v5971 = vpack.c.b16 %v5939, %v5939
        %v5972 = vpack.c.b16 %v5940, %v5940
        %v5973 = vpack.c.b16 %v5941, %v5941
        %v5974 = vpack.c.b16 %v5942, %v5942
        %v5975 = vpack.c.b16 %v5943, %v5943
        %v5976 = vpack.c.b16 %v5944, %v5944
        %v5977 = vpack.c.b16 %v5945, %v5945
        %v5978 = vpack.c.b16 %v5946, %v5946
        %v5979 = vpack.c.b16 %v5947, %v5947
        %v5980 = vpack.c.b16 %v5948, %v5948
        %v5981 = vpack.c.b16 %v5949, %v5949
        %v5982 = vpack.c.b16 %v5950, %v5950
        %v5983 = vpack.c.b16 %v5951, %v5951
        %v5984 = vpack.c.b16 %v5952, %v5952
        %v5985 = vpack.c.b16 %v5953, %v5953
        %v5986 = vpack.c.b16 %v5954, %v5954
        %v5987 = vpack.c.b16 %v5955, %v5955
        %v5988 = vpack.c.b16 %v5956, %v5956
        %v5989 = vpack.c.b16 %v5957, %v5957
        %v5990 = vpack.c.b16 %v5958, %v5958
        %v5991 = vpack.c.b16 %v5959, %v5959
        %v5992 = vpack.c.b16 %v5960, %v5960
        %v5993 = vpack.c.b16 %v5961, %v5961
        %v5994 = vpack.c.b16 %v5962, %v5962
        %v5995 = vpack.c.b16 %v5963, %v5963
        %v5997 = vshrl.u32 %v5964, 16
        %v5999 = vrot.slane %v5997, 7
        %v6000 = vshll.u32 %v5964, 16
        %v6002 = vor.u32 %v5999, %v6000
        %v6003 = vrot.slane %v5999, 4
        %v6005 = vshrl.u32 %v5965, 16
        %v6007 = vrot.slane %v6005, 7
        %v6008 = vshll.u32 %v5965, 16
        %v6010 = vor.u32 %v6007, %v6008
        %v6011 = vsel %vm445, %v6003, %v6010
        %v6012 = vrot.slane %v6007, 4
        %v6014 = vshrl.u32 %v5966, 16
        %v6016 = vrot.slane %v6014, 7
        %v6017 = vshll.u32 %v5966, 16
        %v6019 = vor.u32 %v6016, %v6017
        %v6020 = vrot.slane %v6016, 4
        %v6022 = vshrl.u32 %v5967, 16
        %v6024 = vrot.slane %v6022, 7
        %v6025 = vshll.u32 %v5967, 16
        %v6027 = vor.u32 %v6024, %v6025
        %v6028 = vsel %vm445, %v6020, %v6027
        %v6029 = vrot.slane %v6024, 4
        %v6031 = vshrl.u32 %v5968, 16
        %v6033 = vrot.slane %v6031, 7
        %v6034 = vshll.u32 %v5968, 16
        %v6036 = vor.u32 %v6033, %v6034
        %v6037 = vrot.slane %v6033, 4
        %v6039 = vshrl.u32 %v5969, 16
        %v6041 = vrot.slane %v6039, 7
        %v6042 = vshll.u32 %v5969, 16
        %v6044 = vor.u32 %v6041, %v6042
        %v6045 = vsel %vm445, %v6037, %v6044
        %v6046 = vrot.slane %v6041, 4
        %v6048 = vshrl.u32 %v5970, 16
        %v6050 = vrot.slane %v6048, 7
        %v6051 = vshll.u32 %v5970, 16
        %v6053 = vor.u32 %v6050, %v6051
        %v6054 = vrot.slane %v6050, 4
        %v6056 = vshrl.u32 %v5971, 16
        %v6058 = vrot.slane %v6056, 7
        %v6059 = vshll.u32 %v5971, 16
        %v6061 = vor.u32 %v6058, %v6059
        %v6062 = vsel %vm445, %v6054, %v6061
        %v6063 = vrot.slane %v6058, 4
        %v6065 = vshrl.u32 %v5972, 16
        %v6067 = vrot.slane %v6065, 7
        %v6068 = vshll.u32 %v5972, 16
        %v6070 = vor.u32 %v6067, %v6068
        %v6071 = vrot.slane %v6067, 4
        %v6073 = vshrl.u32 %v5973, 16
        %v6075 = vrot.slane %v6073, 7
        %v6076 = vshll.u32 %v5973, 16
        %v6078 = vor.u32 %v6075, %v6076
        %v6079 = vsel %vm445, %v6071, %v6078
        %v6080 = vrot.slane %v6075, 4
        %v6082 = vshrl.u32 %v5974, 16
        %v6084 = vrot.slane %v6082, 7
        %v6085 = vshll.u32 %v5974, 16
        %v6087 = vor.u32 %v6084, %v6085
        %v6088 = vrot.slane %v6084, 4
        %v6090 = vshrl.u32 %v5975, 16
        %v6092 = vrot.slane %v6090, 7
        %v6093 = vshll.u32 %v5975, 16
        %v6095 = vor.u32 %v6092, %v6093
        %v6096 = vsel %vm445, %v6088, %v6095
        %v6097 = vrot.slane %v6092, 4
        %v6099 = vshrl.u32 %v5976, 16
        %v6101 = vrot.slane %v6099, 7
        %v6102 = vshll.u32 %v5976, 16
        %v6104 = vor.u32 %v6101, %v6102
        %v6105 = vrot.slane %v6101, 4
        %v6107 = vshrl.u32 %v5977, 16
        %v6109 = vrot.slane %v6107, 7
        %v6110 = vshll.u32 %v5977, 16
        %v6112 = vor.u32 %v6109, %v6110
        %v6113 = vsel %vm445, %v6105, %v6112
        %v6114 = vrot.slane %v6109, 4
        %v6116 = vshrl.u32 %v5978, 16
        %v6118 = vrot.slane %v6116, 7
        %v6119 = vshll.u32 %v5978, 16
        %v6121 = vor.u32 %v6118, %v6119
        %v6122 = vrot.slane %v6118, 4
        %v6124 = vshrl.u32 %v5979, 16
        %v6126 = vrot.slane %v6124, 7
        %v6127 = vshll.u32 %v5979, 16
        %v6129 = vor.u32 %v6126, %v6127
        %v6130 = vsel %vm445, %v6122, %v6129
        %v6131 = vrot.slane %v6126, 4
        %v6133 = vshrl.u32 %v5980, 16
        %v6135 = vrot.slane %v6133, 7
        %v6136 = vshll.u32 %v5980, 16
        %v6138 = vor.u32 %v6135, %v6136
        %v6139 = vrot.slane %v6135, 4
        %v6141 = vshrl.u32 %v5981, 16
        %v6143 = vrot.slane %v6141, 7
        %v6144 = vshll.u32 %v5981, 16
        %v6146 = vor.u32 %v6143, %v6144
        %v6147 = vsel %vm445, %v6139, %v6146
        %v6148 = vrot.slane %v6143, 4
        %v6150 = vshrl.u32 %v5982, 16
        %v6152 = vrot.slane %v6150, 7
        %v6153 = vshll.u32 %v5982, 16
        %v6155 = vor.u32 %v6152, %v6153
        %v6156 = vrot.slane %v6152, 4
        %v6158 = vshrl.u32 %v5983, 16
        %v6160 = vrot.slane %v6158, 7
        %v6161 = vshll.u32 %v5983, 16
        %v6163 = vor.u32 %v6160, %v6161
        %v6164 = vsel %vm445, %v6156, %v6163
        %v6165 = vrot.slane %v6160, 4
        %v6167 = vshrl.u32 %v5984, 16
        %v6169 = vrot.slane %v6167, 7
        %v6170 = vshll.u32 %v5984, 16
        %v6172 = vor.u32 %v6169, %v6170
        %v6173 = vrot.slane %v6169, 4
        %v6175 = vshrl.u32 %v5985, 16
        %v6177 = vrot.slane %v6175, 7
        %v6178 = vshll.u32 %v5985, 16
        %v6180 = vor.u32 %v6177, %v6178
        %v6181 = vsel %vm445, %v6173, %v6180
        %v6182 = vrot.slane %v6177, 4
        %v6184 = vshrl.u32 %v5986, 16
        %v6186 = vrot.slane %v6184, 7
        %v6187 = vshll.u32 %v5986, 16
        %v6189 = vor.u32 %v6186, %v6187
        %v6190 = vrot.slane %v6186, 4
        %v6192 = vshrl.u32 %v5987, 16
        %v6194 = vrot.slane %v6192, 7
        %v6195 = vshll.u32 %v5987, 16
        %v6197 = vor.u32 %v6194, %v6195
        %v6198 = vsel %vm445, %v6190, %v6197
        %v6199 = vrot.slane %v6194, 4
        %v6201 = vshrl.u32 %v5988, 16
        %v6203 = vrot.slane %v6201, 7
        %v6204 = vshll.u32 %v5988, 16
        %v6206 = vor.u32 %v6203, %v6204
        %v6207 = vrot.slane %v6203, 4
        %v6209 = vshrl.u32 %v5989, 16
        %v6211 = vrot.slane %v6209, 7
        %v6212 = vshll.u32 %v5989, 16
        %v6214 = vor.u32 %v6211, %v6212
        %v6215 = vsel %vm445, %v6207, %v6214
        %v6216 = vrot.slane %v6211, 4
        %v6218 = vshrl.u32 %v5990, 16
        %v6220 = vrot.slane %v6218, 7
        %v6221 = vshll.u32 %v5990, 16
        %v6223 = vor.u32 %v6220, %v6221
        %v6224 = vrot.slane %v6220, 4
        %v6226 = vshrl.u32 %v5991, 16
        %v6228 = vrot.slane %v6226, 7
        %v6229 = vshll.u32 %v5991, 16
        %v6231 = vor.u32 %v6228, %v6229
        %v6232 = vsel %vm445, %v6224, %v6231
        %v6233 = vrot.slane %v6228, 4
        %v6235 = vshrl.u32 %v5992, 16
        %v6237 = vrot.slane %v6235, 7
        %v6238 = vshll.u32 %v5992, 16
        %v6240 = vor.u32 %v6237, %v6238
        %v6241 = vrot.slane %v6237, 4
        %v6243 = vshrl.u32 %v5993, 16
        %v6245 = vrot.slane %v6243, 7
        %v6246 = vshll.u32 %v5993, 16
        %v6248 = vor.u32 %v6245, %v6246
        %v6249 = vsel %vm445, %v6241, %v6248
        %v6250 = vrot.slane %v6245, 4
        %v6252 = vshrl.u32 %v5994, 16
        %v6254 = vrot.slane %v6252, 7
        %v6255 = vshll.u32 %v5994, 16
        %v6257 = vor.u32 %v6254, %v6255
        %v6258 = vrot.slane %v6254, 4
        %v6260 = vshrl.u32 %v5995, 16
        %v6262 = vrot.slane %v6260, 7
        %v6263 = vshll.u32 %v5995, 16
        %v6265 = vor.u32 %v6262, %v6263
        %v6266 = vsel %vm445, %v6258, %v6265
        %v6267 = vrot.slane %v6262, 4
        %s6316 = scalar_lea.vmem [#allocation3], 12
        %v6317 = vld [vmem:[%s6316] sm:$0xf]
        %v6318 = vsel %vm768, %v6002, %v6317
        %6319 = vst [vmem:[%s6316] sm:$0xf] %v6318
        %6320 = vst [vmem:[%s6316 + $0x4] sm:$0xf] %v6011
        %v6321 = vld [vmem:[%s6316 + $0x8] sm:$0x1]
        %v6322 = vsel %vm333, %v6012, %v6321
        %6323 = vst [vmem:[%s6316 + $0x8] sm:$0x1] %v6322
        %v6324 = vld [vmem:[%s6316 + $0xc] sm:$0xf]
        %v6325 = vsel %vm768, %v6019, %v6324
        %6326 = vst [vmem:[%s6316 + $0xc] sm:$0xf] %v6325
        %6327 = vst [vmem:[%s6316 + $0x10] sm:$0xf] %v6028
        %v6328 = vld [vmem:[%s6316 + $0x14] sm:$0x1]
        %v6329 = vsel %vm333, %v6029, %v6328
        %6330 = vst [vmem:[%s6316 + $0x14] sm:$0x1] %v6329
        %v6331 = vld [vmem:[%s6316 + $0x18] sm:$0xf]
        %v6332 = vsel %vm768, %v6036, %v6331
        %6333 = vst [vmem:[%s6316 + $0x18] sm:$0xf] %v6332
        %6334 = vst [vmem:[%s6316 + $0x1c] sm:$0xf] %v6045
        %v6335 = vld [vmem:[%s6316 + $0x20] sm:$0x1]
        %v6336 = vsel %vm333, %v6046, %v6335
        %6337 = vst [vmem:[%s6316 + $0x20] sm:$0x1] %v6336
        %v6338 = vld [vmem:[%s6316 + $0x24] sm:$0xf]
        %v6339 = vsel %vm768, %v6053, %v6338
        %6340 = vst [vmem:[%s6316 + $0x24] sm:$0xf] %v6339
        %6341 = vst [vmem:[%s6316 + $0x28] sm:$0xf] %v6062
        %v6342 = vld [vmem:[%s6316 + $0x2c] sm:$0x1]
        %v6343 = vsel %vm333, %v6063, %v6342
        %6344 = vst [vmem:[%s6316 + $0x2c] sm:$0x1] %v6343
        %v6345 = vld [vmem:[%s6316 + $0x30] sm:$0xf]
        %v6346 = vsel %vm768, %v6070, %v6345
        %6347 = vst [vmem:[%s6316 + $0x30] sm:$0xf] %v6346
        %6348 = vst [vmem:[%s6316 + $0x34] sm:$0xf] %v6079
        %v6349 = vld [vmem:[%s6316 + $0x38] sm:$0x1]
        %v6350 = vsel %vm333, %v6080, %v6349
        %6351 = vst [vmem:[%s6316 + $0x38] sm:$0x1] %v6350
        %v6352 = vld [vmem:[%s6316 + $0x3c] sm:$0xf]
        %v6353 = vsel %vm768, %v6087, %v6352
        %6354 = vst [vmem:[%s6316 + $0x3c] sm:$0xf] %v6353
        %6355 = vst [vmem:[%s6316 + $0x40] sm:$0xf] %v6096
        %v6356 = vld [vmem:[%s6316 + $0x44] sm:$0x1]
        %v6357 = vsel %vm333, %v6097, %v6356
        %6358 = vst [vmem:[%s6316 + $0x44] sm:$0x1] %v6357
        %v6359 = vld [vmem:[%s6316 + $0x48] sm:$0xf]
        %v6360 = vsel %vm768, %v6104, %v6359
        %6361 = vst [vmem:[%s6316 + $0x48] sm:$0xf] %v6360
        %6362 = vst [vmem:[%s6316 + $0x4c] sm:$0xf] %v6113
        %v6363 = vld [vmem:[%s6316 + $0x50] sm:$0x1]
        %v6364 = vsel %vm333, %v6114, %v6363
        %6365 = vst [vmem:[%s6316 + $0x50] sm:$0x1] %v6364
        %v6366 = vld [vmem:[%s6316 + $0x54] sm:$0xf]
        %v6367 = vsel %vm768, %v6121, %v6366
        %6368 = vst [vmem:[%s6316 + $0x54] sm:$0xf] %v6367
        %6369 = vst [vmem:[%s6316 + $0x58] sm:$0xf] %v6130
        %v6370 = vld [vmem:[%s6316 + $0x5c] sm:$0x1]
        %v6371 = vsel %vm333, %v6131, %v6370
        %6372 = vst [vmem:[%s6316 + $0x5c] sm:$0x1] %v6371
        %v6373 = vld [vmem:[%s6316 + $0x60] sm:$0xf]
        %v6374 = vsel %vm768, %v6138, %v6373
        %6375 = vst [vmem:[%s6316 + $0x60] sm:$0xf] %v6374
        %6376 = vst [vmem:[%s6316 + $0x64] sm:$0xf] %v6147
        %v6377 = vld [vmem:[%s6316 + $0x68] sm:$0x1]
        %v6378 = vsel %vm333, %v6148, %v6377
        %6379 = vst [vmem:[%s6316 + $0x68] sm:$0x1] %v6378
        %v6380 = vld [vmem:[%s6316 + $0x6c] sm:$0xf]
        %v6381 = vsel %vm768, %v6155, %v6380
        %6382 = vst [vmem:[%s6316 + $0x6c] sm:$0xf] %v6381
        %6383 = vst [vmem:[%s6316 + $0x70] sm:$0xf] %v6164
        %v6384 = vld [vmem:[%s6316 + $0x74] sm:$0x1]
        %v6385 = vsel %vm333, %v6165, %v6384
        %6386 = vst [vmem:[%s6316 + $0x74] sm:$0x1] %v6385
        %v6387 = vld [vmem:[%s6316 + $0x78] sm:$0xf]
        %v6388 = vsel %vm768, %v6172, %v6387
        %6389 = vst [vmem:[%s6316 + $0x78] sm:$0xf] %v6388
        %6390 = vst [vmem:[%s6316 + $0x7c] sm:$0xf] %v6181
        %v6391 = vld [vmem:[%s6316 + $0x80] sm:$0x1]
        %v6392 = vsel %vm333, %v6182, %v6391
        %6393 = vst [vmem:[%s6316 + $0x80] sm:$0x1] %v6392
        %v6394 = vld [vmem:[%s6316 + $0x84] sm:$0xf]
        %v6395 = vsel %vm768, %v6189, %v6394
        %6396 = vst [vmem:[%s6316 + $0x84] sm:$0xf] %v6395
        %6397 = vst [vmem:[%s6316 + $0x88] sm:$0xf] %v6198
        %v6398 = vld [vmem:[%s6316 + $0x8c] sm:$0x1]
        %v6399 = vsel %vm333, %v6199, %v6398
        %6400 = vst [vmem:[%s6316 + $0x8c] sm:$0x1] %v6399
        %v6401 = vld [vmem:[%s6316 + $0x90] sm:$0xf]
        %v6402 = vsel %vm768, %v6206, %v6401
        %6403 = vst [vmem:[%s6316 + $0x90] sm:$0xf] %v6402
        %6404 = vst [vmem:[%s6316 + $0x94] sm:$0xf] %v6215
        %v6405 = vld [vmem:[%s6316 + $0x98] sm:$0x1]
        %v6406 = vsel %vm333, %v6216, %v6405
        %6407 = vst [vmem:[%s6316 + $0x98] sm:$0x1] %v6406
        %v6408 = vld [vmem:[%s6316 + $0x9c] sm:$0xf]
        %v6409 = vsel %vm768, %v6223, %v6408
        %6410 = vst [vmem:[%s6316 + $0x9c] sm:$0xf] %v6409
        %6411 = vst [vmem:[%s6316 + $0xa0] sm:$0xf] %v6232
        %v6412 = vld [vmem:[%s6316 + $0xa4] sm:$0x1]
        %v6413 = vsel %vm333, %v6233, %v6412
        %6414 = vst [vmem:[%s6316 + $0xa4] sm:$0x1] %v6413
        %v6415 = vld [vmem:[%s6316 + $0xa8] sm:$0xf]
        %v6416 = vsel %vm768, %v6240, %v6415
        %6417 = vst [vmem:[%s6316 + $0xa8] sm:$0xf] %v6416
        %6418 = vst [vmem:[%s6316 + $0xac] sm:$0xf] %v6249
        %v6419 = vld [vmem:[%s6316 + $0xb0] sm:$0x1]
        %v6420 = vsel %vm333, %v6250, %v6419
        %6421 = vst [vmem:[%s6316 + $0xb0] sm:$0x1] %v6420
        %v6422 = vld [vmem:[%s6316 + $0xb4] sm:$0xf]
        %v6423 = vsel %vm768, %v6257, %v6422
        %6424 = vst [vmem:[%s6316 + $0xb4] sm:$0xf] %v6423
        %6425 = vst [vmem:[%s6316 + $0xb8] sm:$0xf] %v6266
        %v6426 = vld [vmem:[%s6316 + $0xbc] sm:$0x1]
        %v6427 = vsel %vm333, %v6267, %v6426
        %6428 = vst [vmem:[%s6316 + $0xbc] sm:$0x1] %v6427
        %v6429 = vld [vmem:[#allocation3] sm:$0xf]
        %v6430 = vld [vmem:[#allocation3 + $0x4] sm:$0xf]
        %v6431 = vld [vmem:[#allocation3 + $0xc] sm:$0xf]
        %v6432 = vld [vmem:[#allocation3 + $0x10] sm:$0xf]
        %v6433 = vld [vmem:[#allocation3 + $0x18] sm:$0xf]
        %v6434 = vld [vmem:[#allocation3 + $0x1c] sm:$0xf]
        %v6435 = vld [vmem:[#allocation3 + $0x24] sm:$0xf]
        %v6436 = vld [vmem:[#allocation3 + $0x28] sm:$0xf]
        %v6437 = vld [vmem:[#allocation3 + $0x30] sm:$0xf]
        %v6438 = vld [vmem:[#allocation3 + $0x34] sm:$0xf]
        %v6439 = vld [vmem:[#allocation3 + $0x3c] sm:$0xf]
        %v6440 = vld [vmem:[#allocation3 + $0x40] sm:$0xf]
        %v6441 = vld [vmem:[#allocation3 + $0x48] sm:$0xf]
        %v6442 = vld [vmem:[#allocation3 + $0x4c] sm:$0xf]
        %v6443 = vld [vmem:[#allocation3 + $0x54] sm:$0xf]
        %v6444 = vld [vmem:[#allocation3 + $0x58] sm:$0xf]
        %v6445 = vld [vmem:[#allocation3 + $0x60] sm:$0xf]
        %v6446 = vld [vmem:[#allocation3 + $0x64] sm:$0xf]
        %v6447 = vld [vmem:[#allocation3 + $0x6c] sm:$0xf]
        %v6448 = vld [vmem:[#allocation3 + $0x70] sm:$0xf]
        %v6449 = vld [vmem:[#allocation3 + $0x78] sm:$0xf]
        %v6450 = vld [vmem:[#allocation3 + $0x7c] sm:$0xf]
        %v6451 = vld [vmem:[#allocation3 + $0x84] sm:$0xf]
        %v6452 = vld [vmem:[#allocation3 + $0x88] sm:$0xf]
        %v6453 = vld [vmem:[#allocation3 + $0x90] sm:$0xf]
        %v6454 = vld [vmem:[#allocation3 + $0x94] sm:$0xf]
        %v6455 = vld [vmem:[#allocation3 + $0x9c] sm:$0xf]
        %v6456 = vld [vmem:[#allocation3 + $0xa0] sm:$0xf]
        %v6457 = vld [vmem:[#allocation3 + $0xa8] sm:$0xf]
        %v6458 = vld [vmem:[#allocation3 + $0xac] sm:$0xf]
        %v6459 = vld [vmem:[#allocation3 + $0xb4] sm:$0xf]
        %v6460 = vld [vmem:[#allocation3 + $0xb8] sm:$0xf]
        %v6461 = vld [vmem:[#allocation9] sm:$0xf]
        %v6462 = vld [vmem:[#allocation9 + $0x4] sm:$0xf]
        %v6463 = vld [vmem:[#allocation9 + $0x8] sm:$0xf]
        %v6464 = vld [vmem:[#allocation9 + $0xc] sm:$0xf]
        %v6465 = vld [vmem:[#allocation9 + $0x10] sm:$0xf]
        %v6466 = vld [vmem:[#allocation9 + $0x14] sm:$0xf]
        %v6467 = vld [vmem:[#allocation9 + $0x18] sm:$0xf]
        %v6468 = vld [vmem:[#allocation9 + $0x1c] sm:$0xf]
        %v6469 = vld [vmem:[#allocation9 + $0x20] sm:$0xf]
        %v6470 = vld [vmem:[#allocation9 + $0x24] sm:$0xf]
        %v6471 = vld [vmem:[#allocation9 + $0x28] sm:$0xf]
        %v6472 = vld [vmem:[#allocation9 + $0x2c] sm:$0xf]
        %v6473 = vld [vmem:[#allocation9 + $0x30] sm:$0xf]
        %v6474 = vld [vmem:[#allocation9 + $0x34] sm:$0xf]
        %v6475 = vld [vmem:[#allocation9 + $0x38] sm:$0xf]
        %v6476 = vld [vmem:[#allocation9 + $0x3c] sm:$0xf]
        %v6477 = vld [vmem:[#allocation3 + $0x8] sm:$0x1]
        %v6478 = vld [vmem:[#allocation3 + $0x14] sm:$0x1]
        %v6479 = vld [vmem:[#allocation3 + $0x20] sm:$0x1]
        %v6480 = vld [vmem:[#allocation3 + $0x2c] sm:$0x1]
        %v6481 = vld [vmem:[#allocation3 + $0x38] sm:$0x1]
        %v6482 = vld [vmem:[#allocation3 + $0x44] sm:$0x1]
        %v6483 = vld [vmem:[#allocation3 + $0x50] sm:$0x1]
        %v6484 = vld [vmem:[#allocation3 + $0x5c] sm:$0x1]
        %v6485 = vld [vmem:[#allocation3 + $0x68] sm:$0x1]
        %v6486 = vld [vmem:[#allocation3 + $0x74] sm:$0x1]
        %v6487 = vld [vmem:[#allocation3 + $0x80] sm:$0x1]
        %v6488 = vld [vmem:[#allocation3 + $0x8c] sm:$0x1]
        %v6489 = vld [vmem:[#allocation3 + $0x98] sm:$0x1]
        %v6490 = vld [vmem:[#allocation3 + $0xa4] sm:$0x1]
        %v6491 = vld [vmem:[#allocation3 + $0xb0] sm:$0x1]
        %v6492 = vld [vmem:[#allocation3 + $0xbc] sm:$0x1]
        %v6493 = vld [vmem:[#allocation9 + $0x40] sm:$0xf]
        %v6494 = vld [vmem:[#allocation9 + $0x44] sm:$0xf]
        %v6495 = vld [vmem:[#allocation9 + $0x48] sm:$0xf]
        %v6496 = vld [vmem:[#allocation9 + $0x4c] sm:$0xf]
        %v6497 = vld [vmem:[#allocation9 + $0x50] sm:$0xf]
        %v6498 = vld [vmem:[#allocation9 + $0x54] sm:$0xf]
        %v6499 = vld [vmem:[#allocation9 + $0x58] sm:$0xf]
        %v6500 = vld [vmem:[#allocation9 + $0x5c] sm:$0xf]
        %v6501 = vld [vmem:[#allocation9 + $0x60] sm:$0xf]
        %v6502 = vld [vmem:[#allocation9 + $0x64] sm:$0xf]
        %v6503 = vld [vmem:[#allocation9 + $0x68] sm:$0xf]
        %v6504 = vld [vmem:[#allocation9 + $0x6c] sm:$0xf]
        %v6505 = vld [vmem:[#allocation9 + $0x70] sm:$0xf]
        %v6506 = vld [vmem:[#allocation9 + $0x74] sm:$0xf]
        %v6507 = vld [vmem:[#allocation9 + $0x78] sm:$0xf]
        %v6508 = vld [vmem:[#allocation9 + $0x7c] sm:$0xf]
        %v6510 = vshrl.u32 %v6429, 16
        %v6512 = vrot.slane %v6510, 4
        %v6513 = vshll.u32 %v6429, 16
        %v6515 = vrot.slane %v6513, 5
        %v6516 = vor.u32 %v6512, %v6515
        %v6517 = vrot.slane %v6516, 4
        %v6519 = vshll.u32 %v6430, 16
        %v6521 = vrot.slane %v6519, 5
        %v6522 = vsel %vm963, %v6517, %v6521
        %v6523 = vshrl.u32 %v6430, 16
        %v6525 = vrot.slane %v6523, 4
        %v6526 = vor.u32 %v6525, %v6521
        %v6527 = vrot.slane %v6526, 4
        %v6529 = vshll.u32 %v6477, 16
        %v6531 = vrot.slane %v6529, 5
        %v6532 = vsel %vm963, %v6527, %v6531
        %v6534 = vshrl.u32 %v6431, 16
        %v6536 = vrot.slane %v6534, 4
        %v6537 = vshll.u32 %v6431, 16
        %v6539 = vrot.slane %v6537, 5
        %v6540 = vor.u32 %v6536, %v6539
        %v6541 = vrot.slane %v6540, 4
        %v6543 = vshll.u32 %v6432, 16
        %v6545 = vrot.slane %v6543, 5
        %v6546 = vsel %vm963, %v6541, %v6545
        %v6547 = vshrl.u32 %v6432, 16
        %v6549 = vrot.slane %v6547, 4
        %v6550 = vor.u32 %v6549, %v6545
        %v6551 = vrot.slane %v6550, 4
        %v6553 = vshll.u32 %v6478, 16
        %v6555 = vrot.slane %v6553, 5
        %v6556 = vsel %vm963, %v6551, %v6555
        %v6558 = vshrl.u32 %v6433, 16
        %v6560 = vrot.slane %v6558, 4
        %v6561 = vshll.u32 %v6433, 16
        %v6563 = vrot.slane %v6561, 5
        %v6564 = vor.u32 %v6560, %v6563
        %v6565 = vrot.slane %v6564, 4
        %v6567 = vshll.u32 %v6434, 16
        %v6569 = vrot.slane %v6567, 5
        %v6570 = vsel %vm963, %v6565, %v6569
        %v6571 = vshrl.u32 %v6434, 16
        %v6573 = vrot.slane %v6571, 4
        %v6574 = vor.u32 %v6573, %v6569
        %v6575 = vrot.slane %v6574, 4
        %v6577 = vshll.u32 %v6479, 16
        %v6579 = vrot.slane %v6577, 5
        %v6580 = vsel %vm963, %v6575, %v6579
        %v6582 = vshrl.u32 %v6435, 16
        %v6584 = vrot.slane %v6582, 4
        %v6585 = vshll.u32 %v6435, 16
        %v6587 = vrot.slane %v6585, 5
        %v6588 = vor.u32 %v6584, %v6587
        %v6589 = vrot.slane %v6588, 4
        %v6591 = vshll.u32 %v6436, 16
        %v6593 = vrot.slane %v6591, 5
        %v6594 = vsel %vm963, %v6589, %v6593
        %v6595 = vshrl.u32 %v6436, 16
        %v6597 = vrot.slane %v6595, 4
        %v6598 = vor.u32 %v6597, %v6593
        %v6599 = vrot.slane %v6598, 4
        %v6601 = vshll.u32 %v6480, 16
        %v6603 = vrot.slane %v6601, 5
        %v6604 = vsel %vm963, %v6599, %v6603
        %v6606 = vshrl.u32 %v6437, 16
        %v6608 = vrot.slane %v6606, 4
        %v6609 = vshll.u32 %v6437, 16
        %v6611 = vrot.slane %v6609, 5
        %v6612 = vor.u32 %v6608, %v6611
        %v6613 = vrot.slane %v6612, 4
        %v6615 = vshll.u32 %v6438, 16
        %v6617 = vrot.slane %v6615, 5
        %v6618 = vsel %vm963, %v6613, %v6617
        %v6619 = vshrl.u32 %v6438, 16
        %v6621 = vrot.slane %v6619, 4
        %v6622 = vor.u32 %v6621, %v6617
        %v6623 = vrot.slane %v6622, 4
        %v6625 = vshll.u32 %v6481, 16
        %v6627 = vrot.slane %v6625, 5
        %v6628 = vsel %vm963, %v6623, %v6627
        %v6630 = vshrl.u32 %v6439, 16
        %v6632 = vrot.slane %v6630, 4
        %v6633 = vshll.u32 %v6439, 16
        %v6635 = vrot.slane %v6633, 5
        %v6636 = vor.u32 %v6632, %v6635
        %v6637 = vrot.slane %v6636, 4
        %v6639 = vshll.u32 %v6440, 16
        %v6641 = vrot.slane %v6639, 5
        %v6642 = vsel %vm963, %v6637, %v6641
        %v6643 = vshrl.u32 %v6440, 16
        %v6645 = vrot.slane %v6643, 4
        %v6646 = vor.u32 %v6645, %v6641
        %v6647 = vrot.slane %v6646, 4
        %v6649 = vshll.u32 %v6482, 16
        %v6651 = vrot.slane %v6649, 5
        %v6652 = vsel %vm963, %v6647, %v6651
        %v6654 = vshrl.u32 %v6441, 16
        %v6656 = vrot.slane %v6654, 4
        %v6657 = vshll.u32 %v6441, 16
        %v6659 = vrot.slane %v6657, 5
        %v6660 = vor.u32 %v6656, %v6659
        %v6661 = vrot.slane %v6660, 4
        %v6663 = vshll.u32 %v6442, 16
        %v6665 = vrot.slane %v6663, 5
        %v6666 = vsel %vm963, %v6661, %v6665
        %v6667 = vshrl.u32 %v6442, 16
        %v6669 = vrot.slane %v6667, 4
        %v6670 = vor.u32 %v6669, %v6665
        %v6671 = vrot.slane %v6670, 4
        %v6673 = vshll.u32 %v6483, 16
        %v6675 = vrot.slane %v6673, 5
        %v6676 = vsel %vm963, %v6671, %v6675
        %v6678 = vshrl.u32 %v6443, 16
        %v6680 = vrot.slane %v6678, 4
        %v6681 = vshll.u32 %v6443, 16
        %v6683 = vrot.slane %v6681, 5
        %v6684 = vor.u32 %v6680, %v6683
        %v6685 = vrot.slane %v6684, 4
        %v6687 = vshll.u32 %v6444, 16
        %v6689 = vrot.slane %v6687, 5
        %v6690 = vsel %vm963, %v6685, %v6689
        %v6691 = vshrl.u32 %v6444, 16
        %v6693 = vrot.slane %v6691, 4
        %v6694 = vor.u32 %v6693, %v6689
        %v6695 = vrot.slane %v6694, 4
        %v6697 = vshll.u32 %v6484, 16
        %v6699 = vrot.slane %v6697, 5
        %v6700 = vsel %vm963, %v6695, %v6699
        %v6702 = vshrl.u32 %v6445, 16
        %v6704 = vrot.slane %v6702, 4
        %v6705 = vshll.u32 %v6445, 16
        %v6707 = vrot.slane %v6705, 5
        %v6708 = vor.u32 %v6704, %v6707
        %v6709 = vrot.slane %v6708, 4
        %v6711 = vshll.u32 %v6446, 16
        %v6713 = vrot.slane %v6711, 5
        %v6714 = vsel %vm963, %v6709, %v6713
        %v6715 = vshrl.u32 %v6446, 16
        %v6717 = vrot.slane %v6715, 4
        %v6718 = vor.u32 %v6717, %v6713
        %v6719 = vrot.slane %v6718, 4
        %v6721 = vshll.u32 %v6485, 16
        %v6723 = vrot.slane %v6721, 5
        %v6724 = vsel %vm963, %v6719, %v6723
        %v6726 = vshrl.u32 %v6447, 16
        %v6728 = vrot.slane %v6726, 4
        %v6729 = vshll.u32 %v6447, 16
        %v6731 = vrot.slane %v6729, 5
        %v6732 = vor.u32 %v6728, %v6731
        %v6733 = vrot.slane %v6732, 4
        %v6735 = vshll.u32 %v6448, 16
        %v6737 = vrot.slane %v6735, 5
        %v6738 = vsel %vm963, %v6733, %v6737
        %v6739 = vshrl.u32 %v6448, 16
        %v6741 = vrot.slane %v6739, 4
        %v6742 = vor.u32 %v6741, %v6737
        %v6743 = vrot.slane %v6742, 4
        %v6745 = vshll.u32 %v6486, 16
        %v6747 = vrot.slane %v6745, 5
        %v6748 = vsel %vm963, %v6743, %v6747
        %v6750 = vshrl.u32 %v6449, 16
        %v6752 = vrot.slane %v6750, 4
        %v6753 = vshll.u32 %v6449, 16
        %v6755 = vrot.slane %v6753, 5
        %v6756 = vor.u32 %v6752, %v6755
        %v6757 = vrot.slane %v6756, 4
        %v6759 = vshll.u32 %v6450, 16
        %v6761 = vrot.slane %v6759, 5
        %v6762 = vsel %vm963, %v6757, %v6761
        %v6763 = vshrl.u32 %v6450, 16
        %v6765 = vrot.slane %v6763, 4
        %v6766 = vor.u32 %v6765, %v6761
        %v6767 = vrot.slane %v6766, 4
        %v6769 = vshll.u32 %v6487, 16
        %v6771 = vrot.slane %v6769, 5
        %v6772 = vsel %vm963, %v6767, %v6771
        %v6774 = vshrl.u32 %v6451, 16
        %v6776 = vrot.slane %v6774, 4
        %v6777 = vshll.u32 %v6451, 16
        %v6779 = vrot.slane %v6777, 5
        %v6780 = vor.u32 %v6776, %v6779
        %v6781 = vrot.slane %v6780, 4
        %v6783 = vshll.u32 %v6452, 16
        %v6785 = vrot.slane %v6783, 5
        %v6786 = vsel %vm963, %v6781, %v6785
        %v6787 = vshrl.u32 %v6452, 16
        %v6789 = vrot.slane %v6787, 4
        %v6790 = vor.u32 %v6789, %v6785
        %v6791 = vrot.slane %v6790, 4
        %v6793 = vshll.u32 %v6488, 16
        %v6795 = vrot.slane %v6793, 5
        %v6796 = vsel %vm963, %v6791, %v6795
        %v6798 = vshrl.u32 %v6453, 16
        %v6800 = vrot.slane %v6798, 4
        %v6801 = vshll.u32 %v6453, 16
        %v6803 = vrot.slane %v6801, 5
        %v6804 = vor.u32 %v6800, %v6803
        %v6805 = vrot.slane %v6804, 4
        %v6807 = vshll.u32 %v6454, 16
        %v6809 = vrot.slane %v6807, 5
        %v6810 = vsel %vm963, %v6805, %v6809
        %v6811 = vshrl.u32 %v6454, 16
        %v6813 = vrot.slane %v6811, 4
        %v6814 = vor.u32 %v6813, %v6809
        %v6815 = vrot.slane %v6814, 4
        %v6817 = vshll.u32 %v6489, 16
        %v6819 = vrot.slane %v6817, 5
        %v6820 = vsel %vm963, %v6815, %v6819
        %v6822 = vshrl.u32 %v6455, 16
        %v6824 = vrot.slane %v6822, 4
        %v6825 = vshll.u32 %v6455, 16
        %v6827 = vrot.slane %v6825, 5
        %v6828 = vor.u32 %v6824, %v6827
        %v6829 = vrot.slane %v6828, 4
        %v6831 = vshll.u32 %v6456, 16
        %v6833 = vrot.slane %v6831, 5
        %v6834 = vsel %vm963, %v6829, %v6833
        %v6835 = vshrl.u32 %v6456, 16
        %v6837 = vrot.slane %v6835, 4
        %v6838 = vor.u32 %v6837, %v6833
        %v6839 = vrot.slane %v6838, 4
        %v6841 = vshll.u32 %v6490, 16
        %v6843 = vrot.slane %v6841, 5
        %v6844 = vsel %vm963, %v6839, %v6843
        %v6846 = vshrl.u32 %v6457, 16
        %v6848 = vrot.slane %v6846, 4
        %v6849 = vshll.u32 %v6457, 16
        %v6851 = vrot.slane %v6849, 5
        %v6852 = vor.u32 %v6848, %v6851
        %v6853 = vrot.slane %v6852, 4
        %v6855 = vshll.u32 %v6458, 16
        %v6857 = vrot.slane %v6855, 5
        %v6858 = vsel %vm963, %v6853, %v6857
        %v6859 = vshrl.u32 %v6458, 16
        %v6861 = vrot.slane %v6859, 4
        %v6862 = vor.u32 %v6861, %v6857
        %v6863 = vrot.slane %v6862, 4
        %v6865 = vshll.u32 %v6491, 16
        %v6867 = vrot.slane %v6865, 5
        %v6868 = vsel %vm963, %v6863, %v6867
        %v6870 = vshrl.u32 %v6459, 16
        %v6872 = vrot.slane %v6870, 4
        %v6873 = vshll.u32 %v6459, 16
        %v6875 = vrot.slane %v6873, 5
        %v6876 = vor.u32 %v6872, %v6875
        %v6877 = vrot.slane %v6876, 4
        %v6879 = vshll.u32 %v6460, 16
        %v6881 = vrot.slane %v6879, 5
        %v6882 = vsel %vm963, %v6877, %v6881
        %v6883 = vshrl.u32 %v6460, 16
        %v6885 = vrot.slane %v6883, 4
        %v6886 = vor.u32 %v6885, %v6881
        %v6887 = vrot.slane %v6886, 4
        %v6889 = vshll.u32 %v6492, 16
        %v6891 = vrot.slane %v6889, 5
        %v6892 = vsel %vm963, %v6887, %v6891
        %v6893 = vunpack.c.l.b16 %v6522
        %v6894 = vunpack.c.l.b16 %v6532
        %v6895 = vunpack.c.l.b16 %v6546
        %v6896 = vunpack.c.l.b16 %v6556
        %v6897 = vunpack.c.l.b16 %v6570
        %v6898 = vunpack.c.l.b16 %v6580
        %v6899 = vunpack.c.l.b16 %v6594
        %v6900 = vunpack.c.l.b16 %v6604
        %v6901 = vunpack.c.l.b16 %v6618
        %v6902 = vunpack.c.l.b16 %v6628
        %v6903 = vunpack.c.l.b16 %v6642
        %v6904 = vunpack.c.l.b16 %v6652
        %v6905 = vunpack.c.l.b16 %v6666
        %v6906 = vunpack.c.l.b16 %v6676
        %v6907 = vunpack.c.l.b16 %v6690
        %v6908 = vunpack.c.l.b16 %v6700
        %v6909 = vunpack.c.l.b16 %v6714
        %v6910 = vunpack.c.l.b16 %v6724
        %v6911 = vunpack.c.l.b16 %v6738
        %v6912 = vunpack.c.l.b16 %v6748
        %v6913 = vunpack.c.l.b16 %v6762
        %v6914 = vunpack.c.l.b16 %v6772
        %v6915 = vunpack.c.l.b16 %v6786
        %v6916 = vunpack.c.l.b16 %v6796
        %v6917 = vunpack.c.l.b16 %v6810
        %v6918 = vunpack.c.l.b16 %v6820
        %v6919 = vunpack.c.l.b16 %v6834
        %v6920 = vunpack.c.l.b16 %v6844
        %v6921 = vunpack.c.l.b16 %v6858
        %v6922 = vunpack.c.l.b16 %v6868
        %v6923 = vunpack.c.l.b16 %v6882
        %v6924 = vunpack.c.l.b16 %v6892
        %v6925 = vpack.c.b16 %v6894, %v6893
        %v6926 = vpack.c.b16 %v6896, %v6895
        %v6927 = vpack.c.b16 %v6898, %v6897
        %v6928 = vpack.c.b16 %v6900, %v6899
        %v6929 = vpack.c.b16 %v6902, %v6901
        %v6930 = vpack.c.b16 %v6904, %v6903
        %v6931 = vpack.c.b16 %v6906, %v6905
        %v6932 = vpack.c.b16 %v6908, %v6907
        %v6933 = vpack.c.b16 %v6910, %v6909
        %v6934 = vpack.c.b16 %v6912, %v6911
        %v6935 = vpack.c.b16 %v6914, %v6913
        %v6936 = vpack.c.b16 %v6916, %v6915
        %v6937 = vpack.c.b16 %v6918, %v6917
        %v6938 = vpack.c.b16 %v6920, %v6919
        %v6939 = vpack.c.b16 %v6922, %v6921
        %v6940 = vpack.c.b16 %v6924, %v6923
        %v6973 = vunpack.c.l.b16 %v6493
        %v6974 = vunpack.c.l.b16 %v6494
        %v6975 = vunpack.c.l.b16 %v6495
        %v6976 = vunpack.c.l.b16 %v6496
        %v6977 = vunpack.c.l.b16 %v6497
        %v6978 = vunpack.c.l.b16 %v6498
        %v6979 = vunpack.c.l.b16 %v6499
        %v6980 = vunpack.c.l.b16 %v6500
        %v6981 = vunpack.c.l.b16 %v6501
        %v6982 = vunpack.c.l.b16 %v6502
        %v6983 = vunpack.c.l.b16 %v6503
        %v6984 = vunpack.c.l.b16 %v6504
        %v6985 = vunpack.c.l.b16 %v6505
        %v6986 = vunpack.c.l.b16 %v6506
        %v6987 = vunpack.c.l.b16 %v6507
        %v6988 = vunpack.c.l.b16 %v6508
        %v6989 = vpack.c.b16 %v6974, %v6973
        %v6990 = vpack.c.b16 %v6976, %v6975
        %v6991 = vpack.c.b16 %v6978, %v6977
        %v6992 = vpack.c.b16 %v6980, %v6979
        %v6993 = vpack.c.b16 %v6982, %v6981
        %v6994 = vpack.c.b16 %v6984, %v6983
        %v6995 = vpack.c.b16 %v6986, %v6985
        %v6996 = vpack.c.b16 %v6988, %v6987
        %7005 = vmatprep.subr.bf16.mxu0 0
        %7006 = vmatpush1.bf16.msra.mxu0 %v6989
        %7007 = vmatprep.subr.bf16.mxu0 0
        %7008 = vmatpush1.bf16.msra.mxu0 %v6990
        %7009 = vmatprep.subr.bf16.mxu0 0
        %7010 = vmatpush1.bf16.msra.mxu0 %v6991
        %7011 = vmatprep.subr.bf16.mxu0 0
        %7012 = vmatpush1.bf16.msra.mxu0 %v6992
        %7013 = vmatprep.subr.bf16.mxu0 0
        %7014 = vmatpush1.bf16.msra.mxu0 %v6993
        %7015 = vmatprep.subr.bf16.mxu0 0
        %7016 = vmatpush1.bf16.msra.mxu0 %v6994
        %7017 = vmatprep.subr.bf16.mxu0 0
        %7018 = vmatpush1.bf16.msra.mxu0 %v6995
        %7019 = vmatprep.subr.bf16.mxu0 0
        %7020 = vmatpush1.bf16.msra.mxu0 %v6996
        %7021 = vmatprep.subr.bf16.mxu0 0
        %7022 = vmatpush1.bf16.msra.mxu0 0
        %7023 = vmatprep.subr.bf16.mxu0 0
        %7024 = vmatpush1.bf16.msra.mxu0 0
        %7025 = vmatprep.subr.bf16.mxu0 0
        %7026 = vmatpush1.bf16.msra.mxu0 0
        %7027 = vmatprep.subr.bf16.mxu0 0
        %7028 = vmatpush1.bf16.msra.mxu0 0
        %7029 = vmatprep.subr.bf16.mxu0 0
        %7030 = vmatpush1.bf16.msra.mxu0 0
        %7031 = vmatprep.subr.bf16.mxu0 0
        %7032 = vmatpush1.bf16.msra.mxu0 0
        %7033 = vmatprep.subr.bf16.mxu0 0
        %7034 = vmatpush1.bf16.msra.mxu0 0
        %7035 = vmatprep.subr.bf16.mxu0 0
        %7036 = vmatpush1.bf16.msra.mxu0 0
        %7037 = vmatprep.mubr.bf16.mxu0 0
        %7038 = vmatmul.mubr.bf16.gmra.mrb[0].mxu0 %v6925
        %v7039 = vpop.f32.mrb[0].mxu0
        %v7040 = vadd.f32 0.0, %v7039
        %v7041 = vpop.f32.mrb[0].mxu0
        %v7042 = vpop.f32.mrb[0].mxu0
        %v7043 = vadd.f32 0.0, %v7042
        %v7044 = vpop.f32.mrb[0].mxu0
        %7045 = vmatprep.mubr.bf16.mxu0 0
        %7046 = vmatmul.mubr.bf16.gmra.mrb[0].mxu0 %v6926
        %v7047 = vpop.f32.mrb[0].mxu0
        %v7048 = vadd.f32 0.0, %v7047
        %v7049 = vpop.f32.mrb[0].mxu0
        %v7050 = vpop.f32.mrb[0].mxu0
        %v7051 = vadd.f32 0.0, %v7050
        %v7052 = vpop.f32.mrb[0].mxu0
        %7053 = vmatprep.mubr.bf16.mxu0 0
        %7054 = vmatmul.mubr.bf16.gmra.mrb[0].mxu0 %v6927
        %v7055 = vpop.f32.mrb[0].mxu0
        %v7056 = vadd.f32 0.0, %v7055
        %v7057 = vpop.f32.mrb[0].mxu0
        %v7058 = vpop.f32.mrb[0].mxu0
        %v7059 = vadd.f32 0.0, %v7058
        %v7060 = vpop.f32.mrb[0].mxu0
        %7061 = vmatprep.mubr.bf16.mxu0 0
        %7062 = vmatmul.mubr.bf16.gmra.mrb[0].mxu0 %v6928
        %v7063 = vpop.f32.mrb[0].mxu0
        %v7064 = vadd.f32 0.0, %v7063
        %v7065 = vpop.f32.mrb[0].mxu0
        %v7066 = vpop.f32.mrb[0].mxu0
        %v7067 = vadd.f32 0.0, %v7066
        %v7068 = vpop.f32.mrb[0].mxu0
        %7069 = vmatprep.mubr.bf16.mxu0 0
        %7070 = vmatmul.mubr.bf16.gmra.mrb[0].mxu0 %v6929
        %v7071 = vpop.f32.mrb[0].mxu0
        %v7072 = vadd.f32 0.0, %v7071
        %v7073 = vpop.f32.mrb[0].mxu0
        %v7074 = vpop.f32.mrb[0].mxu0
        %v7075 = vadd.f32 0.0, %v7074
        %v7076 = vpop.f32.mrb[0].mxu0
        %7077 = vmatprep.mubr.bf16.mxu0 0
        %7078 = vmatmul.mubr.bf16.gmra.mrb[0].mxu0 %v6930
        %v7079 = vpop.f32.mrb[0].mxu0
        %v7080 = vadd.f32 0.0, %v7079
        %v7081 = vpop.f32.mrb[0].mxu0
        %v7082 = vpop.f32.mrb[0].mxu0
        %v7083 = vadd.f32 0.0, %v7082
        %v7084 = vpop.f32.mrb[0].mxu0
        %7085 = vmatprep.mubr.bf16.mxu0 0
        %7086 = vmatmul.mubr.bf16.gmra.mrb[0].mxu0 %v6931
        %v7087 = vpop.f32.mrb[0].mxu0
        %v7088 = vadd.f32 0.0, %v7087
        %v7089 = vpop.f32.mrb[0].mxu0
        %v7090 = vpop.f32.mrb[0].mxu0
        %v7091 = vadd.f32 0.0, %v7090
        %v7092 = vpop.f32.mrb[0].mxu0
        %7093 = vmatprep.mubr.bf16.mxu0 0
        %7094 = vmatmul.mubr.bf16.gmra.mrb[0].mxu0 %v6932
        %v7095 = vpop.f32.mrb[0].mxu0
        %v7096 = vadd.f32 0.0, %v7095
        %v7097 = vpop.f32.mrb[0].mxu0
        %v7098 = vpop.f32.mrb[0].mxu0
        %v7099 = vadd.f32 0.0, %v7098
        %v7100 = vpop.f32.mrb[0].mxu0
        %7101 = vmatprep.mubr.bf16.mxu0 0
        %7102 = vmatmul.mubr.bf16.gmra.mrb[0].mxu0 %v6933
        %v7103 = vpop.f32.mrb[0].mxu0
        %v7104 = vadd.f32 0.0, %v7103
        %v7105 = vpop.f32.mrb[0].mxu0
        %v7106 = vpop.f32.mrb[0].mxu0
        %v7107 = vadd.f32 0.0, %v7106
        %v7108 = vpop.f32.mrb[0].mxu0
        %7109 = vmatprep.mubr.bf16.mxu0 0
        %7110 = vmatmul.mubr.bf16.gmra.mrb[0].mxu0 %v6934
        %v7111 = vpop.f32.mrb[0].mxu0
        %v7112 = vadd.f32 0.0, %v7111
        %v7113 = vpop.f32.mrb[0].mxu0
        %v7114 = vpop.f32.mrb[0].mxu0
        %v7115 = vadd.f32 0.0, %v7114
        %v7116 = vpop.f32.mrb[0].mxu0
        %7117 = vmatprep.mubr.bf16.mxu0 0
        %7118 = vmatmul.mubr.bf16.gmra.mrb[0].mxu0 %v6935
        %v7119 = vpop.f32.mrb[0].mxu0
        %v7120 = vadd.f32 0.0, %v7119
        %v7121 = vpop.f32.mrb[0].mxu0
        %v7122 = vpop.f32.mrb[0].mxu0
        %v7123 = vadd.f32 0.0, %v7122
        %v7124 = vpop.f32.mrb[0].mxu0
        %7125 = vmatprep.mubr.bf16.mxu0 0
        %7126 = vmatmul.mubr.bf16.gmra.mrb[0].mxu0 %v6936
        %v7127 = vpop.f32.mrb[0].mxu0
        %v7128 = vadd.f32 0.0, %v7127
        %v7129 = vpop.f32.mrb[0].mxu0
        %v7130 = vpop.f32.mrb[0].mxu0
        %v7131 = vadd.f32 0.0, %v7130
        %v7132 = vpop.f32.mrb[0].mxu0
        %7133 = vmatprep.mubr.bf16.mxu0 0
        %7134 = vmatmul.mubr.bf16.gmra.mrb[0].mxu0 %v6937
        %v7135 = vpop.f32.mrb[0].mxu0
        %v7136 = vadd.f32 0.0, %v7135
        %v7137 = vpop.f32.mrb[0].mxu0
        %v7138 = vpop.f32.mrb[0].mxu0
        %v7139 = vadd.f32 0.0, %v7138
        %v7140 = vpop.f32.mrb[0].mxu0
        %7141 = vmatprep.mubr.bf16.mxu0 0
        %7142 = vmatmul.mubr.bf16.gmra.mrb[0].mxu0 %v6938
        %v7143 = vpop.f32.mrb[0].mxu0
        %v7144 = vadd.f32 0.0, %v7143
        %v7145 = vpop.f32.mrb[0].mxu0
        %v7146 = vpop.f32.mrb[0].mxu0
        %v7147 = vadd.f32 0.0, %v7146
        %v7148 = vpop.f32.mrb[0].mxu0
        %7149 = vmatprep.mubr.bf16.mxu0 0
        %7150 = vmatmul.mubr.bf16.gmra.mrb[0].mxu0 %v6939
        %v7151 = vpop.f32.mrb[0].mxu0
        %v7152 = vadd.f32 0.0, %v7151
        %v7153 = vpop.f32.mrb[0].mxu0
        %v7154 = vpop.f32.mrb[0].mxu0
        %v7155 = vadd.f32 0.0, %v7154
        %v7156 = vpop.f32.mrb[0].mxu0
        %7157 = vmatprep.mubr.bf16.mxu0 0
        %7158 = vmatmul.mubr.bf16.gmra.mrb[0].mxu0 %v6940
        %v7159 = vpop.f32.mrb[0].mxu0
        %v7160 = vadd.f32 0.0, %v7159
        %v7161 = vpop.f32.mrb[0].mxu0
        %v7162 = vpop.f32.mrb[0].mxu0
        %v7163 = vadd.f32 0.0, %v7162
        %v7164 = vpop.f32.mrb[0].mxu0
        %7165 = vdwg.mxu0
        %v7198 = vunpack.c.l.b16 %v6429
        %v7199 = vunpack.c.l.b16 %v6430
        %v7200 = vunpack.c.l.b16 %v6431
        %v7201 = vunpack.c.l.b16 %v6432
        %v7202 = vunpack.c.l.b16 %v6433
        %v7203 = vunpack.c.l.b16 %v6434
        %v7204 = vunpack.c.l.b16 %v6435
        %v7205 = vunpack.c.l.b16 %v6436
        %v7206 = vunpack.c.l.b16 %v6437
        %v7207 = vunpack.c.l.b16 %v6438
        %v7208 = vunpack.c.l.b16 %v6439
        %v7209 = vunpack.c.l.b16 %v6440
        %v7210 = vunpack.c.l.b16 %v6441
        %v7211 = vunpack.c.l.b16 %v6442
        %v7212 = vunpack.c.l.b16 %v6443
        %v7213 = vunpack.c.l.b16 %v6444
        %v7214 = vunpack.c.l.b16 %v6445
        %v7215 = vunpack.c.l.b16 %v6446
        %v7216 = vunpack.c.l.b16 %v6447
        %v7217 = vunpack.c.l.b16 %v6448
        %v7218 = vunpack.c.l.b16 %v6449
        %v7219 = vunpack.c.l.b16 %v6450
        %v7220 = vunpack.c.l.b16 %v6451
        %v7221 = vunpack.c.l.b16 %v6452
        %v7222 = vunpack.c.l.b16 %v6453
        %v7223 = vunpack.c.l.b16 %v6454
        %v7224 = vunpack.c.l.b16 %v6455
        %v7225 = vunpack.c.l.b16 %v6456
        %v7226 = vunpack.c.l.b16 %v6457
        %v7227 = vunpack.c.l.b16 %v6458
        %v7228 = vunpack.c.l.b16 %v6459
        %v7229 = vunpack.c.l.b16 %v6460
        %v7230 = vpack.c.b16 %v7199, %v7198
        %v7231 = vpack.c.b16 %v7201, %v7200
        %v7232 = vpack.c.b16 %v7203, %v7202
        %v7233 = vpack.c.b16 %v7205, %v7204
        %v7234 = vpack.c.b16 %v7207, %v7206
        %v7235 = vpack.c.b16 %v7209, %v7208
        %v7236 = vpack.c.b16 %v7211, %v7210
        %v7237 = vpack.c.b16 %v7213, %v7212
        %v7238 = vpack.c.b16 %v7215, %v7214
        %v7239 = vpack.c.b16 %v7217, %v7216
        %v7240 = vpack.c.b16 %v7219, %v7218
        %v7241 = vpack.c.b16 %v7221, %v7220
        %v7242 = vpack.c.b16 %v7223, %v7222
        %v7243 = vpack.c.b16 %v7225, %v7224
        %v7244 = vpack.c.b16 %v7227, %v7226
        %v7245 = vpack.c.b16 %v7229, %v7228
        %v7278 = vunpack.c.l.b16 %v6461
        %v7279 = vunpack.c.l.b16 %v6462
        %v7280 = vunpack.c.l.b16 %v6463
        %v7281 = vunpack.c.l.b16 %v6464
        %v7282 = vunpack.c.l.b16 %v6465
        %v7283 = vunpack.c.l.b16 %v6466
        %v7284 = vunpack.c.l.b16 %v6467
        %v7285 = vunpack.c.l.b16 %v6468
        %v7286 = vunpack.c.l.b16 %v6469
        %v7287 = vunpack.c.l.b16 %v6470
        %v7288 = vunpack.c.l.b16 %v6471
        %v7289 = vunpack.c.l.b16 %v6472
        %v7290 = vunpack.c.l.b16 %v6473
        %v7291 = vunpack.c.l.b16 %v6474
        %v7292 = vunpack.c.l.b16 %v6475
        %v7293 = vunpack.c.l.b16 %v6476
        %v7294 = vpack.c.b16 %v7279, %v7278
        %v7295 = vpack.c.b16 %v7281, %v7280
        %v7296 = vpack.c.b16 %v7283, %v7282
        %v7297 = vpack.c.b16 %v7285, %v7284
        %v7298 = vpack.c.b16 %v7287, %v7286
        %v7299 = vpack.c.b16 %v7289, %v7288
        %v7300 = vpack.c.b16 %v7291, %v7290
        %v7301 = vpack.c.b16 %v7293, %v7292
        %7310 = vmatprep.subr.bf16.mxu0 0
        %7311 = vmatpush1.bf16.msra.mxu0 %v7294
        %7312 = vmatprep.subr.bf16.mxu0 0
        %7313 = vmatpush1.bf16.msra.mxu0 %v7295
        %7314 = vmatprep.subr.bf16.mxu0 0
        %7315 = vmatpush1.bf16.msra.mxu0 %v7296
        %7316 = vmatprep.subr.bf16.mxu0 0
        %7317 = vmatpush1.bf16.msra.mxu0 %v7297
        %7318 = vmatprep.subr.bf16.mxu0 0
        %7319 = vmatpush1.bf16.msra.mxu0 %v7298
        %7320 = vmatprep.subr.bf16.mxu0 0
        %7321 = vmatpush1.bf16.msra.mxu0 %v7299
        %7322 = vmatprep.subr.bf16.mxu0 0
        %7323 = vmatpush1.bf16.msra.mxu0 %v7300
        %7324 = vmatprep.subr.bf16.mxu0 0
        %7325 = vmatpush1.bf16.msra.mxu0 %v7301
        %7326 = vmatprep.subr.bf16.mxu0 0
        %7327 = vmatpush1.bf16.msra.mxu0 0
        %7328 = vmatprep.subr.bf16.mxu0 0
        %7329 = vmatpush1.bf16.msra.mxu0 0
        %7330 = vmatprep.subr.bf16.mxu0 0
        %7331 = vmatpush1.bf16.msra.mxu0 0
        %7332 = vmatprep.subr.bf16.mxu0 0
        %7333 = vmatpush1.bf16.msra.mxu0 0
        %7334 = vmatprep.subr.bf16.mxu0 0
        %7335 = vmatpush1.bf16.msra.mxu0 0
        %7336 = vmatprep.subr.bf16.mxu0 0
        %7337 = vmatpush1.bf16.msra.mxu0 0
        %7338 = vmatprep.subr.bf16.mxu0 0
        %7339 = vmatpush1.bf16.msra.mxu0 0
        %7340 = vmatprep.subr.bf16.mxu0 0
        %7341 = vmatpush1.bf16.msra.mxu0 0
        %7342 = vmatprep.mubr.bf16.mxu0 0
        %7343 = vmatmul.mubr.bf16.gmra.mrb[0].mxu0 %v7230
        %v7344 = vpop.f32.mrb[0].mxu0
        %v7345 = vadd.f32 %v7040, %v7344
        %v7346 = vpop.f32.mrb[0].mxu0
        %v7347 = vpop.f32.mrb[0].mxu0
        %v7348 = vadd.f32 %v7043, %v7347
        %v7349 = vpop.f32.mrb[0].mxu0
        %7350 = vmatprep.mubr.bf16.mxu0 0
        %7351 = vmatmul.mubr.bf16.gmra.mrb[0].mxu0 %v7231
        %v7352 = vpop.f32.mrb[0].mxu0
        %v7353 = vadd.f32 %v7048, %v7352
        %v7354 = vpop.f32.mrb[0].mxu0
        %v7355 = vpop.f32.mrb[0].mxu0
        %v7356 = vadd.f32 %v7051, %v7355
        %v7357 = vpop.f32.mrb[0].mxu0
        %7358 = vmatprep.mubr.bf16.mxu0 0
        %7359 = vmatmul.mubr.bf16.gmra.mrb[0].mxu0 %v7232
        %v7360 = vpop.f32.mrb[0].mxu0
        %v7361 = vadd.f32 %v7056, %v7360
        %v7362 = vpop.f32.mrb[0].mxu0
        %v7363 = vpop.f32.mrb[0].mxu0
        %v7364 = vadd.f32 %v7059, %v7363
        %v7365 = vpop.f32.mrb[0].mxu0
        %7366 = vmatprep.mubr.bf16.mxu0 0
        %7367 = vmatmul.mubr.bf16.gmra.mrb[0].mxu0 %v7233
        %v7368 = vpop.f32.mrb[0].mxu0
        %v7369 = vadd.f32 %v7064, %v7368
        %v7370 = vpop.f32.mrb[0].mxu0
        %v7371 = vpop.f32.mrb[0].mxu0
        %v7372 = vadd.f32 %v7067, %v7371
        %v7373 = vpop.f32.mrb[0].mxu0
        %7374 = vmatprep.mubr.bf16.mxu0 0
        %7375 = vmatmul.mubr.bf16.gmra.mrb[0].mxu0 %v7234
        %v7376 = vpop.f32.mrb[0].mxu0
        %v7377 = vadd.f32 %v7072, %v7376
        %v7378 = vpop.f32.mrb[0].mxu0
        %v7379 = vpop.f32.mrb[0].mxu0
        %v7380 = vadd.f32 %v7075, %v7379
        %v7381 = vpop.f32.mrb[0].mxu0
        %7382 = vmatprep.mubr.bf16.mxu0 0
        %7383 = vmatmul.mubr.bf16.gmra.mrb[0].mxu0 %v7235
        %v7384 = vpop.f32.mrb[0].mxu0
        %v7385 = vadd.f32 %v7080, %v7384
        %v7386 = vpop.f32.mrb[0].mxu0
        %v7387 = vpop.f32.mrb[0].mxu0
        %v7388 = vadd.f32 %v7083, %v7387
        %v7389 = vpop.f32.mrb[0].mxu0
        %7390 = vmatprep.mubr.bf16.mxu0 0
        %7391 = vmatmul.mubr.bf16.gmra.mrb[0].mxu0 %v7236
        %v7392 = vpop.f32.mrb[0].mxu0
        %v7393 = vadd.f32 %v7088, %v7392
        %v7394 = vpop.f32.mrb[0].mxu0
        %v7395 = vpop.f32.mrb[0].mxu0
        %v7396 = vadd.f32 %v7091, %v7395
        %v7397 = vpop.f32.mrb[0].mxu0
        %7398 = vmatprep.mubr.bf16.mxu0 0
        %7399 = vmatmul.mubr.bf16.gmra.mrb[0].mxu0 %v7237
        %v7400 = vpop.f32.mrb[0].mxu0
        %v7401 = vadd.f32 %v7096, %v7400
        %v7402 = vpop.f32.mrb[0].mxu0
        %v7403 = vpop.f32.mrb[0].mxu0
        %v7404 = vadd.f32 %v7099, %v7403
        %v7405 = vpop.f32.mrb[0].mxu0
        %7406 = vmatprep.mubr.bf16.mxu0 0
        %7407 = vmatmul.mubr.bf16.gmra.mrb[0].mxu0 %v7238
        %v7408 = vpop.f32.mrb[0].mxu0
        %v7409 = vadd.f32 %v7104, %v7408
        %v7410 = vpop.f32.mrb[0].mxu0
        %v7411 = vpop.f32.mrb[0].mxu0
        %v7412 = vadd.f32 %v7107, %v7411
        %v7413 = vpop.f32.mrb[0].mxu0
        %7414 = vmatprep.mubr.bf16.mxu0 0
        %7415 = vmatmul.mubr.bf16.gmra.mrb[0].mxu0 %v7239
        %v7416 = vpop.f32.mrb[0].mxu0
        %v7417 = vadd.f32 %v7112, %v7416
        %v7418 = vpop.f32.mrb[0].mxu0
        %v7419 = vpop.f32.mrb[0].mxu0
        %v7420 = vadd.f32 %v7115, %v7419
        %v7421 = vpop.f32.mrb[0].mxu0
        %7422 = vmatprep.mubr.bf16.mxu0 0
        %7423 = vmatmul.mubr.bf16.gmra.mrb[0].mxu0 %v7240
        %v7424 = vpop.f32.mrb[0].mxu0
        %v7425 = vadd.f32 %v7120, %v7424
        %v7426 = vpop.f32.mrb[0].mxu0
        %v7427 = vpop.f32.mrb[0].mxu0
        %v7428 = vadd.f32 %v7123, %v7427
        %v7429 = vpop.f32.mrb[0].mxu0
        %7430 = vmatprep.mubr.bf16.mxu0 0
        %7431 = vmatmul.mubr.bf16.gmra.mrb[0].mxu0 %v7241
        %v7432 = vpop.f32.mrb[0].mxu0
        %v7433 = vadd.f32 %v7128, %v7432
        %v7434 = vpop.f32.mrb[0].mxu0
        %v7435 = vpop.f32.mrb[0].mxu0
        %v7436 = vadd.f32 %v7131, %v7435
        %v7437 = vpop.f32.mrb[0].mxu0
        %7438 = vmatprep.mubr.bf16.mxu0 0
        %7439 = vmatmul.mubr.bf16.gmra.mrb[0].mxu0 %v7242
        %v7440 = vpop.f32.mrb[0].mxu0
        %v7441 = vadd.f32 %v7136, %v7440
        %v7442 = vpop.f32.mrb[0].mxu0
        %v7443 = vpop.f32.mrb[0].mxu0
        %v7444 = vadd.f32 %v7139, %v7443
        %v7445 = vpop.f32.mrb[0].mxu0
        %7446 = vmatprep.mubr.bf16.mxu0 0
        %7447 = vmatmul.mubr.bf16.gmra.mrb[0].mxu0 %v7243
        %v7448 = vpop.f32.mrb[0].mxu0
        %v7449 = vadd.f32 %v7144, %v7448
        %v7450 = vpop.f32.mrb[0].mxu0
        %v7451 = vpop.f32.mrb[0].mxu0
        %v7452 = vadd.f32 %v7147, %v7451
        %v7453 = vpop.f32.mrb[0].mxu0
        %7454 = vmatprep.mubr.bf16.mxu0 0
        %7455 = vmatmul.mubr.bf16.gmra.mrb[0].mxu0 %v7244
        %v7456 = vpop.f32.mrb[0].mxu0
        %v7457 = vadd.f32 %v7152, %v7456
        %v7458 = vpop.f32.mrb[0].mxu0
        %v7459 = vpop.f32.mrb[0].mxu0
        %v7460 = vadd.f32 %v7155, %v7459
        %v7461 = vpop.f32.mrb[0].mxu0
        %7462 = vmatprep.mubr.bf16.mxu0 0
        %7463 = vmatmul.mubr.bf16.gmra.mrb[0].mxu0 %v7245
        %v7464 = vpop.f32.mrb[0].mxu0
        %v7465 = vadd.f32 %v7160, %v7464
        %v7466 = vpop.f32.mrb[0].mxu0
        %v7467 = vpop.f32.mrb[0].mxu0
        %v7468 = vadd.f32 %v7163, %v7467
        %v7469 = vpop.f32.mrb[0].mxu0
        %7470 = vdwg.mxu0
        %v7471 = vld [vmem:[#allocation3] sm:$0xe]
        %v7472 = vld [vmem:[#allocation3 + $0xc] sm:$0xe]
        %v7473 = vld [vmem:[#allocation3 + $0x18] sm:$0xe]
        %v7474 = vld [vmem:[#allocation3 + $0x24] sm:$0xe]
        %v7475 = vld [vmem:[#allocation3 + $0x30] sm:$0xe]
        %v7476 = vld [vmem:[#allocation3 + $0x3c] sm:$0xe]
        %v7477 = vld [vmem:[#allocation3 + $0x48] sm:$0xe]
        %v7478 = vld [vmem:[#allocation3 + $0x54] sm:$0xe]
        %v7479 = vld [vmem:[#allocation3 + $0x60] sm:$0xe]
        %v7480 = vld [vmem:[#allocation3 + $0x6c] sm:$0xe]
        %v7481 = vld [vmem:[#allocation3 + $0x78] sm:$0xe]
        %v7482 = vld [vmem:[#allocation3 + $0x84] sm:$0xe]
        %v7483 = vld [vmem:[#allocation3 + $0x90] sm:$0xe]
        %v7484 = vld [vmem:[#allocation3 + $0x9c] sm:$0xe]
        %v7485 = vld [vmem:[#allocation3 + $0xa8] sm:$0xe]
        %v7486 = vld [vmem:[#allocation3 + $0xb4] sm:$0xe]
        %v7487 = vld [vmem:[#allocation9 + $0x80] sm:$0xf]
        %v7488 = vld [vmem:[#allocation9 + $0x84] sm:$0xf]
        %v7489 = vld [vmem:[#allocation9 + $0x88] sm:$0xf]
        %v7490 = vld [vmem:[#allocation9 + $0x8c] sm:$0xf]
        %v7491 = vld [vmem:[#allocation9 + $0x90] sm:$0xf]
        %v7492 = vld [vmem:[#allocation9 + $0x94] sm:$0xf]
        %v7493 = vld [vmem:[#allocation9 + $0x98] sm:$0xf]
        %v7494 = vld [vmem:[#allocation9 + $0x9c] sm:$0xf]
        %v7495 = vld [vmem:[#allocation9 + $0xa0] sm:$0xf]
        %v7496 = vld [vmem:[#allocation9 + $0xa4] sm:$0xf]
        %v7497 = vld [vmem:[#allocation9 + $0xa8] sm:$0xf]
        %v7498 = vld [vmem:[#allocation9 + $0xac] sm:$0xf]
        %v7499 = vld [vmem:[#allocation9 + $0xb0] sm:$0xf]
        %v7500 = vld [vmem:[#allocation9 + $0xb4] sm:$0xf]
        %v7501 = vld [vmem:[#allocation9 + $0xb8] sm:$0xf]
        %v7502 = vld [vmem:[#allocation9 + $0xbc] sm:$0xf]
        %v7535 = vrot.slane %v7471, 5
        %v7536 = vrot.slane %v7535, 4
        %v7537 = vrot.slane %v6430, 5
        %v7538 = vsel %vm1992, %v7536, %v7537
        %v7539 = vrot.slane %v7537, 4
        %v7540 = vrot.slane %v6477, 5
        %v7541 = vsel %vm1992, %v7539, %v7540
        %v7542 = vrot.slane %v7472, 5
        %v7543 = vrot.slane %v7542, 4
        %v7544 = vrot.slane %v6432, 5
        %v7545 = vsel %vm1992, %v7543, %v7544
        %v7546 = vrot.slane %v7544, 4
        %v7547 = vrot.slane %v6478, 5
        %v7548 = vsel %vm1992, %v7546, %v7547
        %v7549 = vrot.slane %v7473, 5
        %v7550 = vrot.slane %v7549, 4
        %v7551 = vrot.slane %v6434, 5
        %v7552 = vsel %vm1992, %v7550, %v7551
        %v7553 = vrot.slane %v7551, 4
        %v7554 = vrot.slane %v6479, 5
        %v7555 = vsel %vm1992, %v7553, %v7554
        %v7556 = vrot.slane %v7474, 5
        %v7557 = vrot.slane %v7556, 4
        %v7558 = vrot.slane %v6436, 5
        %v7559 = vsel %vm1992, %v7557, %v7558
        %v7560 = vrot.slane %v7558, 4
        %v7561 = vrot.slane %v6480, 5
        %v7562 = vsel %vm1992, %v7560, %v7561
        %v7563 = vrot.slane %v7475, 5
        %v7564 = vrot.slane %v7563, 4
        %v7565 = vrot.slane %v6438, 5
        %v7566 = vsel %vm1992, %v7564, %v7565
        %v7567 = vrot.slane %v7565, 4
        %v7568 = vrot.slane %v6481, 5
        %v7569 = vsel %vm1992, %v7567, %v7568
        %v7570 = vrot.slane %v7476, 5
        %v7571 = vrot.slane %v7570, 4
        %v7572 = vrot.slane %v6440, 5
        %v7573 = vsel %vm1992, %v7571, %v7572
        %v7574 = vrot.slane %v7572, 4
        %v7575 = vrot.slane %v6482, 5
        %v7576 = vsel %vm1992, %v7574, %v7575
        %v7577 = vrot.slane %v7477, 5
        %v7578 = vrot.slane %v7577, 4
        %v7579 = vrot.slane %v6442, 5
        %v7580 = vsel %vm1992, %v7578, %v7579
        %v7581 = vrot.slane %v7579, 4
        %v7582 = vrot.slane %v6483, 5
        %v7583 = vsel %vm1992, %v7581, %v7582
        %v7584 = vrot.slane %v7478, 5
        %v7585 = vrot.slane %v7584, 4
        %v7586 = vrot.slane %v6444, 5
        %v7587 = vsel %vm1992, %v7585, %v7586
        %v7588 = vrot.slane %v7586, 4
        %v7589 = vrot.slane %v6484, 5
        %v7590 = vsel %vm1992, %v7588, %v7589
        %v7591 = vrot.slane %v7479, 5
        %v7592 = vrot.slane %v7591, 4
        %v7593 = vrot.slane %v6446, 5
        %v7594 = vsel %vm1992, %v7592, %v7593
        %v7595 = vrot.slane %v7593, 4
        %v7596 = vrot.slane %v6485, 5
        %v7597 = vsel %vm1992, %v7595, %v7596
        %v7598 = vrot.slane %v7480, 5
        %v7599 = vrot.slane %v7598, 4
        %v7600 = vrot.slane %v6448, 5
        %v7601 = vsel %vm1992, %v7599, %v7600
        %v7602 = vrot.slane %v7600, 4
        %v7603 = vrot.slane %v6486, 5
        %v7604 = vsel %vm1992, %v7602, %v7603
        %v7605 = vrot.slane %v7481, 5
        %v7606 = vrot.slane %v7605, 4
        %v7607 = vrot.slane %v6450, 5
        %v7608 = vsel %vm1992, %v7606, %v7607
        %v7609 = vrot.slane %v7607, 4
        %v7610 = vrot.slane %v6487, 5
        %v7611 = vsel %vm1992, %v7609, %v7610
        %v7612 = vrot.slane %v7482, 5
        %v7613 = vrot.slane %v7612, 4
        %v7614 = vrot.slane %v6452, 5
        %v7615 = vsel %vm1992, %v7613, %v7614
        %v7616 = vrot.slane %v7614, 4
        %v7617 = vrot.slane %v6488, 5
        %v7618 = vsel %vm1992, %v7616, %v7617
        %v7619 = vrot.slane %v7483, 5
        %v7620 = vrot.slane %v7619, 4
        %v7621 = vrot.slane %v6454, 5
        %v7622 = vsel %vm1992, %v7620, %v7621
        %v7623 = vrot.slane %v7621, 4
        %v7624 = vrot.slane %v6489, 5
        %v7625 = vsel %vm1992, %v7623, %v7624
        %v7626 = vrot.slane %v7484, 5
        %v7627 = vrot.slane %v7626, 4
        %v7628 = vrot.slane %v6456, 5
        %v7629 = vsel %vm1992, %v7627, %v7628
        %v7630 = vrot.slane %v7628, 4
        %v7631 = vrot.slane %v6490, 5
        %v7632 = vsel %vm1992, %v7630, %v7631
        %v7633 = vrot.slane %v7485, 5
        %v7634 = vrot.slane %v7633, 4
        %v7635 = vrot.slane %v6458, 5
        %v7636 = vsel %vm1992, %v7634, %v7635
        %v7637 = vrot.slane %v7635, 4
        %v7638 = vrot.slane %v6491, 5
        %v7639 = vsel %vm1992, %v7637, %v7638
        %v7640 = vrot.slane %v7486, 5
        %v7641 = vrot.slane %v7640, 4
        %v7642 = vrot.slane %v6460, 5
        %v7643 = vsel %vm1992, %v7641, %v7642
        %v7644 = vrot.slane %v7642, 4
        %v7645 = vrot.slane %v6492, 5
        %v7646 = vsel %vm1992, %v7644, %v7645
        %v7647 = vunpack.c.l.b16 %v7538
        %v7648 = vunpack.c.l.b16 %v7541
        %v7649 = vunpack.c.l.b16 %v7545
        %v7650 = vunpack.c.l.b16 %v7548
        %v7651 = vunpack.c.l.b16 %v7552
        %v7652 = vunpack.c.l.b16 %v7555
        %v7653 = vunpack.c.l.b16 %v7559
        %v7654 = vunpack.c.l.b16 %v7562
        %v7655 = vunpack.c.l.b16 %v7566
        %v7656 = vunpack.c.l.b16 %v7569
        %v7657 = vunpack.c.l.b16 %v7573
        %v7658 = vunpack.c.l.b16 %v7576
        %v7659 = vunpack.c.l.b16 %v7580
        %v7660 = vunpack.c.l.b16 %v7583
        %v7661 = vunpack.c.l.b16 %v7587
        %v7662 = vunpack.c.l.b16 %v7590
        %v7663 = vunpack.c.l.b16 %v7594
        %v7664 = vunpack.c.l.b16 %v7597
        %v7665 = vunpack.c.l.b16 %v7601
        %v7666 = vunpack.c.l.b16 %v7604
        %v7667 = vunpack.c.l.b16 %v7608
        %v7668 = vunpack.c.l.b16 %v7611
        %v7669 = vunpack.c.l.b16 %v7615
        %v7670 = vunpack.c.l.b16 %v7618
        %v7671 = vunpack.c.l.b16 %v7622
        %v7672 = vunpack.c.l.b16 %v7625
        %v7673 = vunpack.c.l.b16 %v7629
        %v7674 = vunpack.c.l.b16 %v7632
        %v7675 = vunpack.c.l.b16 %v7636
        %v7676 = vunpack.c.l.b16 %v7639
        %v7677 = vunpack.c.l.b16 %v7643
        %v7678 = vunpack.c.l.b16 %v7646
        %v7679 = vpack.c.b16 %v7648, %v7647
        %v7680 = vpack.c.b16 %v7650, %v7649
        %v7681 = vpack.c.b16 %v7652, %v7651
        %v7682 = vpack.c.b16 %v7654, %v7653
        %v7683 = vpack.c.b16 %v7656, %v7655
        %v7684 = vpack.c.b16 %v7658, %v7657
        %v7685 = vpack.c.b16 %v7660, %v7659
        %v7686 = vpack.c.b16 %v7662, %v7661
        %v7687 = vpack.c.b16 %v7664, %v7663
        %v7688 = vpack.c.b16 %v7666, %v7665
        %v7689 = vpack.c.b16 %v7668, %v7667
        %v7690 = vpack.c.b16 %v7670, %v7669
        %v7691 = vpack.c.b16 %v7672, %v7671
        %v7692 = vpack.c.b16 %v7674, %v7673
        %v7693 = vpack.c.b16 %v7676, %v7675
        %v7694 = vpack.c.b16 %v7678, %v7677
        %v7727 = vunpack.c.l.b16 %v7487
        %v7728 = vunpack.c.l.b16 %v7488
        %v7729 = vunpack.c.l.b16 %v7489
        %v7730 = vunpack.c.l.b16 %v7490
        %v7731 = vunpack.c.l.b16 %v7491
        %v7732 = vunpack.c.l.b16 %v7492
        %v7733 = vunpack.c.l.b16 %v7493
        %v7734 = vunpack.c.l.b16 %v7494
        %v7735 = vunpack.c.l.b16 %v7495
        %v7736 = vunpack.c.l.b16 %v7496
        %v7737 = vunpack.c.l.b16 %v7497
        %v7738 = vunpack.c.l.b16 %v7498
        %v7739 = vunpack.c.l.b16 %v7499
        %v7740 = vunpack.c.l.b16 %v7500
        %v7741 = vunpack.c.l.b16 %v7501
        %v7742 = vunpack.c.l.b16 %v7502
        %v7743 = vpack.c.b16 %v7728, %v7727
        %v7744 = vpack.c.b16 %v7730, %v7729
        %v7745 = vpack.c.b16 %v7732, %v7731
        %v7746 = vpack.c.b16 %v7734, %v7733
        %v7747 = vpack.c.b16 %v7736, %v7735
        %v7748 = vpack.c.b16 %v7738, %v7737
        %v7749 = vpack.c.b16 %v7740, %v7739
        %v7750 = vpack.c.b16 %v7742, %v7741
        %7759 = vmatprep.subr.bf16.mxu0 0
        %7760 = vmatpush1.bf16.msra.mxu0 %v7743
        %7761 = vmatprep.subr.bf16.mxu0 0
        %7762 = vmatpush1.bf16.msra.mxu0 %v7744
        %7763 = vmatprep.subr.bf16.mxu0 0
        %7764 = vmatpush1.bf16.msra.mxu0 %v7745
        %7765 = vmatprep.subr.bf16.mxu0 0
        %7766 = vmatpush1.bf16.msra.mxu0 %v7746
        %7767 = vmatprep.subr.bf16.mxu0 0
        %7768 = vmatpush1.bf16.msra.mxu0 %v7747
        %7769 = vmatprep.subr.bf16.mxu0 0
        %7770 = vmatpush1.bf16.msra.mxu0 %v7748
        %7771 = vmatprep.subr.bf16.mxu0 0
        %7772 = vmatpush1.bf16.msra.mxu0 %v7749
        %7773 = vmatprep.subr.bf16.mxu0 0
        %7774 = vmatpush1.bf16.msra.mxu0 %v7750
        %7775 = vmatprep.subr.bf16.mxu0 0
        %7776 = vmatpush1.bf16.msra.mxu0 0
        %7777 = vmatprep.subr.bf16.mxu0 0
        %7778 = vmatpush1.bf16.msra.mxu0 0
        %7779 = vmatprep.subr.bf16.mxu0 0
        %7780 = vmatpush1.bf16.msra.mxu0 0
        %7781 = vmatprep.subr.bf16.mxu0 0
        %7782 = vmatpush1.bf16.msra.mxu0 0
        %7783 = vmatprep.subr.bf16.mxu0 0
        %7784 = vmatpush1.bf16.msra.mxu0 0
        %7785 = vmatprep.subr.bf16.mxu0 0
        %7786 = vmatpush1.bf16.msra.mxu0 0
        %7787 = vmatprep.subr.bf16.mxu0 0
        %7788 = vmatpush1.bf16.msra.mxu0 0
        %7789 = vmatprep.subr.bf16.mxu0 0
        %7790 = vmatpush1.bf16.msra.mxu0 0
        %7791 = vmatprep.mubr.bf16.mxu0 0
        %7792 = vmatmul.mubr.bf16.gmra.mrb[0].mxu0 %v7679
        %v7793 = vpop.f32.mrb[0].mxu0
        %v7794 = vadd.f32 0.0, %v7793
        %v7795 = vpop.f32.mrb[0].mxu0
        %v7796 = vpop.f32.mrb[0].mxu0
        %v7797 = vadd.f32 0.0, %v7796
        %v7798 = vpop.f32.mrb[0].mxu0
        %7799 = vmatprep.mubr.bf16.mxu0 0
        %7800 = vmatmul.mubr.bf16.gmra.mrb[0].mxu0 %v7680
        %v7801 = vpop.f32.mrb[0].mxu0
        %v7802 = vadd.f32 0.0, %v7801
        %v7803 = vpop.f32.mrb[0].mxu0
        %v7804 = vpop.f32.mrb[0].mxu0
        %v7805 = vadd.f32 0.0, %v7804
        %v7806 = vpop.f32.mrb[0].mxu0
        %7807 = vmatprep.mubr.bf16.mxu0 0
        %7808 = vmatmul.mubr.bf16.gmra.mrb[0].mxu0 %v7681
        %v7809 = vpop.f32.mrb[0].mxu0
        %v7810 = vadd.f32 0.0, %v7809
        %v7811 = vpop.f32.mrb[0].mxu0
        %v7812 = vpop.f32.mrb[0].mxu0
        %v7813 = vadd.f32 0.0, %v7812
        %v7814 = vpop.f32.mrb[0].mxu0
        %7815 = vmatprep.mubr.bf16.mxu0 0
        %7816 = vmatmul.mubr.bf16.gmra.mrb[0].mxu0 %v7682
        %v7817 = vpop.f32.mrb[0].mxu0
        %v7818 = vadd.f32 0.0, %v7817
        %v7819 = vpop.f32.mrb[0].mxu0
        %v7820 = vpop.f32.mrb[0].mxu0
        %v7821 = vadd.f32 0.0, %v7820
        %v7822 = vpop.f32.mrb[0].mxu0
        %7823 = vmatprep.mubr.bf16.mxu0 0
        %7824 = vmatmul.mubr.bf16.gmra.mrb[0].mxu0 %v7683
        %v7825 = vpop.f32.mrb[0].mxu0
        %v7826 = vadd.f32 0.0, %v7825
        %v7827 = vpop.f32.mrb[0].mxu0
        %v7828 = vpop.f32.mrb[0].mxu0
        %v7829 = vadd.f32 0.0, %v7828
        %v7830 = vpop.f32.mrb[0].mxu0
        %7831 = vmatprep.mubr.bf16.mxu0 0
        %7832 = vmatmul.mubr.bf16.gmra.mrb[0].mxu0 %v7684
        %v7833 = vpop.f32.mrb[0].mxu0
        %v7834 = vadd.f32 0.0, %v7833
        %v7835 = vpop.f32.mrb[0].mxu0
        %v7836 = vpop.f32.mrb[0].mxu0
        %v7837 = vadd.f32 0.0, %v7836
        %v7838 = vpop.f32.mrb[0].mxu0
        %7839 = vmatprep.mubr.bf16.mxu0 0
        %7840 = vmatmul.mubr.bf16.gmra.mrb[0].mxu0 %v7685
        %v7841 = vpop.f32.mrb[0].mxu0
        %v7842 = vadd.f32 0.0, %v7841
        %v7843 = vpop.f32.mrb[0].mxu0
        %v7844 = vpop.f32.mrb[0].mxu0
        %v7845 = vadd.f32 0.0, %v7844
        %v7846 = vpop.f32.mrb[0].mxu0
        %7847 = vmatprep.mubr.bf16.mxu0 0
        %7848 = vmatmul.mubr.bf16.gmra.mrb[0].mxu0 %v7686
        %v7849 = vpop.f32.mrb[0].mxu0
        %v7850 = vadd.f32 0.0, %v7849
        %v7851 = vpop.f32.mrb[0].mxu0
        %v7852 = vpop.f32.mrb[0].mxu0
        %v7853 = vadd.f32 0.0, %v7852
        %v7854 = vpop.f32.mrb[0].mxu0
        %7855 = vmatprep.mubr.bf16.mxu0 0
        %7856 = vmatmul.mubr.bf16.gmra.mrb[0].mxu0 %v7687
        %v7857 = vpop.f32.mrb[0].mxu0
        %v7858 = vadd.f32 0.0, %v7857
        %v7859 = vpop.f32.mrb[0].mxu0
        %v7860 = vpop.f32.mrb[0].mxu0
        %v7861 = vadd.f32 0.0, %v7860
        %v7862 = vpop.f32.mrb[0].mxu0
        %7863 = vmatprep.mubr.bf16.mxu0 0
        %7864 = vmatmul.mubr.bf16.gmra.mrb[0].mxu0 %v7688
        %v7865 = vpop.f32.mrb[0].mxu0
        %v7866 = vadd.f32 0.0, %v7865
        %v7867 = vpop.f32.mrb[0].mxu0
        %v7868 = vpop.f32.mrb[0].mxu0
        %v7869 = vadd.f32 0.0, %v7868
        %v7870 = vpop.f32.mrb[0].mxu0
        %7871 = vmatprep.mubr.bf16.mxu0 0
        %7872 = vmatmul.mubr.bf16.gmra.mrb[0].mxu0 %v7689
        %v7873 = vpop.f32.mrb[0].mxu0
        %v7874 = vadd.f32 0.0, %v7873
        %v7875 = vpop.f32.mrb[0].mxu0
        %v7876 = vpop.f32.mrb[0].mxu0
        %v7877 = vadd.f32 0.0, %v7876
        %v7878 = vpop.f32.mrb[0].mxu0
        %7879 = vmatprep.mubr.bf16.mxu0 0
        %7880 = vmatmul.mubr.bf16.gmra.mrb[0].mxu0 %v7690
        %v7881 = vpop.f32.mrb[0].mxu0
        %v7882 = vadd.f32 0.0, %v7881
        %v7883 = vpop.f32.mrb[0].mxu0
        %v7884 = vpop.f32.mrb[0].mxu0
        %v7885 = vadd.f32 0.0, %v7884
        %v7886 = vpop.f32.mrb[0].mxu0
        %7887 = vmatprep.mubr.bf16.mxu0 0
        %7888 = vmatmul.mubr.bf16.gmra.mrb[0].mxu0 %v7691
        %v7889 = vpop.f32.mrb[0].mxu0
        %v7890 = vadd.f32 0.0, %v7889
        %v7891 = vpop.f32.mrb[0].mxu0
        %v7892 = vpop.f32.mrb[0].mxu0
        %v7893 = vadd.f32 0.0, %v7892
        %v7894 = vpop.f32.mrb[0].mxu0
        %7895 = vmatprep.mubr.bf16.mxu0 0
        %7896 = vmatmul.mubr.bf16.gmra.mrb[0].mxu0 %v7692
        %v7897 = vpop.f32.mrb[0].mxu0
        %v7898 = vadd.f32 0.0, %v7897
        %v7899 = vpop.f32.mrb[0].mxu0
        %v7900 = vpop.f32.mrb[0].mxu0
        %v7901 = vadd.f32 0.0, %v7900
        %v7902 = vpop.f32.mrb[0].mxu0
        %7903 = vmatprep.mubr.bf16.mxu0 0
        %7904 = vmatmul.mubr.bf16.gmra.mrb[0].mxu0 %v7693
        %v7905 = vpop.f32.mrb[0].mxu0
        %v7906 = vadd.f32 0.0, %v7905
        %v7907 = vpop.f32.mrb[0].mxu0
        %v7908 = vpop.f32.mrb[0].mxu0
        %v7909 = vadd.f32 0.0, %v7908
        %v7910 = vpop.f32.mrb[0].mxu0
        %7911 = vmatprep.mubr.bf16.mxu0 0
        %7912 = vmatmul.mubr.bf16.gmra.mrb[0].mxu0 %v7694
        %v7913 = vpop.f32.mrb[0].mxu0
        %v7914 = vadd.f32 0.0, %v7913
        %v7915 = vpop.f32.mrb[0].mxu0
        %v7916 = vpop.f32.mrb[0].mxu0
        %v7917 = vadd.f32 0.0, %v7916
        %v7918 = vpop.f32.mrb[0].mxu0
        %7919 = vdwg.mxu0
        %v7920 = vadd.f32 %v7345, %v7794
        %v7921 = vadd.f32 %v7348, %v7797
        %v7922 = vadd.f32 %v7353, %v7802
        %v7923 = vadd.f32 %v7356, %v7805
        %v7924 = vadd.f32 %v7361, %v7810
        %v7925 = vadd.f32 %v7364, %v7813
        %v7926 = vadd.f32 %v7369, %v7818
        %v7927 = vadd.f32 %v7372, %v7821
        %v7928 = vadd.f32 %v7377, %v7826
        %v7929 = vadd.f32 %v7380, %v7829
        %v7930 = vadd.f32 %v7385, %v7834
        %v7931 = vadd.f32 %v7388, %v7837
        %v7932 = vadd.f32 %v7393, %v7842
        %v7933 = vadd.f32 %v7396, %v7845
        %v7934 = vadd.f32 %v7401, %v7850
        %v7935 = vadd.f32 %v7404, %v7853
        %v7936 = vadd.f32 %v7409, %v7858
        %v7937 = vadd.f32 %v7412, %v7861
        %v7938 = vadd.f32 %v7417, %v7866
        %v7939 = vadd.f32 %v7420, %v7869
        %v7940 = vadd.f32 %v7425, %v7874
        %v7941 = vadd.f32 %v7428, %v7877
        %v7942 = vadd.f32 %v7433, %v7882
        %v7943 = vadd.f32 %v7436, %v7885
        %v7944 = vadd.f32 %v7441, %v7890
        %v7945 = vadd.f32 %v7444, %v7893
        %v7946 = vadd.f32 %v7449, %v7898
        %v7947 = vadd.f32 %v7452, %v7901
        %v7948 = vadd.f32 %v7457, %v7906
        %v7949 = vadd.f32 %v7460, %v7909
        %v7950 = vadd.f32 %v7465, %v7914
        %v7951 = vadd.f32 %v7468, %v7917
        %v7952 = vld [vmem:[%s6316] sm:$0xf]
        %v7953 = vld [vmem:[%s6316 + $0x4] sm:$0xf]
        %v7954 = vld [vmem:[%s6316 + $0xc] sm:$0xf]
        %v7955 = vld [vmem:[%s6316 + $0x10] sm:$0xf]
        %v7956 = vld [vmem:[%s6316 + $0x18] sm:$0xf]
        %v7957 = vld [vmem:[%s6316 + $0x1c] sm:$0xf]
        %v7958 = vld [vmem:[%s6316 + $0x24] sm:$0xf]
        %v7959 = vld [vmem:[%s6316 + $0x28] sm:$0xf]
        %v7960 = vld [vmem:[%s6316 + $0x30] sm:$0xf]
        %v7961 = vld [vmem:[%s6316 + $0x34] sm:$0xf]
        %v7962 = vld [vmem:[%s6316 + $0x3c] sm:$0xf]
        %v7963 = vld [vmem:[%s6316 + $0x40] sm:$0xf]
        %v7964 = vld [vmem:[%s6316 + $0x48] sm:$0xf]
        %v7965 = vld [vmem:[%s6316 + $0x4c] sm:$0xf]
        %v7966 = vld [vmem:[%s6316 + $0x54] sm:$0xf]
        %v7967 = vld [vmem:[%s6316 + $0x58] sm:$0xf]
        %v7968 = vld [vmem:[%s6316 + $0x60] sm:$0xf]
        %v7969 = vld [vmem:[%s6316 + $0x64] sm:$0xf]
        %v7970 = vld [vmem:[%s6316 + $0x6c] sm:$0xf]
        %v7971 = vld [vmem:[%s6316 + $0x70] sm:$0xf]
        %v7972 = vld [vmem:[%s6316 + $0x78] sm:$0xf]
        %v7973 = vld [vmem:[%s6316 + $0x7c] sm:$0xf]
        %v7974 = vld [vmem:[%s6316 + $0x84] sm:$0xf]
        %v7975 = vld [vmem:[%s6316 + $0x88] sm:$0xf]
        %v7976 = vld [vmem:[%s6316 + $0x90] sm:$0xf]
        %v7977 = vld [vmem:[%s6316 + $0x94] sm:$0xf]
        %v7978 = vld [vmem:[%s6316 + $0x9c] sm:$0xf]
        %v7979 = vld [vmem:[%s6316 + $0xa0] sm:$0xf]
        %v7980 = vld [vmem:[%s6316 + $0xa8] sm:$0xf]
        %v7981 = vld [vmem:[%s6316 + $0xac] sm:$0xf]
        %v7982 = vld [vmem:[%s6316 + $0xb4] sm:$0xf]
        %v7983 = vld [vmem:[%s6316 + $0xb8] sm:$0xf]
        %v7984 = vld [vmem:[#allocation9 + $0xc0] sm:$0xf]
        %v7985 = vld [vmem:[#allocation9 + $0xc4] sm:$0xf]
        %v7986 = vld [vmem:[#allocation9 + $0xc8] sm:$0xf]
        %v7987 = vld [vmem:[#allocation9 + $0xcc] sm:$0xf]
        %v7988 = vld [vmem:[#allocation9 + $0xd0] sm:$0xf]
        %v7989 = vld [vmem:[#allocation9 + $0xd4] sm:$0xf]
        %v7990 = vld [vmem:[#allocation9 + $0xd8] sm:$0xf]
        %v7991 = vld [vmem:[#allocation9 + $0xdc] sm:$0xf]
        %v7992 = vld [vmem:[#allocation9 + $0xe0] sm:$0xf]
        %v7993 = vld [vmem:[#allocation9 + $0xe4] sm:$0xf]
        %v7994 = vld [vmem:[#allocation9 + $0xe8] sm:$0xf]
        %v7995 = vld [vmem:[#allocation9 + $0xec] sm:$0xf]
        %v7996 = vld [vmem:[#allocation9 + $0xf0] sm:$0xf]
        %v7997 = vld [vmem:[#allocation9 + $0xf4] sm:$0xf]
        %v7998 = vld [vmem:[#allocation9 + $0xf8] sm:$0xf]
        %v7999 = vld [vmem:[#allocation9 + $0xfc] sm:$0xf]
        %v8032 = vunpack.c.l.b16 %v7952
        %v8033 = vunpack.c.l.b16 %v7953
        %v8034 = vunpack.c.l.b16 %v7954
        %v8035 = vunpack.c.l.b16 %v7955
        %v8036 = vunpack.c.l.b16 %v7956
        %v8037 = vunpack.c.l.b16 %v7957
        %v8038 = vunpack.c.l.b16 %v7958
        %v8039 = vunpack.c.l.b16 %v7959
        %v8040 = vunpack.c.l.b16 %v7960
        %v8041 = vunpack.c.l.b16 %v7961
        %v8042 = vunpack.c.l.b16 %v7962
        %v8043 = vunpack.c.l.b16 %v7963
        %v8044 = vunpack.c.l.b16 %v7964
        %v8045 = vunpack.c.l.b16 %v7965
        %v8046 = vunpack.c.l.b16 %v7966
        %v8047 = vunpack.c.l.b16 %v7967
        %v8048 = vunpack.c.l.b16 %v7968
        %v8049 = vunpack.c.l.b16 %v7969
        %v8050 = vunpack.c.l.b16 %v7970
        %v8051 = vunpack.c.l.b16 %v7971
        %v8052 = vunpack.c.l.b16 %v7972
        %v8053 = vunpack.c.l.b16 %v7973
        %v8054 = vunpack.c.l.b16 %v7974
        %v8055 = vunpack.c.l.b16 %v7975
        %v8056 = vunpack.c.l.b16 %v7976
        %v8057 = vunpack.c.l.b16 %v7977
        %v8058 = vunpack.c.l.b16 %v7978
        %v8059 = vunpack.c.l.b16 %v7979
        %v8060 = vunpack.c.l.b16 %v7980
        %v8061 = vunpack.c.l.b16 %v7981
        %v8062 = vunpack.c.l.b16 %v7982
        %v8063 = vunpack.c.l.b16 %v7983
        %v8064 = vpack.c.b16 %v8033, %v8032
        %v8065 = vpack.c.b16 %v8035, %v8034
        %v8066 = vpack.c.b16 %v8037, %v8036
        %v8067 = vpack.c.b16 %v8039, %v8038
        %v8068 = vpack.c.b16 %v8041, %v8040
        %v8069 = vpack.c.b16 %v8043, %v8042
        %v8070 = vpack.c.b16 %v8045, %v8044
        %v8071 = vpack.c.b16 %v8047, %v8046
        %v8072 = vpack.c.b16 %v8049, %v8048
        %v8073 = vpack.c.b16 %v8051, %v8050
        %v8074 = vpack.c.b16 %v8053, %v8052
        %v8075 = vpack.c.b16 %v8055, %v8054
        %v8076 = vpack.c.b16 %v8057, %v8056
        %v8077 = vpack.c.b16 %v8059, %v8058
        %v8078 = vpack.c.b16 %v8061, %v8060
        %v8079 = vpack.c.b16 %v8063, %v8062
        %v8112 = vunpack.c.l.b16 %v7984
        %v8113 = vunpack.c.l.b16 %v7985
        %v8114 = vunpack.c.l.b16 %v7986
        %v8115 = vunpack.c.l.b16 %v7987
        %v8116 = vunpack.c.l.b16 %v7988
        %v8117 = vunpack.c.l.b16 %v7989
        %v8118 = vunpack.c.l.b16 %v7990
        %v8119 = vunpack.c.l.b16 %v7991
        %v8120 = vunpack.c.l.b16 %v7992
        %v8121 = vunpack.c.l.b16 %v7993
        %v8122 = vunpack.c.l.b16 %v7994
        %v8123 = vunpack.c.l.b16 %v7995
        %v8124 = vunpack.c.l.b16 %v7996
        %v8125 = vunpack.c.l.b16 %v7997
        %v8126 = vunpack.c.l.b16 %v7998
        %v8127 = vunpack.c.l.b16 %v7999
        %v8128 = vpack.c.b16 %v8113, %v8112
        %v8129 = vpack.c.b16 %v8115, %v8114
        %v8130 = vpack.c.b16 %v8117, %v8116
        %v8131 = vpack.c.b16 %v8119, %v8118
        %v8132 = vpack.c.b16 %v8121, %v8120
        %v8133 = vpack.c.b16 %v8123, %v8122
        %v8134 = vpack.c.b16 %v8125, %v8124
        %v8135 = vpack.c.b16 %v8127, %v8126
        %8144 = vmatprep.subr.bf16.mxu0 0
        %8145 = vmatpush1.bf16.msra.mxu0 %v8128
        %8146 = vmatprep.subr.bf16.mxu0 0
        %8147 = vmatpush1.bf16.msra.mxu0 %v8129
        %8148 = vmatprep.subr.bf16.mxu0 0
        %8149 = vmatpush1.bf16.msra.mxu0 %v8130
        %8150 = vmatprep.subr.bf16.mxu0 0
        %8151 = vmatpush1.bf16.msra.mxu0 %v8131
        %8152 = vmatprep.subr.bf16.mxu0 0
        %8153 = vmatpush1.bf16.msra.mxu0 %v8132
        %8154 = vmatprep.subr.bf16.mxu0 0
        %8155 = vmatpush1.bf16.msra.mxu0 %v8133
        %8156 = vmatprep.subr.bf16.mxu0 0
        %8157 = vmatpush1.bf16.msra.mxu0 %v8134
        %8158 = vmatprep.subr.bf16.mxu0 0
        %8159 = vmatpush1.bf16.msra.mxu0 %v8135
        %8160 = vmatprep.subr.bf16.mxu0 0
        %8161 = vmatpush1.bf16.msra.mxu0 0
        %8162 = vmatprep.subr.bf16.mxu0 0
        %8163 = vmatpush1.bf16.msra.mxu0 0
        %8164 = vmatprep.subr.bf16.mxu0 0
        %8165 = vmatpush1.bf16.msra.mxu0 0
        %8166 = vmatprep.subr.bf16.mxu0 0
        %8167 = vmatpush1.bf16.msra.mxu0 0
        %8168 = vmatprep.subr.bf16.mxu0 0
        %8169 = vmatpush1.bf16.msra.mxu0 0
        %8170 = vmatprep.subr.bf16.mxu0 0
        %8171 = vmatpush1.bf16.msra.mxu0 0
        %8172 = vmatprep.subr.bf16.mxu0 0
        %8173 = vmatpush1.bf16.msra.mxu0 0
        %8174 = vmatprep.subr.bf16.mxu0 0
        %8175 = vmatpush1.bf16.msra.mxu0 0
        %8176 = vmatprep.mubr.bf16.mxu0 0
        %8177 = vmatmul.mubr.bf16.gmra.mrb[0].mxu0 %v8064
        %v8178 = vpop.f32.mrb[0].mxu0
        %v8179 = vadd.f32 0.0, %v8178
        %v8180 = vpop.f32.mrb[0].mxu0
        %v8181 = vpop.f32.mrb[0].mxu0
        %v8182 = vadd.f32 0.0, %v8181
        %v8183 = vpop.f32.mrb[0].mxu0
        %8184 = vmatprep.mubr.bf16.mxu0 0
        %8185 = vmatmul.mubr.bf16.gmra.mrb[0].mxu0 %v8065
        %v8186 = vpop.f32.mrb[0].mxu0
        %v8187 = vadd.f32 0.0, %v8186
        %v8188 = vpop.f32.mrb[0].mxu0
        %v8189 = vpop.f32.mrb[0].mxu0
        %v8190 = vadd.f32 0.0, %v8189
        %v8191 = vpop.f32.mrb[0].mxu0
        %8192 = vmatprep.mubr.bf16.mxu0 0
        %8193 = vmatmul.mubr.bf16.gmra.mrb[0].mxu0 %v8066
        %v8194 = vpop.f32.mrb[0].mxu0
        %v8195 = vadd.f32 0.0, %v8194
        %v8196 = vpop.f32.mrb[0].mxu0
        %v8197 = vpop.f32.mrb[0].mxu0
        %v8198 = vadd.f32 0.0, %v8197
        %v8199 = vpop.f32.mrb[0].mxu0
        %8200 = vmatprep.mubr.bf16.mxu0 0
        %8201 = vmatmul.mubr.bf16.gmra.mrb[0].mxu0 %v8067
        %v8202 = vpop.f32.mrb[0].mxu0
        %v8203 = vadd.f32 0.0, %v8202
        %v8204 = vpop.f32.mrb[0].mxu0
        %v8205 = vpop.f32.mrb[0].mxu0
        %v8206 = vadd.f32 0.0, %v8205
        %v8207 = vpop.f32.mrb[0].mxu0
        %8208 = vmatprep.mubr.bf16.mxu0 0
        %8209 = vmatmul.mubr.bf16.gmra.mrb[0].mxu0 %v8068
        %v8210 = vpop.f32.mrb[0].mxu0
        %v8211 = vadd.f32 0.0, %v8210
        %v8212 = vpop.f32.mrb[0].mxu0
        %v8213 = vpop.f32.mrb[0].mxu0
        %v8214 = vadd.f32 0.0, %v8213
        %v8215 = vpop.f32.mrb[0].mxu0
        %8216 = vmatprep.mubr.bf16.mxu0 0
        %8217 = vmatmul.mubr.bf16.gmra.mrb[0].mxu0 %v8069
        %v8218 = vpop.f32.mrb[0].mxu0
        %v8219 = vadd.f32 0.0, %v8218
        %v8220 = vpop.f32.mrb[0].mxu0
        %v8221 = vpop.f32.mrb[0].mxu0
        %v8222 = vadd.f32 0.0, %v8221
        %v8223 = vpop.f32.mrb[0].mxu0
        %8224 = vmatprep.mubr.bf16.mxu0 0
        %8225 = vmatmul.mubr.bf16.gmra.mrb[0].mxu0 %v8070
        %v8226 = vpop.f32.mrb[0].mxu0
        %v8227 = vadd.f32 0.0, %v8226
        %v8228 = vpop.f32.mrb[0].mxu0
        %v8229 = vpop.f32.mrb[0].mxu0
        %v8230 = vadd.f32 0.0, %v8229
        %v8231 = vpop.f32.mrb[0].mxu0
        %8232 = vmatprep.mubr.bf16.mxu0 0
        %8233 = vmatmul.mubr.bf16.gmra.mrb[0].mxu0 %v8071
        %v8234 = vpop.f32.mrb[0].mxu0
        %v8235 = vadd.f32 0.0, %v8234
        %v8236 = vpop.f32.mrb[0].mxu0
        %v8237 = vpop.f32.mrb[0].mxu0
        %v8238 = vadd.f32 0.0, %v8237
        %v8239 = vpop.f32.mrb[0].mxu0
        %8240 = vmatprep.mubr.bf16.mxu0 0
        %8241 = vmatmul.mubr.bf16.gmra.mrb[0].mxu0 %v8072
        %v8242 = vpop.f32.mrb[0].mxu0
        %v8243 = vadd.f32 0.0, %v8242
        %v8244 = vpop.f32.mrb[0].mxu0
        %v8245 = vpop.f32.mrb[0].mxu0
        %v8246 = vadd.f32 0.0, %v8245
        %v8247 = vpop.f32.mrb[0].mxu0
        %8248 = vmatprep.mubr.bf16.mxu0 0
        %8249 = vmatmul.mubr.bf16.gmra.mrb[0].mxu0 %v8073
        %v8250 = vpop.f32.mrb[0].mxu0
        %v8251 = vadd.f32 0.0, %v8250
        %v8252 = vpop.f32.mrb[0].mxu0
        %v8253 = vpop.f32.mrb[0].mxu0
        %v8254 = vadd.f32 0.0, %v8253
        %v8255 = vpop.f32.mrb[0].mxu0
        %8256 = vmatprep.mubr.bf16.mxu0 0
        %8257 = vmatmul.mubr.bf16.gmra.mrb[0].mxu0 %v8074
        %v8258 = vpop.f32.mrb[0].mxu0
        %v8259 = vadd.f32 0.0, %v8258
        %v8260 = vpop.f32.mrb[0].mxu0
        %v8261 = vpop.f32.mrb[0].mxu0
        %v8262 = vadd.f32 0.0, %v8261
        %v8263 = vpop.f32.mrb[0].mxu0
        %8264 = vmatprep.mubr.bf16.mxu0 0
        %8265 = vmatmul.mubr.bf16.gmra.mrb[0].mxu0 %v8075
        %v8266 = vpop.f32.mrb[0].mxu0
        %v8267 = vadd.f32 0.0, %v8266
        %v8268 = vpop.f32.mrb[0].mxu0
        %v8269 = vpop.f32.mrb[0].mxu0
        %v8270 = vadd.f32 0.0, %v8269
        %v8271 = vpop.f32.mrb[0].mxu0
        %8272 = vmatprep.mubr.bf16.mxu0 0
        %8273 = vmatmul.mubr.bf16.gmra.mrb[0].mxu0 %v8076
        %v8274 = vpop.f32.mrb[0].mxu0
        %v8275 = vadd.f32 0.0, %v8274
        %v8276 = vpop.f32.mrb[0].mxu0
        %v8277 = vpop.f32.mrb[0].mxu0
        %v8278 = vadd.f32 0.0, %v8277
        %v8279 = vpop.f32.mrb[0].mxu0
        %8280 = vmatprep.mubr.bf16.mxu0 0
        %8281 = vmatmul.mubr.bf16.gmra.mrb[0].mxu0 %v8077
        %v8282 = vpop.f32.mrb[0].mxu0
        %v8283 = vadd.f32 0.0, %v8282
        %v8284 = vpop.f32.mrb[0].mxu0
        %v8285 = vpop.f32.mrb[0].mxu0
        %v8286 = vadd.f32 0.0, %v8285
        %v8287 = vpop.f32.mrb[0].mxu0
        %8288 = vmatprep.mubr.bf16.mxu0 0
        %8289 = vmatmul.mubr.bf16.gmra.mrb[0].mxu0 %v8078
        %v8290 = vpop.f32.mrb[0].mxu0
        %v8291 = vadd.f32 0.0, %v8290
        %v8292 = vpop.f32.mrb[0].mxu0
        %v8293 = vpop.f32.mrb[0].mxu0
        %v8294 = vadd.f32 0.0, %v8293
        %v8295 = vpop.f32.mrb[0].mxu0
        %8296 = vmatprep.mubr.bf16.mxu0 0
        %8297 = vmatmul.mubr.bf16.gmra.mrb[0].mxu0 %v8079
        %v8298 = vpop.f32.mrb[0].mxu0
        %v8299 = vadd.f32 0.0, %v8298
        %v8300 = vpop.f32.mrb[0].mxu0
        %v8301 = vpop.f32.mrb[0].mxu0
        %v8302 = vadd.f32 0.0, %v8301
        %v8303 = vpop.f32.mrb[0].mxu0
        %8304 = vdwg.mxu0
        %v8305 = vadd.f32 %v7920, %v8179
        %v8306 = vadd.f32 %v7921, %v8182
        %v8307 = vadd.f32 %v7922, %v8187
        %v8308 = vadd.f32 %v7923, %v8190
        %v8309 = vadd.f32 %v7924, %v8195
        %v8310 = vadd.f32 %v7925, %v8198
        %v8311 = vadd.f32 %v7926, %v8203
        %v8312 = vadd.f32 %v7927, %v8206
        %v8313 = vadd.f32 %v7928, %v8211
        %v8314 = vadd.f32 %v7929, %v8214
        %v8315 = vadd.f32 %v7930, %v8219
        %v8316 = vadd.f32 %v7931, %v8222
        %v8317 = vadd.f32 %v7932, %v8227
        %v8318 = vadd.f32 %v7933, %v8230
        %v8319 = vadd.f32 %v7934, %v8235
        %v8320 = vadd.f32 %v7935, %v8238
        %v8321 = vadd.f32 %v7936, %v8243
        %v8322 = vadd.f32 %v7937, %v8246
        %v8323 = vadd.f32 %v7938, %v8251
        %v8324 = vadd.f32 %v7939, %v8254
        %v8325 = vadd.f32 %v7940, %v8259
        %v8326 = vadd.f32 %v7941, %v8262
        %v8327 = vadd.f32 %v7942, %v8267
        %v8328 = vadd.f32 %v7943, %v8270
        %v8329 = vadd.f32 %v7944, %v8275
        %v8330 = vadd.f32 %v7945, %v8278
        %v8331 = vadd.f32 %v7946, %v8283
        %v8332 = vadd.f32 %v7947, %v8286
        %v8333 = vadd.f32 %v7948, %v8291
        %v8334 = vadd.f32 %v7949, %v8294
        %v8335 = vadd.f32 %v7950, %v8299
        %v8336 = vadd.f32 %v7951, %v8302
        %v8337 = vld [vmem:[%s6316] sm:$0xf]
        %v8338 = vld [vmem:[%s6316 + $0x4] sm:$0xf]
        %v8339 = vld [vmem:[%s6316 + $0x8] sm:$0x1]
        %v8340 = vld [vmem:[%s6316 + $0xc] sm:$0xf]
        %v8341 = vld [vmem:[%s6316 + $0x10] sm:$0xf]
        %v8342 = vld [vmem:[%s6316 + $0x14] sm:$0x1]
        %v8343 = vld [vmem:[%s6316 + $0x18] sm:$0xf]
        %v8344 = vld [vmem:[%s6316 + $0x1c] sm:$0xf]
        %v8345 = vld [vmem:[%s6316 + $0x20] sm:$0x1]
        %v8346 = vld [vmem:[%s6316 + $0x24] sm:$0xf]
        %v8347 = vld [vmem:[%s6316 + $0x28] sm:$0xf]
        %v8348 = vld [vmem:[%s6316 + $0x2c] sm:$0x1]
        %v8349 = vld [vmem:[%s6316 + $0x30] sm:$0xf]
        %v8350 = vld [vmem:[%s6316 + $0x34] sm:$0xf]
        %v8351 = vld [vmem:[%s6316 + $0x38] sm:$0x1]
        %v8352 = vld [vmem:[%s6316 + $0x3c] sm:$0xf]
        %v8353 = vld [vmem:[%s6316 + $0x40] sm:$0xf]
        %v8354 = vld [vmem:[%s6316 + $0x44] sm:$0x1]
        %v8355 = vld [vmem:[%s6316 + $0x48] sm:$0xf]
        %v8356 = vld [vmem:[%s6316 + $0x4c] sm:$0xf]
        %v8357 = vld [vmem:[%s6316 + $0x50] sm:$0x1]
        %v8358 = vld [vmem:[%s6316 + $0x54] sm:$0xf]
        %v8359 = vld [vmem:[%s6316 + $0x58] sm:$0xf]
        %v8360 = vld [vmem:[%s6316 + $0x5c] sm:$0x1]
        %v8361 = vld [vmem:[%s6316 + $0x60] sm:$0xf]
        %v8362 = vld [vmem:[%s6316 + $0x64] sm:$0xf]
        %v8363 = vld [vmem:[%s6316 + $0x68] sm:$0x1]
        %v8364 = vld [vmem:[%s6316 + $0x6c] sm:$0xf]
        %v8365 = vld [vmem:[%s6316 + $0x70] sm:$0xf]
        %v8366 = vld [vmem:[%s6316 + $0x74] sm:$0x1]
        %v8367 = vld [vmem:[%s6316 + $0x78] sm:$0xf]
        %v8368 = vld [vmem:[%s6316 + $0x7c] sm:$0xf]
        %v8369 = vld [vmem:[%s6316 + $0x80] sm:$0x1]
        %v8370 = vld [vmem:[%s6316 + $0x84] sm:$0xf]
        %v8371 = vld [vmem:[%s6316 + $0x88] sm:$0xf]
        %v8372 = vld [vmem:[%s6316 + $0x8c] sm:$0x1]
        %v8373 = vld [vmem:[%s6316 + $0x90] sm:$0xf]
        %v8374 = vld [vmem:[%s6316 + $0x94] sm:$0xf]
        %v8375 = vld [vmem:[%s6316 + $0x98] sm:$0x1]
        %v8376 = vld [vmem:[%s6316 + $0x9c] sm:$0xf]
        %v8377 = vld [vmem:[%s6316 + $0xa0] sm:$0xf]
        %v8378 = vld [vmem:[%s6316 + $0xa4] sm:$0x1]
        %v8379 = vld [vmem:[%s6316 + $0xa8] sm:$0xf]
        %v8380 = vld [vmem:[%s6316 + $0xac] sm:$0xf]
        %v8381 = vld [vmem:[%s6316 + $0xb0] sm:$0x1]
        %v8382 = vld [vmem:[%s6316 + $0xb4] sm:$0xf]
        %v8383 = vld [vmem:[%s6316 + $0xb8] sm:$0xf]
        %v8384 = vld [vmem:[%s6316 + $0xbc] sm:$0x1]
        %v8385 = vld [vmem:[#allocation9 + $0x100] sm:$0xf]
        %v8386 = vld [vmem:[#allocation9 + $0x104] sm:$0xf]
        %v8387 = vld [vmem:[#allocation9 + $0x108] sm:$0xf]
        %v8388 = vld [vmem:[#allocation9 + $0x10c] sm:$0xf]
        %v8389 = vld [vmem:[#allocation9 + $0x110] sm:$0xf]
        %v8390 = vld [vmem:[#allocation9 + $0x114] sm:$0xf]
        %v8391 = vld [vmem:[#allocation9 + $0x118] sm:$0xf]
        %v8392 = vld [vmem:[#allocation9 + $0x11c] sm:$0xf]
        %v8393 = vld [vmem:[#allocation9 + $0x120] sm:$0xf]
        %v8394 = vld [vmem:[#allocation9 + $0x124] sm:$0xf]
        %v8395 = vld [vmem:[#allocation9 + $0x128] sm:$0xf]
        %v8396 = vld [vmem:[#allocation9 + $0x12c] sm:$0xf]
        %v8397 = vld [vmem:[#allocation9 + $0x130] sm:$0xf]
        %v8398 = vld [vmem:[#allocation9 + $0x134] sm:$0xf]
        %v8399 = vld [vmem:[#allocation9 + $0x138] sm:$0xf]
        %v8400 = vld [vmem:[#allocation9 + $0x13c] sm:$0xf]
        %v8402 = vshrl.u32 %v8337, 16
        %v8404 = vrot.slane %v8402, 4
        %v8405 = vshll.u32 %v8337, 16
        %v8407 = vrot.slane %v8405, 5
        %v8408 = vor.u32 %v8404, %v8407
        %v8409 = vrot.slane %v8408, 4
        %v8411 = vshll.u32 %v8338, 16
        %v8413 = vrot.slane %v8411, 5
        %v8414 = vsel %vm963, %v8409, %v8413
        %v8415 = vshrl.u32 %v8338, 16
        %v8417 = vrot.slane %v8415, 4
        %v8418 = vor.u32 %v8417, %v8413
        %v8419 = vrot.slane %v8418, 4
        %v8421 = vshll.u32 %v8339, 16
        %v8423 = vrot.slane %v8421, 5
        %v8424 = vsel %vm963, %v8419, %v8423
        %v8426 = vshrl.u32 %v8340, 16
        %v8428 = vrot.slane %v8426, 4
        %v8429 = vshll.u32 %v8340, 16
        %v8431 = vrot.slane %v8429, 5
        %v8432 = vor.u32 %v8428, %v8431
        %v8433 = vrot.slane %v8432, 4
        %v8435 = vshll.u32 %v8341, 16
        %v8437 = vrot.slane %v8435, 5
        %v8438 = vsel %vm963, %v8433, %v8437
        %v8439 = vshrl.u32 %v8341, 16
        %v8441 = vrot.slane %v8439, 4
        %v8442 = vor.u32 %v8441, %v8437
        %v8443 = vrot.slane %v8442, 4
        %v8445 = vshll.u32 %v8342, 16
        %v8447 = vrot.slane %v8445, 5
        %v8448 = vsel %vm963, %v8443, %v8447
        %v8450 = vshrl.u32 %v8343, 16
        %v8452 = vrot.slane %v8450, 4
        %v8453 = vshll.u32 %v8343, 16
        %v8455 = vrot.slane %v8453, 5
        %v8456 = vor.u32 %v8452, %v8455
        %v8457 = vrot.slane %v8456, 4
        %v8459 = vshll.u32 %v8344, 16
        %v8461 = vrot.slane %v8459, 5
        %v8462 = vsel %vm963, %v8457, %v8461
        %v8463 = vshrl.u32 %v8344, 16
        %v8465 = vrot.slane %v8463, 4
        %v8466 = vor.u32 %v8465, %v8461
        %v8467 = vrot.slane %v8466, 4
        %v8469 = vshll.u32 %v8345, 16
        %v8471 = vrot.slane %v8469, 5
        %v8472 = vsel %vm963, %v8467, %v8471
        %v8474 = vshrl.u32 %v8346, 16
        %v8476 = vrot.slane %v8474, 4
        %v8477 = vshll.u32 %v8346, 16
        %v8479 = vrot.slane %v8477, 5
        %v8480 = vor.u32 %v8476, %v8479
        %v8481 = vrot.slane %v8480, 4
        %v8483 = vshll.u32 %v8347, 16
        %v8485 = vrot.slane %v8483, 5
        %v8486 = vsel %vm963, %v8481, %v8485
        %v8487 = vshrl.u32 %v8347, 16
        %v8489 = vrot.slane %v8487, 4
        %v8490 = vor.u32 %v8489, %v8485
        %v8491 = vrot.slane %v8490, 4
        %v8493 = vshll.u32 %v8348, 16
        %v8495 = vrot.slane %v8493, 5
        %v8496 = vsel %vm963, %v8491, %v8495
        %v8498 = vshrl.u32 %v8349, 16
        %v8500 = vrot.slane %v8498, 4
        %v8501 = vshll.u32 %v8349, 16
        %v8503 = vrot.slane %v8501, 5
        %v8504 = vor.u32 %v8500, %v8503
        %v8505 = vrot.slane %v8504, 4
        %v8507 = vshll.u32 %v8350, 16
        %v8509 = vrot.slane %v8507, 5
        %v8510 = vsel %vm963, %v8505, %v8509
        %v8511 = vshrl.u32 %v8350, 16
        %v8513 = vrot.slane %v8511, 4
        %v8514 = vor.u32 %v8513, %v8509
        %v8515 = vrot.slane %v8514, 4
        %v8517 = vshll.u32 %v8351, 16
        %v8519 = vrot.slane %v8517, 5
        %v8520 = vsel %vm963, %v8515, %v8519
        %v8522 = vshrl.u32 %v8352, 16
        %v8524 = vrot.slane %v8522, 4
        %v8525 = vshll.u32 %v8352, 16
        %v8527 = vrot.slane %v8525, 5
        %v8528 = vor.u32 %v8524, %v8527
        %v8529 = vrot.slane %v8528, 4
        %v8531 = vshll.u32 %v8353, 16
        %v8533 = vrot.slane %v8531, 5
        %v8534 = vsel %vm963, %v8529, %v8533
        %v8535 = vshrl.u32 %v8353, 16
        %v8537 = vrot.slane %v8535, 4
        %v8538 = vor.u32 %v8537, %v8533
        %v8539 = vrot.slane %v8538, 4
        %v8541 = vshll.u32 %v8354, 16
        %v8543 = vrot.slane %v8541, 5
        %v8544 = vsel %vm963, %v8539, %v8543
        %v8546 = vshrl.u32 %v8355, 16
        %v8548 = vrot.slane %v8546, 4
        %v8549 = vshll.u32 %v8355, 16
        %v8551 = vrot.slane %v8549, 5
        %v8552 = vor.u32 %v8548, %v8551
        %v8553 = vrot.slane %v8552, 4
        %v8555 = vshll.u32 %v8356, 16
        %v8557 = vrot.slane %v8555, 5
        %v8558 = vsel %vm963, %v8553, %v8557
        %v8559 = vshrl.u32 %v8356, 16
        %v8561 = vrot.slane %v8559, 4
        %v8562 = vor.u32 %v8561, %v8557
        %v8563 = vrot.slane %v8562, 4
        %v8565 = vshll.u32 %v8357, 16
        %v8567 = vrot.slane %v8565, 5
        %v8568 = vsel %vm963, %v8563, %v8567
        %v8570 = vshrl.u32 %v8358, 16
        %v8572 = vrot.slane %v8570, 4
        %v8573 = vshll.u32 %v8358, 16
        %v8575 = vrot.slane %v8573, 5
        %v8576 = vor.u32 %v8572, %v8575
        %v8577 = vrot.slane %v8576, 4
        %v8579 = vshll.u32 %v8359, 16
        %v8581 = vrot.slane %v8579, 5
        %v8582 = vsel %vm963, %v8577, %v8581
        %v8583 = vshrl.u32 %v8359, 16
        %v8585 = vrot.slane %v8583, 4
        %v8586 = vor.u32 %v8585, %v8581
        %v8587 = vrot.slane %v8586, 4
        %v8589 = vshll.u32 %v8360, 16
        %v8591 = vrot.slane %v8589, 5
        %v8592 = vsel %vm963, %v8587, %v8591
        %v8594 = vshrl.u32 %v8361, 16
        %v8596 = vrot.slane %v8594, 4
        %v8597 = vshll.u32 %v8361, 16
        %v8599 = vrot.slane %v8597, 5
        %v8600 = vor.u32 %v8596, %v8599
        %v8601 = vrot.slane %v8600, 4
        %v8603 = vshll.u32 %v8362, 16
        %v8605 = vrot.slane %v8603, 5
        %v8606 = vsel %vm963, %v8601, %v8605
        %v8607 = vshrl.u32 %v8362, 16
        %v8609 = vrot.slane %v8607, 4
        %v8610 = vor.u32 %v8609, %v8605
        %v8611 = vrot.slane %v8610, 4
        %v8613 = vshll.u32 %v8363, 16
        %v8615 = vrot.slane %v8613, 5
        %v8616 = vsel %vm963, %v8611, %v8615
        %v8618 = vshrl.u32 %v8364, 16
        %v8620 = vrot.slane %v8618, 4
        %v8621 = vshll.u32 %v8364, 16
        %v8623 = vrot.slane %v8621, 5
        %v8624 = vor.u32 %v8620, %v8623
        %v8625 = vrot.slane %v8624, 4
        %v8627 = vshll.u32 %v8365, 16
        %v8629 = vrot.slane %v8627, 5
        %v8630 = vsel %vm963, %v8625, %v8629
        %v8631 = vshrl.u32 %v8365, 16
        %v8633 = vrot.slane %v8631, 4
        %v8634 = vor.u32 %v8633, %v8629
        %v8635 = vrot.slane %v8634, 4
        %v8637 = vshll.u32 %v8366, 16
        %v8639 = vrot.slane %v8637, 5
        %v8640 = vsel %vm963, %v8635, %v8639
        %v8642 = vshrl.u32 %v8367, 16
        %v8644 = vrot.slane %v8642, 4
        %v8645 = vshll.u32 %v8367, 16
        %v8647 = vrot.slane %v8645, 5
        %v8648 = vor.u32 %v8644, %v8647
        %v8649 = vrot.slane %v8648, 4
        %v8651 = vshll.u32 %v8368, 16
        %v8653 = vrot.slane %v8651, 5
        %v8654 = vsel %vm963, %v8649, %v8653
        %v8655 = vshrl.u32 %v8368, 16
        %v8657 = vrot.slane %v8655, 4
        %v8658 = vor.u32 %v8657, %v8653
        %v8659 = vrot.slane %v8658, 4
        %v8661 = vshll.u32 %v8369, 16
        %v8663 = vrot.slane %v8661, 5
        %v8664 = vsel %vm963, %v8659, %v8663
        %v8666 = vshrl.u32 %v8370, 16
        %v8668 = vrot.slane %v8666, 4
        %v8669 = vshll.u32 %v8370, 16
        %v8671 = vrot.slane %v8669, 5
        %v8672 = vor.u32 %v8668, %v8671
        %v8673 = vrot.slane %v8672, 4
        %v8675 = vshll.u32 %v8371, 16
        %v8677 = vrot.slane %v8675, 5
        %v8678 = vsel %vm963, %v8673, %v8677
        %v8679 = vshrl.u32 %v8371, 16
        %v8681 = vrot.slane %v8679, 4
        %v8682 = vor.u32 %v8681, %v8677
        %v8683 = vrot.slane %v8682, 4
        %v8685 = vshll.u32 %v8372, 16
        %v8687 = vrot.slane %v8685, 5
        %v8688 = vsel %vm963, %v8683, %v8687
        %v8690 = vshrl.u32 %v8373, 16
        %v8692 = vrot.slane %v8690, 4
        %v8693 = vshll.u32 %v8373, 16
        %v8695 = vrot.slane %v8693, 5
        %v8696 = vor.u32 %v8692, %v8695
        %v8697 = vrot.slane %v8696, 4
        %v8699 = vshll.u32 %v8374, 16
        %v8701 = vrot.slane %v8699, 5
        %v8702 = vsel %vm963, %v8697, %v8701
        %v8703 = vshrl.u32 %v8374, 16
        %v8705 = vrot.slane %v8703, 4
        %v8706 = vor.u32 %v8705, %v8701
        %v8707 = vrot.slane %v8706, 4
        %v8709 = vshll.u32 %v8375, 16
        %v8711 = vrot.slane %v8709, 5
        %v8712 = vsel %vm963, %v8707, %v8711
        %v8714 = vshrl.u32 %v8376, 16
        %v8716 = vrot.slane %v8714, 4
        %v8717 = vshll.u32 %v8376, 16
        %v8719 = vrot.slane %v8717, 5
        %v8720 = vor.u32 %v8716, %v8719
        %v8721 = vrot.slane %v8720, 4
        %v8723 = vshll.u32 %v8377, 16
        %v8725 = vrot.slane %v8723, 5
        %v8726 = vsel %vm963, %v8721, %v8725
        %v8727 = vshrl.u32 %v8377, 16
        %v8729 = vrot.slane %v8727, 4
        %v8730 = vor.u32 %v8729, %v8725
        %v8731 = vrot.slane %v8730, 4
        %v8733 = vshll.u32 %v8378, 16
        %v8735 = vrot.slane %v8733, 5
        %v8736 = vsel %vm963, %v8731, %v8735
        %v8738 = vshrl.u32 %v8379, 16
        %v8740 = vrot.slane %v8738, 4
        %v8741 = vshll.u32 %v8379, 16
        %v8743 = vrot.slane %v8741, 5
        %v8744 = vor.u32 %v8740, %v8743
        %v8745 = vrot.slane %v8744, 4
        %v8747 = vshll.u32 %v8380, 16
        %v8749 = vrot.slane %v8747, 5
        %v8750 = vsel %vm963, %v8745, %v8749
        %v8751 = vshrl.u32 %v8380, 16
        %v8753 = vrot.slane %v8751, 4
        %v8754 = vor.u32 %v8753, %v8749
        %v8755 = vrot.slane %v8754, 4
        %v8757 = vshll.u32 %v8381, 16
        %v8759 = vrot.slane %v8757, 5
        %v8760 = vsel %vm963, %v8755, %v8759
        %v8762 = vshrl.u32 %v8382, 16
        %v8764 = vrot.slane %v8762, 4
        %v8765 = vshll.u32 %v8382, 16
        %v8767 = vrot.slane %v8765, 5
        %v8768 = vor.u32 %v8764, %v8767
        %v8769 = vrot.slane %v8768, 4
        %v8771 = vshll.u32 %v8383, 16
        %v8773 = vrot.slane %v8771, 5
        %v8774 = vsel %vm963, %v8769, %v8773
        %v8775 = vshrl.u32 %v8383, 16
        %v8777 = vrot.slane %v8775, 4
        %v8778 = vor.u32 %v8777, %v8773
        %v8779 = vrot.slane %v8778, 4
        %v8781 = vshll.u32 %v8384, 16
        %v8783 = vrot.slane %v8781, 5
        %v8784 = vsel %vm963, %v8779, %v8783
        %v8785 = vunpack.c.l.b16 %v8414
        %v8786 = vunpack.c.l.b16 %v8424
        %v8787 = vunpack.c.l.b16 %v8438
        %v8788 = vunpack.c.l.b16 %v8448
        %v8789 = vunpack.c.l.b16 %v8462
        %v8790 = vunpack.c.l.b16 %v8472
        %v8791 = vunpack.c.l.b16 %v8486
        %v8792 = vunpack.c.l.b16 %v8496
        %v8793 = vunpack.c.l.b16 %v8510
        %v8794 = vunpack.c.l.b16 %v8520
        %v8795 = vunpack.c.l.b16 %v8534
        %v8796 = vunpack.c.l.b16 %v8544
        %v8797 = vunpack.c.l.b16 %v8558
        %v8798 = vunpack.c.l.b16 %v8568
        %v8799 = vunpack.c.l.b16 %v8582
        %v8800 = vunpack.c.l.b16 %v8592
        %v8801 = vunpack.c.l.b16 %v8606
        %v8802 = vunpack.c.l.b16 %v8616
        %v8803 = vunpack.c.l.b16 %v8630
        %v8804 = vunpack.c.l.b16 %v8640
        %v8805 = vunpack.c.l.b16 %v8654
        %v8806 = vunpack.c.l.b16 %v8664
        %v8807 = vunpack.c.l.b16 %v8678
        %v8808 = vunpack.c.l.b16 %v8688
        %v8809 = vunpack.c.l.b16 %v8702
        %v8810 = vunpack.c.l.b16 %v8712
        %v8811 = vunpack.c.l.b16 %v8726
        %v8812 = vunpack.c.l.b16 %v8736
        %v8813 = vunpack.c.l.b16 %v8750
        %v8814 = vunpack.c.l.b16 %v8760
        %v8815 = vunpack.c.l.b16 %v8774
        %v8816 = vunpack.c.l.b16 %v8784
        %v8817 = vpack.c.b16 %v8786, %v8785
        %v8818 = vpack.c.b16 %v8788, %v8787
        %v8819 = vpack.c.b16 %v8790, %v8789
        %v8820 = vpack.c.b16 %v8792, %v8791
        %v8821 = vpack.c.b16 %v8794, %v8793
        %v8822 = vpack.c.b16 %v8796, %v8795
        %v8823 = vpack.c.b16 %v8798, %v8797
        %v8824 = vpack.c.b16 %v8800, %v8799
        %v8825 = vpack.c.b16 %v8802, %v8801
        %v8826 = vpack.c.b16 %v8804, %v8803
        %v8827 = vpack.c.b16 %v8806, %v8805
        %v8828 = vpack.c.b16 %v8808, %v8807
        %v8829 = vpack.c.b16 %v8810, %v8809
        %v8830 = vpack.c.b16 %v8812, %v8811
        %v8831 = vpack.c.b16 %v8814, %v8813
        %v8832 = vpack.c.b16 %v8816, %v8815
        %v8865 = vunpack.c.l.b16 %v8385
        %v8866 = vunpack.c.l.b16 %v8386
        %v8867 = vunpack.c.l.b16 %v8387
        %v8868 = vunpack.c.l.b16 %v8388
        %v8869 = vunpack.c.l.b16 %v8389
        %v8870 = vunpack.c.l.b16 %v8390
        %v8871 = vunpack.c.l.b16 %v8391
        %v8872 = vunpack.c.l.b16 %v8392
        %v8873 = vunpack.c.l.b16 %v8393
        %v8874 = vunpack.c.l.b16 %v8394
        %v8875 = vunpack.c.l.b16 %v8395
        %v8876 = vunpack.c.l.b16 %v8396
        %v8877 = vunpack.c.l.b16 %v8397
        %v8878 = vunpack.c.l.b16 %v8398
        %v8879 = vunpack.c.l.b16 %v8399
        %v8880 = vunpack.c.l.b16 %v8400
        %v8881 = vpack.c.b16 %v8866, %v8865
        %v8882 = vpack.c.b16 %v8868, %v8867
        %v8883 = vpack.c.b16 %v8870, %v8869
        %v8884 = vpack.c.b16 %v8872, %v8871
        %v8885 = vpack.c.b16 %v8874, %v8873
        %v8886 = vpack.c.b16 %v8876, %v8875
        %v8887 = vpack.c.b16 %v8878, %v8877
        %v8888 = vpack.c.b16 %v8880, %v8879
        %8897 = vmatprep.subr.bf16.mxu0 0
        %8898 = vmatpush1.bf16.msra.mxu0 %v8881
        %8899 = vmatprep.subr.bf16.mxu0 0
        %8900 = vmatpush1.bf16.msra.mxu0 %v8882
        %8901 = vmatprep.subr.bf16.mxu0 0
        %8902 = vmatpush1.bf16.msra.mxu0 %v8883
        %8903 = vmatprep.subr.bf16.mxu0 0
        %8904 = vmatpush1.bf16.msra.mxu0 %v8884
        %8905 = vmatprep.subr.bf16.mxu0 0
        %8906 = vmatpush1.bf16.msra.mxu0 %v8885
        %8907 = vmatprep.subr.bf16.mxu0 0
        %8908 = vmatpush1.bf16.msra.mxu0 %v8886
        %8909 = vmatprep.subr.bf16.mxu0 0
        %8910 = vmatpush1.bf16.msra.mxu0 %v8887
        %8911 = vmatprep.subr.bf16.mxu0 0
        %8912 = vmatpush1.bf16.msra.mxu0 %v8888
        %8913 = vmatprep.subr.bf16.mxu0 0
        %8914 = vmatpush1.bf16.msra.mxu0 0
        %8915 = vmatprep.subr.bf16.mxu0 0
        %8916 = vmatpush1.bf16.msra.mxu0 0
        %8917 = vmatprep.subr.bf16.mxu0 0
        %8918 = vmatpush1.bf16.msra.mxu0 0
        %8919 = vmatprep.subr.bf16.mxu0 0
        %8920 = vmatpush1.bf16.msra.mxu0 0
        %8921 = vmatprep.subr.bf16.mxu0 0
        %8922 = vmatpush1.bf16.msra.mxu0 0
        %8923 = vmatprep.subr.bf16.mxu0 0
        %8924 = vmatpush1.bf16.msra.mxu0 0
        %8925 = vmatprep.subr.bf16.mxu0 0
        %8926 = vmatpush1.bf16.msra.mxu0 0
        %8927 = vmatprep.subr.bf16.mxu0 0
        %8928 = vmatpush1.bf16.msra.mxu0 0
        %8929 = vmatprep.mubr.bf16.mxu0 0
        %8930 = vmatmul.mubr.bf16.gmra.mrb[0].mxu0 %v8817
        %v8931 = vpop.f32.mrb[0].mxu0
        %v8932 = vadd.f32 0.0, %v8931
        %v8933 = vpop.f32.mrb[0].mxu0
        %v8934 = vpop.f32.mrb[0].mxu0
        %v8935 = vadd.f32 0.0, %v8934
        %v8936 = vpop.f32.mrb[0].mxu0
        %8937 = vmatprep.mubr.bf16.mxu0 0
        %8938 = vmatmul.mubr.bf16.gmra.mrb[0].mxu0 %v8818
        %v8939 = vpop.f32.mrb[0].mxu0
        %v8940 = vadd.f32 0.0, %v8939
        %v8941 = vpop.f32.mrb[0].mxu0
        %v8942 = vpop.f32.mrb[0].mxu0
        %v8943 = vadd.f32 0.0, %v8942
        %v8944 = vpop.f32.mrb[0].mxu0
        %8945 = vmatprep.mubr.bf16.mxu0 0
        %8946 = vmatmul.mubr.bf16.gmra.mrb[0].mxu0 %v8819
        %v8947 = vpop.f32.mrb[0].mxu0
        %v8948 = vadd.f32 0.0, %v8947
        %v8949 = vpop.f32.mrb[0].mxu0
        %v8950 = vpop.f32.mrb[0].mxu0
        %v8951 = vadd.f32 0.0, %v8950
        %v8952 = vpop.f32.mrb[0].mxu0
        %8953 = vmatprep.mubr.bf16.mxu0 0
        %8954 = vmatmul.mubr.bf16.gmra.mrb[0].mxu0 %v8820
        %v8955 = vpop.f32.mrb[0].mxu0
        %v8956 = vadd.f32 0.0, %v8955
        %v8957 = vpop.f32.mrb[0].mxu0
        %v8958 = vpop.f32.mrb[0].mxu0
        %v8959 = vadd.f32 0.0, %v8958
        %v8960 = vpop.f32.mrb[0].mxu0
        %8961 = vmatprep.mubr.bf16.mxu0 0
        %8962 = vmatmul.mubr.bf16.gmra.mrb[0].mxu0 %v8821
        %v8963 = vpop.f32.mrb[0].mxu0
        %v8964 = vadd.f32 0.0, %v8963
        %v8965 = vpop.f32.mrb[0].mxu0
        %v8966 = vpop.f32.mrb[0].mxu0
        %v8967 = vadd.f32 0.0, %v8966
        %v8968 = vpop.f32.mrb[0].mxu0
        %8969 = vmatprep.mubr.bf16.mxu0 0
        %8970 = vmatmul.mubr.bf16.gmra.mrb[0].mxu0 %v8822
        %v8971 = vpop.f32.mrb[0].mxu0
        %v8972 = vadd.f32 0.0, %v8971
        %v8973 = vpop.f32.mrb[0].mxu0
        %v8974 = vpop.f32.mrb[0].mxu0
        %v8975 = vadd.f32 0.0, %v8974
        %v8976 = vpop.f32.mrb[0].mxu0
        %8977 = vmatprep.mubr.bf16.mxu0 0
        %8978 = vmatmul.mubr.bf16.gmra.mrb[0].mxu0 %v8823
        %v8979 = vpop.f32.mrb[0].mxu0
        %v8980 = vadd.f32 0.0, %v8979
        %v8981 = vpop.f32.mrb[0].mxu0
        %v8982 = vpop.f32.mrb[0].mxu0
        %v8983 = vadd.f32 0.0, %v8982
        %v8984 = vpop.f32.mrb[0].mxu0
        %8985 = vmatprep.mubr.bf16.mxu0 0
        %8986 = vmatmul.mubr.bf16.gmra.mrb[0].mxu0 %v8824
        %v8987 = vpop.f32.mrb[0].mxu0
        %v8988 = vadd.f32 0.0, %v8987
        %v8989 = vpop.f32.mrb[0].mxu0
        %v8990 = vpop.f32.mrb[0].mxu0
        %v8991 = vadd.f32 0.0, %v8990
        %v8992 = vpop.f32.mrb[0].mxu0
        %8993 = vmatprep.mubr.bf16.mxu0 0
        %8994 = vmatmul.mubr.bf16.gmra.mrb[0].mxu0 %v8825
        %v8995 = vpop.f32.mrb[0].mxu0
        %v8996 = vadd.f32 0.0, %v8995
        %v8997 = vpop.f32.mrb[0].mxu0
        %v8998 = vpop.f32.mrb[0].mxu0
        %v8999 = vadd.f32 0.0, %v8998
        %v9000 = vpop.f32.mrb[0].mxu0
        %9001 = vmatprep.mubr.bf16.mxu0 0
        %9002 = vmatmul.mubr.bf16.gmra.mrb[0].mxu0 %v8826
        %v9003 = vpop.f32.mrb[0].mxu0
        %v9004 = vadd.f32 0.0, %v9003
        %v9005 = vpop.f32.mrb[0].mxu0
        %v9006 = vpop.f32.mrb[0].mxu0
        %v9007 = vadd.f32 0.0, %v9006
        %v9008 = vpop.f32.mrb[0].mxu0
        %9009 = vmatprep.mubr.bf16.mxu0 0
        %9010 = vmatmul.mubr.bf16.gmra.mrb[0].mxu0 %v8827
        %v9011 = vpop.f32.mrb[0].mxu0
        %v9012 = vadd.f32 0.0, %v9011
        %v9013 = vpop.f32.mrb[0].mxu0
        %v9014 = vpop.f32.mrb[0].mxu0
        %v9015 = vadd.f32 0.0, %v9014
        %v9016 = vpop.f32.mrb[0].mxu0
        %9017 = vmatprep.mubr.bf16.mxu0 0
        %9018 = vmatmul.mubr.bf16.gmra.mrb[0].mxu0 %v8828
        %v9019 = vpop.f32.mrb[0].mxu0
        %v9020 = vadd.f32 0.0, %v9019
        %v9021 = vpop.f32.mrb[0].mxu0
        %v9022 = vpop.f32.mrb[0].mxu0
        %v9023 = vadd.f32 0.0, %v9022
        %v9024 = vpop.f32.mrb[0].mxu0
        %9025 = vmatprep.mubr.bf16.mxu0 0
        %9026 = vmatmul.mubr.bf16.gmra.mrb[0].mxu0 %v8829
        %v9027 = vpop.f32.mrb[0].mxu0
        %v9028 = vadd.f32 0.0, %v9027
        %v9029 = vpop.f32.mrb[0].mxu0
        %v9030 = vpop.f32.mrb[0].mxu0
        %v9031 = vadd.f32 0.0, %v9030
        %v9032 = vpop.f32.mrb[0].mxu0
        %9033 = vmatprep.mubr.bf16.mxu0 0
        %9034 = vmatmul.mubr.bf16.gmra.mrb[0].mxu0 %v8830
        %v9035 = vpop.f32.mrb[0].mxu0
        %v9036 = vadd.f32 0.0, %v9035
        %v9037 = vpop.f32.mrb[0].mxu0
        %v9038 = vpop.f32.mrb[0].mxu0
        %v9039 = vadd.f32 0.0, %v9038
        %v9040 = vpop.f32.mrb[0].mxu0
        %9041 = vmatprep.mubr.bf16.mxu0 0
        %9042 = vmatmul.mubr.bf16.gmra.mrb[0].mxu0 %v8831
        %v9043 = vpop.f32.mrb[0].mxu0
        %v9044 = vadd.f32 0.0, %v9043
        %v9045 = vpop.f32.mrb[0].mxu0
        %v9046 = vpop.f32.mrb[0].mxu0
        %v9047 = vadd.f32 0.0, %v9046
        %v9048 = vpop.f32.mrb[0].mxu0
        %9049 = vmatprep.mubr.bf16.mxu0 0
        %9050 = vmatmul.mubr.bf16.gmra.mrb[0].mxu0 %v8832
        %v9051 = vpop.f32.mrb[0].mxu0
        %v9052 = vadd.f32 0.0, %v9051
        %v9053 = vpop.f32.mrb[0].mxu0
        %v9054 = vpop.f32.mrb[0].mxu0
        %v9055 = vadd.f32 0.0, %v9054
        %v9056 = vpop.f32.mrb[0].mxu0
        %9057 = vdwg.mxu0
        %v9058 = vadd.f32 %v8305, %v8932
        %v9059 = vadd.f32 %v8306, %v8935
        %v9060 = vadd.f32 %v8307, %v8940
        %v9061 = vadd.f32 %v8308, %v8943
        %v9062 = vadd.f32 %v8309, %v8948
        %v9063 = vadd.f32 %v8310, %v8951
        %v9064 = vadd.f32 %v8311, %v8956
        %v9065 = vadd.f32 %v8312, %v8959
        %v9066 = vadd.f32 %v8313, %v8964
        %v9067 = vadd.f32 %v8314, %v8967
        %v9068 = vadd.f32 %v8315, %v8972
        %v9069 = vadd.f32 %v8316, %v8975
        %v9070 = vadd.f32 %v8317, %v8980
        %v9071 = vadd.f32 %v8318, %v8983
        %v9072 = vadd.f32 %v8319, %v8988
        %v9073 = vadd.f32 %v8320, %v8991
        %v9074 = vadd.f32 %v8321, %v8996
        %v9075 = vadd.f32 %v8322, %v8999
        %v9076 = vadd.f32 %v8323, %v9004
        %v9077 = vadd.f32 %v8324, %v9007
        %v9078 = vadd.f32 %v8325, %v9012
        %v9079 = vadd.f32 %v8326, %v9015
        %v9080 = vadd.f32 %v8327, %v9020
        %v9081 = vadd.f32 %v8328, %v9023
        %v9082 = vadd.f32 %v8329, %v9028
        %v9083 = vadd.f32 %v8330, %v9031
        %v9084 = vadd.f32 %v8331, %v9036
        %v9085 = vadd.f32 %v8332, %v9039
        %v9086 = vadd.f32 %v8333, %v9044
        %v9087 = vadd.f32 %v8334, %v9047
        %v9088 = vadd.f32 %v8335, %v9052
        %v9089 = vadd.f32 %v8336, %v9055
        %v9090 = vld [vmem:[%s6316] sm:$0xe]
        %v9091 = vld [vmem:[%s6316 + $0xc] sm:$0xe]
        %v9092 = vld [vmem:[%s6316 + $0x18] sm:$0xe]
        %v9093 = vld [vmem:[%s6316 + $0x24] sm:$0xe]
        %v9094 = vld [vmem:[%s6316 + $0x30] sm:$0xe]
        %v9095 = vld [vmem:[%s6316 + $0x3c] sm:$0xe]
        %v9096 = vld [vmem:[%s6316 + $0x48] sm:$0xe]
        %v9097 = vld [vmem:[%s6316 + $0x54] sm:$0xe]
        %v9098 = vld [vmem:[%s6316 + $0x60] sm:$0xe]
        %v9099 = vld [vmem:[%s6316 + $0x6c] sm:$0xe]
        %v9100 = vld [vmem:[%s6316 + $0x78] sm:$0xe]
        %v9101 = vld [vmem:[%s6316 + $0x84] sm:$0xe]
        %v9102 = vld [vmem:[%s6316 + $0x90] sm:$0xe]
        %v9103 = vld [vmem:[%s6316 + $0x9c] sm:$0xe]
        %v9104 = vld [vmem:[%s6316 + $0xa8] sm:$0xe]
        %v9105 = vld [vmem:[%s6316 + $0xb4] sm:$0xe]
        %v9106 = vld [vmem:[#allocation9 + $0x140] sm:$0xf]
        %v9107 = vld [vmem:[#allocation9 + $0x144] sm:$0xf]
        %v9108 = vld [vmem:[#allocation9 + $0x148] sm:$0xf]
        %v9109 = vld [vmem:[#allocation9 + $0x14c] sm:$0xf]
        %v9110 = vld [vmem:[#allocation9 + $0x150] sm:$0xf]
        %v9111 = vld [vmem:[#allocation9 + $0x154] sm:$0xf]
        %v9112 = vld [vmem:[#allocation9 + $0x158] sm:$0xf]
        %v9113 = vld [vmem:[#allocation9 + $0x15c] sm:$0xf]
        %v9114 = vld [vmem:[#allocation9 + $0x160] sm:$0xf]
        %v9115 = vld [vmem:[#allocation9 + $0x164] sm:$0xf]
        %v9116 = vld [vmem:[#allocation9 + $0x168] sm:$0xf]
        %v9117 = vld [vmem:[#allocation9 + $0x16c] sm:$0xf]
        %v9118 = vld [vmem:[#allocation9 + $0x170] sm:$0xf]
        %v9119 = vld [vmem:[#allocation9 + $0x174] sm:$0xf]
        %v9120 = vld [vmem:[#allocation9 + $0x178] sm:$0xf]
        %v9121 = vld [vmem:[#allocation9 + $0x17c] sm:$0xf]
        %v9170 = vrot.slane %v9090, 5
        %v9171 = vrot.slane %v9170, 4
        %v9172 = vrot.slane %v8338, 5
        %v9173 = vsel %vm1992, %v9171, %v9172
        %v9174 = vrot.slane %v9172, 4
        %v9175 = vrot.slane %v8339, 5
        %v9176 = vsel %vm1992, %v9174, %v9175
        %v9177 = vrot.slane %v9091, 5
        %v9178 = vrot.slane %v9177, 4
        %v9179 = vrot.slane %v8341, 5
        %v9180 = vsel %vm1992, %v9178, %v9179
        %v9181 = vrot.slane %v9179, 4
        %v9182 = vrot.slane %v8342, 5
        %v9183 = vsel %vm1992, %v9181, %v9182
        %v9184 = vrot.slane %v9092, 5
        %v9185 = vrot.slane %v9184, 4
        %v9186 = vrot.slane %v8344, 5
        %v9187 = vsel %vm1992, %v9185, %v9186
        %v9188 = vrot.slane %v9186, 4
        %v9189 = vrot.slane %v8345, 5
        %v9190 = vsel %vm1992, %v9188, %v9189
        %v9191 = vrot.slane %v9093, 5
        %v9192 = vrot.slane %v9191, 4
        %v9193 = vrot.slane %v8347, 5
        %v9194 = vsel %vm1992, %v9192, %v9193
        %v9195 = vrot.slane %v9193, 4
        %v9196 = vrot.slane %v8348, 5
        %v9197 = vsel %vm1992, %v9195, %v9196
        %v9198 = vrot.slane %v9094, 5
        %v9199 = vrot.slane %v9198, 4
        %v9200 = vrot.slane %v8350, 5
        %v9201 = vsel %vm1992, %v9199, %v9200
        %v9202 = vrot.slane %v9200, 4
        %v9203 = vrot.slane %v8351, 5
        %v9204 = vsel %vm1992, %v9202, %v9203
        %v9205 = vrot.slane %v9095, 5
        %v9206 = vrot.slane %v9205, 4
        %v9207 = vrot.slane %v8353, 5
        %v9208 = vsel %vm1992, %v9206, %v9207
        %v9209 = vrot.slane %v9207, 4
        %v9210 = vrot.slane %v8354, 5
        %v9211 = vsel %vm1992, %v9209, %v9210
        %v9212 = vrot.slane %v9096, 5
        %v9213 = vrot.slane %v9212, 4
        %v9214 = vrot.slane %v8356, 5
        %v9215 = vsel %vm1992, %v9213, %v9214
        %v9216 = vrot.slane %v9214, 4
        %v9217 = vrot.slane %v8357, 5
        %v9218 = vsel %vm1992, %v9216, %v9217
        %v9219 = vrot.slane %v9097, 5
        %v9220 = vrot.slane %v9219, 4
        %v9221 = vrot.slane %v8359, 5
        %v9222 = vsel %vm1992, %v9220, %v9221
        %v9223 = vrot.slane %v9221, 4
        %v9224 = vrot.slane %v8360, 5
        %v9225 = vsel %vm1992, %v9223, %v9224
        %v9226 = vrot.slane %v9098, 5
        %v9227 = vrot.slane %v9226, 4
        %v9228 = vrot.slane %v8362, 5
        %v9229 = vsel %vm1992, %v9227, %v9228
        %v9230 = vrot.slane %v9228, 4
        %v9231 = vrot.slane %v8363, 5
        %v9232 = vsel %vm1992, %v9230, %v9231
        %v9233 = vrot.slane %v9099, 5
        %v9234 = vrot.slane %v9233, 4
        %v9235 = vrot.slane %v8365, 5
        %v9236 = vsel %vm1992, %v9234, %v9235
        %v9237 = vrot.slane %v9235, 4
        %v9238 = vrot.slane %v8366, 5
        %v9239 = vsel %vm1992, %v9237, %v9238
        %v9240 = vrot.slane %v9100, 5
        %v9241 = vrot.slane %v9240, 4
        %v9242 = vrot.slane %v8368, 5
        %v9243 = vsel %vm1992, %v9241, %v9242
        %v9244 = vrot.slane %v9242, 4
        %v9245 = vrot.slane %v8369, 5
        %v9246 = vsel %vm1992, %v9244, %v9245
        %v9247 = vrot.slane %v9101, 5
        %v9248 = vrot.slane %v9247, 4
        %v9249 = vrot.slane %v8371, 5
        %v9250 = vsel %vm1992, %v9248, %v9249
        %v9251 = vrot.slane %v9249, 4
        %v9252 = vrot.slane %v8372, 5
        %v9253 = vsel %vm1992, %v9251, %v9252
        %v9254 = vrot.slane %v9102, 5
        %v9255 = vrot.slane %v9254, 4
        %v9256 = vrot.slane %v8374, 5
        %v9257 = vsel %vm1992, %v9255, %v9256
        %v9258 = vrot.slane %v9256, 4
        %v9259 = vrot.slane %v8375, 5
        %v9260 = vsel %vm1992, %v9258, %v9259
        %v9261 = vrot.slane %v9103, 5
        %v9262 = vrot.slane %v9261, 4
        %v9263 = vrot.slane %v8377, 5
        %v9264 = vsel %vm1992, %v9262, %v9263
        %v9265 = vrot.slane %v9263, 4
        %v9266 = vrot.slane %v8378, 5
        %v9267 = vsel %vm1992, %v9265, %v9266
        %v9268 = vrot.slane %v9104, 5
        %v9269 = vrot.slane %v9268, 4
        %v9270 = vrot.slane %v8380, 5
        %v9271 = vsel %vm1992, %v9269, %v9270
        %v9272 = vrot.slane %v9270, 4
        %v9273 = vrot.slane %v8381, 5
        %v9274 = vsel %vm1992, %v9272, %v9273
        %v9275 = vrot.slane %v9105, 5
        %v9276 = vrot.slane %v9275, 4
        %v9277 = vrot.slane %v8383, 5
        %v9278 = vsel %vm1992, %v9276, %v9277
        %v9279 = vrot.slane %v9277, 4
        %v9280 = vrot.slane %v8384, 5
        %v9281 = vsel %vm1992, %v9279, %v9280
        %v9282 = vunpack.c.l.b16 %v9173
        %v9283 = vunpack.c.l.b16 %v9176
        %v9284 = vunpack.c.l.b16 %v9180
        %v9285 = vunpack.c.l.b16 %v9183
        %v9286 = vunpack.c.l.b16 %v9187
        %v9287 = vunpack.c.l.b16 %v9190
        %v9288 = vunpack.c.l.b16 %v9194
        %v9289 = vunpack.c.l.b16 %v9197
        %v9290 = vunpack.c.l.b16 %v9201
        %v9291 = vunpack.c.l.b16 %v9204
        %v9292 = vunpack.c.l.b16 %v9208
        %v9293 = vunpack.c.l.b16 %v9211
        %v9294 = vunpack.c.l.b16 %v9215
        %v9295 = vunpack.c.l.b16 %v9218
        %v9296 = vunpack.c.l.b16 %v9222
        %v9297 = vunpack.c.l.b16 %v9225
        %v9298 = vunpack.c.l.b16 %v9229
        %v9299 = vunpack.c.l.b16 %v9232
        %v9300 = vunpack.c.l.b16 %v9236
        %v9301 = vunpack.c.l.b16 %v9239
        %v9302 = vunpack.c.l.b16 %v9243
        %v9303 = vunpack.c.l.b16 %v9246
        %v9304 = vunpack.c.l.b16 %v9250
        %v9305 = vunpack.c.l.b16 %v9253
        %v9306 = vunpack.c.l.b16 %v9257
        %v9307 = vunpack.c.l.b16 %v9260
        %v9308 = vunpack.c.l.b16 %v9264
        %v9309 = vunpack.c.l.b16 %v9267
        %v9310 = vunpack.c.l.b16 %v9271
        %v9311 = vunpack.c.l.b16 %v9274
        %v9312 = vunpack.c.l.b16 %v9278
        %v9313 = vunpack.c.l.b16 %v9281
        %v9314 = vpack.c.b16 %v9283, %v9282
        %v9315 = vpack.c.b16 %v9285, %v9284
        %v9316 = vpack.c.b16 %v9287, %v9286
        %v9317 = vpack.c.b16 %v9289, %v9288
        %v9318 = vpack.c.b16 %v9291, %v9290
        %v9319 = vpack.c.b16 %v9293, %v9292
        %v9320 = vpack.c.b16 %v9295, %v9294
        %v9321 = vpack.c.b16 %v9297, %v9296
        %v9322 = vpack.c.b16 %v9299, %v9298
        %v9323 = vpack.c.b16 %v9301, %v9300
        %v9324 = vpack.c.b16 %v9303, %v9302
        %v9325 = vpack.c.b16 %v9305, %v9304
        %v9326 = vpack.c.b16 %v9307, %v9306
        %v9327 = vpack.c.b16 %v9309, %v9308
        %v9328 = vpack.c.b16 %v9311, %v9310
        %v9329 = vpack.c.b16 %v9313, %v9312
        %v9362 = vunpack.c.l.b16 %v9106
        %v9363 = vunpack.c.l.b16 %v9107
        %v9364 = vunpack.c.l.b16 %v9108
        %v9365 = vunpack.c.l.b16 %v9109
        %v9366 = vunpack.c.l.b16 %v9110
        %v9367 = vunpack.c.l.b16 %v9111
        %v9368 = vunpack.c.l.b16 %v9112
        %v9369 = vunpack.c.l.b16 %v9113
        %v9370 = vunpack.c.l.b16 %v9114
        %v9371 = vunpack.c.l.b16 %v9115
        %v9372 = vunpack.c.l.b16 %v9116
        %v9373 = vunpack.c.l.b16 %v9117
        %v9374 = vunpack.c.l.b16 %v9118
        %v9375 = vunpack.c.l.b16 %v9119
        %v9376 = vunpack.c.l.b16 %v9120
        %v9377 = vunpack.c.l.b16 %v9121
        %v9378 = vpack.c.b16 %v9363, %v9362
        %v9379 = vpack.c.b16 %v9365, %v9364
        %v9380 = vpack.c.b16 %v9367, %v9366
        %v9381 = vpack.c.b16 %v9369, %v9368
        %v9382 = vpack.c.b16 %v9371, %v9370
        %v9383 = vpack.c.b16 %v9373, %v9372
        %v9384 = vpack.c.b16 %v9375, %v9374
        %v9385 = vpack.c.b16 %v9377, %v9376
        %9394 = vmatprep.subr.bf16.mxu0 0
        %9395 = vmatpush1.bf16.msra.mxu0 %v9378
        %9396 = vmatprep.subr.bf16.mxu0 0
        %9397 = vmatpush1.bf16.msra.mxu0 %v9379
        %9398 = vmatprep.subr.bf16.mxu0 0
        %9399 = vmatpush1.bf16.msra.mxu0 %v9380
        %9400 = vmatprep.subr.bf16.mxu0 0
        %9401 = vmatpush1.bf16.msra.mxu0 %v9381
        %9402 = vmatprep.subr.bf16.mxu0 0
        %9403 = vmatpush1.bf16.msra.mxu0 %v9382
        %9404 = vmatprep.subr.bf16.mxu0 0
        %9405 = vmatpush1.bf16.msra.mxu0 %v9383
        %9406 = vmatprep.subr.bf16.mxu0 0
        %9407 = vmatpush1.bf16.msra.mxu0 %v9384
        %9408 = vmatprep.subr.bf16.mxu0 0
        %9409 = vmatpush1.bf16.msra.mxu0 %v9385
        %9410 = vmatprep.subr.bf16.mxu0 0
        %9411 = vmatpush1.bf16.msra.mxu0 0
        %9412 = vmatprep.subr.bf16.mxu0 0
        %9413 = vmatpush1.bf16.msra.mxu0 0
        %9414 = vmatprep.subr.bf16.mxu0 0
        %9415 = vmatpush1.bf16.msra.mxu0 0
        %9416 = vmatprep.subr.bf16.mxu0 0
        %9417 = vmatpush1.bf16.msra.mxu0 0
        %9418 = vmatprep.subr.bf16.mxu0 0
        %9419 = vmatpush1.bf16.msra.mxu0 0
        %9420 = vmatprep.subr.bf16.mxu0 0
        %9421 = vmatpush1.bf16.msra.mxu0 0
        %9422 = vmatprep.subr.bf16.mxu0 0
        %9423 = vmatpush1.bf16.msra.mxu0 0
        %9424 = vmatprep.subr.bf16.mxu0 0
        %9425 = vmatpush1.bf16.msra.mxu0 0
        %9426 = vmatprep.mubr.bf16.mxu0 0
        %9427 = vmatmul.mubr.bf16.gmra.mrb[0].mxu0 %v9314
        %v9428 = vpop.f32.mrb[0].mxu0
        %v9429 = vadd.f32 0.0, %v9428
        %v9430 = vpop.f32.mrb[0].mxu0
        %v9431 = vpop.f32.mrb[0].mxu0
        %v9432 = vadd.f32 0.0, %v9431
        %v9433 = vpop.f32.mrb[0].mxu0
        %9434 = vmatprep.mubr.bf16.mxu0 0
        %9435 = vmatmul.mubr.bf16.gmra.mrb[0].mxu0 %v9315
        %v9436 = vpop.f32.mrb[0].mxu0
        %v9437 = vadd.f32 0.0, %v9436
        %v9438 = vpop.f32.mrb[0].mxu0
        %v9439 = vpop.f32.mrb[0].mxu0
        %v9440 = vadd.f32 0.0, %v9439
        %v9441 = vpop.f32.mrb[0].mxu0
        %9442 = vmatprep.mubr.bf16.mxu0 0
        %9443 = vmatmul.mubr.bf16.gmra.mrb[0].mxu0 %v9316
        %v9444 = vpop.f32.mrb[0].mxu0
        %v9445 = vadd.f32 0.0, %v9444
        %v9446 = vpop.f32.mrb[0].mxu0
        %v9447 = vpop.f32.mrb[0].mxu0
        %v9448 = vadd.f32 0.0, %v9447
        %v9449 = vpop.f32.mrb[0].mxu0
        %9450 = vmatprep.mubr.bf16.mxu0 0
        %9451 = vmatmul.mubr.bf16.gmra.mrb[0].mxu0 %v9317
        %v9452 = vpop.f32.mrb[0].mxu0
        %v9453 = vadd.f32 0.0, %v9452
        %v9454 = vpop.f32.mrb[0].mxu0
        %v9455 = vpop.f32.mrb[0].mxu0
        %v9456 = vadd.f32 0.0, %v9455
        %v9457 = vpop.f32.mrb[0].mxu0
        %9458 = vmatprep.mubr.bf16.mxu0 0
        %9459 = vmatmul.mubr.bf16.gmra.mrb[0].mxu0 %v9318
        %v9460 = vpop.f32.mrb[0].mxu0
        %v9461 = vadd.f32 0.0, %v9460
        %v9462 = vpop.f32.mrb[0].mxu0
        %v9463 = vpop.f32.mrb[0].mxu0
        %v9464 = vadd.f32 0.0, %v9463
        %v9465 = vpop.f32.mrb[0].mxu0
        %9466 = vmatprep.mubr.bf16.mxu0 0
        %9467 = vmatmul.mubr.bf16.gmra.mrb[0].mxu0 %v9319
        %v9468 = vpop.f32.mrb[0].mxu0
        %v9469 = vadd.f32 0.0, %v9468
        %v9470 = vpop.f32.mrb[0].mxu0
        %v9471 = vpop.f32.mrb[0].mxu0
        %v9472 = vadd.f32 0.0, %v9471
        %v9473 = vpop.f32.mrb[0].mxu0
        %9474 = vmatprep.mubr.bf16.mxu0 0
        %9475 = vmatmul.mubr.bf16.gmra.mrb[0].mxu0 %v9320
        %v9476 = vpop.f32.mrb[0].mxu0
        %v9477 = vadd.f32 0.0, %v9476
        %v9478 = vpop.f32.mrb[0].mxu0
        %v9479 = vpop.f32.mrb[0].mxu0
        %v9480 = vadd.f32 0.0, %v9479
        %v9481 = vpop.f32.mrb[0].mxu0
        %9482 = vmatprep.mubr.bf16.mxu0 0
        %9483 = vmatmul.mubr.bf16.gmra.mrb[0].mxu0 %v9321
        %v9484 = vpop.f32.mrb[0].mxu0
        %v9485 = vadd.f32 0.0, %v9484
        %v9486 = vpop.f32.mrb[0].mxu0
        %v9487 = vpop.f32.mrb[0].mxu0
        %v9488 = vadd.f32 0.0, %v9487
        %v9489 = vpop.f32.mrb[0].mxu0
        %9490 = vmatprep.mubr.bf16.mxu0 0
        %9491 = vmatmul.mubr.bf16.gmra.mrb[0].mxu0 %v9322
        %v9492 = vpop.f32.mrb[0].mxu0
        %v9493 = vadd.f32 0.0, %v9492
        %v9494 = vpop.f32.mrb[0].mxu0
        %v9495 = vpop.f32.mrb[0].mxu0
        %v9496 = vadd.f32 0.0, %v9495
        %v9497 = vpop.f32.mrb[0].mxu0
        %9498 = vmatprep.mubr.bf16.mxu0 0
        %9499 = vmatmul.mubr.bf16.gmra.mrb[0].mxu0 %v9323
        %v9500 = vpop.f32.mrb[0].mxu0
        %v9501 = vadd.f32 0.0, %v9500
        %v9502 = vpop.f32.mrb[0].mxu0
        %v9503 = vpop.f32.mrb[0].mxu0
        %v9504 = vadd.f32 0.0, %v9503
        %v9505 = vpop.f32.mrb[0].mxu0
        %9506 = vmatprep.mubr.bf16.mxu0 0
        %9507 = vmatmul.mubr.bf16.gmra.mrb[0].mxu0 %v9324
        %v9508 = vpop.f32.mrb[0].mxu0
        %v9509 = vadd.f32 0.0, %v9508
        %v9510 = vpop.f32.mrb[0].mxu0
        %v9511 = vpop.f32.mrb[0].mxu0
        %v9512 = vadd.f32 0.0, %v9511
        %v9513 = vpop.f32.mrb[0].mxu0
        %9514 = vmatprep.mubr.bf16.mxu0 0
        %9515 = vmatmul.mubr.bf16.gmra.mrb[0].mxu0 %v9325
        %v9516 = vpop.f32.mrb[0].mxu0
        %v9517 = vadd.f32 0.0, %v9516
        %v9518 = vpop.f32.mrb[0].mxu0
        %v9519 = vpop.f32.mrb[0].mxu0
        %v9520 = vadd.f32 0.0, %v9519
        %v9521 = vpop.f32.mrb[0].mxu0
        %9522 = vmatprep.mubr.bf16.mxu0 0
        %9523 = vmatmul.mubr.bf16.gmra.mrb[0].mxu0 %v9326
        %v9524 = vpop.f32.mrb[0].mxu0
        %v9525 = vadd.f32 0.0, %v9524
        %v9526 = vpop.f32.mrb[0].mxu0
        %v9527 = vpop.f32.mrb[0].mxu0
        %v9528 = vadd.f32 0.0, %v9527
        %v9529 = vpop.f32.mrb[0].mxu0
        %9530 = vmatprep.mubr.bf16.mxu0 0
        %9531 = vmatmul.mubr.bf16.gmra.mrb[0].mxu0 %v9327
        %v9532 = vpop.f32.mrb[0].mxu0
        %v9533 = vadd.f32 0.0, %v9532
        %v9534 = vpop.f32.mrb[0].mxu0
        %v9535 = vpop.f32.mrb[0].mxu0
        %v9536 = vadd.f32 0.0, %v9535
        %v9537 = vpop.f32.mrb[0].mxu0
        %9538 = vmatprep.mubr.bf16.mxu0 0
        %9539 = vmatmul.mubr.bf16.gmra.mrb[0].mxu0 %v9328
        %v9540 = vpop.f32.mrb[0].mxu0
        %v9541 = vadd.f32 0.0, %v9540
        %v9542 = vpop.f32.mrb[0].mxu0
        %v9543 = vpop.f32.mrb[0].mxu0
        %v9544 = vadd.f32 0.0, %v9543
        %v9545 = vpop.f32.mrb[0].mxu0
        %9546 = vmatprep.mubr.bf16.mxu0 0
        %9547 = vmatmul.mubr.bf16.gmra.mrb[0].mxu0 %v9329
        %v9548 = vpop.f32.mrb[0].mxu0
        %v9549 = vadd.f32 0.0, %v9548
        %v9550 = vpop.f32.mrb[0].mxu0
        %v9551 = vpop.f32.mrb[0].mxu0
        %v9552 = vadd.f32 0.0, %v9551
        %v9553 = vpop.f32.mrb[0].mxu0
        %9554 = vdwg.mxu0
        %v9555 = vadd.f32 %v9058, %v9429
        %v9556 = vadd.f32 %v9059, %v9432
        %v9557 = vadd.f32 %v9060, %v9437
        %v9558 = vadd.f32 %v9061, %v9440
        %v9559 = vadd.f32 %v9062, %v9445
        %v9560 = vadd.f32 %v9063, %v9448
        %v9561 = vadd.f32 %v9064, %v9453
        %v9562 = vadd.f32 %v9065, %v9456
        %v9563 = vadd.f32 %v9066, %v9461
        %v9564 = vadd.f32 %v9067, %v9464
        %v9565 = vadd.f32 %v9068, %v9469
        %v9566 = vadd.f32 %v9069, %v9472
        %v9567 = vadd.f32 %v9070, %v9477
        %v9568 = vadd.f32 %v9071, %v9480
        %v9569 = vadd.f32 %v9072, %v9485
        %v9570 = vadd.f32 %v9073, %v9488
        %v9571 = vadd.f32 %v9074, %v9493
        %v9572 = vadd.f32 %v9075, %v9496
        %v9573 = vadd.f32 %v9076, %v9501
        %v9574 = vadd.f32 %v9077, %v9504
        %v9575 = vadd.f32 %v9078, %v9509
        %v9576 = vadd.f32 %v9079, %v9512
        %v9577 = vadd.f32 %v9080, %v9517
        %v9578 = vadd.f32 %v9081, %v9520
        %v9579 = vadd.f32 %v9082, %v9525
        %v9580 = vadd.f32 %v9083, %v9528
        %v9581 = vadd.f32 %v9084, %v9533
        %v9582 = vadd.f32 %v9085, %v9536
        %v9583 = vadd.f32 %v9086, %v9541
        %v9584 = vadd.f32 %v9087, %v9544
        %v9585 = vadd.f32 %v9088, %v9549
        %v9586 = vadd.f32 %v9089, %v9552
        %s9587 = scalar_lea.vmem [#allocation3], 24
        %v9588 = vld [vmem:[%s9587] sm:$0xf]
        %v9589 = vld [vmem:[%s9587 + $0x4] sm:$0xf]
        %v9590 = vld [vmem:[%s9587 + $0xc] sm:$0xf]
        %v9591 = vld [vmem:[%s9587 + $0x10] sm:$0xf]
        %v9592 = vld [vmem:[%s9587 + $0x18] sm:$0xf]
        %v9593 = vld [vmem:[%s9587 + $0x1c] sm:$0xf]
        %v9594 = vld [vmem:[%s9587 + $0x24] sm:$0xf]
        %v9595 = vld [vmem:[%s9587 + $0x28] sm:$0xf]
        %v9596 = vld [vmem:[%s9587 + $0x30] sm:$0xf]
        %v9597 = vld [vmem:[%s9587 + $0x34] sm:$0xf]
        %v9598 = vld [vmem:[%s9587 + $0x3c] sm:$0xf]
        %v9599 = vld [vmem:[%s9587 + $0x40] sm:$0xf]
        %v9600 = vld [vmem:[%s9587 + $0x48] sm:$0xf]
        %v9601 = vld [vmem:[%s9587 + $0x4c] sm:$0xf]
        %v9602 = vld [vmem:[%s9587 + $0x54] sm:$0xf]
        %v9603 = vld [vmem:[%s9587 + $0x58] sm:$0xf]
        %v9604 = vld [vmem:[%s9587 + $0x60] sm:$0xf]
        %v9605 = vld [vmem:[%s9587 + $0x64] sm:$0xf]
        %v9606 = vld [vmem:[%s9587 + $0x6c] sm:$0xf]
        %v9607 = vld [vmem:[%s9587 + $0x70] sm:$0xf]
        %v9608 = vld [vmem:[%s9587 + $0x78] sm:$0xf]
        %v9609 = vld [vmem:[%s9587 + $0x7c] sm:$0xf]
        %v9610 = vld [vmem:[%s9587 + $0x84] sm:$0xf]
        %v9611 = vld [vmem:[%s9587 + $0x88] sm:$0xf]
        %v9612 = vld [vmem:[%s9587 + $0x90] sm:$0xf]
        %v9613 = vld [vmem:[%s9587 + $0x94] sm:$0xf]
        %v9614 = vld [vmem:[%s9587 + $0x9c] sm:$0xf]
        %v9615 = vld [vmem:[%s9587 + $0xa0] sm:$0xf]
        %v9616 = vld [vmem:[%s9587 + $0xa8] sm:$0xf]
        %v9617 = vld [vmem:[%s9587 + $0xac] sm:$0xf]
        %v9618 = vld [vmem:[%s9587 + $0xb4] sm:$0xf]
        %v9619 = vld [vmem:[%s9587 + $0xb8] sm:$0xf]
        %v9620 = vld [vmem:[#allocation9 + $0x180] sm:$0xf]
        %v9621 = vld [vmem:[#allocation9 + $0x184] sm:$0xf]
        %v9622 = vld [vmem:[#allocation9 + $0x188] sm:$0xf]
        %v9623 = vld [vmem:[#allocation9 + $0x18c] sm:$0xf]
        %v9624 = vld [vmem:[#allocation9 + $0x190] sm:$0xf]
        %v9625 = vld [vmem:[#allocation9 + $0x194] sm:$0xf]
        %v9626 = vld [vmem:[#allocation9 + $0x198] sm:$0xf]
        %v9627 = vld [vmem:[#allocation9 + $0x19c] sm:$0xf]
        %v9628 = vld [vmem:[#allocation9 + $0x1a0] sm:$0xf]
        %v9629 = vld [vmem:[#allocation9 + $0x1a4] sm:$0xf]
        %v9630 = vld [vmem:[#allocation9 + $0x1a8] sm:$0xf]
        %v9631 = vld [vmem:[#allocation9 + $0x1ac] sm:$0xf]
        %v9632 = vld [vmem:[#allocation9 + $0x1b0] sm:$0xf]
        %v9633 = vld [vmem:[#allocation9 + $0x1b4] sm:$0xf]
        %v9634 = vld [vmem:[#allocation9 + $0x1b8] sm:$0xf]
        %v9635 = vld [vmem:[#allocation9 + $0x1bc] sm:$0xf]
        %v9668 = vunpack.c.l.b16 %v9588
        %v9669 = vunpack.c.l.b16 %v9589
        %v9670 = vunpack.c.l.b16 %v9590
        %v9671 = vunpack.c.l.b16 %v9591
        %v9672 = vunpack.c.l.b16 %v9592
        %v9673 = vunpack.c.l.b16 %v9593
        %v9674 = vunpack.c.l.b16 %v9594
        %v9675 = vunpack.c.l.b16 %v9595
        %v9676 = vunpack.c.l.b16 %v9596
        %v9677 = vunpack.c.l.b16 %v9597
        %v9678 = vunpack.c.l.b16 %v9598
        %v9679 = vunpack.c.l.b16 %v9599
        %v9680 = vunpack.c.l.b16 %v9600
        %v9681 = vunpack.c.l.b16 %v9601
        %v9682 = vunpack.c.l.b16 %v9602
        %v9683 = vunpack.c.l.b16 %v9603
        %v9684 = vunpack.c.l.b16 %v9604
        %v9685 = vunpack.c.l.b16 %v9605
        %v9686 = vunpack.c.l.b16 %v9606
        %v9687 = vunpack.c.l.b16 %v9607
        %v9688 = vunpack.c.l.b16 %v9608
        %v9689 = vunpack.c.l.b16 %v9609
        %v9690 = vunpack.c.l.b16 %v9610
        %v9691 = vunpack.c.l.b16 %v9611
        %v9692 = vunpack.c.l.b16 %v9612
        %v9693 = vunpack.c.l.b16 %v9613
        %v9694 = vunpack.c.l.b16 %v9614
        %v9695 = vunpack.c.l.b16 %v9615
        %v9696 = vunpack.c.l.b16 %v9616
        %v9697 = vunpack.c.l.b16 %v9617
        %v9698 = vunpack.c.l.b16 %v9618
        %v9699 = vunpack.c.l.b16 %v9619
        %v9700 = vpack.c.b16 %v9669, %v9668
        %v9701 = vpack.c.b16 %v9671, %v9670
        %v9702 = vpack.c.b16 %v9673, %v9672
        %v9703 = vpack.c.b16 %v9675, %v9674
        %v9704 = vpack.c.b16 %v9677, %v9676
        %v9705 = vpack.c.b16 %v9679, %v9678
        %v9706 = vpack.c.b16 %v9681, %v9680
        %v9707 = vpack.c.b16 %v9683, %v9682
        %v9708 = vpack.c.b16 %v9685, %v9684
        %v9709 = vpack.c.b16 %v9687, %v9686
        %v9710 = vpack.c.b16 %v9689, %v9688
        %v9711 = vpack.c.b16 %v9691, %v9690
        %v9712 = vpack.c.b16 %v9693, %v9692
        %v9713 = vpack.c.b16 %v9695, %v9694
        %v9714 = vpack.c.b16 %v9697, %v9696
        %v9715 = vpack.c.b16 %v9699, %v9698
        %v9748 = vunpack.c.l.b16 %v9620
        %v9749 = vunpack.c.l.b16 %v9621
        %v9750 = vunpack.c.l.b16 %v9622
        %v9751 = vunpack.c.l.b16 %v9623
        %v9752 = vunpack.c.l.b16 %v9624
        %v9753 = vunpack.c.l.b16 %v9625
        %v9754 = vunpack.c.l.b16 %v9626
        %v9755 = vunpack.c.l.b16 %v9627
        %v9756 = vunpack.c.l.b16 %v9628
        %v9757 = vunpack.c.l.b16 %v9629
        %v9758 = vunpack.c.l.b16 %v9630
        %v9759 = vunpack.c.l.b16 %v9631
        %v9760 = vunpack.c.l.b16 %v9632
        %v9761 = vunpack.c.l.b16 %v9633
        %v9762 = vunpack.c.l.b16 %v9634
        %v9763 = vunpack.c.l.b16 %v9635
        %v9764 = vpack.c.b16 %v9749, %v9748
        %v9765 = vpack.c.b16 %v9751, %v9750
        %v9766 = vpack.c.b16 %v9753, %v9752
        %v9767 = vpack.c.b16 %v9755, %v9754
        %v9768 = vpack.c.b16 %v9757, %v9756
        %v9769 = vpack.c.b16 %v9759, %v9758
        %v9770 = vpack.c.b16 %v9761, %v9760
        %v9771 = vpack.c.b16 %v9763, %v9762
        %9780 = vmatprep.subr.bf16.mxu0 0
        %9781 = vmatpush1.bf16.msra.mxu0 %v9764
        %9782 = vmatprep.subr.bf16.mxu0 0
        %9783 = vmatpush1.bf16.msra.mxu0 %v9765
        %9784 = vmatprep.subr.bf16.mxu0 0
        %9785 = vmatpush1.bf16.msra.mxu0 %v9766
        %9786 = vmatprep.subr.bf16.mxu0 0
        %9787 = vmatpush1.bf16.msra.mxu0 %v9767
        %9788 = vmatprep.subr.bf16.mxu0 0
        %9789 = vmatpush1.bf16.msra.mxu0 %v9768
        %9790 = vmatprep.subr.bf16.mxu0 0
        %9791 = vmatpush1.bf16.msra.mxu0 %v9769
        %9792 = vmatprep.subr.bf16.mxu0 0
        %9793 = vmatpush1.bf16.msra.mxu0 %v9770
        %9794 = vmatprep.subr.bf16.mxu0 0
        %9795 = vmatpush1.bf16.msra.mxu0 %v9771
        %9796 = vmatprep.subr.bf16.mxu0 0
        %9797 = vmatpush1.bf16.msra.mxu0 0
        %9798 = vmatprep.subr.bf16.mxu0 0
        %9799 = vmatpush1.bf16.msra.mxu0 0
        %9800 = vmatprep.subr.bf16.mxu0 0
        %9801 = vmatpush1.bf16.msra.mxu0 0
        %9802 = vmatprep.subr.bf16.mxu0 0
        %9803 = vmatpush1.bf16.msra.mxu0 0
        %9804 = vmatprep.subr.bf16.mxu0 0
        %9805 = vmatpush1.bf16.msra.mxu0 0
        %9806 = vmatprep.subr.bf16.mxu0 0
        %9807 = vmatpush1.bf16.msra.mxu0 0
        %9808 = vmatprep.subr.bf16.mxu0 0
        %9809 = vmatpush1.bf16.msra.mxu0 0
        %9810 = vmatprep.subr.bf16.mxu0 0
        %9811 = vmatpush1.bf16.msra.mxu0 0
        %9812 = vmatprep.mubr.bf16.mxu0 0
        %9813 = vmatmul.mubr.bf16.gmra.mrb[0].mxu0 %v9700
        %v9814 = vpop.f32.mrb[0].mxu0
        %v9815 = vadd.f32 0.0, %v9814
        %v9816 = vpop.f32.mrb[0].mxu0
        %v9817 = vpop.f32.mrb[0].mxu0
        %v9818 = vadd.f32 0.0, %v9817
        %v9819 = vpop.f32.mrb[0].mxu0
        %9820 = vmatprep.mubr.bf16.mxu0 0
        %9821 = vmatmul.mubr.bf16.gmra.mrb[0].mxu0 %v9701
        %v9822 = vpop.f32.mrb[0].mxu0
        %v9823 = vadd.f32 0.0, %v9822
        %v9824 = vpop.f32.mrb[0].mxu0
        %v9825 = vpop.f32.mrb[0].mxu0
        %v9826 = vadd.f32 0.0, %v9825
        %v9827 = vpop.f32.mrb[0].mxu0
        %9828 = vmatprep.mubr.bf16.mxu0 0
        %9829 = vmatmul.mubr.bf16.gmra.mrb[0].mxu0 %v9702
        %v9830 = vpop.f32.mrb[0].mxu0
        %v9831 = vadd.f32 0.0, %v9830
        %v9832 = vpop.f32.mrb[0].mxu0
        %v9833 = vpop.f32.mrb[0].mxu0
        %v9834 = vadd.f32 0.0, %v9833
        %v9835 = vpop.f32.mrb[0].mxu0
        %9836 = vmatprep.mubr.bf16.mxu0 0
        %9837 = vmatmul.mubr.bf16.gmra.mrb[0].mxu0 %v9703
        %v9838 = vpop.f32.mrb[0].mxu0
        %v9839 = vadd.f32 0.0, %v9838
        %v9840 = vpop.f32.mrb[0].mxu0
        %v9841 = vpop.f32.mrb[0].mxu0
        %v9842 = vadd.f32 0.0, %v9841
        %v9843 = vpop.f32.mrb[0].mxu0
        %9844 = vmatprep.mubr.bf16.mxu0 0
        %9845 = vmatmul.mubr.bf16.gmra.mrb[0].mxu0 %v9704
        %v9846 = vpop.f32.mrb[0].mxu0
        %v9847 = vadd.f32 0.0, %v9846
        %v9848 = vpop.f32.mrb[0].mxu0
        %v9849 = vpop.f32.mrb[0].mxu0
        %v9850 = vadd.f32 0.0, %v9849
        %v9851 = vpop.f32.mrb[0].mxu0
        %9852 = vmatprep.mubr.bf16.mxu0 0
        %9853 = vmatmul.mubr.bf16.gmra.mrb[0].mxu0 %v9705
        %v9854 = vpop.f32.mrb[0].mxu0
        %v9855 = vadd.f32 0.0, %v9854
        %v9856 = vpop.f32.mrb[0].mxu0
        %v9857 = vpop.f32.mrb[0].mxu0
        %v9858 = vadd.f32 0.0, %v9857
        %v9859 = vpop.f32.mrb[0].mxu0
        %9860 = vmatprep.mubr.bf16.mxu0 0
        %9861 = vmatmul.mubr.bf16.gmra.mrb[0].mxu0 %v9706
        %v9862 = vpop.f32.mrb[0].mxu0
        %v9863 = vadd.f32 0.0, %v9862
        %v9864 = vpop.f32.mrb[0].mxu0
        %v9865 = vpop.f32.mrb[0].mxu0
        %v9866 = vadd.f32 0.0, %v9865
        %v9867 = vpop.f32.mrb[0].mxu0
        %9868 = vmatprep.mubr.bf16.mxu0 0
        %9869 = vmatmul.mubr.bf16.gmra.mrb[0].mxu0 %v9707
        %v9870 = vpop.f32.mrb[0].mxu0
        %v9871 = vadd.f32 0.0, %v9870
        %v9872 = vpop.f32.mrb[0].mxu0
        %v9873 = vpop.f32.mrb[0].mxu0
        %v9874 = vadd.f32 0.0, %v9873
        %v9875 = vpop.f32.mrb[0].mxu0
        %9876 = vmatprep.mubr.bf16.mxu0 0
        %9877 = vmatmul.mubr.bf16.gmra.mrb[0].mxu0 %v9708
        %v9878 = vpop.f32.mrb[0].mxu0
        %v9879 = vadd.f32 0.0, %v9878
        %v9880 = vpop.f32.mrb[0].mxu0
        %v9881 = vpop.f32.mrb[0].mxu0
        %v9882 = vadd.f32 0.0, %v9881
        %v9883 = vpop.f32.mrb[0].mxu0
        %9884 = vmatprep.mubr.bf16.mxu0 0
        %9885 = vmatmul.mubr.bf16.gmra.mrb[0].mxu0 %v9709
        %v9886 = vpop.f32.mrb[0].mxu0
        %v9887 = vadd.f32 0.0, %v9886
        %v9888 = vpop.f32.mrb[0].mxu0
        %v9889 = vpop.f32.mrb[0].mxu0
        %v9890 = vadd.f32 0.0, %v9889
        %v9891 = vpop.f32.mrb[0].mxu0
        %9892 = vmatprep.mubr.bf16.mxu0 0
        %9893 = vmatmul.mubr.bf16.gmra.mrb[0].mxu0 %v9710
        %v9894 = vpop.f32.mrb[0].mxu0
        %v9895 = vadd.f32 0.0, %v9894
        %v9896 = vpop.f32.mrb[0].mxu0
        %v9897 = vpop.f32.mrb[0].mxu0
        %v9898 = vadd.f32 0.0, %v9897
        %v9899 = vpop.f32.mrb[0].mxu0
        %9900 = vmatprep.mubr.bf16.mxu0 0
        %9901 = vmatmul.mubr.bf16.gmra.mrb[0].mxu0 %v9711
        %v9902 = vpop.f32.mrb[0].mxu0
        %v9903 = vadd.f32 0.0, %v9902
        %v9904 = vpop.f32.mrb[0].mxu0
        %v9905 = vpop.f32.mrb[0].mxu0
        %v9906 = vadd.f32 0.0, %v9905
        %v9907 = vpop.f32.mrb[0].mxu0
        %9908 = vmatprep.mubr.bf16.mxu0 0
        %9909 = vmatmul.mubr.bf16.gmra.mrb[0].mxu0 %v9712
        %v9910 = vpop.f32.mrb[0].mxu0
        %v9911 = vadd.f32 0.0, %v9910
        %v9912 = vpop.f32.mrb[0].mxu0
        %v9913 = vpop.f32.mrb[0].mxu0
        %v9914 = vadd.f32 0.0, %v9913
        %v9915 = vpop.f32.mrb[0].mxu0
        %9916 = vmatprep.mubr.bf16.mxu0 0
        %9917 = vmatmul.mubr.bf16.gmra.mrb[0].mxu0 %v9713
        %v9918 = vpop.f32.mrb[0].mxu0
        %v9919 = vadd.f32 0.0, %v9918
        %v9920 = vpop.f32.mrb[0].mxu0
        %v9921 = vpop.f32.mrb[0].mxu0
        %v9922 = vadd.f32 0.0, %v9921
        %v9923 = vpop.f32.mrb[0].mxu0
        %9924 = vmatprep.mubr.bf16.mxu0 0
        %9925 = vmatmul.mubr.bf16.gmra.mrb[0].mxu0 %v9714
        %v9926 = vpop.f32.mrb[0].mxu0
        %v9927 = vadd.f32 0.0, %v9926
        %v9928 = vpop.f32.mrb[0].mxu0
        %v9929 = vpop.f32.mrb[0].mxu0
        %v9930 = vadd.f32 0.0, %v9929
        %v9931 = vpop.f32.mrb[0].mxu0
        %9932 = vmatprep.mubr.bf16.mxu0 0
        %9933 = vmatmul.mubr.bf16.gmra.mrb[0].mxu0 %v9715
        %v9934 = vpop.f32.mrb[0].mxu0
        %v9935 = vadd.f32 0.0, %v9934
        %v9936 = vpop.f32.mrb[0].mxu0
        %v9937 = vpop.f32.mrb[0].mxu0
        %v9938 = vadd.f32 0.0, %v9937
        %v9939 = vpop.f32.mrb[0].mxu0
        %9940 = vdwg.mxu0
        %v9941 = vadd.f32 %v9555, %v9815
        %v9942 = vadd.f32 %v9556, %v9818
        %v9943 = vadd.f32 %v9557, %v9823
        %v9944 = vadd.f32 %v9558, %v9826
        %v9945 = vadd.f32 %v9559, %v9831
        %v9946 = vadd.f32 %v9560, %v9834
        %v9947 = vadd.f32 %v9561, %v9839
        %v9948 = vadd.f32 %v9562, %v9842
        %v9949 = vadd.f32 %v9563, %v9847
        %v9950 = vadd.f32 %v9564, %v9850
        %v9951 = vadd.f32 %v9565, %v9855
        %v9952 = vadd.f32 %v9566, %v9858
        %v9953 = vadd.f32 %v9567, %v9863
        %v9954 = vadd.f32 %v9568, %v9866
        %v9955 = vadd.f32 %v9569, %v9871
        %v9956 = vadd.f32 %v9570, %v9874
        %v9957 = vadd.f32 %v9571, %v9879
        %v9958 = vadd.f32 %v9572, %v9882
        %v9959 = vadd.f32 %v9573, %v9887
        %v9960 = vadd.f32 %v9574, %v9890
        %v9961 = vadd.f32 %v9575, %v9895
        %v9962 = vadd.f32 %v9576, %v9898
        %v9963 = vadd.f32 %v9577, %v9903
        %v9964 = vadd.f32 %v9578, %v9906
        %v9965 = vadd.f32 %v9579, %v9911
        %v9966 = vadd.f32 %v9580, %v9914
        %v9967 = vadd.f32 %v9581, %v9919
        %v9968 = vadd.f32 %v9582, %v9922
        %v9969 = vadd.f32 %v9583, %v9927
        %v9970 = vadd.f32 %v9584, %v9930
        %v9971 = vadd.f32 %v9585, %v9935
        %v9972 = vadd.f32 %v9586, %v9938
        %v9973 = vld [vmem:[%s9587] sm:$0xf]
        %v9974 = vld [vmem:[%s9587 + $0x4] sm:$0xf]
        %v9975 = vld [vmem:[%s9587 + $0x8] sm:$0x1]
        %v9976 = vld [vmem:[%s9587 + $0xc] sm:$0xf]
        %v9977 = vld [vmem:[%s9587 + $0x10] sm:$0xf]
        %v9978 = vld [vmem:[%s9587 + $0x14] sm:$0x1]
        %v9979 = vld [vmem:[%s9587 + $0x18] sm:$0xf]
        %v9980 = vld [vmem:[%s9587 + $0x1c] sm:$0xf]
        %v9981 = vld [vmem:[%s9587 + $0x20] sm:$0x1]
        %v9982 = vld [vmem:[%s9587 + $0x24] sm:$0xf]
        %v9983 = vld [vmem:[%s9587 + $0x28] sm:$0xf]
        %v9984 = vld [vmem:[%s9587 + $0x2c] sm:$0x1]
        %v9985 = vld [vmem:[%s9587 + $0x30] sm:$0xf]
        %v9986 = vld [vmem:[%s9587 + $0x34] sm:$0xf]
        %v9987 = vld [vmem:[%s9587 + $0x38] sm:$0x1]
        %v9988 = vld [vmem:[%s9587 + $0x3c] sm:$0xf]
        %v9989 = vld [vmem:[%s9587 + $0x40] sm:$0xf]
        %v9990 = vld [vmem:[%s9587 + $0x44] sm:$0x1]
        %v9991 = vld [vmem:[%s9587 + $0x48] sm:$0xf]
        %v9992 = vld [vmem:[%s9587 + $0x4c] sm:$0xf]
        %v9993 = vld [vmem:[%s9587 + $0x50] sm:$0x1]
        %v9994 = vld [vmem:[%s9587 + $0x54] sm:$0xf]
        %v9995 = vld [vmem:[%s9587 + $0x58] sm:$0xf]
        %v9996 = vld [vmem:[%s9587 + $0x5c] sm:$0x1]
        %v9997 = vld [vmem:[%s9587 + $0x60] sm:$0xf]
        %v9998 = vld [vmem:[%s9587 + $0x64] sm:$0xf]
        %v9999 = vld [vmem:[%s9587 + $0x68] sm:$0x1]
        %v10000 = vld [vmem:[%s9587 + $0x6c] sm:$0xf]
        %v10001 = vld [vmem:[%s9587 + $0x70] sm:$0xf]
        %v10002 = vld [vmem:[%s9587 + $0x74] sm:$0x1]
        %v10003 = vld [vmem:[%s9587 + $0x78] sm:$0xf]
        %v10004 = vld [vmem:[%s9587 + $0x7c] sm:$0xf]
        %v10005 = vld [vmem:[%s9587 + $0x80] sm:$0x1]
        %v10006 = vld [vmem:[%s9587 + $0x84] sm:$0xf]
        %v10007 = vld [vmem:[%s9587 + $0x88] sm:$0xf]
        %v10008 = vld [vmem:[%s9587 + $0x8c] sm:$0x1]
        %v10009 = vld [vmem:[%s9587 + $0x90] sm:$0xf]
        %v10010 = vld [vmem:[%s9587 + $0x94] sm:$0xf]
        %v10011 = vld [vmem:[%s9587 + $0x98] sm:$0x1]
        %v10012 = vld [vmem:[%s9587 + $0x9c] sm:$0xf]
        %v10013 = vld [vmem:[%s9587 + $0xa0] sm:$0xf]
        %v10014 = vld [vmem:[%s9587 + $0xa4] sm:$0x1]
        %v10015 = vld [vmem:[%s9587 + $0xa8] sm:$0xf]
        %v10016 = vld [vmem:[%s9587 + $0xac] sm:$0xf]
        %v10017 = vld [vmem:[%s9587 + $0xb0] sm:$0x1]
        %v10018 = vld [vmem:[%s9587 + $0xb4] sm:$0xf]
        %v10019 = vld [vmem:[%s9587 + $0xb8] sm:$0xf]
        %v10020 = vld [vmem:[%s9587 + $0xbc] sm:$0x1]
        %v10021 = vld [vmem:[#allocation9 + $0x1c0] sm:$0xf]
        %v10022 = vld [vmem:[#allocation9 + $0x1c4] sm:$0xf]
        %v10023 = vld [vmem:[#allocation9 + $0x1c8] sm:$0xf]
        %v10024 = vld [vmem:[#allocation9 + $0x1cc] sm:$0xf]
        %v10025 = vld [vmem:[#allocation9 + $0x1d0] sm:$0xf]
        %v10026 = vld [vmem:[#allocation9 + $0x1d4] sm:$0xf]
        %v10027 = vld [vmem:[#allocation9 + $0x1d8] sm:$0xf]
        %v10028 = vld [vmem:[#allocation9 + $0x1dc] sm:$0xf]
        %v10029 = vld [vmem:[#allocation9 + $0x1e0] sm:$0xf]
        %v10030 = vld [vmem:[#allocation9 + $0x1e4] sm:$0xf]
        %v10031 = vld [vmem:[#allocation9 + $0x1e8] sm:$0xf]
        %v10032 = vld [vmem:[#allocation9 + $0x1ec] sm:$0xf]
        %v10033 = vld [vmem:[#allocation9 + $0x1f0] sm:$0xf]
        %v10034 = vld [vmem:[#allocation9 + $0x1f4] sm:$0xf]
        %v10035 = vld [vmem:[#allocation9 + $0x1f8] sm:$0xf]
        %v10036 = vld [vmem:[#allocation9 + $0x1fc] sm:$0xf]
        %v10038 = vshrl.u32 %v9973, 16
        %v10040 = vrot.slane %v10038, 4
        %v10041 = vshll.u32 %v9973, 16
        %v10043 = vrot.slane %v10041, 5
        %v10044 = vor.u32 %v10040, %v10043
        %v10045 = vrot.slane %v10044, 4
        %v10047 = vshll.u32 %v9974, 16
        %v10049 = vrot.slane %v10047, 5
        %v10050 = vsel %vm963, %v10045, %v10049
        %v10051 = vshrl.u32 %v9974, 16
        %v10053 = vrot.slane %v10051, 4
        %v10054 = vor.u32 %v10053, %v10049
        %v10055 = vrot.slane %v10054, 4
        %v10057 = vshll.u32 %v9975, 16
        %v10059 = vrot.slane %v10057, 5
        %v10060 = vsel %vm963, %v10055, %v10059
        %v10062 = vshrl.u32 %v9976, 16
        %v10064 = vrot.slane %v10062, 4
        %v10065 = vshll.u32 %v9976, 16
        %v10067 = vrot.slane %v10065, 5
        %v10068 = vor.u32 %v10064, %v10067
        %v10069 = vrot.slane %v10068, 4
        %v10071 = vshll.u32 %v9977, 16
        %v10073 = vrot.slane %v10071, 5
        %v10074 = vsel %vm963, %v10069, %v10073
        %v10075 = vshrl.u32 %v9977, 16
        %v10077 = vrot.slane %v10075, 4
        %v10078 = vor.u32 %v10077, %v10073
        %v10079 = vrot.slane %v10078, 4
        %v10081 = vshll.u32 %v9978, 16
        %v10083 = vrot.slane %v10081, 5
        %v10084 = vsel %vm963, %v10079, %v10083
        %v10086 = vshrl.u32 %v9979, 16
        %v10088 = vrot.slane %v10086, 4
        %v10089 = vshll.u32 %v9979, 16
        %v10091 = vrot.slane %v10089, 5
        %v10092 = vor.u32 %v10088, %v10091
        %v10093 = vrot.slane %v10092, 4
        %v10095 = vshll.u32 %v9980, 16
        %v10097 = vrot.slane %v10095, 5
        %v10098 = vsel %vm963, %v10093, %v10097
        %v10099 = vshrl.u32 %v9980, 16
        %v10101 = vrot.slane %v10099, 4
        %v10102 = vor.u32 %v10101, %v10097
        %v10103 = vrot.slane %v10102, 4
        %v10105 = vshll.u32 %v9981, 16
        %v10107 = vrot.slane %v10105, 5
        %v10108 = vsel %vm963, %v10103, %v10107
        %v10110 = vshrl.u32 %v9982, 16
        %v10112 = vrot.slane %v10110, 4
        %v10113 = vshll.u32 %v9982, 16
        %v10115 = vrot.slane %v10113, 5
        %v10116 = vor.u32 %v10112, %v10115
        %v10117 = vrot.slane %v10116, 4
        %v10119 = vshll.u32 %v9983, 16
        %v10121 = vrot.slane %v10119, 5
        %v10122 = vsel %vm963, %v10117, %v10121
        %v10123 = vshrl.u32 %v9983, 16
        %v10125 = vrot.slane %v10123, 4
        %v10126 = vor.u32 %v10125, %v10121
        %v10127 = vrot.slane %v10126, 4
        %v10129 = vshll.u32 %v9984, 16
        %v10131 = vrot.slane %v10129, 5
        %v10132 = vsel %vm963, %v10127, %v10131
        %v10134 = vshrl.u32 %v9985, 16
        %v10136 = vrot.slane %v10134, 4
        %v10137 = vshll.u32 %v9985, 16
        %v10139 = vrot.slane %v10137, 5
        %v10140 = vor.u32 %v10136, %v10139
        %v10141 = vrot.slane %v10140, 4
        %v10143 = vshll.u32 %v9986, 16
        %v10145 = vrot.slane %v10143, 5
        %v10146 = vsel %vm963, %v10141, %v10145
        %v10147 = vshrl.u32 %v9986, 16
        %v10149 = vrot.slane %v10147, 4
        %v10150 = vor.u32 %v10149, %v10145
        %v10151 = vrot.slane %v10150, 4
        %v10153 = vshll.u32 %v9987, 16
        %v10155 = vrot.slane %v10153, 5
        %v10156 = vsel %vm963, %v10151, %v10155
        %v10158 = vshrl.u32 %v9988, 16
        %v10160 = vrot.slane %v10158, 4
        %v10161 = vshll.u32 %v9988, 16
        %v10163 = vrot.slane %v10161, 5
        %v10164 = vor.u32 %v10160, %v10163
        %v10165 = vrot.slane %v10164, 4
        %v10167 = vshll.u32 %v9989, 16
        %v10169 = vrot.slane %v10167, 5
        %v10170 = vsel %vm963, %v10165, %v10169
        %v10171 = vshrl.u32 %v9989, 16
        %v10173 = vrot.slane %v10171, 4
        %v10174 = vor.u32 %v10173, %v10169
        %v10175 = vrot.slane %v10174, 4
        %v10177 = vshll.u32 %v9990, 16
        %v10179 = vrot.slane %v10177, 5
        %v10180 = vsel %vm963, %v10175, %v10179
        %v10182 = vshrl.u32 %v9991, 16
        %v10184 = vrot.slane %v10182, 4
        %v10185 = vshll.u32 %v9991, 16
        %v10187 = vrot.slane %v10185, 5
        %v10188 = vor.u32 %v10184, %v10187
        %v10189 = vrot.slane %v10188, 4
        %v10191 = vshll.u32 %v9992, 16
        %v10193 = vrot.slane %v10191, 5
        %v10194 = vsel %vm963, %v10189, %v10193
        %v10195 = vshrl.u32 %v9992, 16
        %v10197 = vrot.slane %v10195, 4
        %v10198 = vor.u32 %v10197, %v10193
        %v10199 = vrot.slane %v10198, 4
        %v10201 = vshll.u32 %v9993, 16
        %v10203 = vrot.slane %v10201, 5
        %v10204 = vsel %vm963, %v10199, %v10203
        %v10206 = vshrl.u32 %v9994, 16
        %v10208 = vrot.slane %v10206, 4
        %v10209 = vshll.u32 %v9994, 16
        %v10211 = vrot.slane %v10209, 5
        %v10212 = vor.u32 %v10208, %v10211
        %v10213 = vrot.slane %v10212, 4
        %v10215 = vshll.u32 %v9995, 16
        %v10217 = vrot.slane %v10215, 5
        %v10218 = vsel %vm963, %v10213, %v10217
        %v10219 = vshrl.u32 %v9995, 16
        %v10221 = vrot.slane %v10219, 4
        %v10222 = vor.u32 %v10221, %v10217
        %v10223 = vrot.slane %v10222, 4
        %v10225 = vshll.u32 %v9996, 16
        %v10227 = vrot.slane %v10225, 5
        %v10228 = vsel %vm963, %v10223, %v10227
        %v10230 = vshrl.u32 %v9997, 16
        %v10232 = vrot.slane %v10230, 4
        %v10233 = vshll.u32 %v9997, 16
        %v10235 = vrot.slane %v10233, 5
        %v10236 = vor.u32 %v10232, %v10235
        %v10237 = vrot.slane %v10236, 4
        %v10239 = vshll.u32 %v9998, 16
        %v10241 = vrot.slane %v10239, 5
        %v10242 = vsel %vm963, %v10237, %v10241
        %v10243 = vshrl.u32 %v9998, 16
        %v10245 = vrot.slane %v10243, 4
        %v10246 = vor.u32 %v10245, %v10241
        %v10247 = vrot.slane %v10246, 4
        %v10249 = vshll.u32 %v9999, 16
        %v10251 = vrot.slane %v10249, 5
        %v10252 = vsel %vm963, %v10247, %v10251
        %v10254 = vshrl.u32 %v10000, 16
        %v10256 = vrot.slane %v10254, 4
        %v10257 = vshll.u32 %v10000, 16
        %v10259 = vrot.slane %v10257, 5
        %v10260 = vor.u32 %v10256, %v10259
        %v10261 = vrot.slane %v10260, 4
        %v10263 = vshll.u32 %v10001, 16
        %v10265 = vrot.slane %v10263, 5
        %v10266 = vsel %vm963, %v10261, %v10265
        %v10267 = vshrl.u32 %v10001, 16
        %v10269 = vrot.slane %v10267, 4
        %v10270 = vor.u32 %v10269, %v10265
        %v10271 = vrot.slane %v10270, 4
        %v10273 = vshll.u32 %v10002, 16
        %v10275 = vrot.slane %v10273, 5
        %v10276 = vsel %vm963, %v10271, %v10275
        %v10278 = vshrl.u32 %v10003, 16
        %v10280 = vrot.slane %v10278, 4
        %v10281 = vshll.u32 %v10003, 16
        %v10283 = vrot.slane %v10281, 5
        %v10284 = vor.u32 %v10280, %v10283
        %v10285 = vrot.slane %v10284, 4
        %v10287 = vshll.u32 %v10004, 16
        %v10289 = vrot.slane %v10287, 5
        %v10290 = vsel %vm963, %v10285, %v10289
        %v10291 = vshrl.u32 %v10004, 16
        %v10293 = vrot.slane %v10291, 4
        %v10294 = vor.u32 %v10293, %v10289
        %v10295 = vrot.slane %v10294, 4
        %v10297 = vshll.u32 %v10005, 16
        %v10299 = vrot.slane %v10297, 5
        %v10300 = vsel %vm963, %v10295, %v10299
        %v10302 = vshrl.u32 %v10006, 16
        %v10304 = vrot.slane %v10302, 4
        %v10305 = vshll.u32 %v10006, 16
        %v10307 = vrot.slane %v10305, 5
        %v10308 = vor.u32 %v10304, %v10307
        %v10309 = vrot.slane %v10308, 4
        %v10311 = vshll.u32 %v10007, 16
        %v10313 = vrot.slane %v10311, 5
        %v10314 = vsel %vm963, %v10309, %v10313
        %v10315 = vshrl.u32 %v10007, 16
        %v10317 = vrot.slane %v10315, 4
        %v10318 = vor.u32 %v10317, %v10313
        %v10319 = vrot.slane %v10318, 4
        %v10321 = vshll.u32 %v10008, 16
        %v10323 = vrot.slane %v10321, 5
        %v10324 = vsel %vm963, %v10319, %v10323
        %v10326 = vshrl.u32 %v10009, 16
        %v10328 = vrot.slane %v10326, 4
        %v10329 = vshll.u32 %v10009, 16
        %v10331 = vrot.slane %v10329, 5
        %v10332 = vor.u32 %v10328, %v10331
        %v10333 = vrot.slane %v10332, 4
        %v10335 = vshll.u32 %v10010, 16
        %v10337 = vrot.slane %v10335, 5
        %v10338 = vsel %vm963, %v10333, %v10337
        %v10339 = vshrl.u32 %v10010, 16
        %v10341 = vrot.slane %v10339, 4
        %v10342 = vor.u32 %v10341, %v10337
        %v10343 = vrot.slane %v10342, 4
        %v10345 = vshll.u32 %v10011, 16
        %v10347 = vrot.slane %v10345, 5
        %v10348 = vsel %vm963, %v10343, %v10347
        %v10350 = vshrl.u32 %v10012, 16
        %v10352 = vrot.slane %v10350, 4
        %v10353 = vshll.u32 %v10012, 16
        %v10355 = vrot.slane %v10353, 5
        %v10356 = vor.u32 %v10352, %v10355
        %v10357 = vrot.slane %v10356, 4
        %v10359 = vshll.u32 %v10013, 16
        %v10361 = vrot.slane %v10359, 5
        %v10362 = vsel %vm963, %v10357, %v10361
        %v10363 = vshrl.u32 %v10013, 16
        %v10365 = vrot.slane %v10363, 4
        %v10366 = vor.u32 %v10365, %v10361
        %v10367 = vrot.slane %v10366, 4
        %v10369 = vshll.u32 %v10014, 16
        %v10371 = vrot.slane %v10369, 5
        %v10372 = vsel %vm963, %v10367, %v10371
        %v10374 = vshrl.u32 %v10015, 16
        %v10376 = vrot.slane %v10374, 4
        %v10377 = vshll.u32 %v10015, 16
        %v10379 = vrot.slane %v10377, 5
        %v10380 = vor.u32 %v10376, %v10379
        %v10381 = vrot.slane %v10380, 4
        %v10383 = vshll.u32 %v10016, 16
        %v10385 = vrot.slane %v10383, 5
        %v10386 = vsel %vm963, %v10381, %v10385
        %v10387 = vshrl.u32 %v10016, 16
        %v10389 = vrot.slane %v10387, 4
        %v10390 = vor.u32 %v10389, %v10385
        %v10391 = vrot.slane %v10390, 4
        %v10393 = vshll.u32 %v10017, 16
        %v10395 = vrot.slane %v10393, 5
        %v10396 = vsel %vm963, %v10391, %v10395
        %v10398 = vshrl.u32 %v10018, 16
        %v10400 = vrot.slane %v10398, 4
        %v10401 = vshll.u32 %v10018, 16
        %v10403 = vrot.slane %v10401, 5
        %v10404 = vor.u32 %v10400, %v10403
        %v10405 = vrot.slane %v10404, 4
        %v10407 = vshll.u32 %v10019, 16
        %v10409 = vrot.slane %v10407, 5
        %v10410 = vsel %vm963, %v10405, %v10409
        %v10411 = vshrl.u32 %v10019, 16
        %v10413 = vrot.slane %v10411, 4
        %v10414 = vor.u32 %v10413, %v10409
        %v10415 = vrot.slane %v10414, 4
        %v10417 = vshll.u32 %v10020, 16
        %v10419 = vrot.slane %v10417, 5
        %v10420 = vsel %vm963, %v10415, %v10419
        %v10421 = vunpack.c.l.b16 %v10050
        %v10422 = vunpack.c.l.b16 %v10060
        %v10423 = vunpack.c.l.b16 %v10074
        %v10424 = vunpack.c.l.b16 %v10084
        %v10425 = vunpack.c.l.b16 %v10098
        %v10426 = vunpack.c.l.b16 %v10108
        %v10427 = vunpack.c.l.b16 %v10122
        %v10428 = vunpack.c.l.b16 %v10132
        %v10429 = vunpack.c.l.b16 %v10146
        %v10430 = vunpack.c.l.b16 %v10156
        %v10431 = vunpack.c.l.b16 %v10170
        %v10432 = vunpack.c.l.b16 %v10180
        %v10433 = vunpack.c.l.b16 %v10194
        %v10434 = vunpack.c.l.b16 %v10204
        %v10435 = vunpack.c.l.b16 %v10218
        %v10436 = vunpack.c.l.b16 %v10228
        %v10437 = vunpack.c.l.b16 %v10242
        %v10438 = vunpack.c.l.b16 %v10252
        %v10439 = vunpack.c.l.b16 %v10266
        %v10440 = vunpack.c.l.b16 %v10276
        %v10441 = vunpack.c.l.b16 %v10290
        %v10442 = vunpack.c.l.b16 %v10300
        %v10443 = vunpack.c.l.b16 %v10314
        %v10444 = vunpack.c.l.b16 %v10324
        %v10445 = vunpack.c.l.b16 %v10338
        %v10446 = vunpack.c.l.b16 %v10348
        %v10447 = vunpack.c.l.b16 %v10362
        %v10448 = vunpack.c.l.b16 %v10372
        %v10449 = vunpack.c.l.b16 %v10386
        %v10450 = vunpack.c.l.b16 %v10396
        %v10451 = vunpack.c.l.b16 %v10410
        %v10452 = vunpack.c.l.b16 %v10420
        %v10453 = vpack.c.b16 %v10422, %v10421
        %v10454 = vpack.c.b16 %v10424, %v10423
        %v10455 = vpack.c.b16 %v10426, %v10425
        %v10456 = vpack.c.b16 %v10428, %v10427
        %v10457 = vpack.c.b16 %v10430, %v10429
        %v10458 = vpack.c.b16 %v10432, %v10431
        %v10459 = vpack.c.b16 %v10434, %v10433
        %v10460 = vpack.c.b16 %v10436, %v10435
        %v10461 = vpack.c.b16 %v10438, %v10437
        %v10462 = vpack.c.b16 %v10440, %v10439
        %v10463 = vpack.c.b16 %v10442, %v10441
        %v10464 = vpack.c.b16 %v10444, %v10443
        %v10465 = vpack.c.b16 %v10446, %v10445
        %v10466 = vpack.c.b16 %v10448, %v10447
        %v10467 = vpack.c.b16 %v10450, %v10449
        %v10468 = vpack.c.b16 %v10452, %v10451
        %v10501 = vunpack.c.l.b16 %v10021
        %v10502 = vunpack.c.l.b16 %v10022
        %v10503 = vunpack.c.l.b16 %v10023
        %v10504 = vunpack.c.l.b16 %v10024
        %v10505 = vunpack.c.l.b16 %v10025
        %v10506 = vunpack.c.l.b16 %v10026
        %v10507 = vunpack.c.l.b16 %v10027
        %v10508 = vunpack.c.l.b16 %v10028
        %v10509 = vunpack.c.l.b16 %v10029
        %v10510 = vunpack.c.l.b16 %v10030
        %v10511 = vunpack.c.l.b16 %v10031
        %v10512 = vunpack.c.l.b16 %v10032
        %v10513 = vunpack.c.l.b16 %v10033
        %v10514 = vunpack.c.l.b16 %v10034
        %v10515 = vunpack.c.l.b16 %v10035
        %v10516 = vunpack.c.l.b16 %v10036
        %v10517 = vpack.c.b16 %v10502, %v10501
        %v10518 = vpack.c.b16 %v10504, %v10503
        %v10519 = vpack.c.b16 %v10506, %v10505
        %v10520 = vpack.c.b16 %v10508, %v10507
        %v10521 = vpack.c.b16 %v10510, %v10509
        %v10522 = vpack.c.b16 %v10512, %v10511
        %v10523 = vpack.c.b16 %v10514, %v10513
        %v10524 = vpack.c.b16 %v10516, %v10515
        %10533 = vmatprep.subr.bf16.mxu0 0
        %10534 = vmatpush1.bf16.msra.mxu0 %v10517
        %10535 = vmatprep.subr.bf16.mxu0 0
        %10536 = vmatpush1.bf16.msra.mxu0 %v10518
        %10537 = vmatprep.subr.bf16.mxu0 0
        %10538 = vmatpush1.bf16.msra.mxu0 %v10519
        %10539 = vmatprep.subr.bf16.mxu0 0
        %10540 = vmatpush1.bf16.msra.mxu0 %v10520
        %10541 = vmatprep.subr.bf16.mxu0 0
        %10542 = vmatpush1.bf16.msra.mxu0 %v10521
        %10543 = vmatprep.subr.bf16.mxu0 0
        %10544 = vmatpush1.bf16.msra.mxu0 %v10522
        %10545 = vmatprep.subr.bf16.mxu0 0
        %10546 = vmatpush1.bf16.msra.mxu0 %v10523
        %10547 = vmatprep.subr.bf16.mxu0 0
        %10548 = vmatpush1.bf16.msra.mxu0 %v10524
        %10549 = vmatprep.subr.bf16.mxu0 0
        %10550 = vmatpush1.bf16.msra.mxu0 0
        %10551 = vmatprep.subr.bf16.mxu0 0
        %10552 = vmatpush1.bf16.msra.mxu0 0
        %10553 = vmatprep.subr.bf16.mxu0 0
        %10554 = vmatpush1.bf16.msra.mxu0 0
        %10555 = vmatprep.subr.bf16.mxu0 0
        %10556 = vmatpush1.bf16.msra.mxu0 0
        %10557 = vmatprep.subr.bf16.mxu0 0
        %10558 = vmatpush1.bf16.msra.mxu0 0
        %10559 = vmatprep.subr.bf16.mxu0 0
        %10560 = vmatpush1.bf16.msra.mxu0 0
        %10561 = vmatprep.subr.bf16.mxu0 0
        %10562 = vmatpush1.bf16.msra.mxu0 0
        %10563 = vmatprep.subr.bf16.mxu0 0
        %10564 = vmatpush1.bf16.msra.mxu0 0
        %10565 = vmatprep.mubr.bf16.mxu0 0
        %10566 = vmatmul.mubr.bf16.gmra.mrb[0].mxu0 %v10453
        %v10567 = vpop.f32.mrb[0].mxu0
        %v10568 = vadd.f32 0.0, %v10567
        %v10569 = vpop.f32.mrb[0].mxu0
        %v10570 = vpop.f32.mrb[0].mxu0
        %v10571 = vadd.f32 0.0, %v10570
        %v10572 = vpop.f32.mrb[0].mxu0
        %10573 = vmatprep.mubr.bf16.mxu0 0
        %10574 = vmatmul.mubr.bf16.gmra.mrb[0].mxu0 %v10454
        %v10575 = vpop.f32.mrb[0].mxu0
        %v10576 = vadd.f32 0.0, %v10575
        %v10577 = vpop.f32.mrb[0].mxu0
        %v10578 = vpop.f32.mrb[0].mxu0
        %v10579 = vadd.f32 0.0, %v10578
        %v10580 = vpop.f32.mrb[0].mxu0
        %10581 = vmatprep.mubr.bf16.mxu0 0
        %10582 = vmatmul.mubr.bf16.gmra.mrb[0].mxu0 %v10455
        %v10583 = vpop.f32.mrb[0].mxu0
        %v10584 = vadd.f32 0.0, %v10583
        %v10585 = vpop.f32.mrb[0].mxu0
        %v10586 = vpop.f32.mrb[0].mxu0
        %v10587 = vadd.f32 0.0, %v10586
        %v10588 = vpop.f32.mrb[0].mxu0
        %10589 = vmatprep.mubr.bf16.mxu0 0
        %10590 = vmatmul.mubr.bf16.gmra.mrb[0].mxu0 %v10456
        %v10591 = vpop.f32.mrb[0].mxu0
        %v10592 = vadd.f32 0.0, %v10591
        %v10593 = vpop.f32.mrb[0].mxu0
        %v10594 = vpop.f32.mrb[0].mxu0
        %v10595 = vadd.f32 0.0, %v10594
        %v10596 = vpop.f32.mrb[0].mxu0
        %10597 = vmatprep.mubr.bf16.mxu0 0
        %10598 = vmatmul.mubr.bf16.gmra.mrb[0].mxu0 %v10457
        %v10599 = vpop.f32.mrb[0].mxu0
        %v10600 = vadd.f32 0.0, %v10599
        %v10601 = vpop.f32.mrb[0].mxu0
        %v10602 = vpop.f32.mrb[0].mxu0
        %v10603 = vadd.f32 0.0, %v10602
        %v10604 = vpop.f32.mrb[0].mxu0
        %10605 = vmatprep.mubr.bf16.mxu0 0
        %10606 = vmatmul.mubr.bf16.gmra.mrb[0].mxu0 %v10458
        %v10607 = vpop.f32.mrb[0].mxu0
        %v10608 = vadd.f32 0.0, %v10607
        %v10609 = vpop.f32.mrb[0].mxu0
        %v10610 = vpop.f32.mrb[0].mxu0
        %v10611 = vadd.f32 0.0, %v10610
        %v10612 = vpop.f32.mrb[0].mxu0
        %10613 = vmatprep.mubr.bf16.mxu0 0
        %10614 = vmatmul.mubr.bf16.gmra.mrb[0].mxu0 %v10459
        %v10615 = vpop.f32.mrb[0].mxu0
        %v10616 = vadd.f32 0.0, %v10615
        %v10617 = vpop.f32.mrb[0].mxu0
        %v10618 = vpop.f32.mrb[0].mxu0
        %v10619 = vadd.f32 0.0, %v10618
        %v10620 = vpop.f32.mrb[0].mxu0
        %10621 = vmatprep.mubr.bf16.mxu0 0
        %10622 = vmatmul.mubr.bf16.gmra.mrb[0].mxu0 %v10460
        %v10623 = vpop.f32.mrb[0].mxu0
        %v10624 = vadd.f32 0.0, %v10623
        %v10625 = vpop.f32.mrb[0].mxu0
        %v10626 = vpop.f32.mrb[0].mxu0
        %v10627 = vadd.f32 0.0, %v10626
        %v10628 = vpop.f32.mrb[0].mxu0
        %10629 = vmatprep.mubr.bf16.mxu0 0
        %10630 = vmatmul.mubr.bf16.gmra.mrb[0].mxu0 %v10461
        %v10631 = vpop.f32.mrb[0].mxu0
        %v10632 = vadd.f32 0.0, %v10631
        %v10633 = vpop.f32.mrb[0].mxu0
        %v10634 = vpop.f32.mrb[0].mxu0
        %v10635 = vadd.f32 0.0, %v10634
        %v10636 = vpop.f32.mrb[0].mxu0
        %10637 = vmatprep.mubr.bf16.mxu0 0
        %10638 = vmatmul.mubr.bf16.gmra.mrb[0].mxu0 %v10462
        %v10639 = vpop.f32.mrb[0].mxu0
        %v10640 = vadd.f32 0.0, %v10639
        %v10641 = vpop.f32.mrb[0].mxu0
        %v10642 = vpop.f32.mrb[0].mxu0
        %v10643 = vadd.f32 0.0, %v10642
        %v10644 = vpop.f32.mrb[0].mxu0
        %10645 = vmatprep.mubr.bf16.mxu0 0
        %10646 = vmatmul.mubr.bf16.gmra.mrb[0].mxu0 %v10463
        %v10647 = vpop.f32.mrb[0].mxu0
        %v10648 = vadd.f32 0.0, %v10647
        %v10649 = vpop.f32.mrb[0].mxu0
        %v10650 = vpop.f32.mrb[0].mxu0
        %v10651 = vadd.f32 0.0, %v10650
        %v10652 = vpop.f32.mrb[0].mxu0
        %10653 = vmatprep.mubr.bf16.mxu0 0
        %10654 = vmatmul.mubr.bf16.gmra.mrb[0].mxu0 %v10464
        %v10655 = vpop.f32.mrb[0].mxu0
        %v10656 = vadd.f32 0.0, %v10655
        %v10657 = vpop.f32.mrb[0].mxu0
        %v10658 = vpop.f32.mrb[0].mxu0
        %v10659 = vadd.f32 0.0, %v10658
        %v10660 = vpop.f32.mrb[0].mxu0
        %10661 = vmatprep.mubr.bf16.mxu0 0
        %10662 = vmatmul.mubr.bf16.gmra.mrb[0].mxu0 %v10465
        %v10663 = vpop.f32.mrb[0].mxu0
        %v10664 = vadd.f32 0.0, %v10663
        %v10665 = vpop.f32.mrb[0].mxu0
        %v10666 = vpop.f32.mrb[0].mxu0
        %v10667 = vadd.f32 0.0, %v10666
        %v10668 = vpop.f32.mrb[0].mxu0
        %10669 = vmatprep.mubr.bf16.mxu0 0
        %10670 = vmatmul.mubr.bf16.gmra.mrb[0].mxu0 %v10466
        %v10671 = vpop.f32.mrb[0].mxu0
        %v10672 = vadd.f32 0.0, %v10671
        %v10673 = vpop.f32.mrb[0].mxu0
        %v10674 = vpop.f32.mrb[0].mxu0
        %v10675 = vadd.f32 0.0, %v10674
        %v10676 = vpop.f32.mrb[0].mxu0
        %10677 = vmatprep.mubr.bf16.mxu0 0
        %10678 = vmatmul.mubr.bf16.gmra.mrb[0].mxu0 %v10467
        %v10679 = vpop.f32.mrb[0].mxu0
        %v10680 = vadd.f32 0.0, %v10679
        %v10681 = vpop.f32.mrb[0].mxu0
        %v10682 = vpop.f32.mrb[0].mxu0
        %v10683 = vadd.f32 0.0, %v10682
        %v10684 = vpop.f32.mrb[0].mxu0
        %10685 = vmatprep.mubr.bf16.mxu0 0
        %10686 = vmatmul.mubr.bf16.gmra.mrb[0].mxu0 %v10468
        %v10687 = vpop.f32.mrb[0].mxu0
        %v10688 = vadd.f32 0.0, %v10687
        %v10689 = vpop.f32.mrb[0].mxu0
        %v10690 = vpop.f32.mrb[0].mxu0
        %v10691 = vadd.f32 0.0, %v10690
        %v10692 = vpop.f32.mrb[0].mxu0
        %10693 = vdwg.mxu0
        %v10694 = vadd.f32 %v9941, %v10568
        %v10695 = vadd.f32 %v9942, %v10571
        %v10696 = vadd.f32 %v9943, %v10576
        %v10697 = vadd.f32 %v9944, %v10579
        %v10698 = vadd.f32 %v9945, %v10584
        %v10699 = vadd.f32 %v9946, %v10587
        %v10700 = vadd.f32 %v9947, %v10592
        %v10701 = vadd.f32 %v9948, %v10595
        %v10702 = vadd.f32 %v9949, %v10600
        %v10703 = vadd.f32 %v9950, %v10603
        %v10704 = vadd.f32 %v9951, %v10608
        %v10705 = vadd.f32 %v9952, %v10611
        %v10706 = vadd.f32 %v9953, %v10616
        %v10707 = vadd.f32 %v9954, %v10619
        %v10708 = vadd.f32 %v9955, %v10624
        %v10709 = vadd.f32 %v9956, %v10627
        %v10710 = vadd.f32 %v9957, %v10632
        %v10711 = vadd.f32 %v9958, %v10635
        %v10712 = vadd.f32 %v9959, %v10640
        %v10713 = vadd.f32 %v9960, %v10643
        %v10714 = vadd.f32 %v9961, %v10648
        %v10715 = vadd.f32 %v9962, %v10651
        %v10716 = vadd.f32 %v9963, %v10656
        %v10717 = vadd.f32 %v9964, %v10659
        %v10718 = vadd.f32 %v9965, %v10664
        %v10719 = vadd.f32 %v9966, %v10667
        %v10720 = vadd.f32 %v9967, %v10672
        %v10721 = vadd.f32 %v9968, %v10675
        %v10722 = vadd.f32 %v9969, %v10680
        %v10723 = vadd.f32 %v9970, %v10683
        %v10724 = vadd.f32 %v9971, %v10688
        %v10725 = vadd.f32 %v9972, %v10691
        %v10726 = vld [vmem:[%s9587] sm:$0xe]
        %v10727 = vld [vmem:[%s9587 + $0xc] sm:$0xe]
        %v10728 = vld [vmem:[%s9587 + $0x18] sm:$0xe]
        %v10729 = vld [vmem:[%s9587 + $0x24] sm:$0xe]
        %v10730 = vld [vmem:[%s9587 + $0x30] sm:$0xe]
        %v10731 = vld [vmem:[%s9587 + $0x3c] sm:$0xe]
        %v10732 = vld [vmem:[%s9587 + $0x48] sm:$0xe]
        %v10733 = vld [vmem:[%s9587 + $0x54] sm:$0xe]
        %v10734 = vld [vmem:[%s9587 + $0x60] sm:$0xe]
        %v10735 = vld [vmem:[%s9587 + $0x6c] sm:$0xe]
        %v10736 = vld [vmem:[%s9587 + $0x78] sm:$0xe]
        %v10737 = vld [vmem:[%s9587 + $0x84] sm:$0xe]
        %v10738 = vld [vmem:[%s9587 + $0x90] sm:$0xe]
        %v10739 = vld [vmem:[%s9587 + $0x9c] sm:$0xe]
        %v10740 = vld [vmem:[%s9587 + $0xa8] sm:$0xe]
        %v10741 = vld [vmem:[%s9587 + $0xb4] sm:$0xe]
        %v10742 = vld [vmem:[#allocation9 + $0x200] sm:$0xf]
        %v10743 = vld [vmem:[#allocation9 + $0x204] sm:$0xf]
        %v10744 = vld [vmem:[#allocation9 + $0x208] sm:$0xf]
        %v10745 = vld [vmem:[#allocation9 + $0x20c] sm:$0xf]
        %v10746 = vld [vmem:[#allocation9 + $0x210] sm:$0xf]
        %v10747 = vld [vmem:[#allocation9 + $0x214] sm:$0xf]
        %v10748 = vld [vmem:[#allocation9 + $0x218] sm:$0xf]
        %v10749 = vld [vmem:[#allocation9 + $0x21c] sm:$0xf]
        %v10750 = vld [vmem:[#allocation9 + $0x220] sm:$0xf]
        %v10751 = vld [vmem:[#allocation9 + $0x224] sm:$0xf]
        %v10752 = vld [vmem:[#allocation9 + $0x228] sm:$0xf]
        %v10753 = vld [vmem:[#allocation9 + $0x22c] sm:$0xf]
        %v10754 = vld [vmem:[#allocation9 + $0x230] sm:$0xf]
        %v10755 = vld [vmem:[#allocation9 + $0x234] sm:$0xf]
        %v10756 = vld [vmem:[#allocation9 + $0x238] sm:$0xf]
        %v10757 = vld [vmem:[#allocation9 + $0x23c] sm:$0xf]
        %v10806 = vrot.slane %v10726, 5
        %v10807 = vrot.slane %v10806, 4
        %v10808 = vrot.slane %v9974, 5
        %v10809 = vsel %vm1992, %v10807, %v10808
        %v10810 = vrot.slane %v10808, 4
        %v10811 = vrot.slane %v9975, 5
        %v10812 = vsel %vm1992, %v10810, %v10811
        %v10813 = vrot.slane %v10727, 5
        %v10814 = vrot.slane %v10813, 4
        %v10815 = vrot.slane %v9977, 5
        %v10816 = vsel %vm1992, %v10814, %v10815
        %v10817 = vrot.slane %v10815, 4
        %v10818 = vrot.slane %v9978, 5
        %v10819 = vsel %vm1992, %v10817, %v10818
        %v10820 = vrot.slane %v10728, 5
        %v10821 = vrot.slane %v10820, 4
        %v10822 = vrot.slane %v9980, 5
        %v10823 = vsel %vm1992, %v10821, %v10822
        %v10824 = vrot.slane %v10822, 4
        %v10825 = vrot.slane %v9981, 5
        %v10826 = vsel %vm1992, %v10824, %v10825
        %v10827 = vrot.slane %v10729, 5
        %v10828 = vrot.slane %v10827, 4
        %v10829 = vrot.slane %v9983, 5
        %v10830 = vsel %vm1992, %v10828, %v10829
        %v10831 = vrot.slane %v10829, 4
        %v10832 = vrot.slane %v9984, 5
        %v10833 = vsel %vm1992, %v10831, %v10832
        %v10834 = vrot.slane %v10730, 5
        %v10835 = vrot.slane %v10834, 4
        %v10836 = vrot.slane %v9986, 5
        %v10837 = vsel %vm1992, %v10835, %v10836
        %v10838 = vrot.slane %v10836, 4
        %v10839 = vrot.slane %v9987, 5
        %v10840 = vsel %vm1992, %v10838, %v10839
        %v10841 = vrot.slane %v10731, 5
        %v10842 = vrot.slane %v10841, 4
        %v10843 = vrot.slane %v9989, 5
        %v10844 = vsel %vm1992, %v10842, %v10843
        %v10845 = vrot.slane %v10843, 4
        %v10846 = vrot.slane %v9990, 5
        %v10847 = vsel %vm1992, %v10845, %v10846
        %v10848 = vrot.slane %v10732, 5
        %v10849 = vrot.slane %v10848, 4
        %v10850 = vrot.slane %v9992, 5
        %v10851 = vsel %vm1992, %v10849, %v10850
        %v10852 = vrot.slane %v10850, 4
        %v10853 = vrot.slane %v9993, 5
        %v10854 = vsel %vm1992, %v10852, %v10853
        %v10855 = vrot.slane %v10733, 5
        %v10856 = vrot.slane %v10855, 4
        %v10857 = vrot.slane %v9995, 5
        %v10858 = vsel %vm1992, %v10856, %v10857
        %v10859 = vrot.slane %v10857, 4
        %v10860 = vrot.slane %v9996, 5
        %v10861 = vsel %vm1992, %v10859, %v10860
        %v10862 = vrot.slane %v10734, 5
        %v10863 = vrot.slane %v10862, 4
        %v10864 = vrot.slane %v9998, 5
        %v10865 = vsel %vm1992, %v10863, %v10864
        %v10866 = vrot.slane %v10864, 4
        %v10867 = vrot.slane %v9999, 5
        %v10868 = vsel %vm1992, %v10866, %v10867
        %v10869 = vrot.slane %v10735, 5
        %v10870 = vrot.slane %v10869, 4
        %v10871 = vrot.slane %v10001, 5
        %v10872 = vsel %vm1992, %v10870, %v10871
        %v10873 = vrot.slane %v10871, 4
        %v10874 = vrot.slane %v10002, 5
        %v10875 = vsel %vm1992, %v10873, %v10874
        %v10876 = vrot.slane %v10736, 5
        %v10877 = vrot.slane %v10876, 4
        %v10878 = vrot.slane %v10004, 5
        %v10879 = vsel %vm1992, %v10877, %v10878
        %v10880 = vrot.slane %v10878, 4
        %v10881 = vrot.slane %v10005, 5
        %v10882 = vsel %vm1992, %v10880, %v10881
        %v10883 = vrot.slane %v10737, 5
        %v10884 = vrot.slane %v10883, 4
        %v10885 = vrot.slane %v10007, 5
        %v10886 = vsel %vm1992, %v10884, %v10885
        %v10887 = vrot.slane %v10885, 4
        %v10888 = vrot.slane %v10008, 5
        %v10889 = vsel %vm1992, %v10887, %v10888
        %v10890 = vrot.slane %v10738, 5
        %v10891 = vrot.slane %v10890, 4
        %v10892 = vrot.slane %v10010, 5
        %v10893 = vsel %vm1992, %v10891, %v10892
        %v10894 = vrot.slane %v10892, 4
        %v10895 = vrot.slane %v10011, 5
        %v10896 = vsel %vm1992, %v10894, %v10895
        %v10897 = vrot.slane %v10739, 5
        %v10898 = vrot.slane %v10897, 4
        %v10899 = vrot.slane %v10013, 5
        %v10900 = vsel %vm1992, %v10898, %v10899
        %v10901 = vrot.slane %v10899, 4
        %v10902 = vrot.slane %v10014, 5
        %v10903 = vsel %vm1992, %v10901, %v10902
        %v10904 = vrot.slane %v10740, 5
        %v10905 = vrot.slane %v10904, 4
        %v10906 = vrot.slane %v10016, 5
        %v10907 = vsel %vm1992, %v10905, %v10906
        %v10908 = vrot.slane %v10906, 4
        %v10909 = vrot.slane %v10017, 5
        %v10910 = vsel %vm1992, %v10908, %v10909
        %v10911 = vrot.slane %v10741, 5
        %v10912 = vrot.slane %v10911, 4
        %v10913 = vrot.slane %v10019, 5
        %v10914 = vsel %vm1992, %v10912, %v10913
        %v10915 = vrot.slane %v10913, 4
        %v10916 = vrot.slane %v10020, 5
        %v10917 = vsel %vm1992, %v10915, %v10916
        %v10918 = vunpack.c.l.b16 %v10809
        %v10919 = vunpack.c.l.b16 %v10812
        %v10920 = vunpack.c.l.b16 %v10816
        %v10921 = vunpack.c.l.b16 %v10819
        %v10922 = vunpack.c.l.b16 %v10823
        %v10923 = vunpack.c.l.b16 %v10826
        %v10924 = vunpack.c.l.b16 %v10830
        %v10925 = vunpack.c.l.b16 %v10833
        %v10926 = vunpack.c.l.b16 %v10837
        %v10927 = vunpack.c.l.b16 %v10840
        %v10928 = vunpack.c.l.b16 %v10844
        %v10929 = vunpack.c.l.b16 %v10847
        %v10930 = vunpack.c.l.b16 %v10851
        %v10931 = vunpack.c.l.b16 %v10854
        %v10932 = vunpack.c.l.b16 %v10858
        %v10933 = vunpack.c.l.b16 %v10861
        %v10934 = vunpack.c.l.b16 %v10865
        %v10935 = vunpack.c.l.b16 %v10868
        %v10936 = vunpack.c.l.b16 %v10872
        %v10937 = vunpack.c.l.b16 %v10875
        %v10938 = vunpack.c.l.b16 %v10879
        %v10939 = vunpack.c.l.b16 %v10882
        %v10940 = vunpack.c.l.b16 %v10886
        %v10941 = vunpack.c.l.b16 %v10889
        %v10942 = vunpack.c.l.b16 %v10893
        %v10943 = vunpack.c.l.b16 %v10896
        %v10944 = vunpack.c.l.b16 %v10900
        %v10945 = vunpack.c.l.b16 %v10903
        %v10946 = vunpack.c.l.b16 %v10907
        %v10947 = vunpack.c.l.b16 %v10910
        %v10948 = vunpack.c.l.b16 %v10914
        %v10949 = vunpack.c.l.b16 %v10917
        %v10950 = vpack.c.b16 %v10919, %v10918
        %v10951 = vpack.c.b16 %v10921, %v10920
        %v10952 = vpack.c.b16 %v10923, %v10922
        %v10953 = vpack.c.b16 %v10925, %v10924
        %v10954 = vpack.c.b16 %v10927, %v10926
        %v10955 = vpack.c.b16 %v10929, %v10928
        %v10956 = vpack.c.b16 %v10931, %v10930
        %v10957 = vpack.c.b16 %v10933, %v10932
        %v10958 = vpack.c.b16 %v10935, %v10934
        %v10959 = vpack.c.b16 %v10937, %v10936
        %v10960 = vpack.c.b16 %v10939, %v10938
        %v10961 = vpack.c.b16 %v10941, %v10940
        %v10962 = vpack.c.b16 %v10943, %v10942
        %v10963 = vpack.c.b16 %v10945, %v10944
        %v10964 = vpack.c.b16 %v10947, %v10946
        %v10965 = vpack.c.b16 %v10949, %v10948
        %v10998 = vunpack.c.l.b16 %v10742
        %v10999 = vunpack.c.l.b16 %v10743
        %v11000 = vunpack.c.l.b16 %v10744
        %v11001 = vunpack.c.l.b16 %v10745
        %v11002 = vunpack.c.l.b16 %v10746
        %v11003 = vunpack.c.l.b16 %v10747
        %v11004 = vunpack.c.l.b16 %v10748
        %v11005 = vunpack.c.l.b16 %v10749
        %v11006 = vunpack.c.l.b16 %v10750
        %v11007 = vunpack.c.l.b16 %v10751
        %v11008 = vunpack.c.l.b16 %v10752
        %v11009 = vunpack.c.l.b16 %v10753
        %v11010 = vunpack.c.l.b16 %v10754
        %v11011 = vunpack.c.l.b16 %v10755
        %v11012 = vunpack.c.l.b16 %v10756
        %v11013 = vunpack.c.l.b16 %v10757
        %v11014 = vpack.c.b16 %v10999, %v10998
        %v11015 = vpack.c.b16 %v11001, %v11000
        %v11016 = vpack.c.b16 %v11003, %v11002
        %v11017 = vpack.c.b16 %v11005, %v11004
        %v11018 = vpack.c.b16 %v11007, %v11006
        %v11019 = vpack.c.b16 %v11009, %v11008
        %v11020 = vpack.c.b16 %v11011, %v11010
        %v11021 = vpack.c.b16 %v11013, %v11012
        %11030 = vmatprep.subr.bf16.mxu0 0
        %11031 = vmatpush1.bf16.msra.mxu0 %v11014
        %11032 = vmatprep.subr.bf16.mxu0 0
        %11033 = vmatpush1.bf16.msra.mxu0 %v11015
        %11034 = vmatprep.subr.bf16.mxu0 0
        %11035 = vmatpush1.bf16.msra.mxu0 %v11016
        %11036 = vmatprep.subr.bf16.mxu0 0
        %11037 = vmatpush1.bf16.msra.mxu0 %v11017
        %11038 = vmatprep.subr.bf16.mxu0 0
        %11039 = vmatpush1.bf16.msra.mxu0 %v11018
        %11040 = vmatprep.subr.bf16.mxu0 0
        %11041 = vmatpush1.bf16.msra.mxu0 %v11019
        %11042 = vmatprep.subr.bf16.mxu0 0
        %11043 = vmatpush1.bf16.msra.mxu0 %v11020
        %11044 = vmatprep.subr.bf16.mxu0 0
        %11045 = vmatpush1.bf16.msra.mxu0 %v11021
        %11046 = vmatprep.subr.bf16.mxu0 0
        %11047 = vmatpush1.bf16.msra.mxu0 0
        %11048 = vmatprep.subr.bf16.mxu0 0
        %11049 = vmatpush1.bf16.msra.mxu0 0
        %11050 = vmatprep.subr.bf16.mxu0 0
        %11051 = vmatpush1.bf16.msra.mxu0 0
        %11052 = vmatprep.subr.bf16.mxu0 0
        %11053 = vmatpush1.bf16.msra.mxu0 0
        %11054 = vmatprep.subr.bf16.mxu0 0
        %11055 = vmatpush1.bf16.msra.mxu0 0
        %11056 = vmatprep.subr.bf16.mxu0 0
        %11057 = vmatpush1.bf16.msra.mxu0 0
        %11058 = vmatprep.subr.bf16.mxu0 0
        %11059 = vmatpush1.bf16.msra.mxu0 0
        %11060 = vmatprep.subr.bf16.mxu0 0
        %11061 = vmatpush1.bf16.msra.mxu0 0
        %11062 = vmatprep.mubr.bf16.mxu0 0
        %11063 = vmatmul.mubr.bf16.gmra.mrb[0].mxu0 %v10950
        %v11064 = vpop.f32.mrb[0].mxu0
        %v11065 = vadd.f32 0.0, %v11064
        %v11066 = vpop.f32.mrb[0].mxu0
        %v11067 = vpop.f32.mrb[0].mxu0
        %v11068 = vadd.f32 0.0, %v11067
        %v11069 = vpop.f32.mrb[0].mxu0
        %11070 = vmatprep.mubr.bf16.mxu0 0
        %11071 = vmatmul.mubr.bf16.gmra.mrb[0].mxu0 %v10951
        %v11072 = vpop.f32.mrb[0].mxu0
        %v11073 = vadd.f32 0.0, %v11072
        %v11074 = vpop.f32.mrb[0].mxu0
        %v11075 = vpop.f32.mrb[0].mxu0
        %v11076 = vadd.f32 0.0, %v11075
        %v11077 = vpop.f32.mrb[0].mxu0
        %11078 = vmatprep.mubr.bf16.mxu0 0
        %11079 = vmatmul.mubr.bf16.gmra.mrb[0].mxu0 %v10952
        %v11080 = vpop.f32.mrb[0].mxu0
        %v11081 = vadd.f32 0.0, %v11080
        %v11082 = vpop.f32.mrb[0].mxu0
        %v11083 = vpop.f32.mrb[0].mxu0
        %v11084 = vadd.f32 0.0, %v11083
        %v11085 = vpop.f32.mrb[0].mxu0
        %11086 = vmatprep.mubr.bf16.mxu0 0
        %11087 = vmatmul.mubr.bf16.gmra.mrb[0].mxu0 %v10953
        %v11088 = vpop.f32.mrb[0].mxu0
        %v11089 = vadd.f32 0.0, %v11088
        %v11090 = vpop.f32.mrb[0].mxu0
        %v11091 = vpop.f32.mrb[0].mxu0
        %v11092 = vadd.f32 0.0, %v11091
        %v11093 = vpop.f32.mrb[0].mxu0
        %11094 = vmatprep.mubr.bf16.mxu0 0
        %11095 = vmatmul.mubr.bf16.gmra.mrb[0].mxu0 %v10954
        %v11096 = vpop.f32.mrb[0].mxu0
        %v11097 = vadd.f32 0.0, %v11096
        %v11098 = vpop.f32.mrb[0].mxu0
        %v11099 = vpop.f32.mrb[0].mxu0
        %v11100 = vadd.f32 0.0, %v11099
        %v11101 = vpop.f32.mrb[0].mxu0
        %11102 = vmatprep.mubr.bf16.mxu0 0
        %11103 = vmatmul.mubr.bf16.gmra.mrb[0].mxu0 %v10955
        %v11104 = vpop.f32.mrb[0].mxu0
        %v11105 = vadd.f32 0.0, %v11104
        %v11106 = vpop.f32.mrb[0].mxu0
        %v11107 = vpop.f32.mrb[0].mxu0
        %v11108 = vadd.f32 0.0, %v11107
        %v11109 = vpop.f32.mrb[0].mxu0
        %11110 = vmatprep.mubr.bf16.mxu0 0
        %11111 = vmatmul.mubr.bf16.gmra.mrb[0].mxu0 %v10956
        %v11112 = vpop.f32.mrb[0].mxu0
        %v11113 = vadd.f32 0.0, %v11112
        %v11114 = vpop.f32.mrb[0].mxu0
        %v11115 = vpop.f32.mrb[0].mxu0
        %v11116 = vadd.f32 0.0, %v11115
        %v11117 = vpop.f32.mrb[0].mxu0
        %11118 = vmatprep.mubr.bf16.mxu0 0
        %11119 = vmatmul.mubr.bf16.gmra.mrb[0].mxu0 %v10957
        %v11120 = vpop.f32.mrb[0].mxu0
        %v11121 = vadd.f32 0.0, %v11120
        %v11122 = vpop.f32.mrb[0].mxu0
        %v11123 = vpop.f32.mrb[0].mxu0
        %v11124 = vadd.f32 0.0, %v11123
        %v11125 = vpop.f32.mrb[0].mxu0
        %11126 = vmatprep.mubr.bf16.mxu0 0
        %11127 = vmatmul.mubr.bf16.gmra.mrb[0].mxu0 %v10958
        %v11128 = vpop.f32.mrb[0].mxu0
        %v11129 = vadd.f32 0.0, %v11128
        %v11130 = vpop.f32.mrb[0].mxu0
        %v11131 = vpop.f32.mrb[0].mxu0
        %v11132 = vadd.f32 0.0, %v11131
        %v11133 = vpop.f32.mrb[0].mxu0
        %11134 = vmatprep.mubr.bf16.mxu0 0
        %11135 = vmatmul.mubr.bf16.gmra.mrb[0].mxu0 %v10959
        %v11136 = vpop.f32.mrb[0].mxu0
        %v11137 = vadd.f32 0.0, %v11136
        %v11138 = vpop.f32.mrb[0].mxu0
        %v11139 = vpop.f32.mrb[0].mxu0
        %v11140 = vadd.f32 0.0, %v11139
        %v11141 = vpop.f32.mrb[0].mxu0
        %11142 = vmatprep.mubr.bf16.mxu0 0
        %11143 = vmatmul.mubr.bf16.gmra.mrb[0].mxu0 %v10960
        %v11144 = vpop.f32.mrb[0].mxu0
        %v11145 = vadd.f32 0.0, %v11144
        %v11146 = vpop.f32.mrb[0].mxu0
        %v11147 = vpop.f32.mrb[0].mxu0
        %v11148 = vadd.f32 0.0, %v11147
        %v11149 = vpop.f32.mrb[0].mxu0
        %11150 = vmatprep.mubr.bf16.mxu0 0
        %11151 = vmatmul.mubr.bf16.gmra.mrb[0].mxu0 %v10961
        %v11152 = vpop.f32.mrb[0].mxu0
        %v11153 = vadd.f32 0.0, %v11152
        %v11154 = vpop.f32.mrb[0].mxu0
        %v11155 = vpop.f32.mrb[0].mxu0
        %v11156 = vadd.f32 0.0, %v11155
        %v11157 = vpop.f32.mrb[0].mxu0
        %11158 = vmatprep.mubr.bf16.mxu0 0
        %11159 = vmatmul.mubr.bf16.gmra.mrb[0].mxu0 %v10962
        %v11160 = vpop.f32.mrb[0].mxu0
        %v11161 = vadd.f32 0.0, %v11160
        %v11162 = vpop.f32.mrb[0].mxu0
        %v11163 = vpop.f32.mrb[0].mxu0
        %v11164 = vadd.f32 0.0, %v11163
        %v11165 = vpop.f32.mrb[0].mxu0
        %11166 = vmatprep.mubr.bf16.mxu0 0
        %11167 = vmatmul.mubr.bf16.gmra.mrb[0].mxu0 %v10963
        %v11168 = vpop.f32.mrb[0].mxu0
        %v11169 = vadd.f32 0.0, %v11168
        %v11170 = vpop.f32.mrb[0].mxu0
        %v11171 = vpop.f32.mrb[0].mxu0
        %v11172 = vadd.f32 0.0, %v11171
        %v11173 = vpop.f32.mrb[0].mxu0
        %11174 = vmatprep.mubr.bf16.mxu0 0
        %11175 = vmatmul.mubr.bf16.gmra.mrb[0].mxu0 %v10964
        %v11176 = vpop.f32.mrb[0].mxu0
        %v11177 = vadd.f32 0.0, %v11176
        %v11178 = vpop.f32.mrb[0].mxu0
        %v11179 = vpop.f32.mrb[0].mxu0
        %v11180 = vadd.f32 0.0, %v11179
        %v11181 = vpop.f32.mrb[0].mxu0
        %11182 = vmatprep.mubr.bf16.mxu0 0
        %11183 = vmatmul.mubr.bf16.gmra.mrb[0].mxu0 %v10965
        %v11184 = vpop.f32.mrb[0].mxu0
        %v11185 = vadd.f32 0.0, %v11184
        %v11186 = vpop.f32.mrb[0].mxu0
        %v11187 = vpop.f32.mrb[0].mxu0
        %v11188 = vadd.f32 0.0, %v11187
        %v11189 = vpop.f32.mrb[0].mxu0
        %11190 = vdwg.mxu0
        %v11191 = vadd.f32 %v10694, %v11065
        %v11192 = vadd.f32 %v10695, %v11068
        %v11193 = vadd.f32 %v10696, %v11073
        %v11194 = vadd.f32 %v10697, %v11076
        %v11195 = vadd.f32 %v10698, %v11081
        %v11196 = vadd.f32 %v10699, %v11084
        %v11197 = vadd.f32 %v10700, %v11089
        %v11198 = vadd.f32 %v10701, %v11092
        %v11199 = vadd.f32 %v10702, %v11097
        %v11200 = vadd.f32 %v10703, %v11100
        %v11201 = vadd.f32 %v10704, %v11105
        %v11202 = vadd.f32 %v10705, %v11108
        %v11203 = vadd.f32 %v10706, %v11113
        %v11204 = vadd.f32 %v10707, %v11116
        %v11205 = vadd.f32 %v10708, %v11121
        %v11206 = vadd.f32 %v10709, %v11124
        %v11207 = vadd.f32 %v10710, %v11129
        %v11208 = vadd.f32 %v10711, %v11132
        %v11209 = vadd.f32 %v10712, %v11137
        %v11210 = vadd.f32 %v10713, %v11140
        %v11211 = vadd.f32 %v10714, %v11145
        %v11212 = vadd.f32 %v10715, %v11148
        %v11213 = vadd.f32 %v10716, %v11153
        %v11214 = vadd.f32 %v10717, %v11156
        %v11215 = vadd.f32 %v10718, %v11161
        %v11216 = vadd.f32 %v10719, %v11164
        %v11217 = vadd.f32 %v10720, %v11169
        %v11218 = vadd.f32 %v10721, %v11172
        %v11219 = vadd.f32 %v10722, %v11177
        %v11220 = vadd.f32 %v10723, %v11180
        %v11221 = vadd.f32 %v10724, %v11185
        %v11222 = vadd.f32 %v10725, %v11188
        %v11223 = vlaneseq
        %v11224 = vshrl.u32 %v11223, 7
        %v11225 = vsub.s32 0, %v11224
        %v11226 = vrot.slane %v322, %v11225
        %v11227 = vmul.f32 %v11191, %v11226
        %v11228 = vmul.f32 %v11192, %v11226
        %v11229 = vmul.f32 %v11193, %v11226
        %v11230 = vmul.f32 %v11194, %v11226
        %v11231 = vmul.f32 %v11195, %v11226
        %v11232 = vmul.f32 %v11196, %v11226
        %v11233 = vmul.f32 %v11197, %v11226
        %v11234 = vmul.f32 %v11198, %v11226
        %v11235 = vmul.f32 %v11199, %v11226
        %v11236 = vmul.f32 %v11200, %v11226
        %v11237 = vmul.f32 %v11201, %v11226
        %v11238 = vmul.f32 %v11202, %v11226
        %v11239 = vmul.f32 %v11203, %v11226
        %v11240 = vmul.f32 %v11204, %v11226
        %v11241 = vmul.f32 %v11205, %v11226
        %v11242 = vmul.f32 %v11206, %v11226
        %v11243 = vmul.f32 %v11207, %v11226
        %v11244 = vmul.f32 %v11208, %v11226
        %v11245 = vmul.f32 %v11209, %v11226
        %v11246 = vmul.f32 %v11210, %v11226
        %v11247 = vmul.f32 %v11211, %v11226
        %v11248 = vmul.f32 %v11212, %v11226
        %v11249 = vmul.f32 %v11213, %v11226
        %v11250 = vmul.f32 %v11214, %v11226
        %v11251 = vmul.f32 %v11215, %v11226
        %v11252 = vmul.f32 %v11216, %v11226
        %v11253 = vmul.f32 %v11217, %v11226
        %v11254 = vmul.f32 %v11218, %v11226
        %v11255 = vmul.f32 %v11219, %v11226
        %v11256 = vmul.f32 %v11220, %v11226
        %v11257 = vmul.f32 %v11221, %v11226
        %v11258 = vmul.f32 %v11222, %v11226
        %v11259 = vlaneseq
        %v11260 = vshrl.u32 %v11259, 7
        %v11261 = vsub.s32 0, %v11260
        %v11262 = vrot.slane %v323, %v11261
        %v11263 = vadd.f32 %v11227, %v11262
        %v11264 = vadd.f32 %v11228, %v11262
        %v11265 = vadd.f32 %v11229, %v11262
        %v11266 = vadd.f32 %v11230, %v11262
        %v11267 = vadd.f32 %v11231, %v11262
        %v11268 = vadd.f32 %v11232, %v11262
        %v11269 = vadd.f32 %v11233, %v11262
        %v11270 = vadd.f32 %v11234, %v11262
        %v11271 = vadd.f32 %v11235, %v11262
        %v11272 = vadd.f32 %v11236, %v11262
        %v11273 = vadd.f32 %v11237, %v11262
        %v11274 = vadd.f32 %v11238, %v11262
        %v11275 = vadd.f32 %v11239, %v11262
        %v11276 = vadd.f32 %v11240, %v11262
        %v11277 = vadd.f32 %v11241, %v11262
        %v11278 = vadd.f32 %v11242, %v11262
        %v11279 = vadd.f32 %v11243, %v11262
        %v11280 = vadd.f32 %v11244, %v11262
        %v11281 = vadd.f32 %v11245, %v11262
        %v11282 = vadd.f32 %v11246, %v11262
        %v11283 = vadd.f32 %v11247, %v11262
        %v11284 = vadd.f32 %v11248, %v11262
        %v11285 = vadd.f32 %v11249, %v11262
        %v11286 = vadd.f32 %v11250, %v11262
        %v11287 = vadd.f32 %v11251, %v11262
        %v11288 = vadd.f32 %v11252, %v11262
        %v11289 = vadd.f32 %v11253, %v11262
        %v11290 = vadd.f32 %v11254, %v11262
        %v11291 = vadd.f32 %v11255, %v11262
        %v11292 = vadd.f32 %v11256, %v11262
        %v11293 = vadd.f32 %v11257, %v11262
        %v11294 = vadd.f32 %v11258, %v11262
        %v11295 = vld [vmem:[#allocation10] sm:$0xf]
        %v11296 = vld [vmem:[#allocation10 + $0x4] sm:$0xf]
        %v11297 = vld [vmem:[#allocation10 + $0x8] sm:$0xf]
        %v11298 = vld [vmem:[#allocation10 + $0xc] sm:$0xf]
        %v11299 = vld [vmem:[#allocation10 + $0x10] sm:$0xf]
        %v11300 = vld [vmem:[#allocation10 + $0x14] sm:$0xf]
        %v11301 = vld [vmem:[#allocation10 + $0x18] sm:$0xf]
        %v11302 = vld [vmem:[#allocation10 + $0x1c] sm:$0xf]
        %v11303 = vld [vmem:[#allocation10 + $0x20] sm:$0xf]
        %v11304 = vld [vmem:[#allocation10 + $0x24] sm:$0xf]
        %v11305 = vld [vmem:[#allocation10 + $0x28] sm:$0xf]
        %v11306 = vld [vmem:[#allocation10 + $0x2c] sm:$0xf]
        %v11307 = vld [vmem:[#allocation10 + $0x30] sm:$0xf]
        %v11308 = vld [vmem:[#allocation10 + $0x34] sm:$0xf]
        %v11309 = vld [vmem:[#allocation10 + $0x38] sm:$0xf]
        %v11310 = vld [vmem:[#allocation10 + $0x3c] sm:$0xf]
        %v11343 = vunpack.c.l.b16 %v288
        %v11344 = vunpack.c.l.b16 %v289
        %v11345 = vunpack.c.l.b16 %v290
        %v11346 = vunpack.c.l.b16 %v291
        %v11347 = vunpack.c.l.b16 %v292
        %v11348 = vunpack.c.l.b16 %v293
        %v11349 = vunpack.c.l.b16 %v294
        %v11350 = vunpack.c.l.b16 %v295
        %v11351 = vunpack.c.l.b16 %v296
        %v11352 = vunpack.c.l.b16 %v297
        %v11353 = vunpack.c.l.b16 %v298
        %v11354 = vunpack.c.l.b16 %v299
        %v11355 = vunpack.c.l.b16 %v300
        %v11356 = vunpack.c.l.b16 %v301
        %v11357 = vunpack.c.l.b16 %v302
        %v11358 = vunpack.c.l.b16 %v303
        %v11359 = vunpack.c.l.b16 %v304
        %v11360 = vunpack.c.l.b16 %v305
        %v11361 = vunpack.c.l.b16 %v306
        %v11362 = vunpack.c.l.b16 %v307
        %v11363 = vunpack.c.l.b16 %v308
        %v11364 = vunpack.c.l.b16 %v309
        %v11365 = vunpack.c.l.b16 %v310
        %v11366 = vunpack.c.l.b16 %v311
        %v11367 = vunpack.c.l.b16 %v312
        %v11368 = vunpack.c.l.b16 %v313
        %v11369 = vunpack.c.l.b16 %v314
        %v11370 = vunpack.c.l.b16 %v315
        %v11371 = vunpack.c.l.b16 %v316
        %v11372 = vunpack.c.l.b16 %v317
        %v11373 = vunpack.c.l.b16 %v318
        %v11374 = vunpack.c.l.b16 %v319
        %v11375 = vpack.c.b16 %v11344, %v11343
        %v11376 = vpack.c.b16 %v11346, %v11345
        %v11377 = vpack.c.b16 %v11348, %v11347
        %v11378 = vpack.c.b16 %v11350, %v11349
        %v11379 = vpack.c.b16 %v11352, %v11351
        %v11380 = vpack.c.b16 %v11354, %v11353
        %v11381 = vpack.c.b16 %v11356, %v11355
        %v11382 = vpack.c.b16 %v11358, %v11357
        %v11383 = vpack.c.b16 %v11360, %v11359
        %v11384 = vpack.c.b16 %v11362, %v11361
        %v11385 = vpack.c.b16 %v11364, %v11363
        %v11386 = vpack.c.b16 %v11366, %v11365
        %v11387 = vpack.c.b16 %v11368, %v11367
        %v11388 = vpack.c.b16 %v11370, %v11369
        %v11389 = vpack.c.b16 %v11372, %v11371
        %v11390 = vpack.c.b16 %v11374, %v11373
        %v11423 = vunpack.c.l.b16 %v11295
        %v11424 = vunpack.c.l.b16 %v11296
        %v11425 = vunpack.c.l.b16 %v11297
        %v11426 = vunpack.c.l.b16 %v11298
        %v11427 = vunpack.c.l.b16 %v11299
        %v11428 = vunpack.c.l.b16 %v11300
        %v11429 = vunpack.c.l.b16 %v11301
        %v11430 = vunpack.c.l.b16 %v11302
        %v11431 = vunpack.c.l.b16 %v11303
        %v11432 = vunpack.c.l.b16 %v11304
        %v11433 = vunpack.c.l.b16 %v11305
        %v11434 = vunpack.c.l.b16 %v11306
        %v11435 = vunpack.c.l.b16 %v11307
        %v11436 = vunpack.c.l.b16 %v11308
        %v11437 = vunpack.c.l.b16 %v11309
        %v11438 = vunpack.c.l.b16 %v11310
        %v11439 = vpack.c.b16 %v11424, %v11423
        %v11440 = vpack.c.b16 %v11426, %v11425
        %v11441 = vpack.c.b16 %v11428, %v11427
        %v11442 = vpack.c.b16 %v11430, %v11429
        %v11443 = vpack.c.b16 %v11432, %v11431
        %v11444 = vpack.c.b16 %v11434, %v11433
        %v11445 = vpack.c.b16 %v11436, %v11435
        %v11446 = vpack.c.b16 %v11438, %v11437
        %11455 = vmatprep.subr.bf16.mxu0 0
        %11456 = vmatpush1.bf16.msra.mxu0 %v11439
        %11457 = vmatprep.subr.bf16.mxu0 0
        %11458 = vmatpush1.bf16.msra.mxu0 %v11440
        %11459 = vmatprep.subr.bf16.mxu0 0
        %11460 = vmatpush1.bf16.msra.mxu0 %v11441
        %11461 = vmatprep.subr.bf16.mxu0 0
        %11462 = vmatpush1.bf16.msra.mxu0 %v11442
        %11463 = vmatprep.subr.bf16.mxu0 0
        %11464 = vmatpush1.bf16.msra.mxu0 %v11443
        %11465 = vmatprep.subr.bf16.mxu0 0
        %11466 = vmatpush1.bf16.msra.mxu0 %v11444
        %11467 = vmatprep.subr.bf16.mxu0 0
        %11468 = vmatpush1.bf16.msra.mxu0 %v11445
        %11469 = vmatprep.subr.bf16.mxu0 0
        %11470 = vmatpush1.bf16.msra.mxu0 %v11446
        %11471 = vmatprep.subr.bf16.mxu0 0
        %11472 = vmatpush1.bf16.msra.mxu0 0
        %11473 = vmatprep.subr.bf16.mxu0 0
        %11474 = vmatpush1.bf16.msra.mxu0 0
        %11475 = vmatprep.subr.bf16.mxu0 0
        %11476 = vmatpush1.bf16.msra.mxu0 0
        %11477 = vmatprep.subr.bf16.mxu0 0
        %11478 = vmatpush1.bf16.msra.mxu0 0
        %11479 = vmatprep.subr.bf16.mxu0 0
        %11480 = vmatpush1.bf16.msra.mxu0 0
        %11481 = vmatprep.subr.bf16.mxu0 0
        %11482 = vmatpush1.bf16.msra.mxu0 0
        %11483 = vmatprep.subr.bf16.mxu0 0
        %11484 = vmatpush1.bf16.msra.mxu0 0
        %11485 = vmatprep.subr.bf16.mxu0 0
        %11486 = vmatpush1.bf16.msra.mxu0 0
        %11487 = vmatprep.mubr.bf16.mxu0 0
        %11488 = vmatmul.mubr.bf16.gmra.mrb[0].mxu0 %v11375
        %v11489 = vpop.f32.mrb[0].mxu0
        %v11490 = vadd.f32 0.0, %v11489
        %v11491 = vpop.f32.mrb[0].mxu0
        %v11492 = vpop.f32.mrb[0].mxu0
        %v11493 = vadd.f32 0.0, %v11492
        %v11494 = vpop.f32.mrb[0].mxu0
        %11495 = vmatprep.mubr.bf16.mxu0 0
        %11496 = vmatmul.mubr.bf16.gmra.mrb[0].mxu0 %v11376
        %v11497 = vpop.f32.mrb[0].mxu0
        %v11498 = vadd.f32 0.0, %v11497
        %v11499 = vpop.f32.mrb[0].mxu0
        %v11500 = vpop.f32.mrb[0].mxu0
        %v11501 = vadd.f32 0.0, %v11500
        %v11502 = vpop.f32.mrb[0].mxu0
        %11503 = vmatprep.mubr.bf16.mxu0 0
        %11504 = vmatmul.mubr.bf16.gmra.mrb[0].mxu0 %v11377
        %v11505 = vpop.f32.mrb[0].mxu0
        %v11506 = vadd.f32 0.0, %v11505
        %v11507 = vpop.f32.mrb[0].mxu0
        %v11508 = vpop.f32.mrb[0].mxu0
        %v11509 = vadd.f32 0.0, %v11508
        %v11510 = vpop.f32.mrb[0].mxu0
        %11511 = vmatprep.mubr.bf16.mxu0 0
        %11512 = vmatmul.mubr.bf16.gmra.mrb[0].mxu0 %v11378
        %v11513 = vpop.f32.mrb[0].mxu0
        %v11514 = vadd.f32 0.0, %v11513
        %v11515 = vpop.f32.mrb[0].mxu0
        %v11516 = vpop.f32.mrb[0].mxu0
        %v11517 = vadd.f32 0.0, %v11516
        %v11518 = vpop.f32.mrb[0].mxu0
        %11519 = vmatprep.mubr.bf16.mxu0 0
        %11520 = vmatmul.mubr.bf16.gmra.mrb[0].mxu0 %v11379
        %v11521 = vpop.f32.mrb[0].mxu0
        %v11522 = vadd.f32 0.0, %v11521
        %v11523 = vpop.f32.mrb[0].mxu0
        %v11524 = vpop.f32.mrb[0].mxu0
        %v11525 = vadd.f32 0.0, %v11524
        %v11526 = vpop.f32.mrb[0].mxu0
        %11527 = vmatprep.mubr.bf16.mxu0 0
        %11528 = vmatmul.mubr.bf16.gmra.mrb[0].mxu0 %v11380
        %v11529 = vpop.f32.mrb[0].mxu0
        %v11530 = vadd.f32 0.0, %v11529
        %v11531 = vpop.f32.mrb[0].mxu0
        %v11532 = vpop.f32.mrb[0].mxu0
        %v11533 = vadd.f32 0.0, %v11532
        %v11534 = vpop.f32.mrb[0].mxu0
        %11535 = vmatprep.mubr.bf16.mxu0 0
        %11536 = vmatmul.mubr.bf16.gmra.mrb[0].mxu0 %v11381
        %v11537 = vpop.f32.mrb[0].mxu0
        %v11538 = vadd.f32 0.0, %v11537
        %v11539 = vpop.f32.mrb[0].mxu0
        %v11540 = vpop.f32.mrb[0].mxu0
        %v11541 = vadd.f32 0.0, %v11540
        %v11542 = vpop.f32.mrb[0].mxu0
        %11543 = vmatprep.mubr.bf16.mxu0 0
        %11544 = vmatmul.mubr.bf16.gmra.mrb[0].mxu0 %v11382
        %v11545 = vpop.f32.mrb[0].mxu0
        %v11546 = vadd.f32 0.0, %v11545
        %v11547 = vpop.f32.mrb[0].mxu0
        %v11548 = vpop.f32.mrb[0].mxu0
        %v11549 = vadd.f32 0.0, %v11548
        %v11550 = vpop.f32.mrb[0].mxu0
        %11551 = vmatprep.mubr.bf16.mxu0 0
        %11552 = vmatmul.mubr.bf16.gmra.mrb[0].mxu0 %v11383
        %v11553 = vpop.f32.mrb[0].mxu0
        %v11554 = vadd.f32 0.0, %v11553
        %v11555 = vpop.f32.mrb[0].mxu0
        %v11556 = vpop.f32.mrb[0].mxu0
        %v11557 = vadd.f32 0.0, %v11556
        %v11558 = vpop.f32.mrb[0].mxu0
        %11559 = vmatprep.mubr.bf16.mxu0 0
        %11560 = vmatmul.mubr.bf16.gmra.mrb[0].mxu0 %v11384
        %v11561 = vpop.f32.mrb[0].mxu0
        %v11562 = vadd.f32 0.0, %v11561
        %v11563 = vpop.f32.mrb[0].mxu0
        %v11564 = vpop.f32.mrb[0].mxu0
        %v11565 = vadd.f32 0.0, %v11564
        %v11566 = vpop.f32.mrb[0].mxu0
        %11567 = vmatprep.mubr.bf16.mxu0 0
        %11568 = vmatmul.mubr.bf16.gmra.mrb[0].mxu0 %v11385
        %v11569 = vpop.f32.mrb[0].mxu0
        %v11570 = vadd.f32 0.0, %v11569
        %v11571 = vpop.f32.mrb[0].mxu0
        %v11572 = vpop.f32.mrb[0].mxu0
        %v11573 = vadd.f32 0.0, %v11572
        %v11574 = vpop.f32.mrb[0].mxu0
        %11575 = vmatprep.mubr.bf16.mxu0 0
        %11576 = vmatmul.mubr.bf16.gmra.mrb[0].mxu0 %v11386
        %v11577 = vpop.f32.mrb[0].mxu0
        %v11578 = vadd.f32 0.0, %v11577
        %v11579 = vpop.f32.mrb[0].mxu0
        %v11580 = vpop.f32.mrb[0].mxu0
        %v11581 = vadd.f32 0.0, %v11580
        %v11582 = vpop.f32.mrb[0].mxu0
        %11583 = vmatprep.mubr.bf16.mxu0 0
        %11584 = vmatmul.mubr.bf16.gmra.mrb[0].mxu0 %v11387
        %v11585 = vpop.f32.mrb[0].mxu0
        %v11586 = vadd.f32 0.0, %v11585
        %v11587 = vpop.f32.mrb[0].mxu0
        %v11588 = vpop.f32.mrb[0].mxu0
        %v11589 = vadd.f32 0.0, %v11588
        %v11590 = vpop.f32.mrb[0].mxu0
        %11591 = vmatprep.mubr.bf16.mxu0 0
        %11592 = vmatmul.mubr.bf16.gmra.mrb[0].mxu0 %v11388
        %v11593 = vpop.f32.mrb[0].mxu0
        %v11594 = vadd.f32 0.0, %v11593
        %v11595 = vpop.f32.mrb[0].mxu0
        %v11596 = vpop.f32.mrb[0].mxu0
        %v11597 = vadd.f32 0.0, %v11596
        %v11598 = vpop.f32.mrb[0].mxu0
        %11599 = vmatprep.mubr.bf16.mxu0 0
        %11600 = vmatmul.mubr.bf16.gmra.mrb[0].mxu0 %v11389
        %v11601 = vpop.f32.mrb[0].mxu0
        %v11602 = vadd.f32 0.0, %v11601
        %v11603 = vpop.f32.mrb[0].mxu0
        %v11604 = vpop.f32.mrb[0].mxu0
        %v11605 = vadd.f32 0.0, %v11604
        %v11606 = vpop.f32.mrb[0].mxu0
        %11607 = vmatprep.mubr.bf16.mxu0 0
        %11608 = vmatmul.mubr.bf16.gmra.mrb[0].mxu0 %v11390
        %v11609 = vpop.f32.mrb[0].mxu0
        %v11610 = vadd.f32 0.0, %v11609
        %v11611 = vpop.f32.mrb[0].mxu0
        %v11612 = vpop.f32.mrb[0].mxu0
        %v11613 = vadd.f32 0.0, %v11612
        %v11614 = vpop.f32.mrb[0].mxu0
        %11615 = vdwg.mxu0
        %v11616 = vadd.f32 %v11263, %v11490
        %v11617 = vadd.f32 %v11264, %v11493
        %v11618 = vadd.f32 %v11265, %v11498
        %v11619 = vadd.f32 %v11266, %v11501
        %v11620 = vadd.f32 %v11267, %v11506
        %v11621 = vadd.f32 %v11268, %v11509
        %v11622 = vadd.f32 %v11269, %v11514
        %v11623 = vadd.f32 %v11270, %v11517
        %v11624 = vadd.f32 %v11271, %v11522
        %v11625 = vadd.f32 %v11272, %v11525
        %v11626 = vadd.f32 %v11273, %v11530
        %v11627 = vadd.f32 %v11274, %v11533
        %v11628 = vadd.f32 %v11275, %v11538
        %v11629 = vadd.f32 %v11276, %v11541
        %v11630 = vadd.f32 %v11277, %v11546
        %v11631 = vadd.f32 %v11278, %v11549
        %v11632 = vadd.f32 %v11279, %v11554
        %v11633 = vadd.f32 %v11280, %v11557
        %v11634 = vadd.f32 %v11281, %v11562
        %v11635 = vadd.f32 %v11282, %v11565
        %v11636 = vadd.f32 %v11283, %v11570
        %v11637 = vadd.f32 %v11284, %v11573
        %v11638 = vadd.f32 %v11285, %v11578
        %v11639 = vadd.f32 %v11286, %v11581
        %v11640 = vadd.f32 %v11287, %v11586
        %v11641 = vadd.f32 %v11288, %v11589
        %v11642 = vadd.f32 %v11289, %v11594
        %v11643 = vadd.f32 %v11290, %v11597
        %v11644 = vadd.f32 %v11291, %v11602
        %v11645 = vadd.f32 %v11292, %v11605
        %v11646 = vadd.f32 %v11293, %v11610
        %v11647 = vadd.f32 %v11294, %v11613
        %v11648 = vmax.f32 %v11616, 0.0
        %v11649 = vmax.f32 %v11617, 0.0
        %v11650 = vmax.f32 %v11618, 0.0
        %v11651 = vmax.f32 %v11619, 0.0
        %v11652 = vmax.f32 %v11620, 0.0
        %v11653 = vmax.f32 %v11621, 0.0
        %v11654 = vmax.f32 %v11622, 0.0
        %v11655 = vmax.f32 %v11623, 0.0
        %v11656 = vmax.f32 %v11624, 0.0
        %v11657 = vmax.f32 %v11625, 0.0
        %v11658 = vmax.f32 %v11626, 0.0
        %v11659 = vmax.f32 %v11627, 0.0
        %v11660 = vmax.f32 %v11628, 0.0
        %v11661 = vmax.f32 %v11629, 0.0
        %v11662 = vmax.f32 %v11630, 0.0
        %v11663 = vmax.f32 %v11631, 0.0
        %v11664 = vmax.f32 %v11632, 0.0
        %v11665 = vmax.f32 %v11633, 0.0
        %v11666 = vmax.f32 %v11634, 0.0
        %v11667 = vmax.f32 %v11635, 0.0
        %v11668 = vmax.f32 %v11636, 0.0
        %v11669 = vmax.f32 %v11637, 0.0
        %v11670 = vmax.f32 %v11638, 0.0
        %v11671 = vmax.f32 %v11639, 0.0
        %v11672 = vmax.f32 %v11640, 0.0
        %v11673 = vmax.f32 %v11641, 0.0
        %v11674 = vmax.f32 %v11642, 0.0
        %v11675 = vmax.f32 %v11643, 0.0
        %v11676 = vmax.f32 %v11644, 0.0
        %v11677 = vmax.f32 %v11645, 0.0
        %v11678 = vmax.f32 %v11646, 0.0
        %v11679 = vmax.f32 %v11647, 0.0
        %v11680 = vpack.c.bf16 %v11649, %v11648
        %v11681 = vpack.c.bf16 %v11651, %v11650
        %v11682 = vpack.c.bf16 %v11653, %v11652
        %v11683 = vpack.c.bf16 %v11655, %v11654
        %v11684 = vpack.c.bf16 %v11657, %v11656
        %v11685 = vpack.c.bf16 %v11659, %v11658
        %v11686 = vpack.c.bf16 %v11661, %v11660
        %v11687 = vpack.c.bf16 %v11663, %v11662
        %v11688 = vpack.c.bf16 %v11665, %v11664
        %v11689 = vpack.c.bf16 %v11667, %v11666
        %v11690 = vpack.c.bf16 %v11669, %v11668
        %v11691 = vpack.c.bf16 %v11671, %v11670
        %v11692 = vpack.c.bf16 %v11673, %v11672
        %v11693 = vpack.c.bf16 %v11675, %v11674
        %v11694 = vpack.c.bf16 %v11677, %v11676
        %v11695 = vpack.c.bf16 %v11679, %v11678
        %v11712 = vunpack.c.l.b16 %v11680
        %v11713 = vunpack.c.h.b16 %v11680
        %v11714 = vunpack.c.l.b16 %v11681
        %v11715 = vunpack.c.h.b16 %v11681
        %v11716 = vunpack.c.l.b16 %v11682
        %v11717 = vunpack.c.h.b16 %v11682
        %v11718 = vunpack.c.l.b16 %v11683
        %v11719 = vunpack.c.h.b16 %v11683
        %v11720 = vunpack.c.l.b16 %v11684
        %v11721 = vunpack.c.h.b16 %v11684
        %v11722 = vunpack.c.l.b16 %v11685
        %v11723 = vunpack.c.h.b16 %v11685
        %v11724 = vunpack.c.l.b16 %v11686
        %v11725 = vunpack.c.h.b16 %v11686
        %v11726 = vunpack.c.l.b16 %v11687
        %v11727 = vunpack.c.h.b16 %v11687
        %v11728 = vunpack.c.l.b16 %v11688
        %v11729 = vunpack.c.h.b16 %v11688
        %v11730 = vunpack.c.l.b16 %v11689
        %v11731 = vunpack.c.h.b16 %v11689
        %v11732 = vunpack.c.l.b16 %v11690
        %v11733 = vunpack.c.h.b16 %v11690
        %v11734 = vunpack.c.l.b16 %v11691
        %v11735 = vunpack.c.h.b16 %v11691
        %v11736 = vunpack.c.l.b16 %v11692
        %v11737 = vunpack.c.h.b16 %v11692
        %v11738 = vunpack.c.l.b16 %v11693
        %v11739 = vunpack.c.h.b16 %v11693
        %v11740 = vunpack.c.l.b16 %v11694
        %v11741 = vunpack.c.h.b16 %v11694
        %v11742 = vunpack.c.l.b16 %v11695
        %v11743 = vunpack.c.h.b16 %v11695
        %v11744 = vpack.c.b16 %v11712, %v11712
        %v11745 = vpack.c.b16 %v11713, %v11713
        %v11746 = vpack.c.b16 %v11714, %v11714
        %v11747 = vpack.c.b16 %v11715, %v11715
        %v11748 = vpack.c.b16 %v11716, %v11716
        %v11749 = vpack.c.b16 %v11717, %v11717
        %v11750 = vpack.c.b16 %v11718, %v11718
        %v11751 = vpack.c.b16 %v11719, %v11719
        %v11752 = vpack.c.b16 %v11720, %v11720
        %v11753 = vpack.c.b16 %v11721, %v11721
        %v11754 = vpack.c.b16 %v11722, %v11722
        %v11755 = vpack.c.b16 %v11723, %v11723
        %v11756 = vpack.c.b16 %v11724, %v11724
        %v11757 = vpack.c.b16 %v11725, %v11725
        %v11758 = vpack.c.b16 %v11726, %v11726
        %v11759 = vpack.c.b16 %v11727, %v11727
        %v11760 = vpack.c.b16 %v11728, %v11728
        %v11761 = vpack.c.b16 %v11729, %v11729
        %v11762 = vpack.c.b16 %v11730, %v11730
        %v11763 = vpack.c.b16 %v11731, %v11731
        %v11764 = vpack.c.b16 %v11732, %v11732
        %v11765 = vpack.c.b16 %v11733, %v11733
        %v11766 = vpack.c.b16 %v11734, %v11734
        %v11767 = vpack.c.b16 %v11735, %v11735
        %v11768 = vpack.c.b16 %v11736, %v11736
        %v11769 = vpack.c.b16 %v11737, %v11737
        %v11770 = vpack.c.b16 %v11738, %v11738
        %v11771 = vpack.c.b16 %v11739, %v11739
        %v11772 = vpack.c.b16 %v11740, %v11740
        %v11773 = vpack.c.b16 %v11741, %v11741
        %v11774 = vpack.c.b16 %v11742, %v11742
        %v11775 = vpack.c.b16 %v11743, %v11743
        %11808 = vst [vmem:[%s286] sm:$0xf] %v11744
        %11809 = vst [vmem:[%s286 + $0x4] sm:$0xf] %v11745
        %11810 = vst [vmem:[%s286 + $0x8] sm:$0xf] %v11746
        %11811 = vst [vmem:[%s286 + $0xc] sm:$0xf] %v11747
        %11812 = vst [vmem:[%s286 + $0x10] sm:$0xf] %v11748
        %11813 = vst [vmem:[%s286 + $0x14] sm:$0xf] %v11749
        %11814 = vst [vmem:[%s286 + $0x18] sm:$0xf] %v11750
        %11815 = vst [vmem:[%s286 + $0x1c] sm:$0xf] %v11751
        %11816 = vst [vmem:[%s286 + $0x20] sm:$0xf] %v11752
        %11817 = vst [vmem:[%s286 + $0x24] sm:$0xf] %v11753
        %11818 = vst [vmem:[%s286 + $0x28] sm:$0xf] %v11754
        %11819 = vst [vmem:[%s286 + $0x2c] sm:$0xf] %v11755
        %11820 = vst [vmem:[%s286 + $0x30] sm:$0xf] %v11756
        %11821 = vst [vmem:[%s286 + $0x34] sm:$0xf] %v11757
        %11822 = vst [vmem:[%s286 + $0x38] sm:$0xf] %v11758
        %11823 = vst [vmem:[%s286 + $0x3c] sm:$0xf] %v11759
        %11824 = vst [vmem:[%s286 + $0x40] sm:$0xf] %v11760
        %11825 = vst [vmem:[%s286 + $0x44] sm:$0xf] %v11761
        %11826 = vst [vmem:[%s286 + $0x48] sm:$0xf] %v11762
        %11827 = vst [vmem:[%s286 + $0x4c] sm:$0xf] %v11763
        %11828 = vst [vmem:[%s286 + $0x50] sm:$0xf] %v11764
        %11829 = vst [vmem:[%s286 + $0x54] sm:$0xf] %v11765
        %11830 = vst [vmem:[%s286 + $0x58] sm:$0xf] %v11766
        %11831 = vst [vmem:[%s286 + $0x5c] sm:$0xf] %v11767
        %11832 = vst [vmem:[%s286 + $0x60] sm:$0xf] %v11768
        %11833 = vst [vmem:[%s286 + $0x64] sm:$0xf] %v11769
        %11834 = vst [vmem:[%s286 + $0x68] sm:$0xf] %v11770
        %11835 = vst [vmem:[%s286 + $0x6c] sm:$0xf] %v11771
        %11836 = vst [vmem:[%s286 + $0x70] sm:$0xf] %v11772
        %11837 = vst [vmem:[%s286 + $0x74] sm:$0xf] %v11773
        %11838 = vst [vmem:[%s286 + $0x78] sm:$0xf] %v11774
        %11839 = vst [vmem:[%s286 + $0x7c] sm:$0xf] %v11775
        %s11840 = sand.u32 %s142, 1
        %s11841 = scalar_lea.sflag [#allocation6], %s11840
        %s11842 = sand.u32 %s142, 1
        %s11843 = smul.addr %s11842, 128
        %s11844 = scalar_lea.vmem [#allocation12], %s11843
        // Predicated region
        $region57: #{tpu_custom_call.1} parent=39 // pred_check
          %p11845 = pneg %p152
        $region58: #{tpu_custom_call.1} parent=39 // pred_check_branch
          %11847 = sbr.rel (%p11845) target = $region60
        $region59: #{tpu_custom_call.1} parent=39 // pred_region
          %s11849 = ssub.s32 2048, 2048
          %11850 = vsyncadd %s11841, %s11849
          %s11851 = smul.addr %s24, 32
          %s11852 = smul.addr %s11851, 64
          %s11853 = scalar_lea.hbm %s5, %s11852
          %s11854 = sshll.u32 %s11844, 4
          %s11855 = int_to_ptr.vmem [resolvable:$true] %s11854
          %11860 = dma.vmem_to_hbm [thread:$0]  %s11855, 2048, %s11853, %s11841, 64, 64, 4
        $region60: #{tpu_custom_call.1} parent=39 // pred_fallthru
          _
      $region40: #{tpu_custom_call.1} parent=5 // pred_fallthru
        _
      %p11861 = scmp.le.s32.totalorder 2, %s19
      // Predicated region
      $region61: #{tpu_custom_call.1} parent=5 // pred_check
        %p11862 = pneg %p11861
      $region62: #{tpu_custom_call.1} parent=5 // pred_check_branch
        %11864 = sbr.rel (%p11862) target = $region64
      $region63: #{tpu_custom_call.1} parent=5 // pred_region
        %s11865 = ssub.s32 %s19, 2
        // Predicated region
        $region65: #{tpu_custom_call.1} parent=63 // pred_check
          %p11866 = pneg %p158
        $region66: #{tpu_custom_call.1} parent=63 // pred_check_branch
          %11868 = sbr.rel (%p11866) target = $region68
        $region67: #{tpu_custom_call.1} parent=63 // pred_region
          %s11869 = sand.u32 %s143, 1
          %s11870 = scalar_lea.sflag [#allocation6], %s11869
          %s11871 = sand.u32 %s143, 1
          %s11872 = smul.addr %s11871, 128
          %s11873 = scalar_lea.vmem [#allocation12], %s11872
          %11874 = dma.done %s11870, 2048
        $region68: #{tpu_custom_call.1} parent=63 // pred_fallthru
          _
      $region64: #{tpu_custom_call.1} parent=5 // pred_fallthru
        _
    $region6: #{tpu_custom_call.1} parent=1 // loop_footer
      %s23 = sadd.s32 1, %s19
    $region7: #{tpu_custom_call.1} parent=1 // loop_footer_branch
      %18 = sbr.rel target = $region3
    $region8: #{tpu_custom_call.1} parent=1 // loop_exit
      _
    %11875 = vsyncpa [#allocation5], 1
    %s11876 = scalar_lea.sflag [#allocation5], 1
    %11877 = vsyncpa %s11876, 1
    %11878 = vsyncpa [#allocation8], 1
    %11879 = vsyncpa [#allocation11], 1
    %11880 = vsyncpa [#allocation6], 1
    %s11881 = scalar_lea.sflag [#allocation6], 1
    %11882 = vsyncpa %s11881, 1

</llo_original>
